<compile_context>
chip_gen: v6e
topology: v6e:2x2x1
jax: 0.10.0
libtpu: 0.0.40
codegen_flags: <defaults>
</compile_context>

<pallas_src>
import numpy as np
import jax
import jax.numpy as jnp
from jax.experimental import pallas as pl
from jax.experimental.pallas import tpu as pltpu


# ----------------------------------------------------------------------------
# The fused kernel: conv1+pool -> conv2+pool -> fc1/fc2/fc3, one batch tile per step
# ----------------------------------------------------------------------------

def _net_kernel(x_ref, cw1_ref, cb1_ref, cw2_ref, cb2_ref,
                w1_ref, b1_ref, w2_ref, b2_ref, w3_ref, b3_ref, o_ref):
    # x_ref : (16, B, 192) bf16  parity-split conv1 input, lanes = (2p+q)*48 + w*3 + c
    # cw1   : (2, 5, 96, 84) bf16  conv1 blocks [dc, i, q*48 + w*3 + c, out_col]
    # cb1   : (1, 84)  f32         conv1 bias (tiled, conv2-lane-ordered)
    # cw2   : (2, 5, 84, 80) bf16  conv2 blocks
    # cb2   : (1, 80)  f32
    # w1    : (5, 80, 120) bf16    fc1 split per conv2 output row;  b1: (1, 120) f32
    # w2    : (120, 84) bf16;      b2: (1, 84)  f32
    # w3    : (84, 128) bf16 (zero-padded);  b3: (1, 128) f32
    # o_ref : (B, 128) f32
    b = x_ref.shape[1]

    def conv_pool(slabs, w_ref, b_vec):
        # 2x2/2 max-pool of ReLU(conv + bias), computed as: for each pool offset (dr, dc)
        # accumulate 5 tap-row dots, take the max over the 4 offsets, then +bias, ReLU.
        # (bias is constant over the pool window and ReLU is monotone, so this is exact.)
        pooled = None
        for dr in (0, 1):
            for dc in (0, 1):
                acc = None
                for i in range(5):
                    p, r = (dr + i) % 2, (dr + i) // 2
                    part = jnp.dot(slabs[(p, r)], w_ref[dc, i, :, :],
                                   preferred_element_type=jnp.float32)
                    acc = part if acc is None else acc + part
                pooled = acc if pooled is None else jnp.maximum(pooled, acc)
        return jnp.maximum(pooled + b_vec, 0.0)

    # ---- stage 1: conv1(3->6, 5x5) + bias + ReLU + maxpool --------------------------
    # 6 distinct slabs (row parity p, tap-row offset r); contiguous slices, free reshape.
    slabs1 = {(p, r): x_ref[r:r + 14, :, p * 96:(p + 1) * 96].reshape(14 * b, 96)
              for p in (0, 1) for r in (0, 1, 2)}
    y1 = conv_pool(slabs1, cw1_ref, cb1_ref[...])          # (14*B, 84) f32, row = ph*B + n

    # ---- re-split rows by parity for conv2 (free leading-dim reshape + lane concat) --
    y1 = y1.astype(jnp.bfloat16).reshape(7, 2, b, 84)       # [a2, row-parity, n, (q,w,c)]
    xs2 = jnp.concatenate([y1[:, 0], y1[:, 1]], axis=-1)    # (7, B, 168)

    # ---- stage 2: conv2(6->16, 5x5) + bias + ReLU + maxpool -------------------------
    slabs2 = {(p, r): xs2[r:r + 5, :, p * 84:(p + 1) * 84].reshape(5 * b, 84)
              for p in (0, 1) for r in (0, 1, 2)}
    y2 = conv_pool(slabs2, cw2_ref, cb2_ref[...])           # (5*B, 80) f32, row = ph2*B + n
    y2 = y2.astype(jnp.bfloat16).reshape(5, b, 80)          # [h, n, w*16 + c]

    # ---- stage 3: fc1 (split over the 5 rows -> no flatten transpose) + fc2 + fc3 ---
    acc = None
    for h in range(5):
        part = jnp.dot(y2[h], w1_ref[h, :, :], preferred_element_type=jnp.float32)
        acc = part if acc is None else acc + part
    h1 = jnp.maximum(acc + b1_ref[...], 0.0).astype(jnp.bfloat16)            # (B, 120)
    h2 = jnp.maximum(jnp.dot(h1, w2_ref[...], preferred_element_type=jnp.float32)
                     + b2_ref[...], 0.0).astype(jnp.bfloat16)                # (B, 84)
    out = jnp.dot(h2, w3_ref[...], preferred_element_type=jnp.float32) + b3_ref[...]
    o_ref[...] = out.astype(o_ref.dtype)                                     # (B, 128)


# ----------------------------------------------------------------------------
# Forward pass wrapper (layout prep + single gridded pallas_call)
# ----------------------------------------------------------------------------

def _round_up(v, m):
    return (v + m - 1) // m * m


def _to_lane_dense(x_nchw, n_pad):
    """NCHW -> (16, n_pad, 192) with [a, n, (2p+q)*48 + w*3 + c] = x[n, c, 2a+p, 2w+q]."""
    n = x_nchw.shape[0]
    x = jnp.transpose(x_nchw, (0, 2, 3, 1))                      # (N, 32, 32, 3) NHWC
    x = jnp.pad(x, ((0, n_pad - n), (0, 0), (0, 0), (0, 0)))
    x = x.reshape(n_pad, 16, 2, 16, 2, 3)                        # (n, a, p, w, q, c)
    x = jnp.transpose(x, (1, 0, 2, 4, 3, 5))                     # (a, n, p, q, w, c)
    return x.reshape(16, n_pad, 192).astype(jnp.bfloat16)


@jax.jit
def net_forward(prepped, x_nchw):
    n = x_nchw.shape[0]
    b_tile = min(32, _round_up(n, 16))      # multiple of 16 keeps bf16 reshapes tile-exact
    n_pad = _round_up(n, b_tile)
    x_in = _to_lane_dense(x_nchw, n_pad)

    grid_spec = pltpu.PrefetchScalarGridSpec(
        num_scalar_prefetch=0,
        grid=(n_pad // b_tile,),
        in_specs=[
            pl.BlockSpec((16, b_tile, 192), lambda i: (0, i, 0)),
            # Weights/biases: whole-array blocks with constant index_maps -> DMA'd once.
            pl.BlockSpec(prepped["cw1"].shape, lambda i: (0, 0, 0, 0)),
            pl.BlockSpec(prepped["cb1"].shape, lambda i: (0, 0)),
            pl.BlockSpec(prepped["cw2"].shape, lambda i: (0, 0, 0, 0)),
            pl.BlockSpec(prepped["cb2"].shape, lambda i: (0, 0)),
            pl.BlockSpec(prepped["w1"].shape, lambda i: (0, 0, 0)),
            pl.BlockSpec(prepped["b1"].shape, lambda i: (0, 0)),
            pl.BlockSpec(prepped["w2"].shape, lambda i: (0, 0)),
            pl.BlockSpec(prepped["b2"].shape, lambda i: (0, 0)),
            pl.BlockSpec(prepped["w3"].shape, lambda i: (0, 0)),
            pl.BlockSpec(prepped["b3"].shape, lambda i: (0, 0)),
        ],
        out_specs=pl.BlockSpec((b_tile, 128), lambda i: (i, 0)),
    )
    out = pl.pallas_call(
        _net_kernel,
        out_shape=jax.ShapeDtypeStruct((n_pad, 128), jnp.float32),
        grid_spec=grid_spec,
        compiler_params=pltpu.CompilerParams(
            dimension_semantics=("parallel",),      # megacore-shard batch tiles on v7x
            vmem_limit_bytes=32 * 1024 * 1024,
        ),
    )(x_in, prepped["cw1"], prepped["cb1"], prepped["cw2"], prepped["cb2"],
      prepped["w1"], prepped["b1"], prepped["w2"], prepped["b2"],
      prepped["w3"], prepped["b3"])
    return out[:n, :10]


# ----------------------------------------------------------------------------
# One-time parameter packing (outside the hot path)
# ----------------------------------------------------------------------------

def _build_conv_blocks(w, plane_w, pw_out, col_of):
    """Expand a (kh, kw, cin, cout) conv weight into per-(dc, tap-row) dense blocks.

    block[dc, i, q*plane_w*cin + wpos*cin + c, col_of(pw, n)] = w[i, j, c, n]
    for the unique j with (dc + j) % 2 == q and (dc + j) // 2 == wpos - pw.
    """
    w = np.asarray(w, np.float32)
    kh, kw, cin, cout = w.shape
    blk = np.zeros((2, kh, 2 * plane_w * cin, pw_out * cout), np.float32)
    for dc in range(2):
        for i in range(kh):
            for j in range(kw):
                q, rj = (dc + j) % 2, (dc + j) // 2
                for pw in range(pw_out):
                    k0 = (q * plane_w + pw + rj) * cin
                    for n in range(cout):
                        blk[dc, i, k0:k0 + cin, col_of(pw, n)] = w[i, j, :, n]
    return blk


def prepare_params(params):
    bf, f32 = jnp.bfloat16, jnp.float32

    # conv1 output columns pre-permuted into conv2's parity-split lane order (q2, w2, c);
    # conv2 output columns in (w, c) order so the flatten is a free reshape.
    col1 = lambda pw, n: (pw % 2) * 42 + (pw // 2) * 6 + n
    col2 = lambda pw, n: pw * 16 + n
    cw1 = _build_conv_blocks(params["conv1_w"], plane_w=16, pw_out=14, col_of=col1)
    cw2 = _build_conv_blocks(params["conv2_w"], plane_w=7, pw_out=5, col_of=col2)

    # fc1: PyTorch's torch.flatten order is (c, h, w); the kernel produces (h, w, c)
    # features, so permute the weight rows accordingly (works for imported weights too).
    idx = np.arange(400)
    h, w, c = idx // 80, (idx % 80) // 16, idx % 16
    fc1_w = np.asarray(params["fc1_w"])[c * 25 + h * 5 + w, :].reshape(5, 80, 120)

    # fc3: zero-pad 10 -> 128 output columns for lane-dense stores (sliced off outside).
    fc3_w = np.zeros((84, 128), np.float32)
    fc3_w[:, :10] = np.asarray(params["fc3_w"])
    fc3_b = np.zeros((1, 128), np.float32)
    fc3_b[0, :10] = np.asarray(params["fc3_b"])

    return {
        "cw1": jnp.asarray(cw1, bf),
        "cb1": jnp.asarray(np.tile(np.asarray(params["conv1_b"]), 14)[None], f32),
        "cw2": jnp.asarray(cw2, bf),
        "cb2": jnp.asarray(np.tile(np.asarray(params["conv2_b"]), 5)[None], f32),
        "w1": jnp.asarray(fc1_w, bf), "b1": jnp.asarray(params["fc1_b"], f32).reshape(1, -1),
        "w2": jnp.asarray(params["fc2_w"], bf), "b2": jnp.asarray(params["fc2_b"], f32).reshape(1, -1),
        "w3": jnp.asarray(fc3_w, bf), "b3": jnp.asarray(fc3_b, f32),
    }


def init_params(key):
    """Parameters in PyTorch-equivalent layouts: conv weights are HWIO (transpose
    torch's (cout,cin,kh,kw) by (2,3,1,0) when importing), fc weights are (in, out)
    (= torch weight.T), fc1 rows follow torch.flatten's (c, h, w) order.
    Uniform(+-1/sqrt(fan_in)) init, like nn.Conv2d / nn.Linear."""
    ks = jax.random.split(key, 10)

    def u(k, shape, fan_in):
        b = 1.0 / np.sqrt(fan_in)
        return jax.random.uniform(k, shape, jnp.float32, -b, b)

    return {
        "conv1_w": u(ks[0], (5, 5, 3, 6), 75), "conv1_b": u(ks[1], (6,), 75),
        "conv2_w": u(ks[2], (5, 5, 6, 16), 150), "conv2_b": u(ks[3], (16,), 150),
        "fc1_w": u(ks[4], (400, 120), 400), "fc1_b": u(ks[5], (120,), 400),
        "fc2_w": u(ks[6], (120, 84), 120), "fc2_b": u(ks[7], (84,), 120),
        "fc3_w": u(ks[8], (84, 10), 84), "fc3_b": u(ks[9], (10,), 84),
    }


# ----------------------------------------------------------------------------
# Pure-JAX f32 reference (PyTorch `Net` semantics) for validation
# ----------------------------------------------------------------------------

def net_reference(params, x_nchw):
    x = jnp.transpose(x_nchw, (0, 2, 3, 1))

    def conv_relu(x, w, b):
        y = jax.lax.conv_general_dilated(x, w, (1, 1), "VALID",
                                         dimension_numbers=("NHWC", "HWIO", "NHWC"))
        return jax.nn.relu(y + b)

    def pool(x):
        return jax.lax.reduce_window(x, -jnp.inf, jax.lax.max,
                                     (1, 2, 2, 1), (1, 2, 2, 1), "VALID")

    x = pool(conv_relu(x, params["conv1_w"], params["conv1_b"]))    # (N, 14, 14, 6)
    x = pool(conv_relu(x, params["conv2_w"], params["conv2_b"]))    # (N, 5, 5, 16)
    feat = jnp.transpose(x, (0, 3, 1, 2)).reshape(x.shape[0], -1)   # torch.flatten order
    h = jax.nn.relu(feat @ params["fc1_w"] + params["fc1_b"])
    h = jax.nn.relu(h @ params["fc2_w"] + params["fc2_b"])
    return h @ params["fc3_w"] + params["fc3_b"]


if __name__ == "__main__":
    key = jax.random.PRNGKey(0)
    pkey, xkey = jax.random.split(key)
    params = init_params(pkey)
    prepped = prepare_params(params)

    # fc1's 16*5*5 inputs imply 3x32x32 images, as in the reference module.
    x = jax.random.normal(xkey, (2, 3, 32, 32), jnp.float32)   # NCHW, PyTorch layout

    out = jax.block_until_ready(net_forward(prepped, x))
    assert out.shape == (2, 10) and out.dtype == jnp.float32

    ref = net_reference(params, x)
    np.testing.assert_allclose(np.asarray(out), np.asarray(ref), rtol=1e-1, atol=5e-2)
    print("KERNEL_OK")
</pallas_src>

<mosaic_0001>
module attributes {stable_mosaic.version = 11 : i64} {
  func.func @_net_kernel(%arg0: i32, %arg1: memref<16x16x192xbf16, #tpu.memory_space<vmem>>, %arg2: memref<2x5x96x84xbf16, #tpu.memory_space<vmem>>, %arg3: memref<1x84xf32, #tpu.memory_space<vmem>>, %arg4: memref<2x5x84x80xbf16, #tpu.memory_space<vmem>>, %arg5: memref<1x80xf32, #tpu.memory_space<vmem>>, %arg6: memref<5x80x120xbf16, #tpu.memory_space<vmem>>, %arg7: memref<1x120xf32, #tpu.memory_space<vmem>>, %arg8: memref<120x84xbf16, #tpu.memory_space<vmem>>, %arg9: memref<1x84xf32, #tpu.memory_space<vmem>>, %arg10: memref<84x128xbf16, #tpu.memory_space<vmem>>, %arg11: memref<1x128xf32, #tpu.memory_space<vmem>>, %arg12: memref<16x128xf32, #tpu.memory_space<vmem>>) attributes {dimension_semantics = [#tpu.dimension_semantics<parallel>], iteration_bounds = array<i64: 1>, scalar_prefetch = 0 : i64, scratch_operands = 0 : i64, tpu.core_type = #tpu.core_type<tc>, window_params = [{transform_indices = @transform_0, window_bounds = array<i64: 16, 16, 192>}, {pipeline_mode = #tpu.pipeline_mode<synchronous>, transform_indices = @transform_1, window_bounds = array<i64: 2, 5, 96, 84>}, {pipeline_mode = #tpu.pipeline_mode<synchronous>, transform_indices = @transform_2, window_bounds = array<i64: 1, 84>}, {pipeline_mode = #tpu.pipeline_mode<synchronous>, transform_indices = @transform_3, window_bounds = array<i64: 2, 5, 84, 80>}, {pipeline_mode = #tpu.pipeline_mode<synchronous>, transform_indices = @transform_4, window_bounds = array<i64: 1, 80>}, {pipeline_mode = #tpu.pipeline_mode<synchronous>, transform_indices = @transform_5, window_bounds = array<i64: 5, 80, 120>}, {pipeline_mode = #tpu.pipeline_mode<synchronous>, transform_indices = @transform_6, window_bounds = array<i64: 1, 120>}, {pipeline_mode = #tpu.pipeline_mode<synchronous>, transform_indices = @transform_7, window_bounds = array<i64: 120, 84>}, {pipeline_mode = #tpu.pipeline_mode<synchronous>, transform_indices = @transform_8, window_bounds = array<i64: 1, 84>}, {pipeline_mode = #tpu.pipeline_mode<synchronous>, transform_indices = @transform_9, window_bounds = array<i64: 84, 128>}, {pipeline_mode = #tpu.pipeline_mode<synchronous>, transform_indices = @transform_10, window_bounds = array<i64: 1, 128>}, {transform_indices = @transform_11, window_bounds = array<i64: 16, 128>}]} {
    %c0 = arith.constant 0 : index
    %c0_0 = arith.constant 0 : index
    %c0_1 = arith.constant 0 : index
    %0 = vector.load %arg1[%c0, %c0_0, %c0_1] : memref<16x16x192xbf16, #tpu.memory_space<vmem>>, vector<14x16x96xbf16>
    %1 = vector.shape_cast %0 : vector<14x16x96xbf16> to vector<224x96xbf16>
    %c1 = arith.constant 1 : index
    %c0_2 = arith.constant 0 : index
    %c0_3 = arith.constant 0 : index
    %2 = vector.load %arg1[%c1, %c0_2, %c0_3] : memref<16x16x192xbf16, #tpu.memory_space<vmem>>, vector<14x16x96xbf16>
    %3 = vector.shape_cast %2 : vector<14x16x96xbf16> to vector<224x96xbf16>
    %c2 = arith.constant 2 : index
    %c0_4 = arith.constant 0 : index
    %c0_5 = arith.constant 0 : index
    %4 = vector.load %arg1[%c2, %c0_4, %c0_5] : memref<16x16x192xbf16, #tpu.memory_space<vmem>>, vector<14x16x96xbf16>
    %5 = vector.shape_cast %4 : vector<14x16x96xbf16> to vector<224x96xbf16>
    %c0_6 = arith.constant 0 : index
    %c0_7 = arith.constant 0 : index
    %c96 = arith.constant 96 : index
    %6 = vector.load %arg1[%c0_6, %c0_7, %c96] : memref<16x16x192xbf16, #tpu.memory_space<vmem>>, vector<14x16x96xbf16>
    %7 = vector.shape_cast %6 : vector<14x16x96xbf16> to vector<224x96xbf16>
    %c1_8 = arith.constant 1 : index
    %c0_9 = arith.constant 0 : index
    %c96_10 = arith.constant 96 : index
    %8 = vector.load %arg1[%c1_8, %c0_9, %c96_10] : memref<16x16x192xbf16, #tpu.memory_space<vmem>>, vector<14x16x96xbf16>
    %9 = vector.shape_cast %8 : vector<14x16x96xbf16> to vector<224x96xbf16>
    %c2_11 = arith.constant 2 : index
    %c0_12 = arith.constant 0 : index
    %c96_13 = arith.constant 96 : index
    %10 = vector.load %arg1[%c2_11, %c0_12, %c96_13] : memref<16x16x192xbf16, #tpu.memory_space<vmem>>, vector<14x16x96xbf16>
    %11 = vector.shape_cast %10 : vector<14x16x96xbf16> to vector<224x96xbf16>
    %c0_14 = arith.constant 0 : index
    %c0_15 = arith.constant 0 : index
    %12 = vector.load %arg3[%c0_14, %c0_15] : memref<1x84xf32, #tpu.memory_space<vmem>>, vector<1x84xf32>
    %c0_16 = arith.constant 0 : index
    %c0_17 = arith.constant 0 : index
    %c0_18 = arith.constant 0 : index
    %c0_19 = arith.constant 0 : index
    %13 = vector.load %arg2[%c0_16, %c0_17, %c0_18, %c0_19] : memref<2x5x96x84xbf16, #tpu.memory_space<vmem>>, vector<1x1x96x84xbf16>
    %14 = vector.shape_cast %13 : vector<1x1x96x84xbf16> to vector<96x84xbf16>
    %cst = arith.constant dense<0.000000e+00> : vector<224x84xf32>
    %15 = tpu.matmul %1, %14, %cst {dimension_numbers = #tpu.dot_dimension_numbers<[1], [0], [0], [1], [0, 0, 1, 1], [], []>} : vector<224x96xbf16>, vector<96x84xbf16>, vector<224x84xf32> -> vector<224x84xf32>
    %c0_20 = arith.constant 0 : index
    %c1_21 = arith.constant 1 : index
    %c0_22 = arith.constant 0 : index
    %c0_23 = arith.constant 0 : index
    %16 = vector.load %arg2[%c0_20, %c1_21, %c0_22, %c0_23] : memref<2x5x96x84xbf16, #tpu.memory_space<vmem>>, vector<1x1x96x84xbf16>
    %17 = vector.shape_cast %16 : vector<1x1x96x84xbf16> to vector<96x84xbf16>
    %cst_24 = arith.constant dense<0.000000e+00> : vector<224x84xf32>
    %18 = tpu.matmul %7, %17, %cst_24 {dimension_numbers = #tpu.dot_dimension_numbers<[1], [0], [0], [1], [0, 0, 1, 1], [], []>} : vector<224x96xbf16>, vector<96x84xbf16>, vector<224x84xf32> -> vector<224x84xf32>
    %19 = arith.addf %15, %18 : vector<224x84xf32>
    %c0_25 = arith.constant 0 : index
    %c2_26 = arith.constant 2 : index
    %c0_27 = arith.constant 0 : index
    %c0_28 = arith.constant 0 : index
    %20 = vector.load %arg2[%c0_25, %c2_26, %c0_27, %c0_28] : memref<2x5x96x84xbf16, #tpu.memory_space<vmem>>, vector<1x1x96x84xbf16>
    %21 = vector.shape_cast %20 : vector<1x1x96x84xbf16> to vector<96x84xbf16>
    %cst_29 = arith.constant dense<0.000000e+00> : vector<224x84xf32>
    %22 = tpu.matmul %3, %21, %cst_29 {dimension_numbers = #tpu.dot_dimension_numbers<[1], [0], [0], [1], [0, 0, 1, 1], [], []>} : vector<224x96xbf16>, vector<96x84xbf16>, vector<224x84xf32> -> vector<224x84xf32>
    %23 = arith.addf %19, %22 : vector<224x84xf32>
    %c0_30 = arith.constant 0 : index
    %c3 = arith.constant 3 : index
    %c0_31 = arith.constant 0 : index
    %c0_32 = arith.constant 0 : index
    %24 = vector.load %arg2[%c0_30, %c3, %c0_31, %c0_32] : memref<2x5x96x84xbf16, #tpu.memory_space<vmem>>, vector<1x1x96x84xbf16>
    %25 = vector.shape_cast %24 : vector<1x1x96x84xbf16> to vector<96x84xbf16>
    %cst_33 = arith.constant dense<0.000000e+00> : vector<224x84xf32>
    %26 = tpu.matmul %9, %25, %cst_33 {dimension_numbers = #tpu.dot_dimension_numbers<[1], [0], [0], [1], [0, 0, 1, 1], [], []>} : vector<224x96xbf16>, vector<96x84xbf16>, vector<224x84xf32> -> vector<224x84xf32>
    %27 = arith.addf %23, %26 : vector<224x84xf32>
    %c0_34 = arith.constant 0 : index
    %c4 = arith.constant 4 : index
    %c0_35 = arith.constant 0 : index
    %c0_36 = arith.constant 0 : index
    %28 = vector.load %arg2[%c0_34, %c4, %c0_35, %c0_36] : memref<2x5x96x84xbf16, #tpu.memory_space<vmem>>, vector<1x1x96x84xbf16>
    %29 = vector.shape_cast %28 : vector<1x1x96x84xbf16> to vector<96x84xbf16>
    %cst_37 = arith.constant dense<0.000000e+00> : vector<224x84xf32>
    %30 = tpu.matmul %5, %29, %cst_37 {dimension_numbers = #tpu.dot_dimension_numbers<[1], [0], [0], [1], [0, 0, 1, 1], [], []>} : vector<224x96xbf16>, vector<96x84xbf16>, vector<224x84xf32> -> vector<224x84xf32>
    %31 = arith.addf %27, %30 : vector<224x84xf32>
    %c1_38 = arith.constant 1 : index
    %c0_39 = arith.constant 0 : index
    %c0_40 = arith.constant 0 : index
    %c0_41 = arith.constant 0 : index
    %32 = vector.load %arg2[%c1_38, %c0_39, %c0_40, %c0_41] : memref<2x5x96x84xbf16, #tpu.memory_space<vmem>>, vector<1x1x96x84xbf16>
    %33 = vector.shape_cast %32 : vector<1x1x96x84xbf16> to vector<96x84xbf16>
    %cst_42 = arith.constant dense<0.000000e+00> : vector<224x84xf32>
    %34 = tpu.matmul %1, %33, %cst_42 {dimension_numbers = #tpu.dot_dimension_numbers<[1], [0], [0], [1], [0, 0, 1, 1], [], []>} : vector<224x96xbf16>, vector<96x84xbf16>, vector<224x84xf32> -> vector<224x84xf32>
    %c1_43 = arith.constant 1 : index
    %c1_44 = arith.constant 1 : index
    %c0_45 = arith.constant 0 : index
    %c0_46 = arith.constant 0 : index
    %35 = vector.load %arg2[%c1_43, %c1_44, %c0_45, %c0_46] : memref<2x5x96x84xbf16, #tpu.memory_space<vmem>>, vector<1x1x96x84xbf16>
    %36 = vector.shape_cast %35 : vector<1x1x96x84xbf16> to vector<96x84xbf16>
    %cst_47 = arith.constant dense<0.000000e+00> : vector<224x84xf32>
    %37 = tpu.matmul %7, %36, %cst_47 {dimension_numbers = #tpu.dot_dimension_numbers<[1], [0], [0], [1], [0, 0, 1, 1], [], []>} : vector<224x96xbf16>, vector<96x84xbf16>, vector<224x84xf32> -> vector<224x84xf32>
    %38 = arith.addf %34, %37 : vector<224x84xf32>
    %c1_48 = arith.constant 1 : index
    %c2_49 = arith.constant 2 : index
    %c0_50 = arith.constant 0 : index
    %c0_51 = arith.constant 0 : index
    %39 = vector.load %arg2[%c1_48, %c2_49, %c0_50, %c0_51] : memref<2x5x96x84xbf16, #tpu.memory_space<vmem>>, vector<1x1x96x84xbf16>
    %40 = vector.shape_cast %39 : vector<1x1x96x84xbf16> to vector<96x84xbf16>
    %cst_52 = arith.constant dense<0.000000e+00> : vector<224x84xf32>
    %41 = tpu.matmul %3, %40, %cst_52 {dimension_numbers = #tpu.dot_dimension_numbers<[1], [0], [0], [1], [0, 0, 1, 1], [], []>} : vector<224x96xbf16>, vector<96x84xbf16>, vector<224x84xf32> -> vector<224x84xf32>
    %42 = arith.addf %38, %41 : vector<224x84xf32>
    %c1_53 = arith.constant 1 : index
    %c3_54 = arith.constant 3 : index
    %c0_55 = arith.constant 0 : index
    %c0_56 = arith.constant 0 : index
    %43 = vector.load %arg2[%c1_53, %c3_54, %c0_55, %c0_56] : memref<2x5x96x84xbf16, #tpu.memory_space<vmem>>, vector<1x1x96x84xbf16>
    %44 = vector.shape_cast %43 : vector<1x1x96x84xbf16> to vector<96x84xbf16>
    %cst_57 = arith.constant dense<0.000000e+00> : vector<224x84xf32>
    %45 = tpu.matmul %9, %44, %cst_57 {dimension_numbers = #tpu.dot_dimension_numbers<[1], [0], [0], [1], [0, 0, 1, 1], [], []>} : vector<224x96xbf16>, vector<96x84xbf16>, vector<224x84xf32> -> vector<224x84xf32>
    %46 = arith.addf %42, %45 : vector<224x84xf32>
    %c1_58 = arith.constant 1 : index
    %c4_59 = arith.constant 4 : index
    %c0_60 = arith.constant 0 : index
    %c0_61 = arith.constant 0 : index
    %47 = vector.load %arg2[%c1_58, %c4_59, %c0_60, %c0_61] : memref<2x5x96x84xbf16, #tpu.memory_space<vmem>>, vector<1x1x96x84xbf16>
    %48 = vector.shape_cast %47 : vector<1x1x96x84xbf16> to vector<96x84xbf16>
    %cst_62 = arith.constant dense<0.000000e+00> : vector<224x84xf32>
    %49 = tpu.matmul %5, %48, %cst_62 {dimension_numbers = #tpu.dot_dimension_numbers<[1], [0], [0], [1], [0, 0, 1, 1], [], []>} : vector<224x96xbf16>, vector<96x84xbf16>, vector<224x84xf32> -> vector<224x84xf32>
    %50 = arith.addf %46, %49 : vector<224x84xf32>
    %51 = arith.maximumf %31, %50 : vector<224x84xf32>
    %c0_63 = arith.constant 0 : index
    %c0_64 = arith.constant 0 : index
    %c0_65 = arith.constant 0 : index
    %c0_66 = arith.constant 0 : index
    %52 = vector.load %arg2[%c0_63, %c0_64, %c0_65, %c0_66] : memref<2x5x96x84xbf16, #tpu.memory_space<vmem>>, vector<1x1x96x84xbf16>
    %53 = vector.shape_cast %52 : vector<1x1x96x84xbf16> to vector<96x84xbf16>
    %cst_67 = arith.constant dense<0.000000e+00> : vector<224x84xf32>
    %54 = tpu.matmul %7, %53, %cst_67 {dimension_numbers = #tpu.dot_dimension_numbers<[1], [0], [0], [1], [0, 0, 1, 1], [], []>} : vector<224x96xbf16>, vector<96x84xbf16>, vector<224x84xf32> -> vector<224x84xf32>
    %c0_68 = arith.constant 0 : index
    %c1_69 = arith.constant 1 : index
    %c0_70 = arith.constant 0 : index
    %c0_71 = arith.constant 0 : index
    %55 = vector.load %arg2[%c0_68, %c1_69, %c0_70, %c0_71] : memref<2x5x96x84xbf16, #tpu.memory_space<vmem>>, vector<1x1x96x84xbf16>
    %56 = vector.shape_cast %55 : vector<1x1x96x84xbf16> to vector<96x84xbf16>
    %cst_72 = arith.constant dense<0.000000e+00> : vector<224x84xf32>
    %57 = tpu.matmul %3, %56, %cst_72 {dimension_numbers = #tpu.dot_dimension_numbers<[1], [0], [0], [1], [0, 0, 1, 1], [], []>} : vector<224x96xbf16>, vector<96x84xbf16>, vector<224x84xf32> -> vector<224x84xf32>
    %58 = arith.addf %54, %57 : vector<224x84xf32>
    %c0_73 = arith.constant 0 : index
    %c2_74 = arith.constant 2 : index
    %c0_75 = arith.constant 0 : index
    %c0_76 = arith.constant 0 : index
    %59 = vector.load %arg2[%c0_73, %c2_74, %c0_75, %c0_76] : memref<2x5x96x84xbf16, #tpu.memory_space<vmem>>, vector<1x1x96x84xbf16>
    %60 = vector.shape_cast %59 : vector<1x1x96x84xbf16> to vector<96x84xbf16>
    %cst_77 = arith.constant dense<0.000000e+00> : vector<224x84xf32>
    %61 = tpu.matmul %9, %60, %cst_77 {dimension_numbers = #tpu.dot_dimension_numbers<[1], [0], [0], [1], [0, 0, 1, 1], [], []>} : vector<224x96xbf16>, vector<96x84xbf16>, vector<224x84xf32> -> vector<224x84xf32>
    %62 = arith.addf %58, %61 : vector<224x84xf32>
    %c0_78 = arith.constant 0 : index
    %c3_79 = arith.constant 3 : index
    %c0_80 = arith.constant 0 : index
    %c0_81 = arith.constant 0 : index
    %63 = vector.load %arg2[%c0_78, %c3_79, %c0_80, %c0_81] : memref<2x5x96x84xbf16, #tpu.memory_space<vmem>>, vector<1x1x96x84xbf16>
    %64 = vector.shape_cast %63 : vector<1x1x96x84xbf16> to vector<96x84xbf16>
    %cst_82 = arith.constant dense<0.000000e+00> : vector<224x84xf32>
    %65 = tpu.matmul %5, %64, %cst_82 {dimension_numbers = #tpu.dot_dimension_numbers<[1], [0], [0], [1], [0, 0, 1, 1], [], []>} : vector<224x96xbf16>, vector<96x84xbf16>, vector<224x84xf32> -> vector<224x84xf32>
    %66 = arith.addf %62, %65 : vector<224x84xf32>
    %c0_83 = arith.constant 0 : index
    %c4_84 = arith.constant 4 : index
    %c0_85 = arith.constant 0 : index
    %c0_86 = arith.constant 0 : index
    %67 = vector.load %arg2[%c0_83, %c4_84, %c0_85, %c0_86] : memref<2x5x96x84xbf16, #tpu.memory_space<vmem>>, vector<1x1x96x84xbf16>
    %68 = vector.shape_cast %67 : vector<1x1x96x84xbf16> to vector<96x84xbf16>
    %cst_87 = arith.constant dense<0.000000e+00> : vector<224x84xf32>
    %69 = tpu.matmul %11, %68, %cst_87 {dimension_numbers = #tpu.dot_dimension_numbers<[1], [0], [0], [1], [0, 0, 1, 1], [], []>} : vector<224x96xbf16>, vector<96x84xbf16>, vector<224x84xf32> -> vector<224x84xf32>
    %70 = arith.addf %66, %69 : vector<224x84xf32>
    %71 = arith.maximumf %51, %70 : vector<224x84xf32>
    %c1_88 = arith.constant 1 : index
    %c0_89 = arith.constant 0 : index
    %c0_90 = arith.constant 0 : index
    %c0_91 = arith.constant 0 : index
    %72 = vector.load %arg2[%c1_88, %c0_89, %c0_90, %c0_91] : memref<2x5x96x84xbf16, #tpu.memory_space<vmem>>, vector<1x1x96x84xbf16>
    %73 = vector.shape_cast %72 : vector<1x1x96x84xbf16> to vector<96x84xbf16>
    %cst_92 = arith.constant dense<0.000000e+00> : vector<224x84xf32>
    %74 = tpu.matmul %7, %73, %cst_92 {dimension_numbers = #tpu.dot_dimension_numbers<[1], [0], [0], [1], [0, 0, 1, 1], [], []>} : vector<224x96xbf16>, vector<96x84xbf16>, vector<224x84xf32> -> vector<224x84xf32>
    %c1_93 = arith.constant 1 : index
    %c1_94 = arith.constant 1 : index
    %c0_95 = arith.constant 0 : index
    %c0_96 = arith.constant 0 : index
    %75 = vector.load %arg2[%c1_93, %c1_94, %c0_95, %c0_96] : memref<2x5x96x84xbf16, #tpu.memory_space<vmem>>, vector<1x1x96x84xbf16>
    %76 = vector.shape_cast %75 : vector<1x1x96x84xbf16> to vector<96x84xbf16>
    %cst_97 = arith.constant dense<0.000000e+00> : vector<224x84xf32>
    %77 = tpu.matmul %3, %76, %cst_97 {dimension_numbers = #tpu.dot_dimension_numbers<[1], [0], [0], [1], [0, 0, 1, 1], [], []>} : vector<224x96xbf16>, vector<96x84xbf16>, vector<224x84xf32> -> vector<224x84xf32>
    %78 = arith.addf %74, %77 : vector<224x84xf32>
    %c1_98 = arith.constant 1 : index
    %c2_99 = arith.constant 2 : index
    %c0_100 = arith.constant 0 : index
    %c0_101 = arith.constant 0 : index
    %79 = vector.load %arg2[%c1_98, %c2_99, %c0_100, %c0_101] : memref<2x5x96x84xbf16, #tpu.memory_space<vmem>>, vector<1x1x96x84xbf16>
    %80 = vector.shape_cast %79 : vector<1x1x96x84xbf16> to vector<96x84xbf16>
    %cst_102 = arith.constant dense<0.000000e+00> : vector<224x84xf32>
    %81 = tpu.matmul %9, %80, %cst_102 {dimension_numbers = #tpu.dot_dimension_numbers<[1], [0], [0], [1], [0, 0, 1, 1], [], []>} : vector<224x96xbf16>, vector<96x84xbf16>, vector<224x84xf32> -> vector<224x84xf32>
    %82 = arith.addf %78, %81 : vector<224x84xf32>
    %c1_103 = arith.constant 1 : index
    %c3_104 = arith.constant 3 : index
    %c0_105 = arith.constant 0 : index
    %c0_106 = arith.constant 0 : index
    %83 = vector.load %arg2[%c1_103, %c3_104, %c0_105, %c0_106] : memref<2x5x96x84xbf16, #tpu.memory_space<vmem>>, vector<1x1x96x84xbf16>
    %84 = vector.shape_cast %83 : vector<1x1x96x84xbf16> to vector<96x84xbf16>
    %cst_107 = arith.constant dense<0.000000e+00> : vector<224x84xf32>
    %85 = tpu.matmul %5, %84, %cst_107 {dimension_numbers = #tpu.dot_dimension_numbers<[1], [0], [0], [1], [0, 0, 1, 1], [], []>} : vector<224x96xbf16>, vector<96x84xbf16>, vector<224x84xf32> -> vector<224x84xf32>
    %86 = arith.addf %82, %85 : vector<224x84xf32>
    %c1_108 = arith.constant 1 : index
    %c4_109 = arith.constant 4 : index
    %c0_110 = arith.constant 0 : index
    %c0_111 = arith.constant 0 : index
    %87 = vector.load %arg2[%c1_108, %c4_109, %c0_110, %c0_111] : memref<2x5x96x84xbf16, #tpu.memory_space<vmem>>, vector<1x1x96x84xbf16>
    %88 = vector.shape_cast %87 : vector<1x1x96x84xbf16> to vector<96x84xbf16>
    %cst_112 = arith.constant dense<0.000000e+00> : vector<224x84xf32>
    %89 = tpu.matmul %11, %88, %cst_112 {dimension_numbers = #tpu.dot_dimension_numbers<[1], [0], [0], [1], [0, 0, 1, 1], [], []>} : vector<224x96xbf16>, vector<96x84xbf16>, vector<224x84xf32> -> vector<224x84xf32>
    %90 = arith.addf %86, %89 : vector<224x84xf32>
    %91 = arith.maximumf %71, %90 : vector<224x84xf32>
    %92 = vector.broadcast %12 : vector<1x84xf32> to vector<224x84xf32>
    %93 = arith.addf %91, %92 : vector<224x84xf32>
    %cst_113 = arith.constant 0.000000e+00 : f32
    %94 = vector.broadcast %cst_113 : f32 to vector<224x84xf32>
    %95 = arith.maximumf %93, %94 : vector<224x84xf32>
    %96 = arith.truncf %95 : vector<224x84xf32> to vector<224x84xbf16>
    %97 = vector.shape_cast %96 : vector<224x84xbf16> to vector<7x2x16x84xbf16>
    %98 = vector.extract_strided_slice %97 {offsets = [0, 0, 0, 0], sizes = [7, 1, 16, 84], strides = [1, 1, 1, 1]} : vector<7x2x16x84xbf16> to vector<7x1x16x84xbf16>
    %99 = vector.shape_cast %98 : vector<7x1x16x84xbf16> to vector<7x16x84xbf16>
    %100 = vector.extract_strided_slice %97 {offsets = [0, 1, 0, 0], sizes = [7, 1, 16, 84], strides = [1, 1, 1, 1]} : vector<7x2x16x84xbf16> to vector<7x1x16x84xbf16>
    %101 = vector.shape_cast %100 : vector<7x1x16x84xbf16> to vector<7x16x84xbf16>
    %102 = tpu.concatenate %99, %101 in 2 : vector<7x16x84xbf16>, vector<7x16x84xbf16> -> vector<7x16x168xbf16>
    %103 = vector.extract_strided_slice %102 {offsets = [0, 0, 0], sizes = [5, 16, 84], strides = [1, 1, 1]} : vector<7x16x168xbf16> to vector<5x16x84xbf16>
    %104 = vector.shape_cast %103 : vector<5x16x84xbf16> to vector<80x84xbf16>
    %105 = vector.extract_strided_slice %102 {offsets = [1, 0, 0], sizes = [5, 16, 84], strides = [1, 1, 1]} : vector<7x16x168xbf16> to vector<5x16x84xbf16>
    %106 = vector.shape_cast %105 : vector<5x16x84xbf16> to vector<80x84xbf16>
    %107 = vector.extract_strided_slice %102 {offsets = [2, 0, 0], sizes = [5, 16, 84], strides = [1, 1, 1]} : vector<7x16x168xbf16> to vector<5x16x84xbf16>
    %108 = vector.shape_cast %107 : vector<5x16x84xbf16> to vector<80x84xbf16>
    %109 = vector.extract_strided_slice %102 {offsets = [0, 0, 84], sizes = [5, 16, 84], strides = [1, 1, 1]} : vector<7x16x168xbf16> to vector<5x16x84xbf16>
    %110 = vector.shape_cast %109 : vector<5x16x84xbf16> to vector<80x84xbf16>
    %111 = vector.extract_strided_slice %102 {offsets = [1, 0, 84], sizes = [5, 16, 84], strides = [1, 1, 1]} : vector<7x16x168xbf16> to vector<5x16x84xbf16>
    %112 = vector.shape_cast %111 : vector<5x16x84xbf16> to vector<80x84xbf16>
    %113 = vector.extract_strided_slice %102 {offsets = [2, 0, 84], sizes = [5, 16, 84], strides = [1, 1, 1]} : vector<7x16x168xbf16> to vector<5x16x84xbf16>
    %114 = vector.shape_cast %113 : vector<5x16x84xbf16> to vector<80x84xbf16>
    %c0_114 = arith.constant 0 : index
    %c0_115 = arith.constant 0 : index
    %115 = vector.load %arg5[%c0_114, %c0_115] : memref<1x80xf32, #tpu.memory_space<vmem>>, vector<1x80xf32>
    %c0_116 = arith.constant 0 : index
    %c0_117 = arith.constant 0 : index
    %c0_118 = arith.constant 0 : index
    %c0_119 = arith.constant 0 : index
    %116 = vector.load %arg4[%c0_116, %c0_117, %c0_118, %c0_119] : memref<2x5x84x80xbf16, #tpu.memory_space<vmem>>, vector<1x1x84x80xbf16>
    %117 = vector.shape_cast %116 : vector<1x1x84x80xbf16> to vector<84x80xbf16>
    %cst_120 = arith.constant dense<0.000000e+00> : vector<80x80xf32>
    %118 = tpu.matmul %104, %117, %cst_120 {dimension_numbers = #tpu.dot_dimension_numbers<[1], [0], [0], [1], [0, 0, 1, 1], [], []>} : vector<80x84xbf16>, vector<84x80xbf16>, vector<80x80xf32> -> vector<80x80xf32>
    %c0_121 = arith.constant 0 : index
    %c1_122 = arith.constant 1 : index
    %c0_123 = arith.constant 0 : index
    %c0_124 = arith.constant 0 : index
    %119 = vector.load %arg4[%c0_121, %c1_122, %c0_123, %c0_124] : memref<2x5x84x80xbf16, #tpu.memory_space<vmem>>, vector<1x1x84x80xbf16>
    %120 = vector.shape_cast %119 : vector<1x1x84x80xbf16> to vector<84x80xbf16>
    %cst_125 = arith.constant dense<0.000000e+00> : vector<80x80xf32>
    %121 = tpu.matmul %110, %120, %cst_125 {dimension_numbers = #tpu.dot_dimension_numbers<[1], [0], [0], [1], [0, 0, 1, 1], [], []>} : vector<80x84xbf16>, vector<84x80xbf16>, vector<80x80xf32> -> vector<80x80xf32>
    %122 = arith.addf %118, %121 : vector<80x80xf32>
    %c0_126 = arith.constant 0 : index
    %c2_127 = arith.constant 2 : index
    %c0_128 = arith.constant 0 : index
    %c0_129 = arith.constant 0 : index
    %123 = vector.load %arg4[%c0_126, %c2_127, %c0_128, %c0_129] : memref<2x5x84x80xbf16, #tpu.memory_space<vmem>>, vector<1x1x84x80xbf16>
    %124 = vector.shape_cast %123 : vector<1x1x84x80xbf16> to vector<84x80xbf16>
    %cst_130 = arith.constant dense<0.000000e+00> : vector<80x80xf32>
    %125 = tpu.matmul %106, %124, %cst_130 {dimension_numbers = #tpu.dot_dimension_numbers<[1], [0], [0], [1], [0, 0, 1, 1], [], []>} : vector<80x84xbf16>, vector<84x80xbf16>, vector<80x80xf32> -> vector<80x80xf32>
    %126 = arith.addf %122, %125 : vector<80x80xf32>
    %c0_131 = arith.constant 0 : index
    %c3_132 = arith.constant 3 : index
    %c0_133 = arith.constant 0 : index
    %c0_134 = arith.constant 0 : index
    %127 = vector.load %arg4[%c0_131, %c3_132, %c0_133, %c0_134] : memref<2x5x84x80xbf16, #tpu.memory_space<vmem>>, vector<1x1x84x80xbf16>
    %128 = vector.shape_cast %127 : vector<1x1x84x80xbf16> to vector<84x80xbf16>
    %cst_135 = arith.constant dense<0.000000e+00> : vector<80x80xf32>
    %129 = tpu.matmul %112, %128, %cst_135 {dimension_numbers = #tpu.dot_dimension_numbers<[1], [0], [0], [1], [0, 0, 1, 1], [], []>} : vector<80x84xbf16>, vector<84x80xbf16>, vector<80x80xf32> -> vector<80x80xf32>
    %130 = arith.addf %126, %129 : vector<80x80xf32>
    %c0_136 = arith.constant 0 : index
    %c4_137 = arith.constant 4 : index
    %c0_138 = arith.constant 0 : index
    %c0_139 = arith.constant 0 : index
    %131 = vector.load %arg4[%c0_136, %c4_137, %c0_138, %c0_139] : memref<2x5x84x80xbf16, #tpu.memory_space<vmem>>, vector<1x1x84x80xbf16>
    %132 = vector.shape_cast %131 : vector<1x1x84x80xbf16> to vector<84x80xbf16>
    %cst_140 = arith.constant dense<0.000000e+00> : vector<80x80xf32>
    %133 = tpu.matmul %108, %132, %cst_140 {dimension_numbers = #tpu.dot_dimension_numbers<[1], [0], [0], [1], [0, 0, 1, 1], [], []>} : vector<80x84xbf16>, vector<84x80xbf16>, vector<80x80xf32> -> vector<80x80xf32>
    %134 = arith.addf %130, %133 : vector<80x80xf32>
    %c1_141 = arith.constant 1 : index
    %c0_142 = arith.constant 0 : index
    %c0_143 = arith.constant 0 : index
    %c0_144 = arith.constant 0 : index
    %135 = vector.load %arg4[%c1_141, %c0_142, %c0_143, %c0_144] : memref<2x5x84x80xbf16, #tpu.memory_space<vmem>>, vector<1x1x84x80xbf16>
    %136 = vector.shape_cast %135 : vector<1x1x84x80xbf16> to vector<84x80xbf16>
    %cst_145 = arith.constant dense<0.000000e+00> : vector<80x80xf32>
    %137 = tpu.matmul %104, %136, %cst_145 {dimension_numbers = #tpu.dot_dimension_numbers<[1], [0], [0], [1], [0, 0, 1, 1], [], []>} : vector<80x84xbf16>, vector<84x80xbf16>, vector<80x80xf32> -> vector<80x80xf32>
    %c1_146 = arith.constant 1 : index
    %c1_147 = arith.constant 1 : index
    %c0_148 = arith.constant 0 : index
    %c0_149 = arith.constant 0 : index
    %138 = vector.load %arg4[%c1_146, %c1_147, %c0_148, %c0_149] : memref<2x5x84x80xbf16, #tpu.memory_space<vmem>>, vector<1x1x84x80xbf16>
    %139 = vector.shape_cast %138 : vector<1x1x84x80xbf16> to vector<84x80xbf16>
    %cst_150 = arith.constant dense<0.000000e+00> : vector<80x80xf32>
    %140 = tpu.matmul %110, %139, %cst_150 {dimension_numbers = #tpu.dot_dimension_numbers<[1], [0], [0], [1], [0, 0, 1, 1], [], []>} : vector<80x84xbf16>, vector<84x80xbf16>, vector<80x80xf32> -> vector<80x80xf32>
    %141 = arith.addf %137, %140 : vector<80x80xf32>
    %c1_151 = arith.constant 1 : index
    %c2_152 = arith.constant 2 : index
    %c0_153 = arith.constant 0 : index
    %c0_154 = arith.constant 0 : index
    %142 = vector.load %arg4[%c1_151, %c2_152, %c0_153, %c0_154] : memref<2x5x84x80xbf16, #tpu.memory_space<vmem>>, vector<1x1x84x80xbf16>
    %143 = vector.shape_cast %142 : vector<1x1x84x80xbf16> to vector<84x80xbf16>
    %cst_155 = arith.constant dense<0.000000e+00> : vector<80x80xf32>
    %144 = tpu.matmul %106, %143, %cst_155 {dimension_numbers = #tpu.dot_dimension_numbers<[1], [0], [0], [1], [0, 0, 1, 1], [], []>} : vector<80x84xbf16>, vector<84x80xbf16>, vector<80x80xf32> -> vector<80x80xf32>
    %145 = arith.addf %141, %144 : vector<80x80xf32>
    %c1_156 = arith.constant 1 : index
    %c3_157 = arith.constant 3 : index
    %c0_158 = arith.constant 0 : index
    %c0_159 = arith.constant 0 : index
    %146 = vector.load %arg4[%c1_156, %c3_157, %c0_158, %c0_159] : memref<2x5x84x80xbf16, #tpu.memory_space<vmem>>, vector<1x1x84x80xbf16>
    %147 = vector.shape_cast %146 : vector<1x1x84x80xbf16> to vector<84x80xbf16>
    %cst_160 = arith.constant dense<0.000000e+00> : vector<80x80xf32>
    %148 = tpu.matmul %112, %147, %cst_160 {dimension_numbers = #tpu.dot_dimension_numbers<[1], [0], [0], [1], [0, 0, 1, 1], [], []>} : vector<80x84xbf16>, vector<84x80xbf16>, vector<80x80xf32> -> vector<80x80xf32>
    %149 = arith.addf %145, %148 : vector<80x80xf32>
    %c1_161 = arith.constant 1 : index
    %c4_162 = arith.constant 4 : index
    %c0_163 = arith.constant 0 : index
    %c0_164 = arith.constant 0 : index
    %150 = vector.load %arg4[%c1_161, %c4_162, %c0_163, %c0_164] : memref<2x5x84x80xbf16, #tpu.memory_space<vmem>>, vector<1x1x84x80xbf16>
    %151 = vector.shape_cast %150 : vector<1x1x84x80xbf16> to vector<84x80xbf16>
    %cst_165 = arith.constant dense<0.000000e+00> : vector<80x80xf32>
    %152 = tpu.matmul %108, %151, %cst_165 {dimension_numbers = #tpu.dot_dimension_numbers<[1], [0], [0], [1], [0, 0, 1, 1], [], []>} : vector<80x84xbf16>, vector<84x80xbf16>, vector<80x80xf32> -> vector<80x80xf32>
    %153 = arith.addf %149, %152 : vector<80x80xf32>
    %154 = arith.maximumf %134, %153 : vector<80x80xf32>
    %c0_166 = arith.constant 0 : index
    %c0_167 = arith.constant 0 : index
    %c0_168 = arith.constant 0 : index
    %c0_169 = arith.constant 0 : index
    %155 = vector.load %arg4[%c0_166, %c0_167, %c0_168, %c0_169] : memref<2x5x84x80xbf16, #tpu.memory_space<vmem>>, vector<1x1x84x80xbf16>
    %156 = vector.shape_cast %155 : vector<1x1x84x80xbf16> to vector<84x80xbf16>
    %cst_170 = arith.constant dense<0.000000e+00> : vector<80x80xf32>
    %157 = tpu.matmul %110, %156, %cst_170 {dimension_numbers = #tpu.dot_dimension_numbers<[1], [0], [0], [1], [0, 0, 1, 1], [], []>} : vector<80x84xbf16>, vector<84x80xbf16>, vector<80x80xf32> -> vector<80x80xf32>
    %c0_171 = arith.constant 0 : index
    %c1_172 = arith.constant 1 : index
    %c0_173 = arith.constant 0 : index
    %c0_174 = arith.constant 0 : index
    %158 = vector.load %arg4[%c0_171, %c1_172, %c0_173, %c0_174] : memref<2x5x84x80xbf16, #tpu.memory_space<vmem>>, vector<1x1x84x80xbf16>
    %159 = vector.shape_cast %158 : vector<1x1x84x80xbf16> to vector<84x80xbf16>
    %cst_175 = arith.constant dense<0.000000e+00> : vector<80x80xf32>
    %160 = tpu.matmul %106, %159, %cst_175 {dimension_numbers = #tpu.dot_dimension_numbers<[1], [0], [0], [1], [0, 0, 1, 1], [], []>} : vector<80x84xbf16>, vector<84x80xbf16>, vector<80x80xf32> -> vector<80x80xf32>
    %161 = arith.addf %157, %160 : vector<80x80xf32>
    %c0_176 = arith.constant 0 : index
    %c2_177 = arith.constant 2 : index
    %c0_178 = arith.constant 0 : index
    %c0_179 = arith.constant 0 : index
    %162 = vector.load %arg4[%c0_176, %c2_177, %c0_178, %c0_179] : memref<2x5x84x80xbf16, #tpu.memory_space<vmem>>, vector<1x1x84x80xbf16>
    %163 = vector.shape_cast %162 : vector<1x1x84x80xbf16> to vector<84x80xbf16>
    %cst_180 = arith.constant dense<0.000000e+00> : vector<80x80xf32>
    %164 = tpu.matmul %112, %163, %cst_180 {dimension_numbers = #tpu.dot_dimension_numbers<[1], [0], [0], [1], [0, 0, 1, 1], [], []>} : vector<80x84xbf16>, vector<84x80xbf16>, vector<80x80xf32> -> vector<80x80xf32>
    %165 = arith.addf %161, %164 : vector<80x80xf32>
    %c0_181 = arith.constant 0 : index
    %c3_182 = arith.constant 3 : index
    %c0_183 = arith.constant 0 : index
    %c0_184 = arith.constant 0 : index
    %166 = vector.load %arg4[%c0_181, %c3_182, %c0_183, %c0_184] : memref<2x5x84x80xbf16, #tpu.memory_space<vmem>>, vector<1x1x84x80xbf16>
    %167 = vector.shape_cast %166 : vector<1x1x84x80xbf16> to vector<84x80xbf16>
    %cst_185 = arith.constant dense<0.000000e+00> : vector<80x80xf32>
    %168 = tpu.matmul %108, %167, %cst_185 {dimension_numbers = #tpu.dot_dimension_numbers<[1], [0], [0], [1], [0, 0, 1, 1], [], []>} : vector<80x84xbf16>, vector<84x80xbf16>, vector<80x80xf32> -> vector<80x80xf32>
    %169 = arith.addf %165, %168 : vector<80x80xf32>
    %c0_186 = arith.constant 0 : index
    %c4_187 = arith.constant 4 : index
    %c0_188 = arith.constant 0 : index
    %c0_189 = arith.constant 0 : index
    %170 = vector.load %arg4[%c0_186, %c4_187, %c0_188, %c0_189] : memref<2x5x84x80xbf16, #tpu.memory_space<vmem>>, vector<1x1x84x80xbf16>
    %171 = vector.shape_cast %170 : vector<1x1x84x80xbf16> to vector<84x80xbf16>
    %cst_190 = arith.constant dense<0.000000e+00> : vector<80x80xf32>
    %172 = tpu.matmul %114, %171, %cst_190 {dimension_numbers = #tpu.dot_dimension_numbers<[1], [0], [0], [1], [0, 0, 1, 1], [], []>} : vector<80x84xbf16>, vector<84x80xbf16>, vector<80x80xf32> -> vector<80x80xf32>
    %173 = arith.addf %169, %172 : vector<80x80xf32>
    %174 = arith.maximumf %154, %173 : vector<80x80xf32>
    %c1_191 = arith.constant 1 : index
    %c0_192 = arith.constant 0 : index
    %c0_193 = arith.constant 0 : index
    %c0_194 = arith.constant 0 : index
    %175 = vector.load %arg4[%c1_191, %c0_192, %c0_193, %c0_194] : memref<2x5x84x80xbf16, #tpu.memory_space<vmem>>, vector<1x1x84x80xbf16>
    %176 = vector.shape_cast %175 : vector<1x1x84x80xbf16> to vector<84x80xbf16>
    %cst_195 = arith.constant dense<0.000000e+00> : vector<80x80xf32>
    %177 = tpu.matmul %110, %176, %cst_195 {dimension_numbers = #tpu.dot_dimension_numbers<[1], [0], [0], [1], [0, 0, 1, 1], [], []>} : vector<80x84xbf16>, vector<84x80xbf16>, vector<80x80xf32> -> vector<80x80xf32>
    %c1_196 = arith.constant 1 : index
    %c1_197 = arith.constant 1 : index
    %c0_198 = arith.constant 0 : index
    %c0_199 = arith.constant 0 : index
    %178 = vector.load %arg4[%c1_196, %c1_197, %c0_198, %c0_199] : memref<2x5x84x80xbf16, #tpu.memory_space<vmem>>, vector<1x1x84x80xbf16>
    %179 = vector.shape_cast %178 : vector<1x1x84x80xbf16> to vector<84x80xbf16>
    %cst_200 = arith.constant dense<0.000000e+00> : vector<80x80xf32>
    %180 = tpu.matmul %106, %179, %cst_200 {dimension_numbers = #tpu.dot_dimension_numbers<[1], [0], [0], [1], [0, 0, 1, 1], [], []>} : vector<80x84xbf16>, vector<84x80xbf16>, vector<80x80xf32> -> vector<80x80xf32>
    %181 = arith.addf %177, %180 : vector<80x80xf32>
    %c1_201 = arith.constant 1 : index
    %c2_202 = arith.constant 2 : index
    %c0_203 = arith.constant 0 : index
    %c0_204 = arith.constant 0 : index
    %182 = vector.load %arg4[%c1_201, %c2_202, %c0_203, %c0_204] : memref<2x5x84x80xbf16, #tpu.memory_space<vmem>>, vector<1x1x84x80xbf16>
    %183 = vector.shape_cast %182 : vector<1x1x84x80xbf16> to vector<84x80xbf16>
    %cst_205 = arith.constant dense<0.000000e+00> : vector<80x80xf32>
    %184 = tpu.matmul %112, %183, %cst_205 {dimension_numbers = #tpu.dot_dimension_numbers<[1], [0], [0], [1], [0, 0, 1, 1], [], []>} : vector<80x84xbf16>, vector<84x80xbf16>, vector<80x80xf32> -> vector<80x80xf32>
    %185 = arith.addf %181, %184 : vector<80x80xf32>
    %c1_206 = arith.constant 1 : index
    %c3_207 = arith.constant 3 : index
    %c0_208 = arith.constant 0 : index
    %c0_209 = arith.constant 0 : index
    %186 = vector.load %arg4[%c1_206, %c3_207, %c0_208, %c0_209] : memref<2x5x84x80xbf16, #tpu.memory_space<vmem>>, vector<1x1x84x80xbf16>
    %187 = vector.shape_cast %186 : vector<1x1x84x80xbf16> to vector<84x80xbf16>
    %cst_210 = arith.constant dense<0.000000e+00> : vector<80x80xf32>
    %188 = tpu.matmul %108, %187, %cst_210 {dimension_numbers = #tpu.dot_dimension_numbers<[1], [0], [0], [1], [0, 0, 1, 1], [], []>} : vector<80x84xbf16>, vector<84x80xbf16>, vector<80x80xf32> -> vector<80x80xf32>
    %189 = arith.addf %185, %188 : vector<80x80xf32>
    %c1_211 = arith.constant 1 : index
    %c4_212 = arith.constant 4 : index
    %c0_213 = arith.constant 0 : index
    %c0_214 = arith.constant 0 : index
    %190 = vector.load %arg4[%c1_211, %c4_212, %c0_213, %c0_214] : memref<2x5x84x80xbf16, #tpu.memory_space<vmem>>, vector<1x1x84x80xbf16>
    %191 = vector.shape_cast %190 : vector<1x1x84x80xbf16> to vector<84x80xbf16>
    %cst_215 = arith.constant dense<0.000000e+00> : vector<80x80xf32>
    %192 = tpu.matmul %114, %191, %cst_215 {dimension_numbers = #tpu.dot_dimension_numbers<[1], [0], [0], [1], [0, 0, 1, 1], [], []>} : vector<80x84xbf16>, vector<84x80xbf16>, vector<80x80xf32> -> vector<80x80xf32>
    %193 = arith.addf %189, %192 : vector<80x80xf32>
    %194 = arith.maximumf %174, %193 : vector<80x80xf32>
    %195 = vector.broadcast %115 : vector<1x80xf32> to vector<80x80xf32>
    %196 = arith.addf %194, %195 : vector<80x80xf32>
    %cst_216 = arith.constant 0.000000e+00 : f32
    %197 = vector.broadcast %cst_216 : f32 to vector<80x80xf32>
    %198 = arith.maximumf %196, %197 : vector<80x80xf32>
    %199 = arith.truncf %198 : vector<80x80xf32> to vector<80x80xbf16>
    %200 = vector.shape_cast %199 : vector<80x80xbf16> to vector<5x16x80xbf16>
    %201 = vector.extract_strided_slice %200 {offsets = [0, 0, 0], sizes = [1, 16, 80], strides = [1, 1, 1]} : vector<5x16x80xbf16> to vector<1x16x80xbf16>
    %202 = vector.shape_cast %201 : vector<1x16x80xbf16> to vector<16x80xbf16>
    %c0_217 = arith.constant 0 : index
    %c0_218 = arith.constant 0 : index
    %c0_219 = arith.constant 0 : index
    %203 = vector.load %arg6[%c0_217, %c0_218, %c0_219] : memref<5x80x120xbf16, #tpu.memory_space<vmem>>, vector<1x80x120xbf16>
    %204 = vector.shape_cast %203 : vector<1x80x120xbf16> to vector<80x120xbf16>
    %cst_220 = arith.constant dense<0.000000e+00> : vector<16x120xf32>
    %205 = tpu.matmul %202, %204, %cst_220 {dimension_numbers = #tpu.dot_dimension_numbers<[1], [0], [0], [1], [0, 0, 1, 1], [], []>} : vector<16x80xbf16>, vector<80x120xbf16>, vector<16x120xf32> -> vector<16x120xf32>
    %206 = vector.extract_strided_slice %200 {offsets = [1, 0, 0], sizes = [1, 16, 80], strides = [1, 1, 1]} : vector<5x16x80xbf16> to vector<1x16x80xbf16>
    %207 = vector.shape_cast %206 : vector<1x16x80xbf16> to vector<16x80xbf16>
    %c1_221 = arith.constant 1 : index
    %c0_222 = arith.constant 0 : index
    %c0_223 = arith.constant 0 : index
    %208 = vector.load %arg6[%c1_221, %c0_222, %c0_223] : memref<5x80x120xbf16, #tpu.memory_space<vmem>>, vector<1x80x120xbf16>
    %209 = vector.shape_cast %208 : vector<1x80x120xbf16> to vector<80x120xbf16>
    %cst_224 = arith.constant dense<0.000000e+00> : vector<16x120xf32>
    %210 = tpu.matmul %207, %209, %cst_224 {dimension_numbers = #tpu.dot_dimension_numbers<[1], [0], [0], [1], [0, 0, 1, 1], [], []>} : vector<16x80xbf16>, vector<80x120xbf16>, vector<16x120xf32> -> vector<16x120xf32>
    %211 = arith.addf %205, %210 : vector<16x120xf32>
    %212 = vector.extract_strided_slice %200 {offsets = [2, 0, 0], sizes = [1, 16, 80], strides = [1, 1, 1]} : vector<5x16x80xbf16> to vector<1x16x80xbf16>
    %213 = vector.shape_cast %212 : vector<1x16x80xbf16> to vector<16x80xbf16>
    %c2_225 = arith.constant 2 : index
    %c0_226 = arith.constant 0 : index
    %c0_227 = arith.constant 0 : index
    %214 = vector.load %arg6[%c2_225, %c0_226, %c0_227] : memref<5x80x120xbf16, #tpu.memory_space<vmem>>, vector<1x80x120xbf16>
    %215 = vector.shape_cast %214 : vector<1x80x120xbf16> to vector<80x120xbf16>
    %cst_228 = arith.constant dense<0.000000e+00> : vector<16x120xf32>
    %216 = tpu.matmul %213, %215, %cst_228 {dimension_numbers = #tpu.dot_dimension_numbers<[1], [0], [0], [1], [0, 0, 1, 1], [], []>} : vector<16x80xbf16>, vector<80x120xbf16>, vector<16x120xf32> -> vector<16x120xf32>
    %217 = arith.addf %211, %216 : vector<16x120xf32>
    %218 = vector.extract_strided_slice %200 {offsets = [3, 0, 0], sizes = [1, 16, 80], strides = [1, 1, 1]} : vector<5x16x80xbf16> to vector<1x16x80xbf16>
    %219 = vector.shape_cast %218 : vector<1x16x80xbf16> to vector<16x80xbf16>
    %c3_229 = arith.constant 3 : index
    %c0_230 = arith.constant 0 : index
    %c0_231 = arith.constant 0 : index
    %220 = vector.load %arg6[%c3_229, %c0_230, %c0_231] : memref<5x80x120xbf16, #tpu.memory_space<vmem>>, vector<1x80x120xbf16>
    %221 = vector.shape_cast %220 : vector<1x80x120xbf16> to vector<80x120xbf16>
    %cst_232 = arith.constant dense<0.000000e+00> : vector<16x120xf32>
    %222 = tpu.matmul %219, %221, %cst_232 {dimension_numbers = #tpu.dot_dimension_numbers<[1], [0], [0], [1], [0, 0, 1, 1], [], []>} : vector<16x80xbf16>, vector<80x120xbf16>, vector<16x120xf32> -> vector<16x120xf32>
    %223 = arith.addf %217, %222 : vector<16x120xf32>
    %224 = vector.extract_strided_slice %200 {offsets = [4, 0, 0], sizes = [1, 16, 80], strides = [1, 1, 1]} : vector<5x16x80xbf16> to vector<1x16x80xbf16>
    %225 = vector.shape_cast %224 : vector<1x16x80xbf16> to vector<16x80xbf16>
    %c4_233 = arith.constant 4 : index
    %c0_234 = arith.constant 0 : index
    %c0_235 = arith.constant 0 : index
    %226 = vector.load %arg6[%c4_233, %c0_234, %c0_235] : memref<5x80x120xbf16, #tpu.memory_space<vmem>>, vector<1x80x120xbf16>
    %227 = vector.shape_cast %226 : vector<1x80x120xbf16> to vector<80x120xbf16>
    %cst_236 = arith.constant dense<0.000000e+00> : vector<16x120xf32>
    %228 = tpu.matmul %225, %227, %cst_236 {dimension_numbers = #tpu.dot_dimension_numbers<[1], [0], [0], [1], [0, 0, 1, 1], [], []>} : vector<16x80xbf16>, vector<80x120xbf16>, vector<16x120xf32> -> vector<16x120xf32>
    %229 = arith.addf %223, %228 : vector<16x120xf32>
    %c0_237 = arith.constant 0 : index
    %c0_238 = arith.constant 0 : index
    %230 = vector.load %arg7[%c0_237, %c0_238] : memref<1x120xf32, #tpu.memory_space<vmem>>, vector<1x120xf32>
    %231 = vector.broadcast %230 : vector<1x120xf32> to vector<16x120xf32>
    %232 = arith.addf %229, %231 : vector<16x120xf32>
    %cst_239 = arith.constant 0.000000e+00 : f32
    %233 = vector.broadcast %cst_239 : f32 to vector<16x120xf32>
    %234 = arith.maximumf %232, %233 : vector<16x120xf32>
    %235 = arith.truncf %234 : vector<16x120xf32> to vector<16x120xbf16>
    %c0_240 = arith.constant 0 : index
    %c0_241 = arith.constant 0 : index
    %236 = vector.load %arg8[%c0_240, %c0_241] : memref<120x84xbf16, #tpu.memory_space<vmem>>, vector<120x84xbf16>
    %cst_242 = arith.constant dense<0.000000e+00> : vector<16x84xf32>
    %237 = tpu.matmul %235, %236, %cst_242 {dimension_numbers = #tpu.dot_dimension_numbers<[1], [0], [0], [1], [0, 0, 1, 1], [], []>} : vector<16x120xbf16>, vector<120x84xbf16>, vector<16x84xf32> -> vector<16x84xf32>
    %c0_243 = arith.constant 0 : index
    %c0_244 = arith.constant 0 : index
    %238 = vector.load %arg9[%c0_243, %c0_244] : memref<1x84xf32, #tpu.memory_space<vmem>>, vector<1x84xf32>
    %239 = vector.broadcast %238 : vector<1x84xf32> to vector<16x84xf32>
    %240 = arith.addf %237, %239 : vector<16x84xf32>
    %cst_245 = arith.constant 0.000000e+00 : f32
    %241 = vector.broadcast %cst_245 : f32 to vector<16x84xf32>
    %242 = arith.maximumf %240, %241 : vector<16x84xf32>
    %243 = arith.truncf %242 : vector<16x84xf32> to vector<16x84xbf16>
    %c0_246 = arith.constant 0 : index
    %c0_247 = arith.constant 0 : index
    %244 = vector.load %arg10[%c0_246, %c0_247] : memref<84x128xbf16, #tpu.memory_space<vmem>>, vector<84x128xbf16>
    %cst_248 = arith.constant dense<0.000000e+00> : vector<16x128xf32>
    %245 = tpu.matmul %243, %244, %cst_248 {dimension_numbers = #tpu.dot_dimension_numbers<[1], [0], [0], [1], [0, 0, 1, 1], [], []>} : vector<16x84xbf16>, vector<84x128xbf16>, vector<16x128xf32> -> vector<16x128xf32>
    %c0_249 = arith.constant 0 : index
    %c0_250 = arith.constant 0 : index
    %246 = vector.load %arg11[%c0_249, %c0_250] : memref<1x128xf32, #tpu.memory_space<vmem>>, vector<1x128xf32>
    %247 = vector.broadcast %246 : vector<1x128xf32> to vector<16x128xf32>
    %248 = arith.addf %245, %247 : vector<16x128xf32>
    %c0_251 = arith.constant 0 : index
    %c0_252 = arith.constant 0 : index
    %249 = vector.load %arg12[%c0_251, %c0_252] : memref<16x128xf32, #tpu.memory_space<vmem>>, vector<16x128xf32>
    tpu.vector_store %arg12[%c0_251, %c0_252], %248 {strides = array<i32>} : memref<16x128xf32, #tpu.memory_space<vmem>>, vector<16x128xf32>,
    return
  }
  func.func @transform_0(%arg0: i32) -> (i32, i32, i32) {
    %c0_i32 = arith.constant 0 : i32
    %c0_i32_0 = arith.constant 0 : i32
    %c0_i32_1 = arith.constant 0 : i32
    return %c0_i32, %arg0, %c0_i32_0 : i32, i32, i32
  }
  func.func @transform_1(%arg0: i32) -> (i32, i32, i32, i32) {
    %c0_i32 = arith.constant 0 : i32
    %c0_i32_0 = arith.constant 0 : i32
    %c0_i32_1 = arith.constant 0 : i32
    %c0_i32_2 = arith.constant 0 : i32
    %c0_i32_3 = arith.constant 0 : i32
    return %c0_i32, %c0_i32_0, %c0_i32_1, %c0_i32_2 : i32, i32, i32, i32
  }
  func.func @transform_2(%arg0: i32) -> (i32, i32) {
    %c0_i32 = arith.constant 0 : i32
    %c0_i32_0 = arith.constant 0 : i32
    %c0_i32_1 = arith.constant 0 : i32
    return %c0_i32, %c0_i32_0 : i32, i32
  }
  func.func @transform_3(%arg0: i32) -> (i32, i32, i32, i32) {
    %c0_i32 = arith.constant 0 : i32
    %c0_i32_0 = arith.constant 0 : i32
    %c0_i32_1 = arith.constant 0 : i32
    %c0_i32_2 = arith.constant 0 : i32
    %c0_i32_3 = arith.constant 0 : i32
    return %c0_i32, %c0_i32_0, %c0_i32_1, %c0_i32_2 : i32, i32, i32, i32
  }
  func.func @transform_4(%arg0: i32) -> (i32, i32) {
    %c0_i32 = arith.constant 0 : i32
    %c0_i32_0 = arith.constant 0 : i32
    %c0_i32_1 = arith.constant 0 : i32
    return %c0_i32, %c0_i32_0 : i32, i32
  }
  func.func @transform_5(%arg0: i32) -> (i32, i32, i32) {
    %c0_i32 = arith.constant 0 : i32
    %c0_i32_0 = arith.constant 0 : i32
    %c0_i32_1 = arith.constant 0 : i32
    %c0_i32_2 = arith.constant 0 : i32
    return %c0_i32, %c0_i32_0, %c0_i32_1 : i32, i32, i32
  }
  func.func @transform_6(%arg0: i32) -> (i32, i32) {
    %c0_i32 = arith.constant 0 : i32
    %c0_i32_0 = arith.constant 0 : i32
    %c0_i32_1 = arith.constant 0 : i32
    return %c0_i32, %c0_i32_0 : i32, i32
  }
  func.func @transform_7(%arg0: i32) -> (i32, i32) {
    %c0_i32 = arith.constant 0 : i32
    %c0_i32_0 = arith.constant 0 : i32
    %c0_i32_1 = arith.constant 0 : i32
    return %c0_i32, %c0_i32_0 : i32, i32
  }
  func.func @transform_8(%arg0: i32) -> (i32, i32) {
    %c0_i32 = arith.constant 0 : i32
    %c0_i32_0 = arith.constant 0 : i32
    %c0_i32_1 = arith.constant 0 : i32
    return %c0_i32, %c0_i32_0 : i32, i32
  }
  func.func @transform_9(%arg0: i32) -> (i32, i32) {
    %c0_i32 = arith.constant 0 : i32
    %c0_i32_0 = arith.constant 0 : i32
    %c0_i32_1 = arith.constant 0 : i32
    return %c0_i32, %c0_i32_0 : i32, i32
  }
  func.func @transform_10(%arg0: i32) -> (i32, i32) {
    %c0_i32 = arith.constant 0 : i32
    %c0_i32_0 = arith.constant 0 : i32
    %c0_i32_1 = arith.constant 0 : i32
    return %c0_i32, %c0_i32_0 : i32, i32
  }
  func.func @transform_11(%arg0: i32) -> (i32, i32) {
    %c0_i32 = arith.constant 0 : i32
    %c0_i32_0 = arith.constant 0 : i32
    return %arg0, %c0_i32 : i32, i32
  }
}

</mosaic_0001>

<llo_original>
// kernel: net_forward.1
$region0: #{net_forward.1}
  #allocation0 [shape = 'u32[]', space=smem, size = 0x4, offset = 0x4, fixed_abs, tag = 'smem constant byte address 0x4 - core index']
  #allocation1 [shape = 'u32[144,128]{1,0:T(1,128)}', space=vmem, size = 0x12000, scoped, tag = 'internal scratch']
  %s0 = inlined_call_operand.vmem [shape: bf16[16,16,192], index: 0, kind: input, shape index: {}]
  %s1 = inlined_call_operand.vmem [shape: bf16[2,5,96,84], index: 1, kind: input, shape index: {}]
  %s2 = inlined_call_operand.vmem [shape: f32[1,84], index: 2, kind: input, shape index: {}]
  %s3 = inlined_call_operand.vmem [shape: bf16[2,5,84,80], index: 3, kind: input, shape index: {}]
  %s4 = inlined_call_operand.vmem [shape: f32[1,80], index: 4, kind: input, shape index: {}]
  %s5 = inlined_call_operand.vmem [shape: bf16[5,80,120], index: 5, kind: input, shape index: {}]
  %s6 = inlined_call_operand.vmem [shape: f32[1,120], index: 6, kind: input, shape index: {}]
  %s7 = inlined_call_operand.vmem [shape: bf16[120,84], index: 7, kind: input, shape index: {}]
  %s8 = inlined_call_operand.vmem [shape: f32[1,84], index: 8, kind: input, shape index: {}]
  %s9 = inlined_call_operand.vmem [shape: bf16[84,128], index: 9, kind: input, shape index: {}]
  %s10 = inlined_call_operand.vmem [shape: f32[1,128], index: 10, kind: input, shape index: {}]
  %s11 = inlined_call_operand.vmem [shape: f32[16,128], index: 11, kind: output, shape index: {}]
  %s12 = sld [smem:[#allocation0]]
  $region54: #{net_forward.1} parent=0
    _
  %s14 = ssub.s32 1, %s12
  %s15 = scalar_select 0, %s14, %s12
  // Predicated region
  $region2: #{net_forward.1} parent=0 // pred_check
    _
  $region3: #{net_forward.1} parent=0 // pred_check_branch
    %17 = sbr.rel (0) target = $region5
  $region4: #{net_forward.1} parent=0 // pred_region
    _
  $region5: #{net_forward.1} parent=0 // pred_fallthru
    _
  // Predicated region
  $region6: #{net_forward.1} parent=0 // pred_check
    _
  $region7: #{net_forward.1} parent=0 // pred_check_branch
    %19 = sbr.rel (0) target = $region9
  $region8: #{net_forward.1} parent=0 // pred_region
    _
  $region9: #{net_forward.1} parent=0 // pred_fallthru
    _
  // Predicated region
  $region10: #{net_forward.1} parent=0 // pred_check
    _
  $region11: #{net_forward.1} parent=0 // pred_check_branch
    %21 = sbr.rel (0) target = $region13
  $region12: #{net_forward.1} parent=0 // pred_region
    _
  $region13: #{net_forward.1} parent=0 // pred_fallthru
    _
  // Predicated region
  $region14: #{net_forward.1} parent=0 // pred_check
    _
  $region15: #{net_forward.1} parent=0 // pred_check_branch
    %23 = sbr.rel (0) target = $region17
  $region16: #{net_forward.1} parent=0 // pred_region
    _
  $region17: #{net_forward.1} parent=0 // pred_fallthru
    _
  // Predicated region
  $region18: #{net_forward.1} parent=0 // pred_check
    _
  $region19: #{net_forward.1} parent=0 // pred_check_branch
    %25 = sbr.rel (0) target = $region21
  $region20: #{net_forward.1} parent=0 // pred_region
    _
  $region21: #{net_forward.1} parent=0 // pred_fallthru
    _
  // Predicated region
  $region22: #{net_forward.1} parent=0 // pred_check
    _
  $region23: #{net_forward.1} parent=0 // pred_check_branch
    %27 = sbr.rel (0) target = $region25
  $region24: #{net_forward.1} parent=0 // pred_region
    _
  $region25: #{net_forward.1} parent=0 // pred_fallthru
    _
  // Predicated region
  $region26: #{net_forward.1} parent=0 // pred_check
    _
  $region27: #{net_forward.1} parent=0 // pred_check_branch
    %29 = sbr.rel (0) target = $region29
  $region28: #{net_forward.1} parent=0 // pred_region
    _
  $region29: #{net_forward.1} parent=0 // pred_fallthru
    _
  // Predicated region
  $region30: #{net_forward.1} parent=0 // pred_check
    _
  $region31: #{net_forward.1} parent=0 // pred_check_branch
    %31 = sbr.rel (0) target = $region33
  $region32: #{net_forward.1} parent=0 // pred_region
    _
  $region33: #{net_forward.1} parent=0 // pred_fallthru
    _
  // Predicated region
  $region34: #{net_forward.1} parent=0 // pred_check
    _
  $region35: #{net_forward.1} parent=0 // pred_check_branch
    %33 = sbr.rel (0) target = $region37
  $region36: #{net_forward.1} parent=0 // pred_region
    _
  $region37: #{net_forward.1} parent=0 // pred_fallthru
    _
  // Predicated region
  $region38: #{net_forward.1} parent=0 // pred_check
    _
  $region39: #{net_forward.1} parent=0 // pred_check_branch
    %35 = sbr.rel (0) target = $region41
  $region40: #{net_forward.1} parent=0 // pred_region
    _
  $region41: #{net_forward.1} parent=0 // pred_fallthru
    _
  // Predicated region
  $region42: #{net_forward.1} parent=0 // pred_check
    _
  $region43: #{net_forward.1} parent=0 // pred_check_branch
    %37 = sbr.rel (0) target = $region45
  $region44: #{net_forward.1} parent=0 // pred_region
    _
  $region45: #{net_forward.1} parent=0 // pred_fallthru
    _
  %v39 = vld [vmem:[%s0] sm:$0xf]
  %v40 = vld [vmem:[%s0 + $0x8] sm:$0xf]
  %v41 = vld [vmem:[%s0 + $0x10] sm:$0xf]
  %v42 = vld [vmem:[%s0 + $0x18] sm:$0xf]
  %v43 = vld [vmem:[%s0 + $0x20] sm:$0xf]
  %v44 = vld [vmem:[%s0 + $0x28] sm:$0xf]
  %v45 = vld [vmem:[%s0 + $0x30] sm:$0xf]
  %v46 = vld [vmem:[%s0 + $0x38] sm:$0xf]
  %v47 = vld [vmem:[%s0 + $0x40] sm:$0xf]
  %v48 = vld [vmem:[%s0 + $0x48] sm:$0xf]
  %v49 = vld [vmem:[%s0 + $0x50] sm:$0xf]
  %v50 = vld [vmem:[%s0 + $0x58] sm:$0xf]
  %v51 = vld [vmem:[%s0 + $0x60] sm:$0xf]
  %v52 = vld [vmem:[%s0 + $0x68] sm:$0xf]
  %v53 = vld [vmem:[%s0 + $0x70] sm:$0xf]
  %v54 = vld [vmem:[%s0 + $0x78] sm:$0xf]
  %v55 = vld [vmem:[%s0 + $0x80] sm:$0xf]
  %v56 = vld [vmem:[%s0 + $0x88] sm:$0xf]
  %v57 = vld [vmem:[%s0 + $0x90] sm:$0xf]
  %v58 = vld [vmem:[%s0 + $0x98] sm:$0xf]
  %v59 = vld [vmem:[%s0 + $0xa0] sm:$0xf]
  %v60 = vld [vmem:[%s0 + $0xa8] sm:$0xf]
  %v61 = vld [vmem:[%s0 + $0xb0] sm:$0xf]
  %v62 = vld [vmem:[%s0 + $0xb8] sm:$0xf]
  %v63 = vld [vmem:[%s0 + $0xc0] sm:$0xf]
  %v64 = vld [vmem:[%s0 + $0xc8] sm:$0xf]
  %v65 = vld [vmem:[%s0 + $0xd0] sm:$0xf]
  %v66 = vld [vmem:[%s0 + $0xd8] sm:$0xf]
  %s67 = scalar_lea.vmem %s0, 16
  %v68 = vld [vmem:[%s67] sm:$0xf]
  %v69 = vld [vmem:[%s67 + $0x8] sm:$0xf]
  %v70 = vld [vmem:[%s67 + $0x10] sm:$0xf]
  %v71 = vld [vmem:[%s67 + $0x18] sm:$0xf]
  %v72 = vld [vmem:[%s67 + $0x20] sm:$0xf]
  %v73 = vld [vmem:[%s67 + $0x28] sm:$0xf]
  %v74 = vld [vmem:[%s67 + $0x30] sm:$0xf]
  %v75 = vld [vmem:[%s67 + $0x38] sm:$0xf]
  %v76 = vld [vmem:[%s67 + $0x40] sm:$0xf]
  %v77 = vld [vmem:[%s67 + $0x48] sm:$0xf]
  %v78 = vld [vmem:[%s67 + $0x50] sm:$0xf]
  %v79 = vld [vmem:[%s67 + $0x58] sm:$0xf]
  %v80 = vld [vmem:[%s67 + $0x60] sm:$0xf]
  %v81 = vld [vmem:[%s67 + $0x68] sm:$0xf]
  %v82 = vld [vmem:[%s67 + $0x70] sm:$0xf]
  %v83 = vld [vmem:[%s67 + $0x78] sm:$0xf]
  %v84 = vld [vmem:[%s67 + $0x80] sm:$0xf]
  %v85 = vld [vmem:[%s67 + $0x88] sm:$0xf]
  %v86 = vld [vmem:[%s67 + $0x90] sm:$0xf]
  %v87 = vld [vmem:[%s67 + $0x98] sm:$0xf]
  %v88 = vld [vmem:[%s67 + $0xa0] sm:$0xf]
  %v89 = vld [vmem:[%s67 + $0xa8] sm:$0xf]
  %v90 = vld [vmem:[%s67 + $0xb0] sm:$0xf]
  %v91 = vld [vmem:[%s67 + $0xb8] sm:$0xf]
  %v92 = vld [vmem:[%s67 + $0xc0] sm:$0xf]
  %v93 = vld [vmem:[%s67 + $0xc8] sm:$0xf]
  %v94 = vld [vmem:[%s67 + $0xd0] sm:$0xf]
  %v95 = vld [vmem:[%s67 + $0xd8] sm:$0xf]
  %s96 = scalar_lea.vmem %s0, 32
  %v97 = vld [vmem:[%s96] sm:$0xf]
  %v98 = vld [vmem:[%s96 + $0x8] sm:$0xf]
  %v99 = vld [vmem:[%s96 + $0x10] sm:$0xf]
  %v100 = vld [vmem:[%s96 + $0x18] sm:$0xf]
  %v101 = vld [vmem:[%s96 + $0x20] sm:$0xf]
  %v102 = vld [vmem:[%s96 + $0x28] sm:$0xf]
  %v103 = vld [vmem:[%s96 + $0x30] sm:$0xf]
  %v104 = vld [vmem:[%s96 + $0x38] sm:$0xf]
  %v105 = vld [vmem:[%s96 + $0x40] sm:$0xf]
  %v106 = vld [vmem:[%s96 + $0x48] sm:$0xf]
  %v107 = vld [vmem:[%s96 + $0x50] sm:$0xf]
  %v108 = vld [vmem:[%s96 + $0x58] sm:$0xf]
  %v109 = vld [vmem:[%s96 + $0x60] sm:$0xf]
  %v110 = vld [vmem:[%s96 + $0x68] sm:$0xf]
  %v111 = vld [vmem:[%s96 + $0x70] sm:$0xf]
  %v112 = vld [vmem:[%s96 + $0x78] sm:$0xf]
  %v113 = vld [vmem:[%s96 + $0x80] sm:$0xf]
  %v114 = vld [vmem:[%s96 + $0x88] sm:$0xf]
  %v115 = vld [vmem:[%s96 + $0x90] sm:$0xf]
  %v116 = vld [vmem:[%s96 + $0x98] sm:$0xf]
  %v117 = vld [vmem:[%s96 + $0xa0] sm:$0xf]
  %v118 = vld [vmem:[%s96 + $0xa8] sm:$0xf]
  %v119 = vld [vmem:[%s96 + $0xb0] sm:$0xf]
  %v120 = vld [vmem:[%s96 + $0xb8] sm:$0xf]
  %v121 = vld [vmem:[%s96 + $0xc0] sm:$0xf]
  %v122 = vld [vmem:[%s96 + $0xc8] sm:$0xf]
  %v123 = vld [vmem:[%s96 + $0xd0] sm:$0xf]
  %v124 = vld [vmem:[%s96 + $0xd8] sm:$0xf]
  %v125 = vld [vmem:[%s0] sm:$0xff]
  %v126 = vld [vmem:[%s0 + $0x8] sm:$0xff]
  %v127 = vld [vmem:[%s0 + $0x10] sm:$0xff]
  %v128 = vld [vmem:[%s0 + $0x18] sm:$0xff]
  %v129 = vld [vmem:[%s0 + $0x20] sm:$0xff]
  %v130 = vld [vmem:[%s0 + $0x28] sm:$0xff]
  %v131 = vld [vmem:[%s0 + $0x30] sm:$0xff]
  %v132 = vld [vmem:[%s0 + $0x38] sm:$0xff]
  %v133 = vld [vmem:[%s0 + $0x40] sm:$0xff]
  %v134 = vld [vmem:[%s0 + $0x48] sm:$0xff]
  %v135 = vld [vmem:[%s0 + $0x50] sm:$0xff]
  %v136 = vld [vmem:[%s0 + $0x58] sm:$0xff]
  %v137 = vld [vmem:[%s0 + $0x60] sm:$0xff]
  %v138 = vld [vmem:[%s0 + $0x68] sm:$0xff]
  %v139 = vld [vmem:[%s0 + $0x70] sm:$0xff]
  %v140 = vld [vmem:[%s0 + $0x78] sm:$0xff]
  %v141 = vld [vmem:[%s0 + $0x80] sm:$0xff]
  %v142 = vld [vmem:[%s0 + $0x88] sm:$0xff]
  %v143 = vld [vmem:[%s0 + $0x90] sm:$0xff]
  %v144 = vld [vmem:[%s0 + $0x98] sm:$0xff]
  %v145 = vld [vmem:[%s0 + $0xa0] sm:$0xff]
  %v146 = vld [vmem:[%s0 + $0xa8] sm:$0xff]
  %v147 = vld [vmem:[%s0 + $0xb0] sm:$0xff]
  %v148 = vld [vmem:[%s0 + $0xb8] sm:$0xff]
  %v149 = vld [vmem:[%s0 + $0xc0] sm:$0xff]
  %v150 = vld [vmem:[%s0 + $0xc8] sm:$0xff]
  %v151 = vld [vmem:[%s0 + $0xd0] sm:$0xff]
  %v152 = vld [vmem:[%s0 + $0xd8] sm:$0xff]
  %v153 = vld [vmem:[%s67] sm:$0xff]
  %v154 = vld [vmem:[%s67 + $0x8] sm:$0xff]
  %v155 = vld [vmem:[%s67 + $0x10] sm:$0xff]
  %v156 = vld [vmem:[%s67 + $0x18] sm:$0xff]
  %v157 = vld [vmem:[%s67 + $0x20] sm:$0xff]
  %v158 = vld [vmem:[%s67 + $0x28] sm:$0xff]
  %v159 = vld [vmem:[%s67 + $0x30] sm:$0xff]
  %v160 = vld [vmem:[%s67 + $0x38] sm:$0xff]
  %v161 = vld [vmem:[%s67 + $0x40] sm:$0xff]
  %v162 = vld [vmem:[%s67 + $0x48] sm:$0xff]
  %v163 = vld [vmem:[%s67 + $0x50] sm:$0xff]
  %v164 = vld [vmem:[%s67 + $0x58] sm:$0xff]
  %v165 = vld [vmem:[%s67 + $0x60] sm:$0xff]
  %v166 = vld [vmem:[%s67 + $0x68] sm:$0xff]
  %v167 = vld [vmem:[%s67 + $0x70] sm:$0xff]
  %v168 = vld [vmem:[%s67 + $0x78] sm:$0xff]
  %v169 = vld [vmem:[%s67 + $0x80] sm:$0xff]
  %v170 = vld [vmem:[%s67 + $0x88] sm:$0xff]
  %v171 = vld [vmem:[%s67 + $0x90] sm:$0xff]
  %v172 = vld [vmem:[%s67 + $0x98] sm:$0xff]
  %v173 = vld [vmem:[%s67 + $0xa0] sm:$0xff]
  %v174 = vld [vmem:[%s67 + $0xa8] sm:$0xff]
  %v175 = vld [vmem:[%s67 + $0xb0] sm:$0xff]
  %v176 = vld [vmem:[%s67 + $0xb8] sm:$0xff]
  %v177 = vld [vmem:[%s67 + $0xc0] sm:$0xff]
  %v178 = vld [vmem:[%s67 + $0xc8] sm:$0xff]
  %v179 = vld [vmem:[%s67 + $0xd0] sm:$0xff]
  %v180 = vld [vmem:[%s67 + $0xd8] sm:$0xff]
  %v181 = vld [vmem:[%s96] sm:$0xff]
  %v182 = vld [vmem:[%s96 + $0x8] sm:$0xff]
  %v183 = vld [vmem:[%s96 + $0x10] sm:$0xff]
  %v184 = vld [vmem:[%s96 + $0x18] sm:$0xff]
  %v185 = vld [vmem:[%s96 + $0x20] sm:$0xff]
  %v186 = vld [vmem:[%s96 + $0x28] sm:$0xff]
  %v187 = vld [vmem:[%s96 + $0x30] sm:$0xff]
  %v188 = vld [vmem:[%s96 + $0x38] sm:$0xff]
  %v189 = vld [vmem:[%s96 + $0x40] sm:$0xff]
  %v190 = vld [vmem:[%s96 + $0x48] sm:$0xff]
  %v191 = vld [vmem:[%s96 + $0x50] sm:$0xff]
  %v192 = vld [vmem:[%s96 + $0x58] sm:$0xff]
  %v193 = vld [vmem:[%s96 + $0x60] sm:$0xff]
  %v194 = vld [vmem:[%s96 + $0x68] sm:$0xff]
  %v195 = vld [vmem:[%s96 + $0x70] sm:$0xff]
  %v196 = vld [vmem:[%s96 + $0x78] sm:$0xff]
  %v197 = vld [vmem:[%s96 + $0x80] sm:$0xff]
  %v198 = vld [vmem:[%s96 + $0x88] sm:$0xff]
  %v199 = vld [vmem:[%s96 + $0x90] sm:$0xff]
  %v200 = vld [vmem:[%s96 + $0x98] sm:$0xff]
  %v201 = vld [vmem:[%s96 + $0xa0] sm:$0xff]
  %v202 = vld [vmem:[%s96 + $0xa8] sm:$0xff]
  %v203 = vld [vmem:[%s96 + $0xb0] sm:$0xff]
  %v204 = vld [vmem:[%s96 + $0xb8] sm:$0xff]
  %v205 = vld [vmem:[%s96 + $0xc0] sm:$0xff]
  %v206 = vld [vmem:[%s96 + $0xc8] sm:$0xff]
  %v207 = vld [vmem:[%s96 + $0xd0] sm:$0xff]
  %v208 = vld [vmem:[%s96 + $0xd8] sm:$0xff]
  %v209 = vld [vmem:[%s2] sm:$0x1]
  %v210 = vld [vmem:[%s1] sm:$0xf]
  %v211 = vld [vmem:[%s1 + $0x4] sm:$0xf]
  %v212 = vld [vmem:[%s1 + $0x8] sm:$0xf]
  %v213 = vld [vmem:[%s1 + $0xc] sm:$0xf]
  %v214 = vld [vmem:[%s1 + $0x10] sm:$0xf]
  %v215 = vld [vmem:[%s1 + $0x14] sm:$0xf]
  %v216 = vld [vmem:[%s1 + $0x18] sm:$0xf]
  %v217 = vld [vmem:[%s1 + $0x1c] sm:$0xf]
  %v218 = vld [vmem:[%s1 + $0x20] sm:$0xf]
  %v219 = vld [vmem:[%s1 + $0x24] sm:$0xf]
  %v220 = vld [vmem:[%s1 + $0x28] sm:$0xf]
  %v221 = vld [vmem:[%s1 + $0x2c] sm:$0xf]
  %s222 = scalar_lea.vmem %s1, 48
  %v223 = vld [vmem:[%s222] sm:$0xf]
  %v224 = vld [vmem:[%s222 + $0x4] sm:$0xf]
  %v225 = vld [vmem:[%s222 + $0x8] sm:$0xf]
  %v226 = vld [vmem:[%s222 + $0xc] sm:$0xf]
  %v227 = vld [vmem:[%s222 + $0x10] sm:$0xf]
  %v228 = vld [vmem:[%s222 + $0x14] sm:$0xf]
  %v229 = vld [vmem:[%s222 + $0x18] sm:$0xf]
  %v230 = vld [vmem:[%s222 + $0x1c] sm:$0xf]
  %v231 = vld [vmem:[%s222 + $0x20] sm:$0xf]
  %v232 = vld [vmem:[%s222 + $0x24] sm:$0xf]
  %v233 = vld [vmem:[%s222 + $0x28] sm:$0xf]
  %v234 = vld [vmem:[%s222 + $0x2c] sm:$0xf]
  %v263 = vunpack.c.l.b16 %v125
  %v264 = vunpack.c.h.b16 %v125
  %v265 = vunpack.c.l.b16 %v126
  %v266 = vunpack.c.h.b16 %v126
  %v267 = vunpack.c.l.b16 %v127
  %v268 = vunpack.c.h.b16 %v127
  %v269 = vunpack.c.l.b16 %v128
  %v270 = vunpack.c.h.b16 %v128
  %v271 = vunpack.c.l.b16 %v129
  %v272 = vunpack.c.h.b16 %v129
  %v273 = vunpack.c.l.b16 %v130
  %v274 = vunpack.c.h.b16 %v130
  %v275 = vunpack.c.l.b16 %v131
  %v276 = vunpack.c.h.b16 %v131
  %v277 = vunpack.c.l.b16 %v132
  %v278 = vunpack.c.h.b16 %v132
  %v279 = vunpack.c.l.b16 %v133
  %v280 = vunpack.c.h.b16 %v133
  %v281 = vunpack.c.l.b16 %v134
  %v282 = vunpack.c.h.b16 %v134
  %v283 = vunpack.c.l.b16 %v135
  %v284 = vunpack.c.h.b16 %v135
  %v285 = vunpack.c.l.b16 %v136
  %v286 = vunpack.c.h.b16 %v136
  %v287 = vunpack.c.l.b16 %v137
  %v288 = vunpack.c.h.b16 %v137
  %v289 = vunpack.c.l.b16 %v138
  %v290 = vunpack.c.h.b16 %v138
  %v291 = vunpack.c.l.b16 %v139
  %v292 = vunpack.c.h.b16 %v139
  %v293 = vunpack.c.l.b16 %v140
  %v294 = vunpack.c.h.b16 %v140
  %v295 = vunpack.c.l.b16 %v141
  %v296 = vunpack.c.h.b16 %v141
  %v297 = vunpack.c.l.b16 %v142
  %v298 = vunpack.c.h.b16 %v142
  %v299 = vunpack.c.l.b16 %v143
  %v300 = vunpack.c.h.b16 %v143
  %v301 = vunpack.c.l.b16 %v144
  %v302 = vunpack.c.h.b16 %v144
  %v303 = vunpack.c.l.b16 %v145
  %v304 = vunpack.c.h.b16 %v145
  %v305 = vunpack.c.l.b16 %v146
  %v306 = vunpack.c.h.b16 %v146
  %v307 = vunpack.c.l.b16 %v147
  %v308 = vunpack.c.h.b16 %v147
  %v309 = vunpack.c.l.b16 %v148
  %v310 = vunpack.c.h.b16 %v148
  %v311 = vunpack.c.l.b16 %v149
  %v312 = vunpack.c.h.b16 %v149
  %v313 = vunpack.c.l.b16 %v150
  %v314 = vunpack.c.h.b16 %v150
  %v315 = vunpack.c.l.b16 %v151
  %v316 = vunpack.c.h.b16 %v151
  %v317 = vunpack.c.l.b16 %v152
  %v318 = vunpack.c.h.b16 %v152
  %v319 = vpack.c.b16 %v265, %v263
  %v320 = vpack.c.b16 %v266, %v264
  %v321 = vpack.c.b16 %v269, %v267
  %v322 = vpack.c.b16 %v270, %v268
  %v323 = vpack.c.b16 %v273, %v271
  %v324 = vpack.c.b16 %v274, %v272
  %v325 = vpack.c.b16 %v277, %v275
  %v326 = vpack.c.b16 %v278, %v276
  %v327 = vpack.c.b16 %v281, %v279
  %v328 = vpack.c.b16 %v282, %v280
  %v329 = vpack.c.b16 %v285, %v283
  %v330 = vpack.c.b16 %v286, %v284
  %v331 = vpack.c.b16 %v289, %v287
  %v332 = vpack.c.b16 %v290, %v288
  %v333 = vpack.c.b16 %v293, %v291
  %v334 = vpack.c.b16 %v294, %v292
  %v335 = vpack.c.b16 %v297, %v295
  %v336 = vpack.c.b16 %v298, %v296
  %v337 = vpack.c.b16 %v301, %v299
  %v338 = vpack.c.b16 %v302, %v300
  %v339 = vpack.c.b16 %v305, %v303
  %v340 = vpack.c.b16 %v306, %v304
  %v341 = vpack.c.b16 %v309, %v307
  %v342 = vpack.c.b16 %v310, %v308
  %v343 = vpack.c.b16 %v313, %v311
  %v344 = vpack.c.b16 %v314, %v312
  %v345 = vpack.c.b16 %v317, %v315
  %v346 = vpack.c.b16 %v318, %v316
  %347 = vrot.lane.b32.xlu0 %v319, 32
  %v348 = vpop.permute.xlu0 %347
  %349 = vrot.lane.b32.xlu0 %v320, 32
  %v350 = vpop.permute.xlu0 %349
  %351 = vrot.lane.b32.xlu0 %v321, 32
  %v352 = vpop.permute.xlu0 %351
  %353 = vrot.lane.b32.xlu0 %v322, 32
  %v354 = vpop.permute.xlu0 %353
  %355 = vrot.lane.b32.xlu0 %v323, 32
  %v356 = vpop.permute.xlu0 %355
  %357 = vrot.lane.b32.xlu0 %v324, 32
  %v358 = vpop.permute.xlu0 %357
  %359 = vrot.lane.b32.xlu0 %v325, 32
  %v360 = vpop.permute.xlu0 %359
  %361 = vrot.lane.b32.xlu0 %v326, 32
  %v362 = vpop.permute.xlu0 %361
  %363 = vrot.lane.b32.xlu0 %v327, 32
  %v364 = vpop.permute.xlu0 %363
  %365 = vrot.lane.b32.xlu0 %v328, 32
  %v366 = vpop.permute.xlu0 %365
  %367 = vrot.lane.b32.xlu0 %v329, 32
  %v368 = vpop.permute.xlu0 %367
  %369 = vrot.lane.b32.xlu0 %v330, 32
  %v370 = vpop.permute.xlu0 %369
  %371 = vrot.lane.b32.xlu0 %v331, 32
  %v372 = vpop.permute.xlu0 %371
  %373 = vrot.lane.b32.xlu0 %v332, 32
  %v374 = vpop.permute.xlu0 %373
  %375 = vrot.lane.b32.xlu0 %v333, 32
  %v376 = vpop.permute.xlu0 %375
  %377 = vrot.lane.b32.xlu0 %v334, 32
  %v378 = vpop.permute.xlu0 %377
  %379 = vrot.lane.b32.xlu0 %v335, 32
  %v380 = vpop.permute.xlu0 %379
  %381 = vrot.lane.b32.xlu0 %v336, 32
  %v382 = vpop.permute.xlu0 %381
  %383 = vrot.lane.b32.xlu0 %v337, 32
  %v384 = vpop.permute.xlu0 %383
  %385 = vrot.lane.b32.xlu0 %v338, 32
  %v386 = vpop.permute.xlu0 %385
  %387 = vrot.lane.b32.xlu0 %v339, 32
  %v388 = vpop.permute.xlu0 %387
  %389 = vrot.lane.b32.xlu0 %v340, 32
  %v390 = vpop.permute.xlu0 %389
  %391 = vrot.lane.b32.xlu0 %v341, 32
  %v392 = vpop.permute.xlu0 %391
  %393 = vrot.lane.b32.xlu0 %v342, 32
  %v394 = vpop.permute.xlu0 %393
  %395 = vrot.lane.b32.xlu0 %v343, 32
  %v396 = vpop.permute.xlu0 %395
  %397 = vrot.lane.b32.xlu0 %v344, 32
  %v398 = vpop.permute.xlu0 %397
  %399 = vrot.lane.b32.xlu0 %v345, 32
  %v400 = vpop.permute.xlu0 %399
  %401 = vrot.lane.b32.xlu0 %v346, 32
  %v402 = vpop.permute.xlu0 %401
  %vm403 = vcmask 261120
  %v404 = vsel %vm403, %v348, %v350
  %v405 = vsel %vm403, %v352, %v354
  %v406 = vsel %vm403, %v356, %v358
  %v407 = vsel %vm403, %v360, %v362
  %v408 = vsel %vm403, %v364, %v366
  %v409 = vsel %vm403, %v368, %v370
  %v410 = vsel %vm403, %v372, %v374
  %v411 = vsel %vm403, %v376, %v378
  %v412 = vsel %vm403, %v380, %v382
  %v413 = vsel %vm403, %v384, %v386
  %v414 = vsel %vm403, %v388, %v390
  %v415 = vsel %vm403, %v392, %v394
  %v416 = vsel %vm403, %v396, %v398
  %v417 = vsel %vm403, %v400, %v402
  %v430 = vunpack.c.l.b16 %v223
  %v431 = vunpack.c.l.b16 %v224
  %v432 = vunpack.c.l.b16 %v225
  %v433 = vunpack.c.l.b16 %v226
  %v434 = vunpack.c.l.b16 %v227
  %v435 = vunpack.c.l.b16 %v228
  %v436 = vunpack.c.l.b16 %v229
  %v437 = vunpack.c.l.b16 %v230
  %v438 = vunpack.c.l.b16 %v231
  %v439 = vunpack.c.l.b16 %v232
  %v440 = vunpack.c.l.b16 %v233
  %v441 = vunpack.c.l.b16 %v234
  %v442 = vpack.c.b16 %v431, %v430
  %v443 = vpack.c.b16 %v433, %v432
  %v444 = vpack.c.b16 %v435, %v434
  %v445 = vpack.c.b16 %v437, %v436
  %v446 = vpack.c.b16 %v439, %v438
  %v447 = vpack.c.b16 %v441, %v440
  %vm454 = vcmask 785408
  %v456 = vsel %vm454, %v404, 0
  %v459 = vsel %vm454, %v405, 0
  %v462 = vsel %vm454, %v406, 0
  %v465 = vsel %vm454, %v407, 0
  %v468 = vsel %vm454, %v408, 0
  %v471 = vsel %vm454, %v409, 0
  %v474 = vsel %vm454, %v410, 0
  %v477 = vsel %vm454, %v411, 0
  %v480 = vsel %vm454, %v412, 0
  %v483 = vsel %vm454, %v413, 0
  %v486 = vsel %vm454, %v414, 0
  %v489 = vsel %vm454, %v415, 0
  %v492 = vsel %vm454, %v416, 0
  %v495 = vsel %vm454, %v417, 0
  %497 = vmatprep.subr.bf16.mxu0 0
  %498 = vmatpush1.bf16.msra.mxu0 0
  %499 = vmatprep.subr.bf16.mxu0 0
  %500 = vmatpush1.bf16.msra.mxu0 0
  %501 = vmatprep.subr.bf16.mxu0 0
  %502 = vmatpush1.bf16.msra.mxu0 %v447
  %503 = vmatprep.subr.bf16.mxu0 0
  %504 = vmatpush1.bf16.msra.mxu0 %v446
  %505 = vmatprep.subr.bf16.mxu0 0
  %506 = vmatpush1.bf16.msra.mxu0 %v445
  %507 = vmatprep.subr.bf16.mxu0 0
  %508 = vmatpush1.bf16.msra.mxu0 %v444
  %509 = vmatprep.subr.bf16.mxu0 0
  %510 = vmatpush1.bf16.msra.mxu0 %v443
  %511 = vmatprep.subr.bf16.mxu0 0
  %512 = vmatpush1.bf16.msra.mxu0 %v442
  %513 = vmatprep.subr.bf16.mxu0 0
  %514 = vmatpush2.bf16.msra.mxu0 0
  %515 = vmatprep.subr.bf16.mxu0 0
  %516 = vmatpush2.bf16.msra.mxu0 0
  %517 = vmatprep.subr.bf16.mxu0 0
  %518 = vmatpush2.bf16.msra.mxu0 0
  %519 = vmatprep.subr.bf16.mxu0 0
  %520 = vmatpush2.bf16.msra.mxu0 0
  %521 = vmatprep.subr.bf16.mxu0 0
  %522 = vmatpush2.bf16.msra.mxu0 0
  %523 = vmatprep.subr.bf16.mxu0 0
  %524 = vmatpush2.bf16.msra.mxu0 0
  %525 = vmatprep.subr.bf16.mxu0 0
  %526 = vmatpush2.bf16.msra.mxu0 0
  %527 = vmatprep.subr.bf16.mxu0 0
  %528 = vmatpush2.bf16.msra.mxu0 0
  %529 = vmatprep.mubr.bf16.mxu0 0
  %530 = vmatmul.mubr.bf16.gmra.mxu0 %v456
  %v531 = vpop.f32.mrf.mxu0
  %v532 = vadd.f32 0.0, %v531
  %v533 = vpop.f32.mrf.mxu0
  %v534 = vpop.f32.mrf.mxu0
  %v535 = vadd.f32 0.0, %v534
  %v536 = vpop.f32.mrf.mxu0
  %537 = vmatprep.mubr.bf16.mxu0 0
  %538 = vmatmul.mubr.bf16.gmra.mxu0 %v459
  %v539 = vpop.f32.mrf.mxu0
  %v540 = vadd.f32 0.0, %v539
  %v541 = vpop.f32.mrf.mxu0
  %v542 = vpop.f32.mrf.mxu0
  %v543 = vadd.f32 0.0, %v542
  %v544 = vpop.f32.mrf.mxu0
  %545 = vmatprep.mubr.bf16.mxu0 0
  %546 = vmatmul.mubr.bf16.gmra.mxu0 %v462
  %v547 = vpop.f32.mrf.mxu0
  %v548 = vadd.f32 0.0, %v547
  %v549 = vpop.f32.mrf.mxu0
  %v550 = vpop.f32.mrf.mxu0
  %v551 = vadd.f32 0.0, %v550
  %v552 = vpop.f32.mrf.mxu0
  %553 = vmatprep.mubr.bf16.mxu0 0
  %554 = vmatmul.mubr.bf16.gmra.mxu0 %v465
  %v555 = vpop.f32.mrf.mxu0
  %v556 = vadd.f32 0.0, %v555
  %v557 = vpop.f32.mrf.mxu0
  %v558 = vpop.f32.mrf.mxu0
  %v559 = vadd.f32 0.0, %v558
  %v560 = vpop.f32.mrf.mxu0
  %561 = vmatprep.mubr.bf16.mxu0 0
  %562 = vmatmul.mubr.bf16.gmra.mxu0 %v468
  %v563 = vpop.f32.mrf.mxu0
  %v564 = vadd.f32 0.0, %v563
  %v565 = vpop.f32.mrf.mxu0
  %v566 = vpop.f32.mrf.mxu0
  %v567 = vadd.f32 0.0, %v566
  %v568 = vpop.f32.mrf.mxu0
  %569 = vmatprep.mubr.bf16.mxu0 0
  %570 = vmatmul.mubr.bf16.gmra.mxu0 %v471
  %v571 = vpop.f32.mrf.mxu0
  %v572 = vadd.f32 0.0, %v571
  %v573 = vpop.f32.mrf.mxu0
  %v574 = vpop.f32.mrf.mxu0
  %v575 = vadd.f32 0.0, %v574
  %v576 = vpop.f32.mrf.mxu0
  %577 = vmatprep.mubr.bf16.mxu0 0
  %578 = vmatmul.mubr.bf16.gmra.mxu0 %v474
  %v579 = vpop.f32.mrf.mxu0
  %v580 = vadd.f32 0.0, %v579
  %v581 = vpop.f32.mrf.mxu0
  %v582 = vpop.f32.mrf.mxu0
  %v583 = vadd.f32 0.0, %v582
  %v584 = vpop.f32.mrf.mxu0
  %585 = vmatprep.mubr.bf16.mxu0 0
  %586 = vmatmul.mubr.bf16.gmra.mxu0 %v477
  %v587 = vpop.f32.mrf.mxu0
  %v588 = vadd.f32 0.0, %v587
  %v589 = vpop.f32.mrf.mxu0
  %v590 = vpop.f32.mrf.mxu0
  %v591 = vadd.f32 0.0, %v590
  %v592 = vpop.f32.mrf.mxu0
  %593 = vmatprep.mubr.bf16.mxu0 0
  %594 = vmatmul.mubr.bf16.gmra.mxu0 %v480
  %v595 = vpop.f32.mrf.mxu0
  %v596 = vadd.f32 0.0, %v595
  %v597 = vpop.f32.mrf.mxu0
  %v598 = vpop.f32.mrf.mxu0
  %v599 = vadd.f32 0.0, %v598
  %v600 = vpop.f32.mrf.mxu0
  %601 = vmatprep.mubr.bf16.mxu0 0
  %602 = vmatmul.mubr.bf16.gmra.mxu0 %v483
  %v603 = vpop.f32.mrf.mxu0
  %v604 = vadd.f32 0.0, %v603
  %v605 = vpop.f32.mrf.mxu0
  %v606 = vpop.f32.mrf.mxu0
  %v607 = vadd.f32 0.0, %v606
  %v608 = vpop.f32.mrf.mxu0
  %609 = vmatprep.mubr.bf16.mxu0 0
  %610 = vmatmul.mubr.bf16.gmra.mxu0 %v486
  %v611 = vpop.f32.mrf.mxu0
  %v612 = vadd.f32 0.0, %v611
  %v613 = vpop.f32.mrf.mxu0
  %v614 = vpop.f32.mrf.mxu0
  %v615 = vadd.f32 0.0, %v614
  %v616 = vpop.f32.mrf.mxu0
  %617 = vmatprep.mubr.bf16.mxu0 0
  %618 = vmatmul.mubr.bf16.gmra.mxu0 %v489
  %v619 = vpop.f32.mrf.mxu0
  %v620 = vadd.f32 0.0, %v619
  %v621 = vpop.f32.mrf.mxu0
  %v622 = vpop.f32.mrf.mxu0
  %v623 = vadd.f32 0.0, %v622
  %v624 = vpop.f32.mrf.mxu0
  %625 = vmatprep.mubr.bf16.mxu0 0
  %626 = vmatmul.mubr.bf16.gmra.mxu0 %v492
  %v627 = vpop.f32.mrf.mxu0
  %v628 = vadd.f32 0.0, %v627
  %v629 = vpop.f32.mrf.mxu0
  %v630 = vpop.f32.mrf.mxu0
  %v631 = vadd.f32 0.0, %v630
  %v632 = vpop.f32.mrf.mxu0
  %633 = vmatprep.mubr.bf16.mxu0 0
  %634 = vmatmul.mubr.bf16.gmra.mxu0 %v495
  %v635 = vpop.f32.mrf.mxu0
  %v636 = vadd.f32 0.0, %v635
  %v637 = vpop.f32.mrf.mxu0
  %v638 = vpop.f32.mrf.mxu0
  %v639 = vadd.f32 0.0, %v638
  %v640 = vpop.f32.mrf.mxu0
  %641 = vdwg.mxu0
  %v670 = vunpack.c.l.b16 %v39
  %v671 = vunpack.c.l.b16 %v40
  %v672 = vunpack.c.l.b16 %v41
  %v673 = vunpack.c.l.b16 %v42
  %v674 = vunpack.c.l.b16 %v43
  %v675 = vunpack.c.l.b16 %v44
  %v676 = vunpack.c.l.b16 %v45
  %v677 = vunpack.c.l.b16 %v46
  %v678 = vunpack.c.l.b16 %v47
  %v679 = vunpack.c.l.b16 %v48
  %v680 = vunpack.c.l.b16 %v49
  %v681 = vunpack.c.l.b16 %v50
  %v682 = vunpack.c.l.b16 %v51
  %v683 = vunpack.c.l.b16 %v52
  %v684 = vunpack.c.l.b16 %v53
  %v685 = vunpack.c.l.b16 %v54
  %v686 = vunpack.c.l.b16 %v55
  %v687 = vunpack.c.l.b16 %v56
  %v688 = vunpack.c.l.b16 %v57
  %v689 = vunpack.c.l.b16 %v58
  %v690 = vunpack.c.l.b16 %v59
  %v691 = vunpack.c.l.b16 %v60
  %v692 = vunpack.c.l.b16 %v61
  %v693 = vunpack.c.l.b16 %v62
  %v694 = vunpack.c.l.b16 %v63
  %v695 = vunpack.c.l.b16 %v64
  %v696 = vunpack.c.l.b16 %v65
  %v697 = vunpack.c.l.b16 %v66
  %v698 = vpack.c.b16 %v671, %v670
  %v699 = vpack.c.b16 %v673, %v672
  %v700 = vpack.c.b16 %v675, %v674
  %v701 = vpack.c.b16 %v677, %v676
  %v702 = vpack.c.b16 %v679, %v678
  %v703 = vpack.c.b16 %v681, %v680
  %v704 = vpack.c.b16 %v683, %v682
  %v705 = vpack.c.b16 %v685, %v684
  %v706 = vpack.c.b16 %v687, %v686
  %v707 = vpack.c.b16 %v689, %v688
  %v708 = vpack.c.b16 %v691, %v690
  %v709 = vpack.c.b16 %v693, %v692
  %v710 = vpack.c.b16 %v695, %v694
  %v711 = vpack.c.b16 %v697, %v696
  %v724 = vunpack.c.l.b16 %v210
  %v725 = vunpack.c.l.b16 %v211
  %v726 = vunpack.c.l.b16 %v212
  %v727 = vunpack.c.l.b16 %v213
  %v728 = vunpack.c.l.b16 %v214
  %v729 = vunpack.c.l.b16 %v215
  %v730 = vunpack.c.l.b16 %v216
  %v731 = vunpack.c.l.b16 %v217
  %v732 = vunpack.c.l.b16 %v218
  %v733 = vunpack.c.l.b16 %v219
  %v734 = vunpack.c.l.b16 %v220
  %v735 = vunpack.c.l.b16 %v221
  %v736 = vpack.c.b16 %v725, %v724
  %v737 = vpack.c.b16 %v727, %v726
  %v738 = vpack.c.b16 %v729, %v728
  %v739 = vpack.c.b16 %v731, %v730
  %v740 = vpack.c.b16 %v733, %v732
  %v741 = vpack.c.b16 %v735, %v734
  %v749 = vsel %vm454, %v698, 0
  %v752 = vsel %vm454, %v699, 0
  %v755 = vsel %vm454, %v700, 0
  %v758 = vsel %vm454, %v701, 0
  %v761 = vsel %vm454, %v702, 0
  %v764 = vsel %vm454, %v703, 0
  %v767 = vsel %vm454, %v704, 0
  %v770 = vsel %vm454, %v705, 0
  %v773 = vsel %vm454, %v706, 0
  %v776 = vsel %vm454, %v707, 0
  %v779 = vsel %vm454, %v708, 0
  %v782 = vsel %vm454, %v709, 0
  %v785 = vsel %vm454, %v710, 0
  %v788 = vsel %vm454, %v711, 0
  %790 = vmatprep.subr.bf16.mxu0 0
  %791 = vmatpush1.bf16.msra.mxu0 0
  %792 = vmatprep.subr.bf16.mxu0 0
  %793 = vmatpush1.bf16.msra.mxu0 0
  %794 = vmatprep.subr.bf16.mxu0 0
  %795 = vmatpush1.bf16.msra.mxu0 %v741
  %796 = vmatprep.subr.bf16.mxu0 0
  %797 = vmatpush1.bf16.msra.mxu0 %v740
  %798 = vmatprep.subr.bf16.mxu0 0
  %799 = vmatpush1.bf16.msra.mxu0 %v739
  %800 = vmatprep.subr.bf16.mxu0 0
  %801 = vmatpush1.bf16.msra.mxu0 %v738
  %802 = vmatprep.subr.bf16.mxu0 0
  %803 = vmatpush1.bf16.msra.mxu0 %v737
  %804 = vmatprep.subr.bf16.mxu0 0
  %805 = vmatpush1.bf16.msra.mxu0 %v736
  %806 = vmatprep.subr.bf16.mxu0 0
  %807 = vmatpush2.bf16.msra.mxu0 0
  %808 = vmatprep.subr.bf16.mxu0 0
  %809 = vmatpush2.bf16.msra.mxu0 0
  %810 = vmatprep.subr.bf16.mxu0 0
  %811 = vmatpush2.bf16.msra.mxu0 0
  %812 = vmatprep.subr.bf16.mxu0 0
  %813 = vmatpush2.bf16.msra.mxu0 0
  %814 = vmatprep.subr.bf16.mxu0 0
  %815 = vmatpush2.bf16.msra.mxu0 0
  %816 = vmatprep.subr.bf16.mxu0 0
  %817 = vmatpush2.bf16.msra.mxu0 0
  %818 = vmatprep.subr.bf16.mxu0 0
  %819 = vmatpush2.bf16.msra.mxu0 0
  %820 = vmatprep.subr.bf16.mxu0 0
  %821 = vmatpush2.bf16.msra.mxu0 0
  %822 = vmatprep.mubr.bf16.mxu0 0
  %823 = vmatmul.mubr.bf16.gmra.mxu0 %v749
  %v824 = vpop.f32.mrf.mxu0
  %v825 = vadd.f32 %v532, %v824
  %v826 = vpop.f32.mrf.mxu0
  %v827 = vpop.f32.mrf.mxu0
  %v828 = vadd.f32 %v535, %v827
  %v829 = vpop.f32.mrf.mxu0
  %830 = vmatprep.mubr.bf16.mxu0 0
  %831 = vmatmul.mubr.bf16.gmra.mxu0 %v752
  %v832 = vpop.f32.mrf.mxu0
  %v833 = vadd.f32 %v540, %v832
  %v834 = vpop.f32.mrf.mxu0
  %v835 = vpop.f32.mrf.mxu0
  %v836 = vadd.f32 %v543, %v835
  %v837 = vpop.f32.mrf.mxu0
  %838 = vmatprep.mubr.bf16.mxu0 0
  %839 = vmatmul.mubr.bf16.gmra.mxu0 %v755
  %v840 = vpop.f32.mrf.mxu0
  %v841 = vadd.f32 %v548, %v840
  %v842 = vpop.f32.mrf.mxu0
  %v843 = vpop.f32.mrf.mxu0
  %v844 = vadd.f32 %v551, %v843
  %v845 = vpop.f32.mrf.mxu0
  %846 = vmatprep.mubr.bf16.mxu0 0
  %847 = vmatmul.mubr.bf16.gmra.mxu0 %v758
  %v848 = vpop.f32.mrf.mxu0
  %v849 = vadd.f32 %v556, %v848
  %v850 = vpop.f32.mrf.mxu0
  %v851 = vpop.f32.mrf.mxu0
  %v852 = vadd.f32 %v559, %v851
  %v853 = vpop.f32.mrf.mxu0
  %854 = vmatprep.mubr.bf16.mxu0 0
  %855 = vmatmul.mubr.bf16.gmra.mxu0 %v761
  %v856 = vpop.f32.mrf.mxu0
  %v857 = vadd.f32 %v564, %v856
  %v858 = vpop.f32.mrf.mxu0
  %v859 = vpop.f32.mrf.mxu0
  %v860 = vadd.f32 %v567, %v859
  %v861 = vpop.f32.mrf.mxu0
  %862 = vmatprep.mubr.bf16.mxu0 0
  %863 = vmatmul.mubr.bf16.gmra.mxu0 %v764
  %v864 = vpop.f32.mrf.mxu0
  %v865 = vadd.f32 %v572, %v864
  %v866 = vpop.f32.mrf.mxu0
  %v867 = vpop.f32.mrf.mxu0
  %v868 = vadd.f32 %v575, %v867
  %v869 = vpop.f32.mrf.mxu0
  %870 = vmatprep.mubr.bf16.mxu0 0
  %871 = vmatmul.mubr.bf16.gmra.mxu0 %v767
  %v872 = vpop.f32.mrf.mxu0
  %v873 = vadd.f32 %v580, %v872
  %v874 = vpop.f32.mrf.mxu0
  %v875 = vpop.f32.mrf.mxu0
  %v876 = vadd.f32 %v583, %v875
  %v877 = vpop.f32.mrf.mxu0
  %878 = vmatprep.mubr.bf16.mxu0 0
  %879 = vmatmul.mubr.bf16.gmra.mxu0 %v770
  %v880 = vpop.f32.mrf.mxu0
  %v881 = vadd.f32 %v588, %v880
  %v882 = vpop.f32.mrf.mxu0
  %v883 = vpop.f32.mrf.mxu0
  %v884 = vadd.f32 %v591, %v883
  %v885 = vpop.f32.mrf.mxu0
  %886 = vmatprep.mubr.bf16.mxu0 0
  %887 = vmatmul.mubr.bf16.gmra.mxu0 %v773
  %v888 = vpop.f32.mrf.mxu0
  %v889 = vadd.f32 %v596, %v888
  %v890 = vpop.f32.mrf.mxu0
  %v891 = vpop.f32.mrf.mxu0
  %v892 = vadd.f32 %v599, %v891
  %v893 = vpop.f32.mrf.mxu0
  %894 = vmatprep.mubr.bf16.mxu0 0
  %895 = vmatmul.mubr.bf16.gmra.mxu0 %v776
  %v896 = vpop.f32.mrf.mxu0
  %v897 = vadd.f32 %v604, %v896
  %v898 = vpop.f32.mrf.mxu0
  %v899 = vpop.f32.mrf.mxu0
  %v900 = vadd.f32 %v607, %v899
  %v901 = vpop.f32.mrf.mxu0
  %902 = vmatprep.mubr.bf16.mxu0 0
  %903 = vmatmul.mubr.bf16.gmra.mxu0 %v779
  %v904 = vpop.f32.mrf.mxu0
  %v905 = vadd.f32 %v612, %v904
  %v906 = vpop.f32.mrf.mxu0
  %v907 = vpop.f32.mrf.mxu0
  %v908 = vadd.f32 %v615, %v907
  %v909 = vpop.f32.mrf.mxu0
  %910 = vmatprep.mubr.bf16.mxu0 0
  %911 = vmatmul.mubr.bf16.gmra.mxu0 %v782
  %v912 = vpop.f32.mrf.mxu0
  %v913 = vadd.f32 %v620, %v912
  %v914 = vpop.f32.mrf.mxu0
  %v915 = vpop.f32.mrf.mxu0
  %v916 = vadd.f32 %v623, %v915
  %v917 = vpop.f32.mrf.mxu0
  %918 = vmatprep.mubr.bf16.mxu0 0
  %919 = vmatmul.mubr.bf16.gmra.mxu0 %v785
  %v920 = vpop.f32.mrf.mxu0
  %v921 = vadd.f32 %v628, %v920
  %v922 = vpop.f32.mrf.mxu0
  %v923 = vpop.f32.mrf.mxu0
  %v924 = vadd.f32 %v631, %v923
  %v925 = vpop.f32.mrf.mxu0
  %926 = vmatprep.mubr.bf16.mxu0 0
  %927 = vmatmul.mubr.bf16.gmra.mxu0 %v788
  %v928 = vpop.f32.mrf.mxu0
  %v929 = vadd.f32 %v636, %v928
  %v930 = vpop.f32.mrf.mxu0
  %v931 = vpop.f32.mrf.mxu0
  %v932 = vadd.f32 %v639, %v931
  %v933 = vpop.f32.mrf.mxu0
  %934 = vdwg.mxu0
  %s935 = scalar_lea.vmem %s1, 96
  %v936 = vld [vmem:[%s935] sm:$0xf]
  %v937 = vld [vmem:[%s935 + $0x4] sm:$0xf]
  %v938 = vld [vmem:[%s935 + $0x8] sm:$0xf]
  %v939 = vld [vmem:[%s935 + $0xc] sm:$0xf]
  %v940 = vld [vmem:[%s935 + $0x10] sm:$0xf]
  %v941 = vld [vmem:[%s935 + $0x14] sm:$0xf]
  %v942 = vld [vmem:[%s935 + $0x18] sm:$0xf]
  %v943 = vld [vmem:[%s935 + $0x1c] sm:$0xf]
  %v944 = vld [vmem:[%s935 + $0x20] sm:$0xf]
  %v945 = vld [vmem:[%s935 + $0x24] sm:$0xf]
  %v946 = vld [vmem:[%s935 + $0x28] sm:$0xf]
  %v947 = vld [vmem:[%s935 + $0x2c] sm:$0xf]
  %v976 = vunpack.c.l.b16 %v68
  %v977 = vunpack.c.l.b16 %v69
  %v978 = vunpack.c.l.b16 %v70
  %v979 = vunpack.c.l.b16 %v71
  %v980 = vunpack.c.l.b16 %v72
  %v981 = vunpack.c.l.b16 %v73
  %v982 = vunpack.c.l.b16 %v74
  %v983 = vunpack.c.l.b16 %v75
  %v984 = vunpack.c.l.b16 %v76
  %v985 = vunpack.c.l.b16 %v77
  %v986 = vunpack.c.l.b16 %v78
  %v987 = vunpack.c.l.b16 %v79
  %v988 = vunpack.c.l.b16 %v80
  %v989 = vunpack.c.l.b16 %v81
  %v990 = vunpack.c.l.b16 %v82
  %v991 = vunpack.c.l.b16 %v83
  %v992 = vunpack.c.l.b16 %v84
  %v993 = vunpack.c.l.b16 %v85
  %v994 = vunpack.c.l.b16 %v86
  %v995 = vunpack.c.l.b16 %v87
  %v996 = vunpack.c.l.b16 %v88
  %v997 = vunpack.c.l.b16 %v89
  %v998 = vunpack.c.l.b16 %v90
  %v999 = vunpack.c.l.b16 %v91
  %v1000 = vunpack.c.l.b16 %v92
  %v1001 = vunpack.c.l.b16 %v93
  %v1002 = vunpack.c.l.b16 %v94
  %v1003 = vunpack.c.l.b16 %v95
  %v1004 = vpack.c.b16 %v977, %v976
  %v1005 = vpack.c.b16 %v979, %v978
  %v1006 = vpack.c.b16 %v981, %v980
  %v1007 = vpack.c.b16 %v983, %v982
  %v1008 = vpack.c.b16 %v985, %v984
  %v1009 = vpack.c.b16 %v987, %v986
  %v1010 = vpack.c.b16 %v989, %v988
  %v1011 = vpack.c.b16 %v991, %v990
  %v1012 = vpack.c.b16 %v993, %v992
  %v1013 = vpack.c.b16 %v995, %v994
  %v1014 = vpack.c.b16 %v997, %v996
  %v1015 = vpack.c.b16 %v999, %v998
  %v1016 = vpack.c.b16 %v1001, %v1000
  %v1017 = vpack.c.b16 %v1003, %v1002
  %v1030 = vunpack.c.l.b16 %v936
  %v1031 = vunpack.c.l.b16 %v937
  %v1032 = vunpack.c.l.b16 %v938
  %v1033 = vunpack.c.l.b16 %v939
  %v1034 = vunpack.c.l.b16 %v940
  %v1035 = vunpack.c.l.b16 %v941
  %v1036 = vunpack.c.l.b16 %v942
  %v1037 = vunpack.c.l.b16 %v943
  %v1038 = vunpack.c.l.b16 %v944
  %v1039 = vunpack.c.l.b16 %v945
  %v1040 = vunpack.c.l.b16 %v946
  %v1041 = vunpack.c.l.b16 %v947
  %v1042 = vpack.c.b16 %v1031, %v1030
  %v1043 = vpack.c.b16 %v1033, %v1032
  %v1044 = vpack.c.b16 %v1035, %v1034
  %v1045 = vpack.c.b16 %v1037, %v1036
  %v1046 = vpack.c.b16 %v1039, %v1038
  %v1047 = vpack.c.b16 %v1041, %v1040
  %v1055 = vsel %vm454, %v1004, 0
  %v1058 = vsel %vm454, %v1005, 0
  %v1061 = vsel %vm454, %v1006, 0
  %v1064 = vsel %vm454, %v1007, 0
  %v1067 = vsel %vm454, %v1008, 0
  %v1070 = vsel %vm454, %v1009, 0
  %v1073 = vsel %vm454, %v1010, 0
  %v1076 = vsel %vm454, %v1011, 0
  %v1079 = vsel %vm454, %v1012, 0
  %v1082 = vsel %vm454, %v1013, 0
  %v1085 = vsel %vm454, %v1014, 0
  %v1088 = vsel %vm454, %v1015, 0
  %v1091 = vsel %vm454, %v1016, 0
  %v1094 = vsel %vm454, %v1017, 0
  %1096 = vmatprep.subr.bf16.mxu0 0
  %1097 = vmatpush1.bf16.msra.mxu0 0
  %1098 = vmatprep.subr.bf16.mxu0 0
  %1099 = vmatpush1.bf16.msra.mxu0 0
  %1100 = vmatprep.subr.bf16.mxu0 0
  %1101 = vmatpush1.bf16.msra.mxu0 %v1047
  %1102 = vmatprep.subr.bf16.mxu0 0
  %1103 = vmatpush1.bf16.msra.mxu0 %v1046
  %1104 = vmatprep.subr.bf16.mxu0 0
  %1105 = vmatpush1.bf16.msra.mxu0 %v1045
  %1106 = vmatprep.subr.bf16.mxu0 0
  %1107 = vmatpush1.bf16.msra.mxu0 %v1044
  %1108 = vmatprep.subr.bf16.mxu0 0
  %1109 = vmatpush1.bf16.msra.mxu0 %v1043
  %1110 = vmatprep.subr.bf16.mxu0 0
  %1111 = vmatpush1.bf16.msra.mxu0 %v1042
  %1112 = vmatprep.subr.bf16.mxu0 0
  %1113 = vmatpush2.bf16.msra.mxu0 0
  %1114 = vmatprep.subr.bf16.mxu0 0
  %1115 = vmatpush2.bf16.msra.mxu0 0
  %1116 = vmatprep.subr.bf16.mxu0 0
  %1117 = vmatpush2.bf16.msra.mxu0 0
  %1118 = vmatprep.subr.bf16.mxu0 0
  %1119 = vmatpush2.bf16.msra.mxu0 0
  %1120 = vmatprep.subr.bf16.mxu0 0
  %1121 = vmatpush2.bf16.msra.mxu0 0
  %1122 = vmatprep.subr.bf16.mxu0 0
  %1123 = vmatpush2.bf16.msra.mxu0 0
  %1124 = vmatprep.subr.bf16.mxu0 0
  %1125 = vmatpush2.bf16.msra.mxu0 0
  %1126 = vmatprep.subr.bf16.mxu0 0
  %1127 = vmatpush2.bf16.msra.mxu0 0
  %1128 = vmatprep.mubr.bf16.mxu0 0
  %1129 = vmatmul.mubr.bf16.gmra.mxu0 %v1055
  %v1130 = vpop.f32.mrf.mxu0
  %v1131 = vadd.f32 0.0, %v1130
  %v1132 = vpop.f32.mrf.mxu0
  %v1133 = vpop.f32.mrf.mxu0
  %v1134 = vadd.f32 0.0, %v1133
  %v1135 = vpop.f32.mrf.mxu0
  %1136 = vmatprep.mubr.bf16.mxu0 0
  %1137 = vmatmul.mubr.bf16.gmra.mxu0 %v1058
  %v1138 = vpop.f32.mrf.mxu0
  %v1139 = vadd.f32 0.0, %v1138
  %v1140 = vpop.f32.mrf.mxu0
  %v1141 = vpop.f32.mrf.mxu0
  %v1142 = vadd.f32 0.0, %v1141
  %v1143 = vpop.f32.mrf.mxu0
  %1144 = vmatprep.mubr.bf16.mxu0 0
  %1145 = vmatmul.mubr.bf16.gmra.mxu0 %v1061
  %v1146 = vpop.f32.mrf.mxu0
  %v1147 = vadd.f32 0.0, %v1146
  %v1148 = vpop.f32.mrf.mxu0
  %v1149 = vpop.f32.mrf.mxu0
  %v1150 = vadd.f32 0.0, %v1149
  %v1151 = vpop.f32.mrf.mxu0
  %1152 = vmatprep.mubr.bf16.mxu0 0
  %1153 = vmatmul.mubr.bf16.gmra.mxu0 %v1064
  %v1154 = vpop.f32.mrf.mxu0
  %v1155 = vadd.f32 0.0, %v1154
  %v1156 = vpop.f32.mrf.mxu0
  %v1157 = vpop.f32.mrf.mxu0
  %v1158 = vadd.f32 0.0, %v1157
  %v1159 = vpop.f32.mrf.mxu0
  %1160 = vmatprep.mubr.bf16.mxu0 0
  %1161 = vmatmul.mubr.bf16.gmra.mxu0 %v1067
  %v1162 = vpop.f32.mrf.mxu0
  %v1163 = vadd.f32 0.0, %v1162
  %v1164 = vpop.f32.mrf.mxu0
  %v1165 = vpop.f32.mrf.mxu0
  %v1166 = vadd.f32 0.0, %v1165
  %v1167 = vpop.f32.mrf.mxu0
  %1168 = vmatprep.mubr.bf16.mxu0 0
  %1169 = vmatmul.mubr.bf16.gmra.mxu0 %v1070
  %v1170 = vpop.f32.mrf.mxu0
  %v1171 = vadd.f32 0.0, %v1170
  %v1172 = vpop.f32.mrf.mxu0
  %v1173 = vpop.f32.mrf.mxu0
  %v1174 = vadd.f32 0.0, %v1173
  %v1175 = vpop.f32.mrf.mxu0
  %1176 = vmatprep.mubr.bf16.mxu0 0
  %1177 = vmatmul.mubr.bf16.gmra.mxu0 %v1073
  %v1178 = vpop.f32.mrf.mxu0
  %v1179 = vadd.f32 0.0, %v1178
  %v1180 = vpop.f32.mrf.mxu0
  %v1181 = vpop.f32.mrf.mxu0
  %v1182 = vadd.f32 0.0, %v1181
  %v1183 = vpop.f32.mrf.mxu0
  %1184 = vmatprep.mubr.bf16.mxu0 0
  %1185 = vmatmul.mubr.bf16.gmra.mxu0 %v1076
  %v1186 = vpop.f32.mrf.mxu0
  %v1187 = vadd.f32 0.0, %v1186
  %v1188 = vpop.f32.mrf.mxu0
  %v1189 = vpop.f32.mrf.mxu0
  %v1190 = vadd.f32 0.0, %v1189
  %v1191 = vpop.f32.mrf.mxu0
  %1192 = vmatprep.mubr.bf16.mxu0 0
  %1193 = vmatmul.mubr.bf16.gmra.mxu0 %v1079
  %v1194 = vpop.f32.mrf.mxu0
  %v1195 = vadd.f32 0.0, %v1194
  %v1196 = vpop.f32.mrf.mxu0
  %v1197 = vpop.f32.mrf.mxu0
  %v1198 = vadd.f32 0.0, %v1197
  %v1199 = vpop.f32.mrf.mxu0
  %1200 = vmatprep.mubr.bf16.mxu0 0
  %1201 = vmatmul.mubr.bf16.gmra.mxu0 %v1082
  %v1202 = vpop.f32.mrf.mxu0
  %v1203 = vadd.f32 0.0, %v1202
  %v1204 = vpop.f32.mrf.mxu0
  %v1205 = vpop.f32.mrf.mxu0
  %v1206 = vadd.f32 0.0, %v1205
  %v1207 = vpop.f32.mrf.mxu0
  %1208 = vmatprep.mubr.bf16.mxu0 0
  %1209 = vmatmul.mubr.bf16.gmra.mxu0 %v1085
  %v1210 = vpop.f32.mrf.mxu0
  %v1211 = vadd.f32 0.0, %v1210
  %v1212 = vpop.f32.mrf.mxu0
  %v1213 = vpop.f32.mrf.mxu0
  %v1214 = vadd.f32 0.0, %v1213
  %v1215 = vpop.f32.mrf.mxu0
  %1216 = vmatprep.mubr.bf16.mxu0 0
  %1217 = vmatmul.mubr.bf16.gmra.mxu0 %v1088
  %v1218 = vpop.f32.mrf.mxu0
  %v1219 = vadd.f32 0.0, %v1218
  %v1220 = vpop.f32.mrf.mxu0
  %v1221 = vpop.f32.mrf.mxu0
  %v1222 = vadd.f32 0.0, %v1221
  %v1223 = vpop.f32.mrf.mxu0
  %1224 = vmatprep.mubr.bf16.mxu0 0
  %1225 = vmatmul.mubr.bf16.gmra.mxu0 %v1091
  %v1226 = vpop.f32.mrf.mxu0
  %v1227 = vadd.f32 0.0, %v1226
  %v1228 = vpop.f32.mrf.mxu0
  %v1229 = vpop.f32.mrf.mxu0
  %v1230 = vadd.f32 0.0, %v1229
  %v1231 = vpop.f32.mrf.mxu0
  %1232 = vmatprep.mubr.bf16.mxu0 0
  %1233 = vmatmul.mubr.bf16.gmra.mxu0 %v1094
  %v1234 = vpop.f32.mrf.mxu0
  %v1235 = vadd.f32 0.0, %v1234
  %v1236 = vpop.f32.mrf.mxu0
  %v1237 = vpop.f32.mrf.mxu0
  %v1238 = vadd.f32 0.0, %v1237
  %v1239 = vpop.f32.mrf.mxu0
  %1240 = vdwg.mxu0
  %v1241 = vadd.f32 %v825, %v1131
  %v1242 = vadd.f32 %v828, %v1134
  %v1243 = vadd.f32 %v833, %v1139
  %v1244 = vadd.f32 %v836, %v1142
  %v1245 = vadd.f32 %v841, %v1147
  %v1246 = vadd.f32 %v844, %v1150
  %v1247 = vadd.f32 %v849, %v1155
  %v1248 = vadd.f32 %v852, %v1158
  %v1249 = vadd.f32 %v857, %v1163
  %v1250 = vadd.f32 %v860, %v1166
  %v1251 = vadd.f32 %v865, %v1171
  %v1252 = vadd.f32 %v868, %v1174
  %v1253 = vadd.f32 %v873, %v1179
  %v1254 = vadd.f32 %v876, %v1182
  %v1255 = vadd.f32 %v881, %v1187
  %v1256 = vadd.f32 %v884, %v1190
  %v1257 = vadd.f32 %v889, %v1195
  %v1258 = vadd.f32 %v892, %v1198
  %v1259 = vadd.f32 %v897, %v1203
  %v1260 = vadd.f32 %v900, %v1206
  %v1261 = vadd.f32 %v905, %v1211
  %v1262 = vadd.f32 %v908, %v1214
  %v1263 = vadd.f32 %v913, %v1219
  %v1264 = vadd.f32 %v916, %v1222
  %v1265 = vadd.f32 %v921, %v1227
  %v1266 = vadd.f32 %v924, %v1230
  %v1267 = vadd.f32 %v929, %v1235
  %v1268 = vadd.f32 %v932, %v1238
  %s1269 = scalar_lea.vmem %s1, 144
  %v1270 = vld [vmem:[%s1269] sm:$0xf]
  %v1271 = vld [vmem:[%s1269 + $0x4] sm:$0xf]
  %v1272 = vld [vmem:[%s1269 + $0x8] sm:$0xf]
  %v1273 = vld [vmem:[%s1269 + $0xc] sm:$0xf]
  %v1274 = vld [vmem:[%s1269 + $0x10] sm:$0xf]
  %v1275 = vld [vmem:[%s1269 + $0x14] sm:$0xf]
  %v1276 = vld [vmem:[%s1269 + $0x18] sm:$0xf]
  %v1277 = vld [vmem:[%s1269 + $0x1c] sm:$0xf]
  %v1278 = vld [vmem:[%s1269 + $0x20] sm:$0xf]
  %v1279 = vld [vmem:[%s1269 + $0x24] sm:$0xf]
  %v1280 = vld [vmem:[%s1269 + $0x28] sm:$0xf]
  %v1281 = vld [vmem:[%s1269 + $0x2c] sm:$0xf]
  %v1310 = vunpack.c.l.b16 %v153
  %v1311 = vunpack.c.h.b16 %v153
  %v1312 = vunpack.c.l.b16 %v154
  %v1313 = vunpack.c.h.b16 %v154
  %v1314 = vunpack.c.l.b16 %v155
  %v1315 = vunpack.c.h.b16 %v155
  %v1316 = vunpack.c.l.b16 %v156
  %v1317 = vunpack.c.h.b16 %v156
  %v1318 = vunpack.c.l.b16 %v157
  %v1319 = vunpack.c.h.b16 %v157
  %v1320 = vunpack.c.l.b16 %v158
  %v1321 = vunpack.c.h.b16 %v158
  %v1322 = vunpack.c.l.b16 %v159
  %v1323 = vunpack.c.h.b16 %v159
  %v1324 = vunpack.c.l.b16 %v160
  %v1325 = vunpack.c.h.b16 %v160
  %v1326 = vunpack.c.l.b16 %v161
  %v1327 = vunpack.c.h.b16 %v161
  %v1328 = vunpack.c.l.b16 %v162
  %v1329 = vunpack.c.h.b16 %v162
  %v1330 = vunpack.c.l.b16 %v163
  %v1331 = vunpack.c.h.b16 %v163
  %v1332 = vunpack.c.l.b16 %v164
  %v1333 = vunpack.c.h.b16 %v164
  %v1334 = vunpack.c.l.b16 %v165
  %v1335 = vunpack.c.h.b16 %v165
  %v1336 = vunpack.c.l.b16 %v166
  %v1337 = vunpack.c.h.b16 %v166
  %v1338 = vunpack.c.l.b16 %v167
  %v1339 = vunpack.c.h.b16 %v167
  %v1340 = vunpack.c.l.b16 %v168
  %v1341 = vunpack.c.h.b16 %v168
  %v1342 = vunpack.c.l.b16 %v169
  %v1343 = vunpack.c.h.b16 %v169
  %v1344 = vunpack.c.l.b16 %v170
  %v1345 = vunpack.c.h.b16 %v170
  %v1346 = vunpack.c.l.b16 %v171
  %v1347 = vunpack.c.h.b16 %v171
  %v1348 = vunpack.c.l.b16 %v172
  %v1349 = vunpack.c.h.b16 %v172
  %v1350 = vunpack.c.l.b16 %v173
  %v1351 = vunpack.c.h.b16 %v173
  %v1352 = vunpack.c.l.b16 %v174
  %v1353 = vunpack.c.h.b16 %v174
  %v1354 = vunpack.c.l.b16 %v175
  %v1355 = vunpack.c.h.b16 %v175
  %v1356 = vunpack.c.l.b16 %v176
  %v1357 = vunpack.c.h.b16 %v176
  %v1358 = vunpack.c.l.b16 %v177
  %v1359 = vunpack.c.h.b16 %v177
  %v1360 = vunpack.c.l.b16 %v178
  %v1361 = vunpack.c.h.b16 %v178
  %v1362 = vunpack.c.l.b16 %v179
  %v1363 = vunpack.c.h.b16 %v179
  %v1364 = vunpack.c.l.b16 %v180
  %v1365 = vunpack.c.h.b16 %v180
  %v1366 = vpack.c.b16 %v1312, %v1310
  %v1367 = vpack.c.b16 %v1313, %v1311
  %v1368 = vpack.c.b16 %v1316, %v1314
  %v1369 = vpack.c.b16 %v1317, %v1315
  %v1370 = vpack.c.b16 %v1320, %v1318
  %v1371 = vpack.c.b16 %v1321, %v1319
  %v1372 = vpack.c.b16 %v1324, %v1322
  %v1373 = vpack.c.b16 %v1325, %v1323
  %v1374 = vpack.c.b16 %v1328, %v1326
  %v1375 = vpack.c.b16 %v1329, %v1327
  %v1376 = vpack.c.b16 %v1332, %v1330
  %v1377 = vpack.c.b16 %v1333, %v1331
  %v1378 = vpack.c.b16 %v1336, %v1334
  %v1379 = vpack.c.b16 %v1337, %v1335
  %v1380 = vpack.c.b16 %v1340, %v1338
  %v1381 = vpack.c.b16 %v1341, %v1339
  %v1382 = vpack.c.b16 %v1344, %v1342
  %v1383 = vpack.c.b16 %v1345, %v1343
  %v1384 = vpack.c.b16 %v1348, %v1346
  %v1385 = vpack.c.b16 %v1349, %v1347
  %v1386 = vpack.c.b16 %v1352, %v1350
  %v1387 = vpack.c.b16 %v1353, %v1351
  %v1388 = vpack.c.b16 %v1356, %v1354
  %v1389 = vpack.c.b16 %v1357, %v1355
  %v1390 = vpack.c.b16 %v1360, %v1358
  %v1391 = vpack.c.b16 %v1361, %v1359
  %v1392 = vpack.c.b16 %v1364, %v1362
  %v1393 = vpack.c.b16 %v1365, %v1363
  %1394 = vrot.lane.b32.xlu0 %v1366, 32
  %v1395 = vpop.permute.xlu0 %1394
  %1396 = vrot.lane.b32.xlu0 %v1367, 32
  %v1397 = vpop.permute.xlu0 %1396
  %1398 = vrot.lane.b32.xlu0 %v1368, 32
  %v1399 = vpop.permute.xlu0 %1398
  %1400 = vrot.lane.b32.xlu0 %v1369, 32
  %v1401 = vpop.permute.xlu0 %1400
  %1402 = vrot.lane.b32.xlu0 %v1370, 32
  %v1403 = vpop.permute.xlu0 %1402
  %1404 = vrot.lane.b32.xlu0 %v1371, 32
  %v1405 = vpop.permute.xlu0 %1404
  %1406 = vrot.lane.b32.xlu0 %v1372, 32
  %v1407 = vpop.permute.xlu0 %1406
  %1408 = vrot.lane.b32.xlu0 %v1373, 32
  %v1409 = vpop.permute.xlu0 %1408
  %1410 = vrot.lane.b32.xlu0 %v1374, 32
  %v1411 = vpop.permute.xlu0 %1410
  %1412 = vrot.lane.b32.xlu0 %v1375, 32
  %v1413 = vpop.permute.xlu0 %1412
  %1414 = vrot.lane.b32.xlu0 %v1376, 32
  %v1415 = vpop.permute.xlu0 %1414
  %1416 = vrot.lane.b32.xlu0 %v1377, 32
  %v1417 = vpop.permute.xlu0 %1416
  %1418 = vrot.lane.b32.xlu0 %v1378, 32
  %v1419 = vpop.permute.xlu0 %1418
  %1420 = vrot.lane.b32.xlu0 %v1379, 32
  %v1421 = vpop.permute.xlu0 %1420
  %1422 = vrot.lane.b32.xlu0 %v1380, 32
  %v1423 = vpop.permute.xlu0 %1422
  %1424 = vrot.lane.b32.xlu0 %v1381, 32
  %v1425 = vpop.permute.xlu0 %1424
  %1426 = vrot.lane.b32.xlu0 %v1382, 32
  %v1427 = vpop.permute.xlu0 %1426
  %1428 = vrot.lane.b32.xlu0 %v1383, 32
  %v1429 = vpop.permute.xlu0 %1428
  %1430 = vrot.lane.b32.xlu0 %v1384, 32
  %v1431 = vpop.permute.xlu0 %1430
  %1432 = vrot.lane.b32.xlu0 %v1385, 32
  %v1433 = vpop.permute.xlu0 %1432
  %1434 = vrot.lane.b32.xlu0 %v1386, 32
  %v1435 = vpop.permute.xlu0 %1434
  %1436 = vrot.lane.b32.xlu0 %v1387, 32
  %v1437 = vpop.permute.xlu0 %1436
  %1438 = vrot.lane.b32.xlu0 %v1388, 32
  %v1439 = vpop.permute.xlu0 %1438
  %1440 = vrot.lane.b32.xlu0 %v1389, 32
  %v1441 = vpop.permute.xlu0 %1440
  %1442 = vrot.lane.b32.xlu0 %v1390, 32
  %v1443 = vpop.permute.xlu0 %1442
  %1444 = vrot.lane.b32.xlu0 %v1391, 32
  %v1445 = vpop.permute.xlu0 %1444
  %1446 = vrot.lane.b32.xlu0 %v1392, 32
  %v1447 = vpop.permute.xlu0 %1446
  %1448 = vrot.lane.b32.xlu0 %v1393, 32
  %v1449 = vpop.permute.xlu0 %1448
  %v1450 = vsel %vm403, %v1395, %v1397
  %v1451 = vsel %vm403, %v1399, %v1401
  %v1452 = vsel %vm403, %v1403, %v1405
  %v1453 = vsel %vm403, %v1407, %v1409
  %v1454 = vsel %vm403, %v1411, %v1413
  %v1455 = vsel %vm403, %v1415, %v1417
  %v1456 = vsel %vm403, %v1419, %v1421
  %v1457 = vsel %vm403, %v1423, %v1425
  %v1458 = vsel %vm403, %v1427, %v1429
  %v1459 = vsel %vm403, %v1431, %v1433
  %v1460 = vsel %vm403, %v1435, %v1437
  %v1461 = vsel %vm403, %v1439, %v1441
  %v1462 = vsel %vm403, %v1443, %v1445
  %v1463 = vsel %vm403, %v1447, %v1449
  %v1476 = vunpack.c.l.b16 %v1270
  %v1477 = vunpack.c.l.b16 %v1271
  %v1478 = vunpack.c.l.b16 %v1272
  %v1479 = vunpack.c.l.b16 %v1273
  %v1480 = vunpack.c.l.b16 %v1274
  %v1481 = vunpack.c.l.b16 %v1275
  %v1482 = vunpack.c.l.b16 %v1276
  %v1483 = vunpack.c.l.b16 %v1277
  %v1484 = vunpack.c.l.b16 %v1278
  %v1485 = vunpack.c.l.b16 %v1279
  %v1486 = vunpack.c.l.b16 %v1280
  %v1487 = vunpack.c.l.b16 %v1281
  %v1488 = vpack.c.b16 %v1477, %v1476
  %v1489 = vpack.c.b16 %v1479, %v1478
  %v1490 = vpack.c.b16 %v1481, %v1480
  %v1491 = vpack.c.b16 %v1483, %v1482
  %v1492 = vpack.c.b16 %v1485, %v1484
  %v1493 = vpack.c.b16 %v1487, %v1486
  %v1501 = vsel %vm454, %v1450, 0
  %v1504 = vsel %vm454, %v1451, 0
  %v1507 = vsel %vm454, %v1452, 0
  %v1510 = vsel %vm454, %v1453, 0
  %v1513 = vsel %vm454, %v1454, 0
  %v1516 = vsel %vm454, %v1455, 0
  %v1519 = vsel %vm454, %v1456, 0
  %v1522 = vsel %vm454, %v1457, 0
  %v1525 = vsel %vm454, %v1458, 0
  %v1528 = vsel %vm454, %v1459, 0
  %v1531 = vsel %vm454, %v1460, 0
  %v1534 = vsel %vm454, %v1461, 0
  %v1537 = vsel %vm454, %v1462, 0
  %v1540 = vsel %vm454, %v1463, 0
  %1542 = vmatprep.subr.bf16.mxu0 0
  %1543 = vmatpush1.bf16.msra.mxu0 0
  %1544 = vmatprep.subr.bf16.mxu0 0
  %1545 = vmatpush1.bf16.msra.mxu0 0
  %1546 = vmatprep.subr.bf16.mxu0 0
  %1547 = vmatpush1.bf16.msra.mxu0 %v1493
  %1548 = vmatprep.subr.bf16.mxu0 0
  %1549 = vmatpush1.bf16.msra.mxu0 %v1492
  %1550 = vmatprep.subr.bf16.mxu0 0
  %1551 = vmatpush1.bf16.msra.mxu0 %v1491
  %1552 = vmatprep.subr.bf16.mxu0 0
  %1553 = vmatpush1.bf16.msra.mxu0 %v1490
  %1554 = vmatprep.subr.bf16.mxu0 0
  %1555 = vmatpush1.bf16.msra.mxu0 %v1489
  %1556 = vmatprep.subr.bf16.mxu0 0
  %1557 = vmatpush1.bf16.msra.mxu0 %v1488
  %1558 = vmatprep.subr.bf16.mxu0 0
  %1559 = vmatpush2.bf16.msra.mxu0 0
  %1560 = vmatprep.subr.bf16.mxu0 0
  %1561 = vmatpush2.bf16.msra.mxu0 0
  %1562 = vmatprep.subr.bf16.mxu0 0
  %1563 = vmatpush2.bf16.msra.mxu0 0
  %1564 = vmatprep.subr.bf16.mxu0 0
  %1565 = vmatpush2.bf16.msra.mxu0 0
  %1566 = vmatprep.subr.bf16.mxu0 0
  %1567 = vmatpush2.bf16.msra.mxu0 0
  %1568 = vmatprep.subr.bf16.mxu0 0
  %1569 = vmatpush2.bf16.msra.mxu0 0
  %1570 = vmatprep.subr.bf16.mxu0 0
  %1571 = vmatpush2.bf16.msra.mxu0 0
  %1572 = vmatprep.subr.bf16.mxu0 0
  %1573 = vmatpush2.bf16.msra.mxu0 0
  %1574 = vmatprep.mubr.bf16.mxu0 0
  %1575 = vmatmul.mubr.bf16.gmra.mxu0 %v1501
  %v1576 = vpop.f32.mrf.mxu0
  %v1577 = vadd.f32 0.0, %v1576
  %v1578 = vpop.f32.mrf.mxu0
  %v1579 = vpop.f32.mrf.mxu0
  %v1580 = vadd.f32 0.0, %v1579
  %v1581 = vpop.f32.mrf.mxu0
  %1582 = vmatprep.mubr.bf16.mxu0 0
  %1583 = vmatmul.mubr.bf16.gmra.mxu0 %v1504
  %v1584 = vpop.f32.mrf.mxu0
  %v1585 = vadd.f32 0.0, %v1584
  %v1586 = vpop.f32.mrf.mxu0
  %v1587 = vpop.f32.mrf.mxu0
  %v1588 = vadd.f32 0.0, %v1587
  %v1589 = vpop.f32.mrf.mxu0
  %1590 = vmatprep.mubr.bf16.mxu0 0
  %1591 = vmatmul.mubr.bf16.gmra.mxu0 %v1507
  %v1592 = vpop.f32.mrf.mxu0
  %v1593 = vadd.f32 0.0, %v1592
  %v1594 = vpop.f32.mrf.mxu0
  %v1595 = vpop.f32.mrf.mxu0
  %v1596 = vadd.f32 0.0, %v1595
  %v1597 = vpop.f32.mrf.mxu0
  %1598 = vmatprep.mubr.bf16.mxu0 0
  %1599 = vmatmul.mubr.bf16.gmra.mxu0 %v1510
  %v1600 = vpop.f32.mrf.mxu0
  %v1601 = vadd.f32 0.0, %v1600
  %v1602 = vpop.f32.mrf.mxu0
  %v1603 = vpop.f32.mrf.mxu0
  %v1604 = vadd.f32 0.0, %v1603
  %v1605 = vpop.f32.mrf.mxu0
  %1606 = vmatprep.mubr.bf16.mxu0 0
  %1607 = vmatmul.mubr.bf16.gmra.mxu0 %v1513
  %v1608 = vpop.f32.mrf.mxu0
  %v1609 = vadd.f32 0.0, %v1608
  %v1610 = vpop.f32.mrf.mxu0
  %v1611 = vpop.f32.mrf.mxu0
  %v1612 = vadd.f32 0.0, %v1611
  %v1613 = vpop.f32.mrf.mxu0
  %1614 = vmatprep.mubr.bf16.mxu0 0
  %1615 = vmatmul.mubr.bf16.gmra.mxu0 %v1516
  %v1616 = vpop.f32.mrf.mxu0
  %v1617 = vadd.f32 0.0, %v1616
  %v1618 = vpop.f32.mrf.mxu0
  %v1619 = vpop.f32.mrf.mxu0
  %v1620 = vadd.f32 0.0, %v1619
  %v1621 = vpop.f32.mrf.mxu0
  %1622 = vmatprep.mubr.bf16.mxu0 0
  %1623 = vmatmul.mubr.bf16.gmra.mxu0 %v1519
  %v1624 = vpop.f32.mrf.mxu0
  %v1625 = vadd.f32 0.0, %v1624
  %v1626 = vpop.f32.mrf.mxu0
  %v1627 = vpop.f32.mrf.mxu0
  %v1628 = vadd.f32 0.0, %v1627
  %v1629 = vpop.f32.mrf.mxu0
  %1630 = vmatprep.mubr.bf16.mxu0 0
  %1631 = vmatmul.mubr.bf16.gmra.mxu0 %v1522
  %v1632 = vpop.f32.mrf.mxu0
  %v1633 = vadd.f32 0.0, %v1632
  %v1634 = vpop.f32.mrf.mxu0
  %v1635 = vpop.f32.mrf.mxu0
  %v1636 = vadd.f32 0.0, %v1635
  %v1637 = vpop.f32.mrf.mxu0
  %1638 = vmatprep.mubr.bf16.mxu0 0
  %1639 = vmatmul.mubr.bf16.gmra.mxu0 %v1525
  %v1640 = vpop.f32.mrf.mxu0
  %v1641 = vadd.f32 0.0, %v1640
  %v1642 = vpop.f32.mrf.mxu0
  %v1643 = vpop.f32.mrf.mxu0
  %v1644 = vadd.f32 0.0, %v1643
  %v1645 = vpop.f32.mrf.mxu0
  %1646 = vmatprep.mubr.bf16.mxu0 0
  %1647 = vmatmul.mubr.bf16.gmra.mxu0 %v1528
  %v1648 = vpop.f32.mrf.mxu0
  %v1649 = vadd.f32 0.0, %v1648
  %v1650 = vpop.f32.mrf.mxu0
  %v1651 = vpop.f32.mrf.mxu0
  %v1652 = vadd.f32 0.0, %v1651
  %v1653 = vpop.f32.mrf.mxu0
  %1654 = vmatprep.mubr.bf16.mxu0 0
  %1655 = vmatmul.mubr.bf16.gmra.mxu0 %v1531
  %v1656 = vpop.f32.mrf.mxu0
  %v1657 = vadd.f32 0.0, %v1656
  %v1658 = vpop.f32.mrf.mxu0
  %v1659 = vpop.f32.mrf.mxu0
  %v1660 = vadd.f32 0.0, %v1659
  %v1661 = vpop.f32.mrf.mxu0
  %1662 = vmatprep.mubr.bf16.mxu0 0
  %1663 = vmatmul.mubr.bf16.gmra.mxu0 %v1534
  %v1664 = vpop.f32.mrf.mxu0
  %v1665 = vadd.f32 0.0, %v1664
  %v1666 = vpop.f32.mrf.mxu0
  %v1667 = vpop.f32.mrf.mxu0
  %v1668 = vadd.f32 0.0, %v1667
  %v1669 = vpop.f32.mrf.mxu0
  %1670 = vmatprep.mubr.bf16.mxu0 0
  %1671 = vmatmul.mubr.bf16.gmra.mxu0 %v1537
  %v1672 = vpop.f32.mrf.mxu0
  %v1673 = vadd.f32 0.0, %v1672
  %v1674 = vpop.f32.mrf.mxu0
  %v1675 = vpop.f32.mrf.mxu0
  %v1676 = vadd.f32 0.0, %v1675
  %v1677 = vpop.f32.mrf.mxu0
  %1678 = vmatprep.mubr.bf16.mxu0 0
  %1679 = vmatmul.mubr.bf16.gmra.mxu0 %v1540
  %v1680 = vpop.f32.mrf.mxu0
  %v1681 = vadd.f32 0.0, %v1680
  %v1682 = vpop.f32.mrf.mxu0
  %v1683 = vpop.f32.mrf.mxu0
  %v1684 = vadd.f32 0.0, %v1683
  %v1685 = vpop.f32.mrf.mxu0
  %1686 = vdwg.mxu0
  %v1687 = vadd.f32 %v1241, %v1577
  %v1688 = vadd.f32 %v1242, %v1580
  %v1689 = vadd.f32 %v1243, %v1585
  %v1690 = vadd.f32 %v1244, %v1588
  %v1691 = vadd.f32 %v1245, %v1593
  %v1692 = vadd.f32 %v1246, %v1596
  %v1693 = vadd.f32 %v1247, %v1601
  %v1694 = vadd.f32 %v1248, %v1604
  %v1695 = vadd.f32 %v1249, %v1609
  %v1696 = vadd.f32 %v1250, %v1612
  %v1697 = vadd.f32 %v1251, %v1617
  %v1698 = vadd.f32 %v1252, %v1620
  %v1699 = vadd.f32 %v1253, %v1625
  %v1700 = vadd.f32 %v1254, %v1628
  %v1701 = vadd.f32 %v1255, %v1633
  %v1702 = vadd.f32 %v1256, %v1636
  %v1703 = vadd.f32 %v1257, %v1641
  %v1704 = vadd.f32 %v1258, %v1644
  %v1705 = vadd.f32 %v1259, %v1649
  %v1706 = vadd.f32 %v1260, %v1652
  %v1707 = vadd.f32 %v1261, %v1657
  %v1708 = vadd.f32 %v1262, %v1660
  %v1709 = vadd.f32 %v1263, %v1665
  %v1710 = vadd.f32 %v1264, %v1668
  %v1711 = vadd.f32 %v1265, %v1673
  %v1712 = vadd.f32 %v1266, %v1676
  %v1713 = vadd.f32 %v1267, %v1681
  %v1714 = vadd.f32 %v1268, %v1684
  %s1715 = scalar_lea.vmem %s1, 192
  %v1716 = vld [vmem:[%s1715] sm:$0xf]
  %v1717 = vld [vmem:[%s1715 + $0x4] sm:$0xf]
  %v1718 = vld [vmem:[%s1715 + $0x8] sm:$0xf]
  %v1719 = vld [vmem:[%s1715 + $0xc] sm:$0xf]
  %v1720 = vld [vmem:[%s1715 + $0x10] sm:$0xf]
  %v1721 = vld [vmem:[%s1715 + $0x14] sm:$0xf]
  %v1722 = vld [vmem:[%s1715 + $0x18] sm:$0xf]
  %v1723 = vld [vmem:[%s1715 + $0x1c] sm:$0xf]
  %v1724 = vld [vmem:[%s1715 + $0x20] sm:$0xf]
  %v1725 = vld [vmem:[%s1715 + $0x24] sm:$0xf]
  %v1726 = vld [vmem:[%s1715 + $0x28] sm:$0xf]
  %v1727 = vld [vmem:[%s1715 + $0x2c] sm:$0xf]
  %v1756 = vunpack.c.l.b16 %v97
  %v1757 = vunpack.c.l.b16 %v98
  %v1758 = vunpack.c.l.b16 %v99
  %v1759 = vunpack.c.l.b16 %v100
  %v1760 = vunpack.c.l.b16 %v101
  %v1761 = vunpack.c.l.b16 %v102
  %v1762 = vunpack.c.l.b16 %v103
  %v1763 = vunpack.c.l.b16 %v104
  %v1764 = vunpack.c.l.b16 %v105
  %v1765 = vunpack.c.l.b16 %v106
  %v1766 = vunpack.c.l.b16 %v107
  %v1767 = vunpack.c.l.b16 %v108
  %v1768 = vunpack.c.l.b16 %v109
  %v1769 = vunpack.c.l.b16 %v110
  %v1770 = vunpack.c.l.b16 %v111
  %v1771 = vunpack.c.l.b16 %v112
  %v1772 = vunpack.c.l.b16 %v113
  %v1773 = vunpack.c.l.b16 %v114
  %v1774 = vunpack.c.l.b16 %v115
  %v1775 = vunpack.c.l.b16 %v116
  %v1776 = vunpack.c.l.b16 %v117
  %v1777 = vunpack.c.l.b16 %v118
  %v1778 = vunpack.c.l.b16 %v119
  %v1779 = vunpack.c.l.b16 %v120
  %v1780 = vunpack.c.l.b16 %v121
  %v1781 = vunpack.c.l.b16 %v122
  %v1782 = vunpack.c.l.b16 %v123
  %v1783 = vunpack.c.l.b16 %v124
  %v1784 = vpack.c.b16 %v1757, %v1756
  %v1785 = vpack.c.b16 %v1759, %v1758
  %v1786 = vpack.c.b16 %v1761, %v1760
  %v1787 = vpack.c.b16 %v1763, %v1762
  %v1788 = vpack.c.b16 %v1765, %v1764
  %v1789 = vpack.c.b16 %v1767, %v1766
  %v1790 = vpack.c.b16 %v1769, %v1768
  %v1791 = vpack.c.b16 %v1771, %v1770
  %v1792 = vpack.c.b16 %v1773, %v1772
  %v1793 = vpack.c.b16 %v1775, %v1774
  %v1794 = vpack.c.b16 %v1777, %v1776
  %v1795 = vpack.c.b16 %v1779, %v1778
  %v1796 = vpack.c.b16 %v1781, %v1780
  %v1797 = vpack.c.b16 %v1783, %v1782
  %v1810 = vunpack.c.l.b16 %v1716
  %v1811 = vunpack.c.l.b16 %v1717
  %v1812 = vunpack.c.l.b16 %v1718
  %v1813 = vunpack.c.l.b16 %v1719
  %v1814 = vunpack.c.l.b16 %v1720
  %v1815 = vunpack.c.l.b16 %v1721
  %v1816 = vunpack.c.l.b16 %v1722
  %v1817 = vunpack.c.l.b16 %v1723
  %v1818 = vunpack.c.l.b16 %v1724
  %v1819 = vunpack.c.l.b16 %v1725
  %v1820 = vunpack.c.l.b16 %v1726
  %v1821 = vunpack.c.l.b16 %v1727
  %v1822 = vpack.c.b16 %v1811, %v1810
  %v1823 = vpack.c.b16 %v1813, %v1812
  %v1824 = vpack.c.b16 %v1815, %v1814
  %v1825 = vpack.c.b16 %v1817, %v1816
  %v1826 = vpack.c.b16 %v1819, %v1818
  %v1827 = vpack.c.b16 %v1821, %v1820
  %v1835 = vsel %vm454, %v1784, 0
  %v1838 = vsel %vm454, %v1785, 0
  %v1841 = vsel %vm454, %v1786, 0
  %v1844 = vsel %vm454, %v1787, 0
  %v1847 = vsel %vm454, %v1788, 0
  %v1850 = vsel %vm454, %v1789, 0
  %v1853 = vsel %vm454, %v1790, 0
  %v1856 = vsel %vm454, %v1791, 0
  %v1859 = vsel %vm454, %v1792, 0
  %v1862 = vsel %vm454, %v1793, 0
  %v1865 = vsel %vm454, %v1794, 0
  %v1868 = vsel %vm454, %v1795, 0
  %v1871 = vsel %vm454, %v1796, 0
  %v1874 = vsel %vm454, %v1797, 0
  %1876 = vmatprep.subr.bf16.mxu0 0
  %1877 = vmatpush1.bf16.msra.mxu0 0
  %1878 = vmatprep.subr.bf16.mxu0 0
  %1879 = vmatpush1.bf16.msra.mxu0 0
  %1880 = vmatprep.subr.bf16.mxu0 0
  %1881 = vmatpush1.bf16.msra.mxu0 %v1827
  %1882 = vmatprep.subr.bf16.mxu0 0
  %1883 = vmatpush1.bf16.msra.mxu0 %v1826
  %1884 = vmatprep.subr.bf16.mxu0 0
  %1885 = vmatpush1.bf16.msra.mxu0 %v1825
  %1886 = vmatprep.subr.bf16.mxu0 0
  %1887 = vmatpush1.bf16.msra.mxu0 %v1824
  %1888 = vmatprep.subr.bf16.mxu0 0
  %1889 = vmatpush1.bf16.msra.mxu0 %v1823
  %1890 = vmatprep.subr.bf16.mxu0 0
  %1891 = vmatpush1.bf16.msra.mxu0 %v1822
  %1892 = vmatprep.subr.bf16.mxu0 0
  %1893 = vmatpush2.bf16.msra.mxu0 0
  %1894 = vmatprep.subr.bf16.mxu0 0
  %1895 = vmatpush2.bf16.msra.mxu0 0
  %1896 = vmatprep.subr.bf16.mxu0 0
  %1897 = vmatpush2.bf16.msra.mxu0 0
  %1898 = vmatprep.subr.bf16.mxu0 0
  %1899 = vmatpush2.bf16.msra.mxu0 0
  %1900 = vmatprep.subr.bf16.mxu0 0
  %1901 = vmatpush2.bf16.msra.mxu0 0
  %1902 = vmatprep.subr.bf16.mxu0 0
  %1903 = vmatpush2.bf16.msra.mxu0 0
  %1904 = vmatprep.subr.bf16.mxu0 0
  %1905 = vmatpush2.bf16.msra.mxu0 0
  %1906 = vmatprep.subr.bf16.mxu0 0
  %1907 = vmatpush2.bf16.msra.mxu0 0
  %1908 = vmatprep.mubr.bf16.mxu0 0
  %1909 = vmatmul.mubr.bf16.gmra.mxu0 %v1835
  %v1910 = vpop.f32.mrf.mxu0
  %v1911 = vadd.f32 0.0, %v1910
  %v1912 = vpop.f32.mrf.mxu0
  %v1913 = vpop.f32.mrf.mxu0
  %v1914 = vadd.f32 0.0, %v1913
  %v1915 = vpop.f32.mrf.mxu0
  %1916 = vmatprep.mubr.bf16.mxu0 0
  %1917 = vmatmul.mubr.bf16.gmra.mxu0 %v1838
  %v1918 = vpop.f32.mrf.mxu0
  %v1919 = vadd.f32 0.0, %v1918
  %v1920 = vpop.f32.mrf.mxu0
  %v1921 = vpop.f32.mrf.mxu0
  %v1922 = vadd.f32 0.0, %v1921
  %v1923 = vpop.f32.mrf.mxu0
  %1924 = vmatprep.mubr.bf16.mxu0 0
  %1925 = vmatmul.mubr.bf16.gmra.mxu0 %v1841
  %v1926 = vpop.f32.mrf.mxu0
  %v1927 = vadd.f32 0.0, %v1926
  %v1928 = vpop.f32.mrf.mxu0
  %v1929 = vpop.f32.mrf.mxu0
  %v1930 = vadd.f32 0.0, %v1929
  %v1931 = vpop.f32.mrf.mxu0
  %1932 = vmatprep.mubr.bf16.mxu0 0
  %1933 = vmatmul.mubr.bf16.gmra.mxu0 %v1844
  %v1934 = vpop.f32.mrf.mxu0
  %v1935 = vadd.f32 0.0, %v1934
  %v1936 = vpop.f32.mrf.mxu0
  %v1937 = vpop.f32.mrf.mxu0
  %v1938 = vadd.f32 0.0, %v1937
  %v1939 = vpop.f32.mrf.mxu0
  %1940 = vmatprep.mubr.bf16.mxu0 0
  %1941 = vmatmul.mubr.bf16.gmra.mxu0 %v1847
  %v1942 = vpop.f32.mrf.mxu0
  %v1943 = vadd.f32 0.0, %v1942
  %v1944 = vpop.f32.mrf.mxu0
  %v1945 = vpop.f32.mrf.mxu0
  %v1946 = vadd.f32 0.0, %v1945
  %v1947 = vpop.f32.mrf.mxu0
  %1948 = vmatprep.mubr.bf16.mxu0 0
  %1949 = vmatmul.mubr.bf16.gmra.mxu0 %v1850
  %v1950 = vpop.f32.mrf.mxu0
  %v1951 = vadd.f32 0.0, %v1950
  %v1952 = vpop.f32.mrf.mxu0
  %v1953 = vpop.f32.mrf.mxu0
  %v1954 = vadd.f32 0.0, %v1953
  %v1955 = vpop.f32.mrf.mxu0
  %1956 = vmatprep.mubr.bf16.mxu0 0
  %1957 = vmatmul.mubr.bf16.gmra.mxu0 %v1853
  %v1958 = vpop.f32.mrf.mxu0
  %v1959 = vadd.f32 0.0, %v1958
  %v1960 = vpop.f32.mrf.mxu0
  %v1961 = vpop.f32.mrf.mxu0
  %v1962 = vadd.f32 0.0, %v1961
  %v1963 = vpop.f32.mrf.mxu0
  %1964 = vmatprep.mubr.bf16.mxu0 0
  %1965 = vmatmul.mubr.bf16.gmra.mxu0 %v1856
  %v1966 = vpop.f32.mrf.mxu0
  %v1967 = vadd.f32 0.0, %v1966
  %v1968 = vpop.f32.mrf.mxu0
  %v1969 = vpop.f32.mrf.mxu0
  %v1970 = vadd.f32 0.0, %v1969
  %v1971 = vpop.f32.mrf.mxu0
  %1972 = vmatprep.mubr.bf16.mxu0 0
  %1973 = vmatmul.mubr.bf16.gmra.mxu0 %v1859
  %v1974 = vpop.f32.mrf.mxu0
  %v1975 = vadd.f32 0.0, %v1974
  %v1976 = vpop.f32.mrf.mxu0
  %v1977 = vpop.f32.mrf.mxu0
  %v1978 = vadd.f32 0.0, %v1977
  %v1979 = vpop.f32.mrf.mxu0
  %1980 = vmatprep.mubr.bf16.mxu0 0
  %1981 = vmatmul.mubr.bf16.gmra.mxu0 %v1862
  %v1982 = vpop.f32.mrf.mxu0
  %v1983 = vadd.f32 0.0, %v1982
  %v1984 = vpop.f32.mrf.mxu0
  %v1985 = vpop.f32.mrf.mxu0
  %v1986 = vadd.f32 0.0, %v1985
  %v1987 = vpop.f32.mrf.mxu0
  %1988 = vmatprep.mubr.bf16.mxu0 0
  %1989 = vmatmul.mubr.bf16.gmra.mxu0 %v1865
  %v1990 = vpop.f32.mrf.mxu0
  %v1991 = vadd.f32 0.0, %v1990
  %v1992 = vpop.f32.mrf.mxu0
  %v1993 = vpop.f32.mrf.mxu0
  %v1994 = vadd.f32 0.0, %v1993
  %v1995 = vpop.f32.mrf.mxu0
  %1996 = vmatprep.mubr.bf16.mxu0 0
  %1997 = vmatmul.mubr.bf16.gmra.mxu0 %v1868
  %v1998 = vpop.f32.mrf.mxu0
  %v1999 = vadd.f32 0.0, %v1998
  %v2000 = vpop.f32.mrf.mxu0
  %v2001 = vpop.f32.mrf.mxu0
  %v2002 = vadd.f32 0.0, %v2001
  %v2003 = vpop.f32.mrf.mxu0
  %2004 = vmatprep.mubr.bf16.mxu0 0
  %2005 = vmatmul.mubr.bf16.gmra.mxu0 %v1871
  %v2006 = vpop.f32.mrf.mxu0
  %v2007 = vadd.f32 0.0, %v2006
  %v2008 = vpop.f32.mrf.mxu0
  %v2009 = vpop.f32.mrf.mxu0
  %v2010 = vadd.f32 0.0, %v2009
  %v2011 = vpop.f32.mrf.mxu0
  %2012 = vmatprep.mubr.bf16.mxu0 0
  %2013 = vmatmul.mubr.bf16.gmra.mxu0 %v1874
  %v2014 = vpop.f32.mrf.mxu0
  %v2015 = vadd.f32 0.0, %v2014
  %v2016 = vpop.f32.mrf.mxu0
  %v2017 = vpop.f32.mrf.mxu0
  %v2018 = vadd.f32 0.0, %v2017
  %v2019 = vpop.f32.mrf.mxu0
  %2020 = vdwg.mxu0
  %v2021 = vadd.f32 %v1687, %v1911
  %v2022 = vadd.f32 %v1688, %v1914
  %v2023 = vadd.f32 %v1689, %v1919
  %v2024 = vadd.f32 %v1690, %v1922
  %v2025 = vadd.f32 %v1691, %v1927
  %v2026 = vadd.f32 %v1692, %v1930
  %v2027 = vadd.f32 %v1693, %v1935
  %v2028 = vadd.f32 %v1694, %v1938
  %v2029 = vadd.f32 %v1695, %v1943
  %v2030 = vadd.f32 %v1696, %v1946
  %v2031 = vadd.f32 %v1697, %v1951
  %v2032 = vadd.f32 %v1698, %v1954
  %v2033 = vadd.f32 %v1699, %v1959
  %v2034 = vadd.f32 %v1700, %v1962
  %v2035 = vadd.f32 %v1701, %v1967
  %v2036 = vadd.f32 %v1702, %v1970
  %v2037 = vadd.f32 %v1703, %v1975
  %v2038 = vadd.f32 %v1704, %v1978
  %v2039 = vadd.f32 %v1705, %v1983
  %v2040 = vadd.f32 %v1706, %v1986
  %v2041 = vadd.f32 %v1707, %v1991
  %v2042 = vadd.f32 %v1708, %v1994
  %v2043 = vadd.f32 %v1709, %v1999
  %v2044 = vadd.f32 %v1710, %v2002
  %v2045 = vadd.f32 %v1711, %v2007
  %v2046 = vadd.f32 %v1712, %v2010
  %v2047 = vadd.f32 %v1713, %v2015
  %v2048 = vadd.f32 %v1714, %v2018
  %s2049 = scalar_lea.vmem %s1, 240
  %v2050 = vld [vmem:[%s2049] sm:$0xf]
  %v2051 = vld [vmem:[%s2049 + $0x4] sm:$0xf]
  %v2052 = vld [vmem:[%s2049 + $0x8] sm:$0xf]
  %v2053 = vld [vmem:[%s2049 + $0xc] sm:$0xf]
  %v2054 = vld [vmem:[%s2049 + $0x10] sm:$0xf]
  %v2055 = vld [vmem:[%s2049 + $0x14] sm:$0xf]
  %v2056 = vld [vmem:[%s2049 + $0x18] sm:$0xf]
  %v2057 = vld [vmem:[%s2049 + $0x1c] sm:$0xf]
  %v2058 = vld [vmem:[%s2049 + $0x20] sm:$0xf]
  %v2059 = vld [vmem:[%s2049 + $0x24] sm:$0xf]
  %v2060 = vld [vmem:[%s2049 + $0x28] sm:$0xf]
  %v2061 = vld [vmem:[%s2049 + $0x2c] sm:$0xf]
  %s2062 = scalar_lea.vmem %s1, 288
  %v2063 = vld [vmem:[%s2062] sm:$0xf]
  %v2064 = vld [vmem:[%s2062 + $0x4] sm:$0xf]
  %v2065 = vld [vmem:[%s2062 + $0x8] sm:$0xf]
  %v2066 = vld [vmem:[%s2062 + $0xc] sm:$0xf]
  %v2067 = vld [vmem:[%s2062 + $0x10] sm:$0xf]
  %v2068 = vld [vmem:[%s2062 + $0x14] sm:$0xf]
  %v2069 = vld [vmem:[%s2062 + $0x18] sm:$0xf]
  %v2070 = vld [vmem:[%s2062 + $0x1c] sm:$0xf]
  %v2071 = vld [vmem:[%s2062 + $0x20] sm:$0xf]
  %v2072 = vld [vmem:[%s2062 + $0x24] sm:$0xf]
  %v2073 = vld [vmem:[%s2062 + $0x28] sm:$0xf]
  %v2074 = vld [vmem:[%s2062 + $0x2c] sm:$0xf]
  %v2087 = vunpack.c.l.b16 %v2063
  %v2088 = vunpack.c.l.b16 %v2064
  %v2089 = vunpack.c.l.b16 %v2065
  %v2090 = vunpack.c.l.b16 %v2066
  %v2091 = vunpack.c.l.b16 %v2067
  %v2092 = vunpack.c.l.b16 %v2068
  %v2093 = vunpack.c.l.b16 %v2069
  %v2094 = vunpack.c.l.b16 %v2070
  %v2095 = vunpack.c.l.b16 %v2071
  %v2096 = vunpack.c.l.b16 %v2072
  %v2097 = vunpack.c.l.b16 %v2073
  %v2098 = vunpack.c.l.b16 %v2074
  %v2099 = vpack.c.b16 %v2088, %v2087
  %v2100 = vpack.c.b16 %v2090, %v2089
  %v2101 = vpack.c.b16 %v2092, %v2091
  %v2102 = vpack.c.b16 %v2094, %v2093
  %v2103 = vpack.c.b16 %v2096, %v2095
  %v2104 = vpack.c.b16 %v2098, %v2097
  %2111 = vmatprep.subr.bf16.mxu0 0
  %2112 = vmatpush1.bf16.msra.mxu0 0
  %2113 = vmatprep.subr.bf16.mxu0 0
  %2114 = vmatpush1.bf16.msra.mxu0 0
  %2115 = vmatprep.subr.bf16.mxu0 0
  %2116 = vmatpush1.bf16.msra.mxu0 %v2104
  %2117 = vmatprep.subr.bf16.mxu0 0
  %2118 = vmatpush1.bf16.msra.mxu0 %v2103
  %2119 = vmatprep.subr.bf16.mxu0 0
  %2120 = vmatpush1.bf16.msra.mxu0 %v2102
  %2121 = vmatprep.subr.bf16.mxu0 0
  %2122 = vmatpush1.bf16.msra.mxu0 %v2101
  %2123 = vmatprep.subr.bf16.mxu0 0
  %2124 = vmatpush1.bf16.msra.mxu0 %v2100
  %2125 = vmatprep.subr.bf16.mxu0 0
  %2126 = vmatpush1.bf16.msra.mxu0 %v2099
  %2127 = vmatprep.subr.bf16.mxu0 0
  %2128 = vmatpush2.bf16.msra.mxu0 0
  %2129 = vmatprep.subr.bf16.mxu0 0
  %2130 = vmatpush2.bf16.msra.mxu0 0
  %2131 = vmatprep.subr.bf16.mxu0 0
  %2132 = vmatpush2.bf16.msra.mxu0 0
  %2133 = vmatprep.subr.bf16.mxu0 0
  %2134 = vmatpush2.bf16.msra.mxu0 0
  %2135 = vmatprep.subr.bf16.mxu0 0
  %2136 = vmatpush2.bf16.msra.mxu0 0
  %2137 = vmatprep.subr.bf16.mxu0 0
  %2138 = vmatpush2.bf16.msra.mxu0 0
  %2139 = vmatprep.subr.bf16.mxu0 0
  %2140 = vmatpush2.bf16.msra.mxu0 0
  %2141 = vmatprep.subr.bf16.mxu0 0
  %2142 = vmatpush2.bf16.msra.mxu0 0
  %2143 = vmatprep.mubr.bf16.mxu0 0
  %2144 = vmatmul.mubr.bf16.gmra.mxu0 %v456
  %v2145 = vpop.f32.mrf.mxu0
  %v2146 = vadd.f32 0.0, %v2145
  %v2147 = vpop.f32.mrf.mxu0
  %v2148 = vpop.f32.mrf.mxu0
  %v2149 = vadd.f32 0.0, %v2148
  %v2150 = vpop.f32.mrf.mxu0
  %2151 = vmatprep.mubr.bf16.mxu0 0
  %2152 = vmatmul.mubr.bf16.gmra.mxu0 %v459
  %v2153 = vpop.f32.mrf.mxu0
  %v2154 = vadd.f32 0.0, %v2153
  %v2155 = vpop.f32.mrf.mxu0
  %v2156 = vpop.f32.mrf.mxu0
  %v2157 = vadd.f32 0.0, %v2156
  %v2158 = vpop.f32.mrf.mxu0
  %2159 = vmatprep.mubr.bf16.mxu0 0
  %2160 = vmatmul.mubr.bf16.gmra.mxu0 %v462
  %v2161 = vpop.f32.mrf.mxu0
  %v2162 = vadd.f32 0.0, %v2161
  %v2163 = vpop.f32.mrf.mxu0
  %v2164 = vpop.f32.mrf.mxu0
  %v2165 = vadd.f32 0.0, %v2164
  %v2166 = vpop.f32.mrf.mxu0
  %2167 = vmatprep.mubr.bf16.mxu0 0
  %2168 = vmatmul.mubr.bf16.gmra.mxu0 %v465
  %v2169 = vpop.f32.mrf.mxu0
  %v2170 = vadd.f32 0.0, %v2169
  %v2171 = vpop.f32.mrf.mxu0
  %v2172 = vpop.f32.mrf.mxu0
  %v2173 = vadd.f32 0.0, %v2172
  %v2174 = vpop.f32.mrf.mxu0
  %2175 = vmatprep.mubr.bf16.mxu0 0
  %2176 = vmatmul.mubr.bf16.gmra.mxu0 %v468
  %v2177 = vpop.f32.mrf.mxu0
  %v2178 = vadd.f32 0.0, %v2177
  %v2179 = vpop.f32.mrf.mxu0
  %v2180 = vpop.f32.mrf.mxu0
  %v2181 = vadd.f32 0.0, %v2180
  %v2182 = vpop.f32.mrf.mxu0
  %2183 = vmatprep.mubr.bf16.mxu0 0
  %2184 = vmatmul.mubr.bf16.gmra.mxu0 %v471
  %v2185 = vpop.f32.mrf.mxu0
  %v2186 = vadd.f32 0.0, %v2185
  %v2187 = vpop.f32.mrf.mxu0
  %v2188 = vpop.f32.mrf.mxu0
  %v2189 = vadd.f32 0.0, %v2188
  %v2190 = vpop.f32.mrf.mxu0
  %2191 = vmatprep.mubr.bf16.mxu0 0
  %2192 = vmatmul.mubr.bf16.gmra.mxu0 %v474
  %v2193 = vpop.f32.mrf.mxu0
  %v2194 = vadd.f32 0.0, %v2193
  %v2195 = vpop.f32.mrf.mxu0
  %v2196 = vpop.f32.mrf.mxu0
  %v2197 = vadd.f32 0.0, %v2196
  %v2198 = vpop.f32.mrf.mxu0
  %2199 = vmatprep.mubr.bf16.mxu0 0
  %2200 = vmatmul.mubr.bf16.gmra.mxu0 %v477
  %v2201 = vpop.f32.mrf.mxu0
  %v2202 = vadd.f32 0.0, %v2201
  %v2203 = vpop.f32.mrf.mxu0
  %v2204 = vpop.f32.mrf.mxu0
  %v2205 = vadd.f32 0.0, %v2204
  %v2206 = vpop.f32.mrf.mxu0
  %2207 = vmatprep.mubr.bf16.mxu0 0
  %2208 = vmatmul.mubr.bf16.gmra.mxu0 %v480
  %v2209 = vpop.f32.mrf.mxu0
  %v2210 = vadd.f32 0.0, %v2209
  %v2211 = vpop.f32.mrf.mxu0
  %v2212 = vpop.f32.mrf.mxu0
  %v2213 = vadd.f32 0.0, %v2212
  %v2214 = vpop.f32.mrf.mxu0
  %2215 = vmatprep.mubr.bf16.mxu0 0
  %2216 = vmatmul.mubr.bf16.gmra.mxu0 %v483
  %v2217 = vpop.f32.mrf.mxu0
  %v2218 = vadd.f32 0.0, %v2217
  %v2219 = vpop.f32.mrf.mxu0
  %v2220 = vpop.f32.mrf.mxu0
  %v2221 = vadd.f32 0.0, %v2220
  %v2222 = vpop.f32.mrf.mxu0
  %2223 = vmatprep.mubr.bf16.mxu0 0
  %2224 = vmatmul.mubr.bf16.gmra.mxu0 %v486
  %v2225 = vpop.f32.mrf.mxu0
  %v2226 = vadd.f32 0.0, %v2225
  %v2227 = vpop.f32.mrf.mxu0
  %v2228 = vpop.f32.mrf.mxu0
  %v2229 = vadd.f32 0.0, %v2228
  %v2230 = vpop.f32.mrf.mxu0
  %2231 = vmatprep.mubr.bf16.mxu0 0
  %2232 = vmatmul.mubr.bf16.gmra.mxu0 %v489
  %v2233 = vpop.f32.mrf.mxu0
  %v2234 = vadd.f32 0.0, %v2233
  %v2235 = vpop.f32.mrf.mxu0
  %v2236 = vpop.f32.mrf.mxu0
  %v2237 = vadd.f32 0.0, %v2236
  %v2238 = vpop.f32.mrf.mxu0
  %2239 = vmatprep.mubr.bf16.mxu0 0
  %2240 = vmatmul.mubr.bf16.gmra.mxu0 %v492
  %v2241 = vpop.f32.mrf.mxu0
  %v2242 = vadd.f32 0.0, %v2241
  %v2243 = vpop.f32.mrf.mxu0
  %v2244 = vpop.f32.mrf.mxu0
  %v2245 = vadd.f32 0.0, %v2244
  %v2246 = vpop.f32.mrf.mxu0
  %2247 = vmatprep.mubr.bf16.mxu0 0
  %2248 = vmatmul.mubr.bf16.gmra.mxu0 %v495
  %v2249 = vpop.f32.mrf.mxu0
  %v2250 = vadd.f32 0.0, %v2249
  %v2251 = vpop.f32.mrf.mxu0
  %v2252 = vpop.f32.mrf.mxu0
  %v2253 = vadd.f32 0.0, %v2252
  %v2254 = vpop.f32.mrf.mxu0
  %2255 = vdwg.mxu0
  %v2268 = vunpack.c.l.b16 %v2050
  %v2269 = vunpack.c.l.b16 %v2051
  %v2270 = vunpack.c.l.b16 %v2052
  %v2271 = vunpack.c.l.b16 %v2053
  %v2272 = vunpack.c.l.b16 %v2054
  %v2273 = vunpack.c.l.b16 %v2055
  %v2274 = vunpack.c.l.b16 %v2056
  %v2275 = vunpack.c.l.b16 %v2057
  %v2276 = vunpack.c.l.b16 %v2058
  %v2277 = vunpack.c.l.b16 %v2059
  %v2278 = vunpack.c.l.b16 %v2060
  %v2279 = vunpack.c.l.b16 %v2061
  %v2280 = vpack.c.b16 %v2269, %v2268
  %v2281 = vpack.c.b16 %v2271, %v2270
  %v2282 = vpack.c.b16 %v2273, %v2272
  %v2283 = vpack.c.b16 %v2275, %v2274
  %v2284 = vpack.c.b16 %v2277, %v2276
  %v2285 = vpack.c.b16 %v2279, %v2278
  %2292 = vmatprep.subr.bf16.mxu0 0
  %2293 = vmatpush1.bf16.msra.mxu0 0
  %2294 = vmatprep.subr.bf16.mxu0 0
  %2295 = vmatpush1.bf16.msra.mxu0 0
  %2296 = vmatprep.subr.bf16.mxu0 0
  %2297 = vmatpush1.bf16.msra.mxu0 %v2285
  %2298 = vmatprep.subr.bf16.mxu0 0
  %2299 = vmatpush1.bf16.msra.mxu0 %v2284
  %2300 = vmatprep.subr.bf16.mxu0 0
  %2301 = vmatpush1.bf16.msra.mxu0 %v2283
  %2302 = vmatprep.subr.bf16.mxu0 0
  %2303 = vmatpush1.bf16.msra.mxu0 %v2282
  %2304 = vmatprep.subr.bf16.mxu0 0
  %2305 = vmatpush1.bf16.msra.mxu0 %v2281
  %2306 = vmatprep.subr.bf16.mxu0 0
  %2307 = vmatpush1.bf16.msra.mxu0 %v2280
  %2308 = vmatprep.subr.bf16.mxu0 0
  %2309 = vmatpush2.bf16.msra.mxu0 0
  %2310 = vmatprep.subr.bf16.mxu0 0
  %2311 = vmatpush2.bf16.msra.mxu0 0
  %2312 = vmatprep.subr.bf16.mxu0 0
  %2313 = vmatpush2.bf16.msra.mxu0 0
  %2314 = vmatprep.subr.bf16.mxu0 0
  %2315 = vmatpush2.bf16.msra.mxu0 0
  %2316 = vmatprep.subr.bf16.mxu0 0
  %2317 = vmatpush2.bf16.msra.mxu0 0
  %2318 = vmatprep.subr.bf16.mxu0 0
  %2319 = vmatpush2.bf16.msra.mxu0 0
  %2320 = vmatprep.subr.bf16.mxu0 0
  %2321 = vmatpush2.bf16.msra.mxu0 0
  %2322 = vmatprep.subr.bf16.mxu0 0
  %2323 = vmatpush2.bf16.msra.mxu0 0
  %2324 = vmatprep.mubr.bf16.mxu0 0
  %2325 = vmatmul.mubr.bf16.gmra.mxu0 %v749
  %v2326 = vpop.f32.mrf.mxu0
  %v2327 = vadd.f32 %v2146, %v2326
  %v2328 = vpop.f32.mrf.mxu0
  %v2329 = vpop.f32.mrf.mxu0
  %v2330 = vadd.f32 %v2149, %v2329
  %v2331 = vpop.f32.mrf.mxu0
  %2332 = vmatprep.mubr.bf16.mxu0 0
  %2333 = vmatmul.mubr.bf16.gmra.mxu0 %v752
  %v2334 = vpop.f32.mrf.mxu0
  %v2335 = vadd.f32 %v2154, %v2334
  %v2336 = vpop.f32.mrf.mxu0
  %v2337 = vpop.f32.mrf.mxu0
  %v2338 = vadd.f32 %v2157, %v2337
  %v2339 = vpop.f32.mrf.mxu0
  %2340 = vmatprep.mubr.bf16.mxu0 0
  %2341 = vmatmul.mubr.bf16.gmra.mxu0 %v755
  %v2342 = vpop.f32.mrf.mxu0
  %v2343 = vadd.f32 %v2162, %v2342
  %v2344 = vpop.f32.mrf.mxu0
  %v2345 = vpop.f32.mrf.mxu0
  %v2346 = vadd.f32 %v2165, %v2345
  %v2347 = vpop.f32.mrf.mxu0
  %2348 = vmatprep.mubr.bf16.mxu0 0
  %2349 = vmatmul.mubr.bf16.gmra.mxu0 %v758
  %v2350 = vpop.f32.mrf.mxu0
  %v2351 = vadd.f32 %v2170, %v2350
  %v2352 = vpop.f32.mrf.mxu0
  %v2353 = vpop.f32.mrf.mxu0
  %v2354 = vadd.f32 %v2173, %v2353
  %v2355 = vpop.f32.mrf.mxu0
  %2356 = vmatprep.mubr.bf16.mxu0 0
  %2357 = vmatmul.mubr.bf16.gmra.mxu0 %v761
  %v2358 = vpop.f32.mrf.mxu0
  %v2359 = vadd.f32 %v2178, %v2358
  %v2360 = vpop.f32.mrf.mxu0
  %v2361 = vpop.f32.mrf.mxu0
  %v2362 = vadd.f32 %v2181, %v2361
  %v2363 = vpop.f32.mrf.mxu0
  %2364 = vmatprep.mubr.bf16.mxu0 0
  %2365 = vmatmul.mubr.bf16.gmra.mxu0 %v764
  %v2366 = vpop.f32.mrf.mxu0
  %v2367 = vadd.f32 %v2186, %v2366
  %v2368 = vpop.f32.mrf.mxu0
  %v2369 = vpop.f32.mrf.mxu0
  %v2370 = vadd.f32 %v2189, %v2369
  %v2371 = vpop.f32.mrf.mxu0
  %2372 = vmatprep.mubr.bf16.mxu0 0
  %2373 = vmatmul.mubr.bf16.gmra.mxu0 %v767
  %v2374 = vpop.f32.mrf.mxu0
  %v2375 = vadd.f32 %v2194, %v2374
  %v2376 = vpop.f32.mrf.mxu0
  %v2377 = vpop.f32.mrf.mxu0
  %v2378 = vadd.f32 %v2197, %v2377
  %v2379 = vpop.f32.mrf.mxu0
  %2380 = vmatprep.mubr.bf16.mxu0 0
  %2381 = vmatmul.mubr.bf16.gmra.mxu0 %v770
  %v2382 = vpop.f32.mrf.mxu0
  %v2383 = vadd.f32 %v2202, %v2382
  %v2384 = vpop.f32.mrf.mxu0
  %v2385 = vpop.f32.mrf.mxu0
  %v2386 = vadd.f32 %v2205, %v2385
  %v2387 = vpop.f32.mrf.mxu0
  %2388 = vmatprep.mubr.bf16.mxu0 0
  %2389 = vmatmul.mubr.bf16.gmra.mxu0 %v773
  %v2390 = vpop.f32.mrf.mxu0
  %v2391 = vadd.f32 %v2210, %v2390
  %v2392 = vpop.f32.mrf.mxu0
  %v2393 = vpop.f32.mrf.mxu0
  %v2394 = vadd.f32 %v2213, %v2393
  %v2395 = vpop.f32.mrf.mxu0
  %2396 = vmatprep.mubr.bf16.mxu0 0
  %2397 = vmatmul.mubr.bf16.gmra.mxu0 %v776
  %v2398 = vpop.f32.mrf.mxu0
  %v2399 = vadd.f32 %v2218, %v2398
  %v2400 = vpop.f32.mrf.mxu0
  %v2401 = vpop.f32.mrf.mxu0
  %v2402 = vadd.f32 %v2221, %v2401
  %v2403 = vpop.f32.mrf.mxu0
  %2404 = vmatprep.mubr.bf16.mxu0 0
  %2405 = vmatmul.mubr.bf16.gmra.mxu0 %v779
  %v2406 = vpop.f32.mrf.mxu0
  %v2407 = vadd.f32 %v2226, %v2406
  %v2408 = vpop.f32.mrf.mxu0
  %v2409 = vpop.f32.mrf.mxu0
  %v2410 = vadd.f32 %v2229, %v2409
  %v2411 = vpop.f32.mrf.mxu0
  %2412 = vmatprep.mubr.bf16.mxu0 0
  %2413 = vmatmul.mubr.bf16.gmra.mxu0 %v782
  %v2414 = vpop.f32.mrf.mxu0
  %v2415 = vadd.f32 %v2234, %v2414
  %v2416 = vpop.f32.mrf.mxu0
  %v2417 = vpop.f32.mrf.mxu0
  %v2418 = vadd.f32 %v2237, %v2417
  %v2419 = vpop.f32.mrf.mxu0
  %2420 = vmatprep.mubr.bf16.mxu0 0
  %2421 = vmatmul.mubr.bf16.gmra.mxu0 %v785
  %v2422 = vpop.f32.mrf.mxu0
  %v2423 = vadd.f32 %v2242, %v2422
  %v2424 = vpop.f32.mrf.mxu0
  %v2425 = vpop.f32.mrf.mxu0
  %v2426 = vadd.f32 %v2245, %v2425
  %v2427 = vpop.f32.mrf.mxu0
  %2428 = vmatprep.mubr.bf16.mxu0 0
  %2429 = vmatmul.mubr.bf16.gmra.mxu0 %v788
  %v2430 = vpop.f32.mrf.mxu0
  %v2431 = vadd.f32 %v2250, %v2430
  %v2432 = vpop.f32.mrf.mxu0
  %v2433 = vpop.f32.mrf.mxu0
  %v2434 = vadd.f32 %v2253, %v2433
  %v2435 = vpop.f32.mrf.mxu0
  %2436 = vdwg.mxu0
  %s2437 = scalar_lea.vmem %s1, 336
  %v2438 = vld [vmem:[%s2437] sm:$0xf]
  %v2439 = vld [vmem:[%s2437 + $0x4] sm:$0xf]
  %v2440 = vld [vmem:[%s2437 + $0x8] sm:$0xf]
  %v2441 = vld [vmem:[%s2437 + $0xc] sm:$0xf]
  %v2442 = vld [vmem:[%s2437 + $0x10] sm:$0xf]
  %v2443 = vld [vmem:[%s2437 + $0x14] sm:$0xf]
  %v2444 = vld [vmem:[%s2437 + $0x18] sm:$0xf]
  %v2445 = vld [vmem:[%s2437 + $0x1c] sm:$0xf]
  %v2446 = vld [vmem:[%s2437 + $0x20] sm:$0xf]
  %v2447 = vld [vmem:[%s2437 + $0x24] sm:$0xf]
  %v2448 = vld [vmem:[%s2437 + $0x28] sm:$0xf]
  %v2449 = vld [vmem:[%s2437 + $0x2c] sm:$0xf]
  %v2462 = vunpack.c.l.b16 %v2438
  %v2463 = vunpack.c.l.b16 %v2439
  %v2464 = vunpack.c.l.b16 %v2440
  %v2465 = vunpack.c.l.b16 %v2441
  %v2466 = vunpack.c.l.b16 %v2442
  %v2467 = vunpack.c.l.b16 %v2443
  %v2468 = vunpack.c.l.b16 %v2444
  %v2469 = vunpack.c.l.b16 %v2445
  %v2470 = vunpack.c.l.b16 %v2446
  %v2471 = vunpack.c.l.b16 %v2447
  %v2472 = vunpack.c.l.b16 %v2448
  %v2473 = vunpack.c.l.b16 %v2449
  %v2474 = vpack.c.b16 %v2463, %v2462
  %v2475 = vpack.c.b16 %v2465, %v2464
  %v2476 = vpack.c.b16 %v2467, %v2466
  %v2477 = vpack.c.b16 %v2469, %v2468
  %v2478 = vpack.c.b16 %v2471, %v2470
  %v2479 = vpack.c.b16 %v2473, %v2472
  %2486 = vmatprep.subr.bf16.mxu0 0
  %2487 = vmatpush1.bf16.msra.mxu0 0
  %2488 = vmatprep.subr.bf16.mxu0 0
  %2489 = vmatpush1.bf16.msra.mxu0 0
  %2490 = vmatprep.subr.bf16.mxu0 0
  %2491 = vmatpush1.bf16.msra.mxu0 %v2479
  %2492 = vmatprep.subr.bf16.mxu0 0
  %2493 = vmatpush1.bf16.msra.mxu0 %v2478
  %2494 = vmatprep.subr.bf16.mxu0 0
  %2495 = vmatpush1.bf16.msra.mxu0 %v2477
  %2496 = vmatprep.subr.bf16.mxu0 0
  %2497 = vmatpush1.bf16.msra.mxu0 %v2476
  %2498 = vmatprep.subr.bf16.mxu0 0
  %2499 = vmatpush1.bf16.msra.mxu0 %v2475
  %2500 = vmatprep.subr.bf16.mxu0 0
  %2501 = vmatpush1.bf16.msra.mxu0 %v2474
  %2502 = vmatprep.subr.bf16.mxu0 0
  %2503 = vmatpush2.bf16.msra.mxu0 0
  %2504 = vmatprep.subr.bf16.mxu0 0
  %2505 = vmatpush2.bf16.msra.mxu0 0
  %2506 = vmatprep.subr.bf16.mxu0 0
  %2507 = vmatpush2.bf16.msra.mxu0 0
  %2508 = vmatprep.subr.bf16.mxu0 0
  %2509 = vmatpush2.bf16.msra.mxu0 0
  %2510 = vmatprep.subr.bf16.mxu0 0
  %2511 = vmatpush2.bf16.msra.mxu0 0
  %2512 = vmatprep.subr.bf16.mxu0 0
  %2513 = vmatpush2.bf16.msra.mxu0 0
  %2514 = vmatprep.subr.bf16.mxu0 0
  %2515 = vmatpush2.bf16.msra.mxu0 0
  %2516 = vmatprep.subr.bf16.mxu0 0
  %2517 = vmatpush2.bf16.msra.mxu0 0
  %2518 = vmatprep.mubr.bf16.mxu0 0
  %2519 = vmatmul.mubr.bf16.gmra.mxu0 %v1055
  %v2520 = vpop.f32.mrf.mxu0
  %v2521 = vadd.f32 0.0, %v2520
  %v2522 = vpop.f32.mrf.mxu0
  %v2523 = vpop.f32.mrf.mxu0
  %v2524 = vadd.f32 0.0, %v2523
  %v2525 = vpop.f32.mrf.mxu0
  %2526 = vmatprep.mubr.bf16.mxu0 0
  %2527 = vmatmul.mubr.bf16.gmra.mxu0 %v1058
  %v2528 = vpop.f32.mrf.mxu0
  %v2529 = vadd.f32 0.0, %v2528
  %v2530 = vpop.f32.mrf.mxu0
  %v2531 = vpop.f32.mrf.mxu0
  %v2532 = vadd.f32 0.0, %v2531
  %v2533 = vpop.f32.mrf.mxu0
  %2534 = vmatprep.mubr.bf16.mxu0 0
  %2535 = vmatmul.mubr.bf16.gmra.mxu0 %v1061
  %v2536 = vpop.f32.mrf.mxu0
  %v2537 = vadd.f32 0.0, %v2536
  %v2538 = vpop.f32.mrf.mxu0
  %v2539 = vpop.f32.mrf.mxu0
  %v2540 = vadd.f32 0.0, %v2539
  %v2541 = vpop.f32.mrf.mxu0
  %2542 = vmatprep.mubr.bf16.mxu0 0
  %2543 = vmatmul.mubr.bf16.gmra.mxu0 %v1064
  %v2544 = vpop.f32.mrf.mxu0
  %v2545 = vadd.f32 0.0, %v2544
  %v2546 = vpop.f32.mrf.mxu0
  %v2547 = vpop.f32.mrf.mxu0
  %v2548 = vadd.f32 0.0, %v2547
  %v2549 = vpop.f32.mrf.mxu0
  %2550 = vmatprep.mubr.bf16.mxu0 0
  %2551 = vmatmul.mubr.bf16.gmra.mxu0 %v1067
  %v2552 = vpop.f32.mrf.mxu0
  %v2553 = vadd.f32 0.0, %v2552
  %v2554 = vpop.f32.mrf.mxu0
  %v2555 = vpop.f32.mrf.mxu0
  %v2556 = vadd.f32 0.0, %v2555
  %v2557 = vpop.f32.mrf.mxu0
  %2558 = vmatprep.mubr.bf16.mxu0 0
  %2559 = vmatmul.mubr.bf16.gmra.mxu0 %v1070
  %v2560 = vpop.f32.mrf.mxu0
  %v2561 = vadd.f32 0.0, %v2560
  %v2562 = vpop.f32.mrf.mxu0
  %v2563 = vpop.f32.mrf.mxu0
  %v2564 = vadd.f32 0.0, %v2563
  %v2565 = vpop.f32.mrf.mxu0
  %2566 = vmatprep.mubr.bf16.mxu0 0
  %2567 = vmatmul.mubr.bf16.gmra.mxu0 %v1073
  %v2568 = vpop.f32.mrf.mxu0
  %v2569 = vadd.f32 0.0, %v2568
  %v2570 = vpop.f32.mrf.mxu0
  %v2571 = vpop.f32.mrf.mxu0
  %v2572 = vadd.f32 0.0, %v2571
  %v2573 = vpop.f32.mrf.mxu0
  %2574 = vmatprep.mubr.bf16.mxu0 0
  %2575 = vmatmul.mubr.bf16.gmra.mxu0 %v1076
  %v2576 = vpop.f32.mrf.mxu0
  %v2577 = vadd.f32 0.0, %v2576
  %v2578 = vpop.f32.mrf.mxu0
  %v2579 = vpop.f32.mrf.mxu0
  %v2580 = vadd.f32 0.0, %v2579
  %v2581 = vpop.f32.mrf.mxu0
  %2582 = vmatprep.mubr.bf16.mxu0 0
  %2583 = vmatmul.mubr.bf16.gmra.mxu0 %v1079
  %v2584 = vpop.f32.mrf.mxu0
  %v2585 = vadd.f32 0.0, %v2584
  %v2586 = vpop.f32.mrf.mxu0
  %v2587 = vpop.f32.mrf.mxu0
  %v2588 = vadd.f32 0.0, %v2587
  %v2589 = vpop.f32.mrf.mxu0
  %2590 = vmatprep.mubr.bf16.mxu0 0
  %2591 = vmatmul.mubr.bf16.gmra.mxu0 %v1082
  %v2592 = vpop.f32.mrf.mxu0
  %v2593 = vadd.f32 0.0, %v2592
  %v2594 = vpop.f32.mrf.mxu0
  %v2595 = vpop.f32.mrf.mxu0
  %v2596 = vadd.f32 0.0, %v2595
  %v2597 = vpop.f32.mrf.mxu0
  %2598 = vmatprep.mubr.bf16.mxu0 0
  %2599 = vmatmul.mubr.bf16.gmra.mxu0 %v1085
  %v2600 = vpop.f32.mrf.mxu0
  %v2601 = vadd.f32 0.0, %v2600
  %v2602 = vpop.f32.mrf.mxu0
  %v2603 = vpop.f32.mrf.mxu0
  %v2604 = vadd.f32 0.0, %v2603
  %v2605 = vpop.f32.mrf.mxu0
  %2606 = vmatprep.mubr.bf16.mxu0 0
  %2607 = vmatmul.mubr.bf16.gmra.mxu0 %v1088
  %v2608 = vpop.f32.mrf.mxu0
  %v2609 = vadd.f32 0.0, %v2608
  %v2610 = vpop.f32.mrf.mxu0
  %v2611 = vpop.f32.mrf.mxu0
  %v2612 = vadd.f32 0.0, %v2611
  %v2613 = vpop.f32.mrf.mxu0
  %2614 = vmatprep.mubr.bf16.mxu0 0
  %2615 = vmatmul.mubr.bf16.gmra.mxu0 %v1091
  %v2616 = vpop.f32.mrf.mxu0
  %v2617 = vadd.f32 0.0, %v2616
  %v2618 = vpop.f32.mrf.mxu0
  %v2619 = vpop.f32.mrf.mxu0
  %v2620 = vadd.f32 0.0, %v2619
  %v2621 = vpop.f32.mrf.mxu0
  %2622 = vmatprep.mubr.bf16.mxu0 0
  %2623 = vmatmul.mubr.bf16.gmra.mxu0 %v1094
  %v2624 = vpop.f32.mrf.mxu0
  %v2625 = vadd.f32 0.0, %v2624
  %v2626 = vpop.f32.mrf.mxu0
  %v2627 = vpop.f32.mrf.mxu0
  %v2628 = vadd.f32 0.0, %v2627
  %v2629 = vpop.f32.mrf.mxu0
  %2630 = vdwg.mxu0
  %v2631 = vadd.f32 %v2327, %v2521
  %v2632 = vadd.f32 %v2330, %v2524
  %v2633 = vadd.f32 %v2335, %v2529
  %v2634 = vadd.f32 %v2338, %v2532
  %v2635 = vadd.f32 %v2343, %v2537
  %v2636 = vadd.f32 %v2346, %v2540
  %v2637 = vadd.f32 %v2351, %v2545
  %v2638 = vadd.f32 %v2354, %v2548
  %v2639 = vadd.f32 %v2359, %v2553
  %v2640 = vadd.f32 %v2362, %v2556
  %v2641 = vadd.f32 %v2367, %v2561
  %v2642 = vadd.f32 %v2370, %v2564
  %v2643 = vadd.f32 %v2375, %v2569
  %v2644 = vadd.f32 %v2378, %v2572
  %v2645 = vadd.f32 %v2383, %v2577
  %v2646 = vadd.f32 %v2386, %v2580
  %v2647 = vadd.f32 %v2391, %v2585
  %v2648 = vadd.f32 %v2394, %v2588
  %v2649 = vadd.f32 %v2399, %v2593
  %v2650 = vadd.f32 %v2402, %v2596
  %v2651 = vadd.f32 %v2407, %v2601
  %v2652 = vadd.f32 %v2410, %v2604
  %v2653 = vadd.f32 %v2415, %v2609
  %v2654 = vadd.f32 %v2418, %v2612
  %v2655 = vadd.f32 %v2423, %v2617
  %v2656 = vadd.f32 %v2426, %v2620
  %v2657 = vadd.f32 %v2431, %v2625
  %v2658 = vadd.f32 %v2434, %v2628
  %s2659 = scalar_lea.vmem %s1, 384
  %v2660 = vld [vmem:[%s2659] sm:$0xf]
  %v2661 = vld [vmem:[%s2659 + $0x4] sm:$0xf]
  %v2662 = vld [vmem:[%s2659 + $0x8] sm:$0xf]
  %v2663 = vld [vmem:[%s2659 + $0xc] sm:$0xf]
  %v2664 = vld [vmem:[%s2659 + $0x10] sm:$0xf]
  %v2665 = vld [vmem:[%s2659 + $0x14] sm:$0xf]
  %v2666 = vld [vmem:[%s2659 + $0x18] sm:$0xf]
  %v2667 = vld [vmem:[%s2659 + $0x1c] sm:$0xf]
  %v2668 = vld [vmem:[%s2659 + $0x20] sm:$0xf]
  %v2669 = vld [vmem:[%s2659 + $0x24] sm:$0xf]
  %v2670 = vld [vmem:[%s2659 + $0x28] sm:$0xf]
  %v2671 = vld [vmem:[%s2659 + $0x2c] sm:$0xf]
  %v2684 = vunpack.c.l.b16 %v2660
  %v2685 = vunpack.c.l.b16 %v2661
  %v2686 = vunpack.c.l.b16 %v2662
  %v2687 = vunpack.c.l.b16 %v2663
  %v2688 = vunpack.c.l.b16 %v2664
  %v2689 = vunpack.c.l.b16 %v2665
  %v2690 = vunpack.c.l.b16 %v2666
  %v2691 = vunpack.c.l.b16 %v2667
  %v2692 = vunpack.c.l.b16 %v2668
  %v2693 = vunpack.c.l.b16 %v2669
  %v2694 = vunpack.c.l.b16 %v2670
  %v2695 = vunpack.c.l.b16 %v2671
  %v2696 = vpack.c.b16 %v2685, %v2684
  %v2697 = vpack.c.b16 %v2687, %v2686
  %v2698 = vpack.c.b16 %v2689, %v2688
  %v2699 = vpack.c.b16 %v2691, %v2690
  %v2700 = vpack.c.b16 %v2693, %v2692
  %v2701 = vpack.c.b16 %v2695, %v2694
  %2708 = vmatprep.subr.bf16.mxu0 0
  %2709 = vmatpush1.bf16.msra.mxu0 0
  %2710 = vmatprep.subr.bf16.mxu0 0
  %2711 = vmatpush1.bf16.msra.mxu0 0
  %2712 = vmatprep.subr.bf16.mxu0 0
  %2713 = vmatpush1.bf16.msra.mxu0 %v2701
  %2714 = vmatprep.subr.bf16.mxu0 0
  %2715 = vmatpush1.bf16.msra.mxu0 %v2700
  %2716 = vmatprep.subr.bf16.mxu0 0
  %2717 = vmatpush1.bf16.msra.mxu0 %v2699
  %2718 = vmatprep.subr.bf16.mxu0 0
  %2719 = vmatpush1.bf16.msra.mxu0 %v2698
  %2720 = vmatprep.subr.bf16.mxu0 0
  %2721 = vmatpush1.bf16.msra.mxu0 %v2697
  %2722 = vmatprep.subr.bf16.mxu0 0
  %2723 = vmatpush1.bf16.msra.mxu0 %v2696
  %2724 = vmatprep.subr.bf16.mxu0 0
  %2725 = vmatpush2.bf16.msra.mxu0 0
  %2726 = vmatprep.subr.bf16.mxu0 0
  %2727 = vmatpush2.bf16.msra.mxu0 0
  %2728 = vmatprep.subr.bf16.mxu0 0
  %2729 = vmatpush2.bf16.msra.mxu0 0
  %2730 = vmatprep.subr.bf16.mxu0 0
  %2731 = vmatpush2.bf16.msra.mxu0 0
  %2732 = vmatprep.subr.bf16.mxu0 0
  %2733 = vmatpush2.bf16.msra.mxu0 0
  %2734 = vmatprep.subr.bf16.mxu0 0
  %2735 = vmatpush2.bf16.msra.mxu0 0
  %2736 = vmatprep.subr.bf16.mxu0 0
  %2737 = vmatpush2.bf16.msra.mxu0 0
  %2738 = vmatprep.subr.bf16.mxu0 0
  %2739 = vmatpush2.bf16.msra.mxu0 0
  %2740 = vmatprep.mubr.bf16.mxu0 0
  %2741 = vmatmul.mubr.bf16.gmra.mxu0 %v1501
  %v2742 = vpop.f32.mrf.mxu0
  %v2743 = vadd.f32 0.0, %v2742
  %v2744 = vpop.f32.mrf.mxu0
  %v2745 = vpop.f32.mrf.mxu0
  %v2746 = vadd.f32 0.0, %v2745
  %v2747 = vpop.f32.mrf.mxu0
  %2748 = vmatprep.mubr.bf16.mxu0 0
  %2749 = vmatmul.mubr.bf16.gmra.mxu0 %v1504
  %v2750 = vpop.f32.mrf.mxu0
  %v2751 = vadd.f32 0.0, %v2750
  %v2752 = vpop.f32.mrf.mxu0
  %v2753 = vpop.f32.mrf.mxu0
  %v2754 = vadd.f32 0.0, %v2753
  %v2755 = vpop.f32.mrf.mxu0
  %2756 = vmatprep.mubr.bf16.mxu0 0
  %2757 = vmatmul.mubr.bf16.gmra.mxu0 %v1507
  %v2758 = vpop.f32.mrf.mxu0
  %v2759 = vadd.f32 0.0, %v2758
  %v2760 = vpop.f32.mrf.mxu0
  %v2761 = vpop.f32.mrf.mxu0
  %v2762 = vadd.f32 0.0, %v2761
  %v2763 = vpop.f32.mrf.mxu0
  %2764 = vmatprep.mubr.bf16.mxu0 0
  %2765 = vmatmul.mubr.bf16.gmra.mxu0 %v1510
  %v2766 = vpop.f32.mrf.mxu0
  %v2767 = vadd.f32 0.0, %v2766
  %v2768 = vpop.f32.mrf.mxu0
  %v2769 = vpop.f32.mrf.mxu0
  %v2770 = vadd.f32 0.0, %v2769
  %v2771 = vpop.f32.mrf.mxu0
  %2772 = vmatprep.mubr.bf16.mxu0 0
  %2773 = vmatmul.mubr.bf16.gmra.mxu0 %v1513
  %v2774 = vpop.f32.mrf.mxu0
  %v2775 = vadd.f32 0.0, %v2774
  %v2776 = vpop.f32.mrf.mxu0
  %v2777 = vpop.f32.mrf.mxu0
  %v2778 = vadd.f32 0.0, %v2777
  %v2779 = vpop.f32.mrf.mxu0
  %2780 = vmatprep.mubr.bf16.mxu0 0
  %2781 = vmatmul.mubr.bf16.gmra.mxu0 %v1516
  %v2782 = vpop.f32.mrf.mxu0
  %v2783 = vadd.f32 0.0, %v2782
  %v2784 = vpop.f32.mrf.mxu0
  %v2785 = vpop.f32.mrf.mxu0
  %v2786 = vadd.f32 0.0, %v2785
  %v2787 = vpop.f32.mrf.mxu0
  %2788 = vmatprep.mubr.bf16.mxu0 0
  %2789 = vmatmul.mubr.bf16.gmra.mxu0 %v1519
  %v2790 = vpop.f32.mrf.mxu0
  %v2791 = vadd.f32 0.0, %v2790
  %v2792 = vpop.f32.mrf.mxu0
  %v2793 = vpop.f32.mrf.mxu0
  %v2794 = vadd.f32 0.0, %v2793
  %v2795 = vpop.f32.mrf.mxu0
  %2796 = vmatprep.mubr.bf16.mxu0 0
  %2797 = vmatmul.mubr.bf16.gmra.mxu0 %v1522
  %v2798 = vpop.f32.mrf.mxu0
  %v2799 = vadd.f32 0.0, %v2798
  %v2800 = vpop.f32.mrf.mxu0
  %v2801 = vpop.f32.mrf.mxu0
  %v2802 = vadd.f32 0.0, %v2801
  %v2803 = vpop.f32.mrf.mxu0
  %2804 = vmatprep.mubr.bf16.mxu0 0
  %2805 = vmatmul.mubr.bf16.gmra.mxu0 %v1525
  %v2806 = vpop.f32.mrf.mxu0
  %v2807 = vadd.f32 0.0, %v2806
  %v2808 = vpop.f32.mrf.mxu0
  %v2809 = vpop.f32.mrf.mxu0
  %v2810 = vadd.f32 0.0, %v2809
  %v2811 = vpop.f32.mrf.mxu0
  %2812 = vmatprep.mubr.bf16.mxu0 0
  %2813 = vmatmul.mubr.bf16.gmra.mxu0 %v1528
  %v2814 = vpop.f32.mrf.mxu0
  %v2815 = vadd.f32 0.0, %v2814
  %v2816 = vpop.f32.mrf.mxu0
  %v2817 = vpop.f32.mrf.mxu0
  %v2818 = vadd.f32 0.0, %v2817
  %v2819 = vpop.f32.mrf.mxu0
  %2820 = vmatprep.mubr.bf16.mxu0 0
  %2821 = vmatmul.mubr.bf16.gmra.mxu0 %v1531
  %v2822 = vpop.f32.mrf.mxu0
  %v2823 = vadd.f32 0.0, %v2822
  %v2824 = vpop.f32.mrf.mxu0
  %v2825 = vpop.f32.mrf.mxu0
  %v2826 = vadd.f32 0.0, %v2825
  %v2827 = vpop.f32.mrf.mxu0
  %2828 = vmatprep.mubr.bf16.mxu0 0
  %2829 = vmatmul.mubr.bf16.gmra.mxu0 %v1534
  %v2830 = vpop.f32.mrf.mxu0
  %v2831 = vadd.f32 0.0, %v2830
  %v2832 = vpop.f32.mrf.mxu0
  %v2833 = vpop.f32.mrf.mxu0
  %v2834 = vadd.f32 0.0, %v2833
  %v2835 = vpop.f32.mrf.mxu0
  %2836 = vmatprep.mubr.bf16.mxu0 0
  %2837 = vmatmul.mubr.bf16.gmra.mxu0 %v1537
  %v2838 = vpop.f32.mrf.mxu0
  %v2839 = vadd.f32 0.0, %v2838
  %v2840 = vpop.f32.mrf.mxu0
  %v2841 = vpop.f32.mrf.mxu0
  %v2842 = vadd.f32 0.0, %v2841
  %v2843 = vpop.f32.mrf.mxu0
  %2844 = vmatprep.mubr.bf16.mxu0 0
  %2845 = vmatmul.mubr.bf16.gmra.mxu0 %v1540
  %v2846 = vpop.f32.mrf.mxu0
  %v2847 = vadd.f32 0.0, %v2846
  %v2848 = vpop.f32.mrf.mxu0
  %v2849 = vpop.f32.mrf.mxu0
  %v2850 = vadd.f32 0.0, %v2849
  %v2851 = vpop.f32.mrf.mxu0
  %2852 = vdwg.mxu0
  %v2853 = vadd.f32 %v2631, %v2743
  %v2854 = vadd.f32 %v2632, %v2746
  %v2855 = vadd.f32 %v2633, %v2751
  %v2856 = vadd.f32 %v2634, %v2754
  %v2857 = vadd.f32 %v2635, %v2759
  %v2858 = vadd.f32 %v2636, %v2762
  %v2859 = vadd.f32 %v2637, %v2767
  %v2860 = vadd.f32 %v2638, %v2770
  %v2861 = vadd.f32 %v2639, %v2775
  %v2862 = vadd.f32 %v2640, %v2778
  %v2863 = vadd.f32 %v2641, %v2783
  %v2864 = vadd.f32 %v2642, %v2786
  %v2865 = vadd.f32 %v2643, %v2791
  %v2866 = vadd.f32 %v2644, %v2794
  %v2867 = vadd.f32 %v2645, %v2799
  %v2868 = vadd.f32 %v2646, %v2802
  %v2869 = vadd.f32 %v2647, %v2807
  %v2870 = vadd.f32 %v2648, %v2810
  %v2871 = vadd.f32 %v2649, %v2815
  %v2872 = vadd.f32 %v2650, %v2818
  %v2873 = vadd.f32 %v2651, %v2823
  %v2874 = vadd.f32 %v2652, %v2826
  %v2875 = vadd.f32 %v2653, %v2831
  %v2876 = vadd.f32 %v2654, %v2834
  %v2877 = vadd.f32 %v2655, %v2839
  %v2878 = vadd.f32 %v2656, %v2842
  %v2879 = vadd.f32 %v2657, %v2847
  %v2880 = vadd.f32 %v2658, %v2850
  %s2881 = scalar_lea.vmem %s1, 432
  %v2882 = vld [vmem:[%s2881] sm:$0xf]
  %v2883 = vld [vmem:[%s2881 + $0x4] sm:$0xf]
  %v2884 = vld [vmem:[%s2881 + $0x8] sm:$0xf]
  %v2885 = vld [vmem:[%s2881 + $0xc] sm:$0xf]
  %v2886 = vld [vmem:[%s2881 + $0x10] sm:$0xf]
  %v2887 = vld [vmem:[%s2881 + $0x14] sm:$0xf]
  %v2888 = vld [vmem:[%s2881 + $0x18] sm:$0xf]
  %v2889 = vld [vmem:[%s2881 + $0x1c] sm:$0xf]
  %v2890 = vld [vmem:[%s2881 + $0x20] sm:$0xf]
  %v2891 = vld [vmem:[%s2881 + $0x24] sm:$0xf]
  %v2892 = vld [vmem:[%s2881 + $0x28] sm:$0xf]
  %v2893 = vld [vmem:[%s2881 + $0x2c] sm:$0xf]
  %v2906 = vunpack.c.l.b16 %v2882
  %v2907 = vunpack.c.l.b16 %v2883
  %v2908 = vunpack.c.l.b16 %v2884
  %v2909 = vunpack.c.l.b16 %v2885
  %v2910 = vunpack.c.l.b16 %v2886
  %v2911 = vunpack.c.l.b16 %v2887
  %v2912 = vunpack.c.l.b16 %v2888
  %v2913 = vunpack.c.l.b16 %v2889
  %v2914 = vunpack.c.l.b16 %v2890
  %v2915 = vunpack.c.l.b16 %v2891
  %v2916 = vunpack.c.l.b16 %v2892
  %v2917 = vunpack.c.l.b16 %v2893
  %v2918 = vpack.c.b16 %v2907, %v2906
  %v2919 = vpack.c.b16 %v2909, %v2908
  %v2920 = vpack.c.b16 %v2911, %v2910
  %v2921 = vpack.c.b16 %v2913, %v2912
  %v2922 = vpack.c.b16 %v2915, %v2914
  %v2923 = vpack.c.b16 %v2917, %v2916
  %2930 = vmatprep.subr.bf16.mxu0 0
  %2931 = vmatpush1.bf16.msra.mxu0 0
  %2932 = vmatprep.subr.bf16.mxu0 0
  %2933 = vmatpush1.bf16.msra.mxu0 0
  %2934 = vmatprep.subr.bf16.mxu0 0
  %2935 = vmatpush1.bf16.msra.mxu0 %v2923
  %2936 = vmatprep.subr.bf16.mxu0 0
  %2937 = vmatpush1.bf16.msra.mxu0 %v2922
  %2938 = vmatprep.subr.bf16.mxu0 0
  %2939 = vmatpush1.bf16.msra.mxu0 %v2921
  %2940 = vmatprep.subr.bf16.mxu0 0
  %2941 = vmatpush1.bf16.msra.mxu0 %v2920
  %2942 = vmatprep.subr.bf16.mxu0 0
  %2943 = vmatpush1.bf16.msra.mxu0 %v2919
  %2944 = vmatprep.subr.bf16.mxu0 0
  %2945 = vmatpush1.bf16.msra.mxu0 %v2918
  %2946 = vmatprep.subr.bf16.mxu0 0
  %2947 = vmatpush2.bf16.msra.mxu0 0
  %2948 = vmatprep.subr.bf16.mxu0 0
  %2949 = vmatpush2.bf16.msra.mxu0 0
  %2950 = vmatprep.subr.bf16.mxu0 0
  %2951 = vmatpush2.bf16.msra.mxu0 0
  %2952 = vmatprep.subr.bf16.mxu0 0
  %2953 = vmatpush2.bf16.msra.mxu0 0
  %2954 = vmatprep.subr.bf16.mxu0 0
  %2955 = vmatpush2.bf16.msra.mxu0 0
  %2956 = vmatprep.subr.bf16.mxu0 0
  %2957 = vmatpush2.bf16.msra.mxu0 0
  %2958 = vmatprep.subr.bf16.mxu0 0
  %2959 = vmatpush2.bf16.msra.mxu0 0
  %2960 = vmatprep.subr.bf16.mxu0 0
  %2961 = vmatpush2.bf16.msra.mxu0 0
  %2962 = vmatprep.mubr.bf16.mxu0 0
  %2963 = vmatmul.mubr.bf16.gmra.mxu0 %v1835
  %v2964 = vpop.f32.mrf.mxu0
  %v2965 = vadd.f32 0.0, %v2964
  %v2966 = vpop.f32.mrf.mxu0
  %v2967 = vpop.f32.mrf.mxu0
  %v2968 = vadd.f32 0.0, %v2967
  %v2969 = vpop.f32.mrf.mxu0
  %2970 = vmatprep.mubr.bf16.mxu0 0
  %2971 = vmatmul.mubr.bf16.gmra.mxu0 %v1838
  %v2972 = vpop.f32.mrf.mxu0
  %v2973 = vadd.f32 0.0, %v2972
  %v2974 = vpop.f32.mrf.mxu0
  %v2975 = vpop.f32.mrf.mxu0
  %v2976 = vadd.f32 0.0, %v2975
  %v2977 = vpop.f32.mrf.mxu0
  %2978 = vmatprep.mubr.bf16.mxu0 0
  %2979 = vmatmul.mubr.bf16.gmra.mxu0 %v1841
  %v2980 = vpop.f32.mrf.mxu0
  %v2981 = vadd.f32 0.0, %v2980
  %v2982 = vpop.f32.mrf.mxu0
  %v2983 = vpop.f32.mrf.mxu0
  %v2984 = vadd.f32 0.0, %v2983
  %v2985 = vpop.f32.mrf.mxu0
  %2986 = vmatprep.mubr.bf16.mxu0 0
  %2987 = vmatmul.mubr.bf16.gmra.mxu0 %v1844
  %v2988 = vpop.f32.mrf.mxu0
  %v2989 = vadd.f32 0.0, %v2988
  %v2990 = vpop.f32.mrf.mxu0
  %v2991 = vpop.f32.mrf.mxu0
  %v2992 = vadd.f32 0.0, %v2991
  %v2993 = vpop.f32.mrf.mxu0
  %2994 = vmatprep.mubr.bf16.mxu0 0
  %2995 = vmatmul.mubr.bf16.gmra.mxu0 %v1847
  %v2996 = vpop.f32.mrf.mxu0
  %v2997 = vadd.f32 0.0, %v2996
  %v2998 = vpop.f32.mrf.mxu0
  %v2999 = vpop.f32.mrf.mxu0
  %v3000 = vadd.f32 0.0, %v2999
  %v3001 = vpop.f32.mrf.mxu0
  %3002 = vmatprep.mubr.bf16.mxu0 0
  %3003 = vmatmul.mubr.bf16.gmra.mxu0 %v1850
  %v3004 = vpop.f32.mrf.mxu0
  %v3005 = vadd.f32 0.0, %v3004
  %v3006 = vpop.f32.mrf.mxu0
  %v3007 = vpop.f32.mrf.mxu0
  %v3008 = vadd.f32 0.0, %v3007
  %v3009 = vpop.f32.mrf.mxu0
  %3010 = vmatprep.mubr.bf16.mxu0 0
  %3011 = vmatmul.mubr.bf16.gmra.mxu0 %v1853
  %v3012 = vpop.f32.mrf.mxu0
  %v3013 = vadd.f32 0.0, %v3012
  %v3014 = vpop.f32.mrf.mxu0
  %v3015 = vpop.f32.mrf.mxu0
  %v3016 = vadd.f32 0.0, %v3015
  %v3017 = vpop.f32.mrf.mxu0
  %3018 = vmatprep.mubr.bf16.mxu0 0
  %3019 = vmatmul.mubr.bf16.gmra.mxu0 %v1856
  %v3020 = vpop.f32.mrf.mxu0
  %v3021 = vadd.f32 0.0, %v3020
  %v3022 = vpop.f32.mrf.mxu0
  %v3023 = vpop.f32.mrf.mxu0
  %v3024 = vadd.f32 0.0, %v3023
  %v3025 = vpop.f32.mrf.mxu0
  %3026 = vmatprep.mubr.bf16.mxu0 0
  %3027 = vmatmul.mubr.bf16.gmra.mxu0 %v1859
  %v3028 = vpop.f32.mrf.mxu0
  %v3029 = vadd.f32 0.0, %v3028
  %v3030 = vpop.f32.mrf.mxu0
  %v3031 = vpop.f32.mrf.mxu0
  %v3032 = vadd.f32 0.0, %v3031
  %v3033 = vpop.f32.mrf.mxu0
  %3034 = vmatprep.mubr.bf16.mxu0 0
  %3035 = vmatmul.mubr.bf16.gmra.mxu0 %v1862
  %v3036 = vpop.f32.mrf.mxu0
  %v3037 = vadd.f32 0.0, %v3036
  %v3038 = vpop.f32.mrf.mxu0
  %v3039 = vpop.f32.mrf.mxu0
  %v3040 = vadd.f32 0.0, %v3039
  %v3041 = vpop.f32.mrf.mxu0
  %3042 = vmatprep.mubr.bf16.mxu0 0
  %3043 = vmatmul.mubr.bf16.gmra.mxu0 %v1865
  %v3044 = vpop.f32.mrf.mxu0
  %v3045 = vadd.f32 0.0, %v3044
  %v3046 = vpop.f32.mrf.mxu0
  %v3047 = vpop.f32.mrf.mxu0
  %v3048 = vadd.f32 0.0, %v3047
  %v3049 = vpop.f32.mrf.mxu0
  %3050 = vmatprep.mubr.bf16.mxu0 0
  %3051 = vmatmul.mubr.bf16.gmra.mxu0 %v1868
  %v3052 = vpop.f32.mrf.mxu0
  %v3053 = vadd.f32 0.0, %v3052
  %v3054 = vpop.f32.mrf.mxu0
  %v3055 = vpop.f32.mrf.mxu0
  %v3056 = vadd.f32 0.0, %v3055
  %v3057 = vpop.f32.mrf.mxu0
  %3058 = vmatprep.mubr.bf16.mxu0 0
  %3059 = vmatmul.mubr.bf16.gmra.mxu0 %v1871
  %v3060 = vpop.f32.mrf.mxu0
  %v3061 = vadd.f32 0.0, %v3060
  %v3062 = vpop.f32.mrf.mxu0
  %v3063 = vpop.f32.mrf.mxu0
  %v3064 = vadd.f32 0.0, %v3063
  %v3065 = vpop.f32.mrf.mxu0
  %3066 = vmatprep.mubr.bf16.mxu0 0
  %3067 = vmatmul.mubr.bf16.gmra.mxu0 %v1874
  %v3068 = vpop.f32.mrf.mxu0
  %v3069 = vadd.f32 0.0, %v3068
  %v3070 = vpop.f32.mrf.mxu0
  %v3071 = vpop.f32.mrf.mxu0
  %v3072 = vadd.f32 0.0, %v3071
  %v3073 = vpop.f32.mrf.mxu0
  %3074 = vdwg.mxu0
  %v3075 = vadd.f32 %v2853, %v2965
  %v3076 = vadd.f32 %v2854, %v2968
  %v3077 = vadd.f32 %v2855, %v2973
  %v3078 = vadd.f32 %v2856, %v2976
  %v3079 = vadd.f32 %v2857, %v2981
  %v3080 = vadd.f32 %v2858, %v2984
  %v3081 = vadd.f32 %v2859, %v2989
  %v3082 = vadd.f32 %v2860, %v2992
  %v3083 = vadd.f32 %v2861, %v2997
  %v3084 = vadd.f32 %v2862, %v3000
  %v3085 = vadd.f32 %v2863, %v3005
  %v3086 = vadd.f32 %v2864, %v3008
  %v3087 = vadd.f32 %v2865, %v3013
  %v3088 = vadd.f32 %v2866, %v3016
  %v3089 = vadd.f32 %v2867, %v3021
  %v3090 = vadd.f32 %v2868, %v3024
  %v3091 = vadd.f32 %v2869, %v3029
  %v3092 = vadd.f32 %v2870, %v3032
  %v3093 = vadd.f32 %v2871, %v3037
  %v3094 = vadd.f32 %v2872, %v3040
  %v3095 = vadd.f32 %v2873, %v3045
  %v3096 = vadd.f32 %v2874, %v3048
  %v3097 = vadd.f32 %v2875, %v3053
  %v3098 = vadd.f32 %v2876, %v3056
  %v3099 = vadd.f32 %v2877, %v3061
  %v3100 = vadd.f32 %v2878, %v3064
  %v3101 = vadd.f32 %v2879, %v3069
  %v3102 = vadd.f32 %v2880, %v3072
  %v3103 = vmax.f32 %v2021, %v3075
  %v3104 = vmax.f32 %v2022, %v3076
  %v3105 = vmax.f32 %v2023, %v3077
  %v3106 = vmax.f32 %v2024, %v3078
  %v3107 = vmax.f32 %v2025, %v3079
  %v3108 = vmax.f32 %v2026, %v3080
  %v3109 = vmax.f32 %v2027, %v3081
  %v3110 = vmax.f32 %v2028, %v3082
  %v3111 = vmax.f32 %v2029, %v3083
  %v3112 = vmax.f32 %v2030, %v3084
  %v3113 = vmax.f32 %v2031, %v3085
  %v3114 = vmax.f32 %v2032, %v3086
  %v3115 = vmax.f32 %v2033, %v3087
  %v3116 = vmax.f32 %v2034, %v3088
  %v3117 = vmax.f32 %v2035, %v3089
  %v3118 = vmax.f32 %v2036, %v3090
  %v3119 = vmax.f32 %v2037, %v3091
  %v3120 = vmax.f32 %v2038, %v3092
  %v3121 = vmax.f32 %v2039, %v3093
  %v3122 = vmax.f32 %v2040, %v3094
  %v3123 = vmax.f32 %v2041, %v3095
  %v3124 = vmax.f32 %v2042, %v3096
  %v3125 = vmax.f32 %v2043, %v3097
  %v3126 = vmax.f32 %v2044, %v3098
  %v3127 = vmax.f32 %v2045, %v3099
  %v3128 = vmax.f32 %v2046, %v3100
  %v3129 = vmax.f32 %v2047, %v3101
  %v3130 = vmax.f32 %v2048, %v3102
  %3131 = vmatprep.subr.bf16.mxu0 0
  %3132 = vmatpush1.bf16.msra.mxu0 0
  %3133 = vmatprep.subr.bf16.mxu0 0
  %3134 = vmatpush1.bf16.msra.mxu0 0
  %3135 = vmatprep.subr.bf16.mxu0 0
  %3136 = vmatpush1.bf16.msra.mxu0 %v447
  %3137 = vmatprep.subr.bf16.mxu0 0
  %3138 = vmatpush1.bf16.msra.mxu0 %v446
  %3139 = vmatprep.subr.bf16.mxu0 0
  %3140 = vmatpush1.bf16.msra.mxu0 %v445
  %3141 = vmatprep.subr.bf16.mxu0 0
  %3142 = vmatpush1.bf16.msra.mxu0 %v444
  %3143 = vmatprep.subr.bf16.mxu0 0
  %3144 = vmatpush1.bf16.msra.mxu0 %v443
  %3145 = vmatprep.subr.bf16.mxu0 0
  %3146 = vmatpush1.bf16.msra.mxu0 %v442
  %3147 = vmatprep.subr.bf16.mxu0 0
  %3148 = vmatpush2.bf16.msra.mxu0 0
  %3149 = vmatprep.subr.bf16.mxu0 0
  %3150 = vmatpush2.bf16.msra.mxu0 0
  %3151 = vmatprep.subr.bf16.mxu0 0
  %3152 = vmatpush2.bf16.msra.mxu0 0
  %3153 = vmatprep.subr.bf16.mxu0 0
  %3154 = vmatpush2.bf16.msra.mxu0 0
  %3155 = vmatprep.subr.bf16.mxu0 0
  %3156 = vmatpush2.bf16.msra.mxu0 0
  %3157 = vmatprep.subr.bf16.mxu0 0
  %3158 = vmatpush2.bf16.msra.mxu0 0
  %3159 = vmatprep.subr.bf16.mxu0 0
  %3160 = vmatpush2.bf16.msra.mxu0 0
  %3161 = vmatprep.subr.bf16.mxu0 0
  %3162 = vmatpush2.bf16.msra.mxu0 0
  %3163 = vmatprep.mubr.bf16.mxu0 0
  %3164 = vmatmul.mubr.bf16.gmra.mxu0 %v1055
  %v3165 = vpop.f32.mrf.mxu0
  %v3166 = vadd.f32 0.0, %v3165
  %v3167 = vpop.f32.mrf.mxu0
  %v3168 = vpop.f32.mrf.mxu0
  %v3169 = vadd.f32 0.0, %v3168
  %v3170 = vpop.f32.mrf.mxu0
  %3171 = vmatprep.mubr.bf16.mxu0 0
  %3172 = vmatmul.mubr.bf16.gmra.mxu0 %v1058
  %v3173 = vpop.f32.mrf.mxu0
  %v3174 = vadd.f32 0.0, %v3173
  %v3175 = vpop.f32.mrf.mxu0
  %v3176 = vpop.f32.mrf.mxu0
  %v3177 = vadd.f32 0.0, %v3176
  %v3178 = vpop.f32.mrf.mxu0
  %3179 = vmatprep.mubr.bf16.mxu0 0
  %3180 = vmatmul.mubr.bf16.gmra.mxu0 %v1061
  %v3181 = vpop.f32.mrf.mxu0
  %v3182 = vadd.f32 0.0, %v3181
  %v3183 = vpop.f32.mrf.mxu0
  %v3184 = vpop.f32.mrf.mxu0
  %v3185 = vadd.f32 0.0, %v3184
  %v3186 = vpop.f32.mrf.mxu0
  %3187 = vmatprep.mubr.bf16.mxu0 0
  %3188 = vmatmul.mubr.bf16.gmra.mxu0 %v1064
  %v3189 = vpop.f32.mrf.mxu0
  %v3190 = vadd.f32 0.0, %v3189
  %v3191 = vpop.f32.mrf.mxu0
  %v3192 = vpop.f32.mrf.mxu0
  %v3193 = vadd.f32 0.0, %v3192
  %v3194 = vpop.f32.mrf.mxu0
  %3195 = vmatprep.mubr.bf16.mxu0 0
  %3196 = vmatmul.mubr.bf16.gmra.mxu0 %v1067
  %v3197 = vpop.f32.mrf.mxu0
  %v3198 = vadd.f32 0.0, %v3197
  %v3199 = vpop.f32.mrf.mxu0
  %v3200 = vpop.f32.mrf.mxu0
  %v3201 = vadd.f32 0.0, %v3200
  %v3202 = vpop.f32.mrf.mxu0
  %3203 = vmatprep.mubr.bf16.mxu0 0
  %3204 = vmatmul.mubr.bf16.gmra.mxu0 %v1070
  %v3205 = vpop.f32.mrf.mxu0
  %v3206 = vadd.f32 0.0, %v3205
  %v3207 = vpop.f32.mrf.mxu0
  %v3208 = vpop.f32.mrf.mxu0
  %v3209 = vadd.f32 0.0, %v3208
  %v3210 = vpop.f32.mrf.mxu0
  %3211 = vmatprep.mubr.bf16.mxu0 0
  %3212 = vmatmul.mubr.bf16.gmra.mxu0 %v1073
  %v3213 = vpop.f32.mrf.mxu0
  %v3214 = vadd.f32 0.0, %v3213
  %v3215 = vpop.f32.mrf.mxu0
  %v3216 = vpop.f32.mrf.mxu0
  %v3217 = vadd.f32 0.0, %v3216
  %v3218 = vpop.f32.mrf.mxu0
  %3219 = vmatprep.mubr.bf16.mxu0 0
  %3220 = vmatmul.mubr.bf16.gmra.mxu0 %v1076
  %v3221 = vpop.f32.mrf.mxu0
  %v3222 = vadd.f32 0.0, %v3221
  %v3223 = vpop.f32.mrf.mxu0
  %v3224 = vpop.f32.mrf.mxu0
  %v3225 = vadd.f32 0.0, %v3224
  %v3226 = vpop.f32.mrf.mxu0
  %3227 = vmatprep.mubr.bf16.mxu0 0
  %3228 = vmatmul.mubr.bf16.gmra.mxu0 %v1079
  %v3229 = vpop.f32.mrf.mxu0
  %v3230 = vadd.f32 0.0, %v3229
  %v3231 = vpop.f32.mrf.mxu0
  %v3232 = vpop.f32.mrf.mxu0
  %v3233 = vadd.f32 0.0, %v3232
  %v3234 = vpop.f32.mrf.mxu0
  %3235 = vmatprep.mubr.bf16.mxu0 0
  %3236 = vmatmul.mubr.bf16.gmra.mxu0 %v1082
  %v3237 = vpop.f32.mrf.mxu0
  %v3238 = vadd.f32 0.0, %v3237
  %v3239 = vpop.f32.mrf.mxu0
  %v3240 = vpop.f32.mrf.mxu0
  %v3241 = vadd.f32 0.0, %v3240
  %v3242 = vpop.f32.mrf.mxu0
  %3243 = vmatprep.mubr.bf16.mxu0 0
  %3244 = vmatmul.mubr.bf16.gmra.mxu0 %v1085
  %v3245 = vpop.f32.mrf.mxu0
  %v3246 = vadd.f32 0.0, %v3245
  %v3247 = vpop.f32.mrf.mxu0
  %v3248 = vpop.f32.mrf.mxu0
  %v3249 = vadd.f32 0.0, %v3248
  %v3250 = vpop.f32.mrf.mxu0
  %3251 = vmatprep.mubr.bf16.mxu0 0
  %3252 = vmatmul.mubr.bf16.gmra.mxu0 %v1088
  %v3253 = vpop.f32.mrf.mxu0
  %v3254 = vadd.f32 0.0, %v3253
  %v3255 = vpop.f32.mrf.mxu0
  %v3256 = vpop.f32.mrf.mxu0
  %v3257 = vadd.f32 0.0, %v3256
  %v3258 = vpop.f32.mrf.mxu0
  %3259 = vmatprep.mubr.bf16.mxu0 0
  %3260 = vmatmul.mubr.bf16.gmra.mxu0 %v1091
  %v3261 = vpop.f32.mrf.mxu0
  %v3262 = vadd.f32 0.0, %v3261
  %v3263 = vpop.f32.mrf.mxu0
  %v3264 = vpop.f32.mrf.mxu0
  %v3265 = vadd.f32 0.0, %v3264
  %v3266 = vpop.f32.mrf.mxu0
  %3267 = vmatprep.mubr.bf16.mxu0 0
  %3268 = vmatmul.mubr.bf16.gmra.mxu0 %v1094
  %v3269 = vpop.f32.mrf.mxu0
  %v3270 = vadd.f32 0.0, %v3269
  %v3271 = vpop.f32.mrf.mxu0
  %v3272 = vpop.f32.mrf.mxu0
  %v3273 = vadd.f32 0.0, %v3272
  %v3274 = vpop.f32.mrf.mxu0
  %3275 = vdwg.mxu0
  %3276 = vmatprep.subr.bf16.mxu0 0
  %3277 = vmatpush1.bf16.msra.mxu0 0
  %3278 = vmatprep.subr.bf16.mxu0 0
  %3279 = vmatpush1.bf16.msra.mxu0 0
  %3280 = vmatprep.subr.bf16.mxu0 0
  %3281 = vmatpush1.bf16.msra.mxu0 %v741
  %3282 = vmatprep.subr.bf16.mxu0 0
  %3283 = vmatpush1.bf16.msra.mxu0 %v740
  %3284 = vmatprep.subr.bf16.mxu0 0
  %3285 = vmatpush1.bf16.msra.mxu0 %v739
  %3286 = vmatprep.subr.bf16.mxu0 0
  %3287 = vmatpush1.bf16.msra.mxu0 %v738
  %3288 = vmatprep.subr.bf16.mxu0 0
  %3289 = vmatpush1.bf16.msra.mxu0 %v737
  %3290 = vmatprep.subr.bf16.mxu0 0
  %3291 = vmatpush1.bf16.msra.mxu0 %v736
  %3292 = vmatprep.subr.bf16.mxu0 0
  %3293 = vmatpush2.bf16.msra.mxu0 0
  %3294 = vmatprep.subr.bf16.mxu0 0
  %3295 = vmatpush2.bf16.msra.mxu0 0
  %3296 = vmatprep.subr.bf16.mxu0 0
  %3297 = vmatpush2.bf16.msra.mxu0 0
  %3298 = vmatprep.subr.bf16.mxu0 0
  %3299 = vmatpush2.bf16.msra.mxu0 0
  %3300 = vmatprep.subr.bf16.mxu0 0
  %3301 = vmatpush2.bf16.msra.mxu0 0
  %3302 = vmatprep.subr.bf16.mxu0 0
  %3303 = vmatpush2.bf16.msra.mxu0 0
  %3304 = vmatprep.subr.bf16.mxu0 0
  %3305 = vmatpush2.bf16.msra.mxu0 0
  %3306 = vmatprep.subr.bf16.mxu0 0
  %3307 = vmatpush2.bf16.msra.mxu0 0
  %3308 = vmatprep.mubr.bf16.mxu0 0
  %3309 = vmatmul.mubr.bf16.gmra.mxu0 %v456
  %v3310 = vpop.f32.mrf.mxu0
  %v3311 = vadd.f32 %v3166, %v3310
  %v3312 = vpop.f32.mrf.mxu0
  %v3313 = vpop.f32.mrf.mxu0
  %v3314 = vadd.f32 %v3169, %v3313
  %v3315 = vpop.f32.mrf.mxu0
  %3316 = vmatprep.mubr.bf16.mxu0 0
  %3317 = vmatmul.mubr.bf16.gmra.mxu0 %v459
  %v3318 = vpop.f32.mrf.mxu0
  %v3319 = vadd.f32 %v3174, %v3318
  %v3320 = vpop.f32.mrf.mxu0
  %v3321 = vpop.f32.mrf.mxu0
  %v3322 = vadd.f32 %v3177, %v3321
  %v3323 = vpop.f32.mrf.mxu0
  %3324 = vmatprep.mubr.bf16.mxu0 0
  %3325 = vmatmul.mubr.bf16.gmra.mxu0 %v462
  %v3326 = vpop.f32.mrf.mxu0
  %v3327 = vadd.f32 %v3182, %v3326
  %v3328 = vpop.f32.mrf.mxu0
  %v3329 = vpop.f32.mrf.mxu0
  %v3330 = vadd.f32 %v3185, %v3329
  %v3331 = vpop.f32.mrf.mxu0
  %3332 = vmatprep.mubr.bf16.mxu0 0
  %3333 = vmatmul.mubr.bf16.gmra.mxu0 %v465
  %v3334 = vpop.f32.mrf.mxu0
  %v3335 = vadd.f32 %v3190, %v3334
  %v3336 = vpop.f32.mrf.mxu0
  %v3337 = vpop.f32.mrf.mxu0
  %v3338 = vadd.f32 %v3193, %v3337
  %v3339 = vpop.f32.mrf.mxu0
  %3340 = vmatprep.mubr.bf16.mxu0 0
  %3341 = vmatmul.mubr.bf16.gmra.mxu0 %v468
  %v3342 = vpop.f32.mrf.mxu0
  %v3343 = vadd.f32 %v3198, %v3342
  %v3344 = vpop.f32.mrf.mxu0
  %v3345 = vpop.f32.mrf.mxu0
  %v3346 = vadd.f32 %v3201, %v3345
  %v3347 = vpop.f32.mrf.mxu0
  %3348 = vmatprep.mubr.bf16.mxu0 0
  %3349 = vmatmul.mubr.bf16.gmra.mxu0 %v471
  %v3350 = vpop.f32.mrf.mxu0
  %v3351 = vadd.f32 %v3206, %v3350
  %v3352 = vpop.f32.mrf.mxu0
  %v3353 = vpop.f32.mrf.mxu0
  %v3354 = vadd.f32 %v3209, %v3353
  %v3355 = vpop.f32.mrf.mxu0
  %3356 = vmatprep.mubr.bf16.mxu0 0
  %3357 = vmatmul.mubr.bf16.gmra.mxu0 %v474
  %v3358 = vpop.f32.mrf.mxu0
  %v3359 = vadd.f32 %v3214, %v3358
  %v3360 = vpop.f32.mrf.mxu0
  %v3361 = vpop.f32.mrf.mxu0
  %v3362 = vadd.f32 %v3217, %v3361
  %v3363 = vpop.f32.mrf.mxu0
  %3364 = vmatprep.mubr.bf16.mxu0 0
  %3365 = vmatmul.mubr.bf16.gmra.mxu0 %v477
  %v3366 = vpop.f32.mrf.mxu0
  %v3367 = vadd.f32 %v3222, %v3366
  %v3368 = vpop.f32.mrf.mxu0
  %v3369 = vpop.f32.mrf.mxu0
  %v3370 = vadd.f32 %v3225, %v3369
  %v3371 = vpop.f32.mrf.mxu0
  %3372 = vmatprep.mubr.bf16.mxu0 0
  %3373 = vmatmul.mubr.bf16.gmra.mxu0 %v480
  %v3374 = vpop.f32.mrf.mxu0
  %v3375 = vadd.f32 %v3230, %v3374
  %v3376 = vpop.f32.mrf.mxu0
  %v3377 = vpop.f32.mrf.mxu0
  %v3378 = vadd.f32 %v3233, %v3377
  %v3379 = vpop.f32.mrf.mxu0
  %3380 = vmatprep.mubr.bf16.mxu0 0
  %3381 = vmatmul.mubr.bf16.gmra.mxu0 %v483
  %v3382 = vpop.f32.mrf.mxu0
  %v3383 = vadd.f32 %v3238, %v3382
  %v3384 = vpop.f32.mrf.mxu0
  %v3385 = vpop.f32.mrf.mxu0
  %v3386 = vadd.f32 %v3241, %v3385
  %v3387 = vpop.f32.mrf.mxu0
  %3388 = vmatprep.mubr.bf16.mxu0 0
  %3389 = vmatmul.mubr.bf16.gmra.mxu0 %v486
  %v3390 = vpop.f32.mrf.mxu0
  %v3391 = vadd.f32 %v3246, %v3390
  %v3392 = vpop.f32.mrf.mxu0
  %v3393 = vpop.f32.mrf.mxu0
  %v3394 = vadd.f32 %v3249, %v3393
  %v3395 = vpop.f32.mrf.mxu0
  %3396 = vmatprep.mubr.bf16.mxu0 0
  %3397 = vmatmul.mubr.bf16.gmra.mxu0 %v489
  %v3398 = vpop.f32.mrf.mxu0
  %v3399 = vadd.f32 %v3254, %v3398
  %v3400 = vpop.f32.mrf.mxu0
  %v3401 = vpop.f32.mrf.mxu0
  %v3402 = vadd.f32 %v3257, %v3401
  %v3403 = vpop.f32.mrf.mxu0
  %3404 = vmatprep.mubr.bf16.mxu0 0
  %3405 = vmatmul.mubr.bf16.gmra.mxu0 %v492
  %v3406 = vpop.f32.mrf.mxu0
  %v3407 = vadd.f32 %v3262, %v3406
  %v3408 = vpop.f32.mrf.mxu0
  %v3409 = vpop.f32.mrf.mxu0
  %v3410 = vadd.f32 %v3265, %v3409
  %v3411 = vpop.f32.mrf.mxu0
  %3412 = vmatprep.mubr.bf16.mxu0 0
  %3413 = vmatmul.mubr.bf16.gmra.mxu0 %v495
  %v3414 = vpop.f32.mrf.mxu0
  %v3415 = vadd.f32 %v3270, %v3414
  %v3416 = vpop.f32.mrf.mxu0
  %v3417 = vpop.f32.mrf.mxu0
  %v3418 = vadd.f32 %v3273, %v3417
  %v3419 = vpop.f32.mrf.mxu0
  %3420 = vdwg.mxu0
  %3421 = vmatprep.subr.bf16.mxu0 0
  %3422 = vmatpush1.bf16.msra.mxu0 0
  %3423 = vmatprep.subr.bf16.mxu0 0
  %3424 = vmatpush1.bf16.msra.mxu0 0
  %3425 = vmatprep.subr.bf16.mxu0 0
  %3426 = vmatpush1.bf16.msra.mxu0 %v1047
  %3427 = vmatprep.subr.bf16.mxu0 0
  %3428 = vmatpush1.bf16.msra.mxu0 %v1046
  %3429 = vmatprep.subr.bf16.mxu0 0
  %3430 = vmatpush1.bf16.msra.mxu0 %v1045
  %3431 = vmatprep.subr.bf16.mxu0 0
  %3432 = vmatpush1.bf16.msra.mxu0 %v1044
  %3433 = vmatprep.subr.bf16.mxu0 0
  %3434 = vmatpush1.bf16.msra.mxu0 %v1043
  %3435 = vmatprep.subr.bf16.mxu0 0
  %3436 = vmatpush1.bf16.msra.mxu0 %v1042
  %3437 = vmatprep.subr.bf16.mxu0 0
  %3438 = vmatpush2.bf16.msra.mxu0 0
  %3439 = vmatprep.subr.bf16.mxu0 0
  %3440 = vmatpush2.bf16.msra.mxu0 0
  %3441 = vmatprep.subr.bf16.mxu0 0
  %3442 = vmatpush2.bf16.msra.mxu0 0
  %3443 = vmatprep.subr.bf16.mxu0 0
  %3444 = vmatpush2.bf16.msra.mxu0 0
  %3445 = vmatprep.subr.bf16.mxu0 0
  %3446 = vmatpush2.bf16.msra.mxu0 0
  %3447 = vmatprep.subr.bf16.mxu0 0
  %3448 = vmatpush2.bf16.msra.mxu0 0
  %3449 = vmatprep.subr.bf16.mxu0 0
  %3450 = vmatpush2.bf16.msra.mxu0 0
  %3451 = vmatprep.subr.bf16.mxu0 0
  %3452 = vmatpush2.bf16.msra.mxu0 0
  %3453 = vmatprep.mubr.bf16.mxu0 0
  %3454 = vmatmul.mubr.bf16.gmra.mxu0 %v1501
  %v3455 = vpop.f32.mrf.mxu0
  %v3456 = vadd.f32 0.0, %v3455
  %v3457 = vpop.f32.mrf.mxu0
  %v3458 = vpop.f32.mrf.mxu0
  %v3459 = vadd.f32 0.0, %v3458
  %v3460 = vpop.f32.mrf.mxu0
  %3461 = vmatprep.mubr.bf16.mxu0 0
  %3462 = vmatmul.mubr.bf16.gmra.mxu0 %v1504
  %v3463 = vpop.f32.mrf.mxu0
  %v3464 = vadd.f32 0.0, %v3463
  %v3465 = vpop.f32.mrf.mxu0
  %v3466 = vpop.f32.mrf.mxu0
  %v3467 = vadd.f32 0.0, %v3466
  %v3468 = vpop.f32.mrf.mxu0
  %3469 = vmatprep.mubr.bf16.mxu0 0
  %3470 = vmatmul.mubr.bf16.gmra.mxu0 %v1507
  %v3471 = vpop.f32.mrf.mxu0
  %v3472 = vadd.f32 0.0, %v3471
  %v3473 = vpop.f32.mrf.mxu0
  %v3474 = vpop.f32.mrf.mxu0
  %v3475 = vadd.f32 0.0, %v3474
  %v3476 = vpop.f32.mrf.mxu0
  %3477 = vmatprep.mubr.bf16.mxu0 0
  %3478 = vmatmul.mubr.bf16.gmra.mxu0 %v1510
  %v3479 = vpop.f32.mrf.mxu0
  %v3480 = vadd.f32 0.0, %v3479
  %v3481 = vpop.f32.mrf.mxu0
  %v3482 = vpop.f32.mrf.mxu0
  %v3483 = vadd.f32 0.0, %v3482
  %v3484 = vpop.f32.mrf.mxu0
  %3485 = vmatprep.mubr.bf16.mxu0 0
  %3486 = vmatmul.mubr.bf16.gmra.mxu0 %v1513
  %v3487 = vpop.f32.mrf.mxu0
  %v3488 = vadd.f32 0.0, %v3487
  %v3489 = vpop.f32.mrf.mxu0
  %v3490 = vpop.f32.mrf.mxu0
  %v3491 = vadd.f32 0.0, %v3490
  %v3492 = vpop.f32.mrf.mxu0
  %3493 = vmatprep.mubr.bf16.mxu0 0
  %3494 = vmatmul.mubr.bf16.gmra.mxu0 %v1516
  %v3495 = vpop.f32.mrf.mxu0
  %v3496 = vadd.f32 0.0, %v3495
  %v3497 = vpop.f32.mrf.mxu0
  %v3498 = vpop.f32.mrf.mxu0
  %v3499 = vadd.f32 0.0, %v3498
  %v3500 = vpop.f32.mrf.mxu0
  %3501 = vmatprep.mubr.bf16.mxu0 0
  %3502 = vmatmul.mubr.bf16.gmra.mxu0 %v1519
  %v3503 = vpop.f32.mrf.mxu0
  %v3504 = vadd.f32 0.0, %v3503
  %v3505 = vpop.f32.mrf.mxu0
  %v3506 = vpop.f32.mrf.mxu0
  %v3507 = vadd.f32 0.0, %v3506
  %v3508 = vpop.f32.mrf.mxu0
  %3509 = vmatprep.mubr.bf16.mxu0 0
  %3510 = vmatmul.mubr.bf16.gmra.mxu0 %v1522
  %v3511 = vpop.f32.mrf.mxu0
  %v3512 = vadd.f32 0.0, %v3511
  %v3513 = vpop.f32.mrf.mxu0
  %v3514 = vpop.f32.mrf.mxu0
  %v3515 = vadd.f32 0.0, %v3514
  %v3516 = vpop.f32.mrf.mxu0
  %3517 = vmatprep.mubr.bf16.mxu0 0
  %3518 = vmatmul.mubr.bf16.gmra.mxu0 %v1525
  %v3519 = vpop.f32.mrf.mxu0
  %v3520 = vadd.f32 0.0, %v3519
  %v3521 = vpop.f32.mrf.mxu0
  %v3522 = vpop.f32.mrf.mxu0
  %v3523 = vadd.f32 0.0, %v3522
  %v3524 = vpop.f32.mrf.mxu0
  %3525 = vmatprep.mubr.bf16.mxu0 0
  %3526 = vmatmul.mubr.bf16.gmra.mxu0 %v1528
  %v3527 = vpop.f32.mrf.mxu0
  %v3528 = vadd.f32 0.0, %v3527
  %v3529 = vpop.f32.mrf.mxu0
  %v3530 = vpop.f32.mrf.mxu0
  %v3531 = vadd.f32 0.0, %v3530
  %v3532 = vpop.f32.mrf.mxu0
  %3533 = vmatprep.mubr.bf16.mxu0 0
  %3534 = vmatmul.mubr.bf16.gmra.mxu0 %v1531
  %v3535 = vpop.f32.mrf.mxu0
  %v3536 = vadd.f32 0.0, %v3535
  %v3537 = vpop.f32.mrf.mxu0
  %v3538 = vpop.f32.mrf.mxu0
  %v3539 = vadd.f32 0.0, %v3538
  %v3540 = vpop.f32.mrf.mxu0
  %3541 = vmatprep.mubr.bf16.mxu0 0
  %3542 = vmatmul.mubr.bf16.gmra.mxu0 %v1534
  %v3543 = vpop.f32.mrf.mxu0
  %v3544 = vadd.f32 0.0, %v3543
  %v3545 = vpop.f32.mrf.mxu0
  %v3546 = vpop.f32.mrf.mxu0
  %v3547 = vadd.f32 0.0, %v3546
  %v3548 = vpop.f32.mrf.mxu0
  %3549 = vmatprep.mubr.bf16.mxu0 0
  %3550 = vmatmul.mubr.bf16.gmra.mxu0 %v1537
  %v3551 = vpop.f32.mrf.mxu0
  %v3552 = vadd.f32 0.0, %v3551
  %v3553 = vpop.f32.mrf.mxu0
  %v3554 = vpop.f32.mrf.mxu0
  %v3555 = vadd.f32 0.0, %v3554
  %v3556 = vpop.f32.mrf.mxu0
  %3557 = vmatprep.mubr.bf16.mxu0 0
  %3558 = vmatmul.mubr.bf16.gmra.mxu0 %v1540
  %v3559 = vpop.f32.mrf.mxu0
  %v3560 = vadd.f32 0.0, %v3559
  %v3561 = vpop.f32.mrf.mxu0
  %v3562 = vpop.f32.mrf.mxu0
  %v3563 = vadd.f32 0.0, %v3562
  %v3564 = vpop.f32.mrf.mxu0
  %3565 = vdwg.mxu0
  %v3566 = vadd.f32 %v3311, %v3456
  %v3567 = vadd.f32 %v3314, %v3459
  %v3568 = vadd.f32 %v3319, %v3464
  %v3569 = vadd.f32 %v3322, %v3467
  %v3570 = vadd.f32 %v3327, %v3472
  %v3571 = vadd.f32 %v3330, %v3475
  %v3572 = vadd.f32 %v3335, %v3480
  %v3573 = vadd.f32 %v3338, %v3483
  %v3574 = vadd.f32 %v3343, %v3488
  %v3575 = vadd.f32 %v3346, %v3491
  %v3576 = vadd.f32 %v3351, %v3496
  %v3577 = vadd.f32 %v3354, %v3499
  %v3578 = vadd.f32 %v3359, %v3504
  %v3579 = vadd.f32 %v3362, %v3507
  %v3580 = vadd.f32 %v3367, %v3512
  %v3581 = vadd.f32 %v3370, %v3515
  %v3582 = vadd.f32 %v3375, %v3520
  %v3583 = vadd.f32 %v3378, %v3523
  %v3584 = vadd.f32 %v3383, %v3528
  %v3585 = vadd.f32 %v3386, %v3531
  %v3586 = vadd.f32 %v3391, %v3536
  %v3587 = vadd.f32 %v3394, %v3539
  %v3588 = vadd.f32 %v3399, %v3544
  %v3589 = vadd.f32 %v3402, %v3547
  %v3590 = vadd.f32 %v3407, %v3552
  %v3591 = vadd.f32 %v3410, %v3555
  %v3592 = vadd.f32 %v3415, %v3560
  %v3593 = vadd.f32 %v3418, %v3563
  %3594 = vmatprep.subr.bf16.mxu0 0
  %3595 = vmatpush1.bf16.msra.mxu0 0
  %3596 = vmatprep.subr.bf16.mxu0 0
  %3597 = vmatpush1.bf16.msra.mxu0 0
  %3598 = vmatprep.subr.bf16.mxu0 0
  %3599 = vmatpush1.bf16.msra.mxu0 %v1493
  %3600 = vmatprep.subr.bf16.mxu0 0
  %3601 = vmatpush1.bf16.msra.mxu0 %v1492
  %3602 = vmatprep.subr.bf16.mxu0 0
  %3603 = vmatpush1.bf16.msra.mxu0 %v1491
  %3604 = vmatprep.subr.bf16.mxu0 0
  %3605 = vmatpush1.bf16.msra.mxu0 %v1490
  %3606 = vmatprep.subr.bf16.mxu0 0
  %3607 = vmatpush1.bf16.msra.mxu0 %v1489
  %3608 = vmatprep.subr.bf16.mxu0 0
  %3609 = vmatpush1.bf16.msra.mxu0 %v1488
  %3610 = vmatprep.subr.bf16.mxu0 0
  %3611 = vmatpush2.bf16.msra.mxu0 0
  %3612 = vmatprep.subr.bf16.mxu0 0
  %3613 = vmatpush2.bf16.msra.mxu0 0
  %3614 = vmatprep.subr.bf16.mxu0 0
  %3615 = vmatpush2.bf16.msra.mxu0 0
  %3616 = vmatprep.subr.bf16.mxu0 0
  %3617 = vmatpush2.bf16.msra.mxu0 0
  %3618 = vmatprep.subr.bf16.mxu0 0
  %3619 = vmatpush2.bf16.msra.mxu0 0
  %3620 = vmatprep.subr.bf16.mxu0 0
  %3621 = vmatpush2.bf16.msra.mxu0 0
  %3622 = vmatprep.subr.bf16.mxu0 0
  %3623 = vmatpush2.bf16.msra.mxu0 0
  %3624 = vmatprep.subr.bf16.mxu0 0
  %3625 = vmatpush2.bf16.msra.mxu0 0
  %3626 = vmatprep.mubr.bf16.mxu0 0
  %3627 = vmatmul.mubr.bf16.gmra.mxu0 %v1835
  %v3628 = vpop.f32.mrf.mxu0
  %v3629 = vadd.f32 0.0, %v3628
  %v3630 = vpop.f32.mrf.mxu0
  %v3631 = vpop.f32.mrf.mxu0
  %v3632 = vadd.f32 0.0, %v3631
  %v3633 = vpop.f32.mrf.mxu0
  %3634 = vmatprep.mubr.bf16.mxu0 0
  %3635 = vmatmul.mubr.bf16.gmra.mxu0 %v1838
  %v3636 = vpop.f32.mrf.mxu0
  %v3637 = vadd.f32 0.0, %v3636
  %v3638 = vpop.f32.mrf.mxu0
  %v3639 = vpop.f32.mrf.mxu0
  %v3640 = vadd.f32 0.0, %v3639
  %v3641 = vpop.f32.mrf.mxu0
  %3642 = vmatprep.mubr.bf16.mxu0 0
  %3643 = vmatmul.mubr.bf16.gmra.mxu0 %v1841
  %v3644 = vpop.f32.mrf.mxu0
  %v3645 = vadd.f32 0.0, %v3644
  %v3646 = vpop.f32.mrf.mxu0
  %v3647 = vpop.f32.mrf.mxu0
  %v3648 = vadd.f32 0.0, %v3647
  %v3649 = vpop.f32.mrf.mxu0
  %3650 = vmatprep.mubr.bf16.mxu0 0
  %3651 = vmatmul.mubr.bf16.gmra.mxu0 %v1844
  %v3652 = vpop.f32.mrf.mxu0
  %v3653 = vadd.f32 0.0, %v3652
  %v3654 = vpop.f32.mrf.mxu0
  %v3655 = vpop.f32.mrf.mxu0
  %v3656 = vadd.f32 0.0, %v3655
  %v3657 = vpop.f32.mrf.mxu0
  %3658 = vmatprep.mubr.bf16.mxu0 0
  %3659 = vmatmul.mubr.bf16.gmra.mxu0 %v1847
  %v3660 = vpop.f32.mrf.mxu0
  %v3661 = vadd.f32 0.0, %v3660
  %v3662 = vpop.f32.mrf.mxu0
  %v3663 = vpop.f32.mrf.mxu0
  %v3664 = vadd.f32 0.0, %v3663
  %v3665 = vpop.f32.mrf.mxu0
  %3666 = vmatprep.mubr.bf16.mxu0 0
  %3667 = vmatmul.mubr.bf16.gmra.mxu0 %v1850
  %v3668 = vpop.f32.mrf.mxu0
  %v3669 = vadd.f32 0.0, %v3668
  %v3670 = vpop.f32.mrf.mxu0
  %v3671 = vpop.f32.mrf.mxu0
  %v3672 = vadd.f32 0.0, %v3671
  %v3673 = vpop.f32.mrf.mxu0
  %3674 = vmatprep.mubr.bf16.mxu0 0
  %3675 = vmatmul.mubr.bf16.gmra.mxu0 %v1853
  %v3676 = vpop.f32.mrf.mxu0
  %v3677 = vadd.f32 0.0, %v3676
  %v3678 = vpop.f32.mrf.mxu0
  %v3679 = vpop.f32.mrf.mxu0
  %v3680 = vadd.f32 0.0, %v3679
  %v3681 = vpop.f32.mrf.mxu0
  %3682 = vmatprep.mubr.bf16.mxu0 0
  %3683 = vmatmul.mubr.bf16.gmra.mxu0 %v1856
  %v3684 = vpop.f32.mrf.mxu0
  %v3685 = vadd.f32 0.0, %v3684
  %v3686 = vpop.f32.mrf.mxu0
  %v3687 = vpop.f32.mrf.mxu0
  %v3688 = vadd.f32 0.0, %v3687
  %v3689 = vpop.f32.mrf.mxu0
  %3690 = vmatprep.mubr.bf16.mxu0 0
  %3691 = vmatmul.mubr.bf16.gmra.mxu0 %v1859
  %v3692 = vpop.f32.mrf.mxu0
  %v3693 = vadd.f32 0.0, %v3692
  %v3694 = vpop.f32.mrf.mxu0
  %v3695 = vpop.f32.mrf.mxu0
  %v3696 = vadd.f32 0.0, %v3695
  %v3697 = vpop.f32.mrf.mxu0
  %3698 = vmatprep.mubr.bf16.mxu0 0
  %3699 = vmatmul.mubr.bf16.gmra.mxu0 %v1862
  %v3700 = vpop.f32.mrf.mxu0
  %v3701 = vadd.f32 0.0, %v3700
  %v3702 = vpop.f32.mrf.mxu0
  %v3703 = vpop.f32.mrf.mxu0
  %v3704 = vadd.f32 0.0, %v3703
  %v3705 = vpop.f32.mrf.mxu0
  %3706 = vmatprep.mubr.bf16.mxu0 0
  %3707 = vmatmul.mubr.bf16.gmra.mxu0 %v1865
  %v3708 = vpop.f32.mrf.mxu0
  %v3709 = vadd.f32 0.0, %v3708
  %v3710 = vpop.f32.mrf.mxu0
  %v3711 = vpop.f32.mrf.mxu0
  %v3712 = vadd.f32 0.0, %v3711
  %v3713 = vpop.f32.mrf.mxu0
  %3714 = vmatprep.mubr.bf16.mxu0 0
  %3715 = vmatmul.mubr.bf16.gmra.mxu0 %v1868
  %v3716 = vpop.f32.mrf.mxu0
  %v3717 = vadd.f32 0.0, %v3716
  %v3718 = vpop.f32.mrf.mxu0
  %v3719 = vpop.f32.mrf.mxu0
  %v3720 = vadd.f32 0.0, %v3719
  %v3721 = vpop.f32.mrf.mxu0
  %3722 = vmatprep.mubr.bf16.mxu0 0
  %3723 = vmatmul.mubr.bf16.gmra.mxu0 %v1871
  %v3724 = vpop.f32.mrf.mxu0
  %v3725 = vadd.f32 0.0, %v3724
  %v3726 = vpop.f32.mrf.mxu0
  %v3727 = vpop.f32.mrf.mxu0
  %v3728 = vadd.f32 0.0, %v3727
  %v3729 = vpop.f32.mrf.mxu0
  %3730 = vmatprep.mubr.bf16.mxu0 0
  %3731 = vmatmul.mubr.bf16.gmra.mxu0 %v1874
  %v3732 = vpop.f32.mrf.mxu0
  %v3733 = vadd.f32 0.0, %v3732
  %v3734 = vpop.f32.mrf.mxu0
  %v3735 = vpop.f32.mrf.mxu0
  %v3736 = vadd.f32 0.0, %v3735
  %v3737 = vpop.f32.mrf.mxu0
  %3738 = vdwg.mxu0
  %v3739 = vadd.f32 %v3566, %v3629
  %v3740 = vadd.f32 %v3567, %v3632
  %v3741 = vadd.f32 %v3568, %v3637
  %v3742 = vadd.f32 %v3569, %v3640
  %v3743 = vadd.f32 %v3570, %v3645
  %v3744 = vadd.f32 %v3571, %v3648
  %v3745 = vadd.f32 %v3572, %v3653
  %v3746 = vadd.f32 %v3573, %v3656
  %v3747 = vadd.f32 %v3574, %v3661
  %v3748 = vadd.f32 %v3575, %v3664
  %v3749 = vadd.f32 %v3576, %v3669
  %v3750 = vadd.f32 %v3577, %v3672
  %v3751 = vadd.f32 %v3578, %v3677
  %v3752 = vadd.f32 %v3579, %v3680
  %v3753 = vadd.f32 %v3580, %v3685
  %v3754 = vadd.f32 %v3581, %v3688
  %v3755 = vadd.f32 %v3582, %v3693
  %v3756 = vadd.f32 %v3583, %v3696
  %v3757 = vadd.f32 %v3584, %v3701
  %v3758 = vadd.f32 %v3585, %v3704
  %v3759 = vadd.f32 %v3586, %v3709
  %v3760 = vadd.f32 %v3587, %v3712
  %v3761 = vadd.f32 %v3588, %v3717
  %v3762 = vadd.f32 %v3589, %v3720
  %v3763 = vadd.f32 %v3590, %v3725
  %v3764 = vadd.f32 %v3591, %v3728
  %v3765 = vadd.f32 %v3592, %v3733
  %v3766 = vadd.f32 %v3593, %v3736
  %v3795 = vunpack.c.l.b16 %v181
  %v3796 = vunpack.c.h.b16 %v181
  %v3797 = vunpack.c.l.b16 %v182
  %v3798 = vunpack.c.h.b16 %v182
  %v3799 = vunpack.c.l.b16 %v183
  %v3800 = vunpack.c.h.b16 %v183
  %v3801 = vunpack.c.l.b16 %v184
  %v3802 = vunpack.c.h.b16 %v184
  %v3803 = vunpack.c.l.b16 %v185
  %v3804 = vunpack.c.h.b16 %v185
  %v3805 = vunpack.c.l.b16 %v186
  %v3806 = vunpack.c.h.b16 %v186
  %v3807 = vunpack.c.l.b16 %v187
  %v3808 = vunpack.c.h.b16 %v187
  %v3809 = vunpack.c.l.b16 %v188
  %v3810 = vunpack.c.h.b16 %v188
  %v3811 = vunpack.c.l.b16 %v189
  %v3812 = vunpack.c.h.b16 %v189
  %v3813 = vunpack.c.l.b16 %v190
  %v3814 = vunpack.c.h.b16 %v190
  %v3815 = vunpack.c.l.b16 %v191
  %v3816 = vunpack.c.h.b16 %v191
  %v3817 = vunpack.c.l.b16 %v192
  %v3818 = vunpack.c.h.b16 %v192
  %v3819 = vunpack.c.l.b16 %v193
  %v3820 = vunpack.c.h.b16 %v193
  %v3821 = vunpack.c.l.b16 %v194
  %v3822 = vunpack.c.h.b16 %v194
  %v3823 = vunpack.c.l.b16 %v195
  %v3824 = vunpack.c.h.b16 %v195
  %v3825 = vunpack.c.l.b16 %v196
  %v3826 = vunpack.c.h.b16 %v196
  %v3827 = vunpack.c.l.b16 %v197
  %v3828 = vunpack.c.h.b16 %v197
  %v3829 = vunpack.c.l.b16 %v198
  %v3830 = vunpack.c.h.b16 %v198
  %v3831 = vunpack.c.l.b16 %v199
  %v3832 = vunpack.c.h.b16 %v199
  %v3833 = vunpack.c.l.b16 %v200
  %v3834 = vunpack.c.h.b16 %v200
  %v3835 = vunpack.c.l.b16 %v201
  %v3836 = vunpack.c.h.b16 %v201
  %v3837 = vunpack.c.l.b16 %v202
  %v3838 = vunpack.c.h.b16 %v202
  %v3839 = vunpack.c.l.b16 %v203
  %v3840 = vunpack.c.h.b16 %v203
  %v3841 = vunpack.c.l.b16 %v204
  %v3842 = vunpack.c.h.b16 %v204
  %v3843 = vunpack.c.l.b16 %v205
  %v3844 = vunpack.c.h.b16 %v205
  %v3845 = vunpack.c.l.b16 %v206
  %v3846 = vunpack.c.h.b16 %v206
  %v3847 = vunpack.c.l.b16 %v207
  %v3848 = vunpack.c.h.b16 %v207
  %v3849 = vunpack.c.l.b16 %v208
  %v3850 = vunpack.c.h.b16 %v208
  %v3851 = vpack.c.b16 %v3797, %v3795
  %v3852 = vpack.c.b16 %v3798, %v3796
  %v3853 = vpack.c.b16 %v3801, %v3799
  %v3854 = vpack.c.b16 %v3802, %v3800
  %v3855 = vpack.c.b16 %v3805, %v3803
  %v3856 = vpack.c.b16 %v3806, %v3804
  %v3857 = vpack.c.b16 %v3809, %v3807
  %v3858 = vpack.c.b16 %v3810, %v3808
  %v3859 = vpack.c.b16 %v3813, %v3811
  %v3860 = vpack.c.b16 %v3814, %v3812
  %v3861 = vpack.c.b16 %v3817, %v3815
  %v3862 = vpack.c.b16 %v3818, %v3816
  %v3863 = vpack.c.b16 %v3821, %v3819
  %v3864 = vpack.c.b16 %v3822, %v3820
  %v3865 = vpack.c.b16 %v3825, %v3823
  %v3866 = vpack.c.b16 %v3826, %v3824
  %v3867 = vpack.c.b16 %v3829, %v3827
  %v3868 = vpack.c.b16 %v3830, %v3828
  %v3869 = vpack.c.b16 %v3833, %v3831
  %v3870 = vpack.c.b16 %v3834, %v3832
  %v3871 = vpack.c.b16 %v3837, %v3835
  %v3872 = vpack.c.b16 %v3838, %v3836
  %v3873 = vpack.c.b16 %v3841, %v3839
  %v3874 = vpack.c.b16 %v3842, %v3840
  %v3875 = vpack.c.b16 %v3845, %v3843
  %v3876 = vpack.c.b16 %v3846, %v3844
  %v3877 = vpack.c.b16 %v3849, %v3847
  %v3878 = vpack.c.b16 %v3850, %v3848
  %3879 = vrot.lane.b32.xlu0 %v3851, 32
  %v3880 = vpop.permute.xlu0 %3879
  %3881 = vrot.lane.b32.xlu0 %v3852, 32
  %v3882 = vpop.permute.xlu0 %3881
  %3883 = vrot.lane.b32.xlu0 %v3853, 32
  %v3884 = vpop.permute.xlu0 %3883
  %3885 = vrot.lane.b32.xlu0 %v3854, 32
  %v3886 = vpop.permute.xlu0 %3885
  %3887 = vrot.lane.b32.xlu0 %v3855, 32
  %v3888 = vpop.permute.xlu0 %3887
  %3889 = vrot.lane.b32.xlu0 %v3856, 32
  %v3890 = vpop.permute.xlu0 %3889
  %3891 = vrot.lane.b32.xlu0 %v3857, 32
  %v3892 = vpop.permute.xlu0 %3891
  %3893 = vrot.lane.b32.xlu0 %v3858, 32
  %v3894 = vpop.permute.xlu0 %3893
  %3895 = vrot.lane.b32.xlu0 %v3859, 32
  %v3896 = vpop.permute.xlu0 %3895
  %3897 = vrot.lane.b32.xlu0 %v3860, 32
  %v3898 = vpop.permute.xlu0 %3897
  %3899 = vrot.lane.b32.xlu0 %v3861, 32
  %v3900 = vpop.permute.xlu0 %3899
  %3901 = vrot.lane.b32.xlu0 %v3862, 32
  %v3902 = vpop.permute.xlu0 %3901
  %3903 = vrot.lane.b32.xlu0 %v3863, 32
  %v3904 = vpop.permute.xlu0 %3903
  %3905 = vrot.lane.b32.xlu0 %v3864, 32
  %v3906 = vpop.permute.xlu0 %3905
  %3907 = vrot.lane.b32.xlu0 %v3865, 32
  %v3908 = vpop.permute.xlu0 %3907
  %3909 = vrot.lane.b32.xlu0 %v3866, 32
  %v3910 = vpop.permute.xlu0 %3909
  %3911 = vrot.lane.b32.xlu0 %v3867, 32
  %v3912 = vpop.permute.xlu0 %3911
  %3913 = vrot.lane.b32.xlu0 %v3868, 32
  %v3914 = vpop.permute.xlu0 %3913
  %3915 = vrot.lane.b32.xlu0 %v3869, 32
  %v3916 = vpop.permute.xlu0 %3915
  %3917 = vrot.lane.b32.xlu0 %v3870, 32
  %v3918 = vpop.permute.xlu0 %3917
  %3919 = vrot.lane.b32.xlu0 %v3871, 32
  %v3920 = vpop.permute.xlu0 %3919
  %3921 = vrot.lane.b32.xlu0 %v3872, 32
  %v3922 = vpop.permute.xlu0 %3921
  %3923 = vrot.lane.b32.xlu0 %v3873, 32
  %v3924 = vpop.permute.xlu0 %3923
  %3925 = vrot.lane.b32.xlu0 %v3874, 32
  %v3926 = vpop.permute.xlu0 %3925
  %3927 = vrot.lane.b32.xlu0 %v3875, 32
  %v3928 = vpop.permute.xlu0 %3927
  %3929 = vrot.lane.b32.xlu0 %v3876, 32
  %v3930 = vpop.permute.xlu0 %3929
  %3931 = vrot.lane.b32.xlu0 %v3877, 32
  %v3932 = vpop.permute.xlu0 %3931
  %3933 = vrot.lane.b32.xlu0 %v3878, 32
  %v3934 = vpop.permute.xlu0 %3933
  %v3935 = vsel %vm403, %v3880, %v3882
  %v3936 = vsel %vm403, %v3884, %v3886
  %v3937 = vsel %vm403, %v3888, %v3890
  %v3938 = vsel %vm403, %v3892, %v3894
  %v3939 = vsel %vm403, %v3896, %v3898
  %v3940 = vsel %vm403, %v3900, %v3902
  %v3941 = vsel %vm403, %v3904, %v3906
  %v3942 = vsel %vm403, %v3908, %v3910
  %v3943 = vsel %vm403, %v3912, %v3914
  %v3944 = vsel %vm403, %v3916, %v3918
  %v3945 = vsel %vm403, %v3920, %v3922
  %v3946 = vsel %vm403, %v3924, %v3926
  %v3947 = vsel %vm403, %v3928, %v3930
  %v3948 = vsel %vm403, %v3932, %v3934
  %v3950 = vsel %vm454, %v3935, 0
  %v3953 = vsel %vm454, %v3936, 0
  %v3956 = vsel %vm454, %v3937, 0
  %v3959 = vsel %vm454, %v3938, 0
  %v3962 = vsel %vm454, %v3939, 0
  %v3965 = vsel %vm454, %v3940, 0
  %v3968 = vsel %vm454, %v3941, 0
  %v3971 = vsel %vm454, %v3942, 0
  %v3974 = vsel %vm454, %v3943, 0
  %v3977 = vsel %vm454, %v3944, 0
  %v3980 = vsel %vm454, %v3945, 0
  %v3983 = vsel %vm454, %v3946, 0
  %v3986 = vsel %vm454, %v3947, 0
  %v3989 = vsel %vm454, %v3948, 0
  %3991 = vmatprep.subr.bf16.mxu0 0
  %3992 = vmatpush1.bf16.msra.mxu0 0
  %3993 = vmatprep.subr.bf16.mxu0 0
  %3994 = vmatpush1.bf16.msra.mxu0 0
  %3995 = vmatprep.subr.bf16.mxu0 0
  %3996 = vmatpush1.bf16.msra.mxu0 %v1827
  %3997 = vmatprep.subr.bf16.mxu0 0
  %3998 = vmatpush1.bf16.msra.mxu0 %v1826
  %3999 = vmatprep.subr.bf16.mxu0 0
  %4000 = vmatpush1.bf16.msra.mxu0 %v1825
  %4001 = vmatprep.subr.bf16.mxu0 0
  %4002 = vmatpush1.bf16.msra.mxu0 %v1824
  %4003 = vmatprep.subr.bf16.mxu0 0
  %4004 = vmatpush1.bf16.msra.mxu0 %v1823
  %4005 = vmatprep.subr.bf16.mxu0 0
  %4006 = vmatpush1.bf16.msra.mxu0 %v1822
  %4007 = vmatprep.subr.bf16.mxu0 0
  %4008 = vmatpush2.bf16.msra.mxu0 0
  %4009 = vmatprep.subr.bf16.mxu0 0
  %4010 = vmatpush2.bf16.msra.mxu0 0
  %4011 = vmatprep.subr.bf16.mxu0 0
  %4012 = vmatpush2.bf16.msra.mxu0 0
  %4013 = vmatprep.subr.bf16.mxu0 0
  %4014 = vmatpush2.bf16.msra.mxu0 0
  %4015 = vmatprep.subr.bf16.mxu0 0
  %4016 = vmatpush2.bf16.msra.mxu0 0
  %4017 = vmatprep.subr.bf16.mxu0 0
  %4018 = vmatpush2.bf16.msra.mxu0 0
  %4019 = vmatprep.subr.bf16.mxu0 0
  %4020 = vmatpush2.bf16.msra.mxu0 0
  %4021 = vmatprep.subr.bf16.mxu0 0
  %4022 = vmatpush2.bf16.msra.mxu0 0
  %4023 = vmatprep.mubr.bf16.mxu0 0
  %4024 = vmatmul.mubr.bf16.gmra.mxu0 %v3950
  %v4025 = vpop.f32.mrf.mxu0
  %v4026 = vadd.f32 0.0, %v4025
  %v4027 = vpop.f32.mrf.mxu0
  %v4028 = vpop.f32.mrf.mxu0
  %v4029 = vadd.f32 0.0, %v4028
  %v4030 = vpop.f32.mrf.mxu0
  %4031 = vmatprep.mubr.bf16.mxu0 0
  %4032 = vmatmul.mubr.bf16.gmra.mxu0 %v3953
  %v4033 = vpop.f32.mrf.mxu0
  %v4034 = vadd.f32 0.0, %v4033
  %v4035 = vpop.f32.mrf.mxu0
  %v4036 = vpop.f32.mrf.mxu0
  %v4037 = vadd.f32 0.0, %v4036
  %v4038 = vpop.f32.mrf.mxu0
  %4039 = vmatprep.mubr.bf16.mxu0 0
  %4040 = vmatmul.mubr.bf16.gmra.mxu0 %v3956
  %v4041 = vpop.f32.mrf.mxu0
  %v4042 = vadd.f32 0.0, %v4041
  %v4043 = vpop.f32.mrf.mxu0
  %v4044 = vpop.f32.mrf.mxu0
  %v4045 = vadd.f32 0.0, %v4044
  %v4046 = vpop.f32.mrf.mxu0
  %4047 = vmatprep.mubr.bf16.mxu0 0
  %4048 = vmatmul.mubr.bf16.gmra.mxu0 %v3959
  %v4049 = vpop.f32.mrf.mxu0
  %v4050 = vadd.f32 0.0, %v4049
  %v4051 = vpop.f32.mrf.mxu0
  %v4052 = vpop.f32.mrf.mxu0
  %v4053 = vadd.f32 0.0, %v4052
  %v4054 = vpop.f32.mrf.mxu0
  %4055 = vmatprep.mubr.bf16.mxu0 0
  %4056 = vmatmul.mubr.bf16.gmra.mxu0 %v3962
  %v4057 = vpop.f32.mrf.mxu0
  %v4058 = vadd.f32 0.0, %v4057
  %v4059 = vpop.f32.mrf.mxu0
  %v4060 = vpop.f32.mrf.mxu0
  %v4061 = vadd.f32 0.0, %v4060
  %v4062 = vpop.f32.mrf.mxu0
  %4063 = vmatprep.mubr.bf16.mxu0 0
  %4064 = vmatmul.mubr.bf16.gmra.mxu0 %v3965
  %v4065 = vpop.f32.mrf.mxu0
  %v4066 = vadd.f32 0.0, %v4065
  %v4067 = vpop.f32.mrf.mxu0
  %v4068 = vpop.f32.mrf.mxu0
  %v4069 = vadd.f32 0.0, %v4068
  %v4070 = vpop.f32.mrf.mxu0
  %4071 = vmatprep.mubr.bf16.mxu0 0
  %4072 = vmatmul.mubr.bf16.gmra.mxu0 %v3968
  %v4073 = vpop.f32.mrf.mxu0
  %v4074 = vadd.f32 0.0, %v4073
  %v4075 = vpop.f32.mrf.mxu0
  %v4076 = vpop.f32.mrf.mxu0
  %v4077 = vadd.f32 0.0, %v4076
  %v4078 = vpop.f32.mrf.mxu0
  %4079 = vmatprep.mubr.bf16.mxu0 0
  %4080 = vmatmul.mubr.bf16.gmra.mxu0 %v3971
  %v4081 = vpop.f32.mrf.mxu0
  %v4082 = vadd.f32 0.0, %v4081
  %v4083 = vpop.f32.mrf.mxu0
  %v4084 = vpop.f32.mrf.mxu0
  %v4085 = vadd.f32 0.0, %v4084
  %v4086 = vpop.f32.mrf.mxu0
  %4087 = vmatprep.mubr.bf16.mxu0 0
  %4088 = vmatmul.mubr.bf16.gmra.mxu0 %v3974
  %v4089 = vpop.f32.mrf.mxu0
  %v4090 = vadd.f32 0.0, %v4089
  %v4091 = vpop.f32.mrf.mxu0
  %v4092 = vpop.f32.mrf.mxu0
  %v4093 = vadd.f32 0.0, %v4092
  %v4094 = vpop.f32.mrf.mxu0
  %4095 = vmatprep.mubr.bf16.mxu0 0
  %4096 = vmatmul.mubr.bf16.gmra.mxu0 %v3977
  %v4097 = vpop.f32.mrf.mxu0
  %v4098 = vadd.f32 0.0, %v4097
  %v4099 = vpop.f32.mrf.mxu0
  %v4100 = vpop.f32.mrf.mxu0
  %v4101 = vadd.f32 0.0, %v4100
  %v4102 = vpop.f32.mrf.mxu0
  %4103 = vmatprep.mubr.bf16.mxu0 0
  %4104 = vmatmul.mubr.bf16.gmra.mxu0 %v3980
  %v4105 = vpop.f32.mrf.mxu0
  %v4106 = vadd.f32 0.0, %v4105
  %v4107 = vpop.f32.mrf.mxu0
  %v4108 = vpop.f32.mrf.mxu0
  %v4109 = vadd.f32 0.0, %v4108
  %v4110 = vpop.f32.mrf.mxu0
  %4111 = vmatprep.mubr.bf16.mxu0 0
  %4112 = vmatmul.mubr.bf16.gmra.mxu0 %v3983
  %v4113 = vpop.f32.mrf.mxu0
  %v4114 = vadd.f32 0.0, %v4113
  %v4115 = vpop.f32.mrf.mxu0
  %v4116 = vpop.f32.mrf.mxu0
  %v4117 = vadd.f32 0.0, %v4116
  %v4118 = vpop.f32.mrf.mxu0
  %4119 = vmatprep.mubr.bf16.mxu0 0
  %4120 = vmatmul.mubr.bf16.gmra.mxu0 %v3986
  %v4121 = vpop.f32.mrf.mxu0
  %v4122 = vadd.f32 0.0, %v4121
  %v4123 = vpop.f32.mrf.mxu0
  %v4124 = vpop.f32.mrf.mxu0
  %v4125 = vadd.f32 0.0, %v4124
  %v4126 = vpop.f32.mrf.mxu0
  %4127 = vmatprep.mubr.bf16.mxu0 0
  %4128 = vmatmul.mubr.bf16.gmra.mxu0 %v3989
  %v4129 = vpop.f32.mrf.mxu0
  %v4130 = vadd.f32 0.0, %v4129
  %v4131 = vpop.f32.mrf.mxu0
  %v4132 = vpop.f32.mrf.mxu0
  %v4133 = vadd.f32 0.0, %v4132
  %v4134 = vpop.f32.mrf.mxu0
  %4135 = vdwg.mxu0
  %v4136 = vadd.f32 %v3739, %v4026
  %v4137 = vadd.f32 %v3740, %v4029
  %v4138 = vadd.f32 %v3741, %v4034
  %v4139 = vadd.f32 %v3742, %v4037
  %v4140 = vadd.f32 %v3743, %v4042
  %v4141 = vadd.f32 %v3744, %v4045
  %v4142 = vadd.f32 %v3745, %v4050
  %v4143 = vadd.f32 %v3746, %v4053
  %v4144 = vadd.f32 %v3747, %v4058
  %v4145 = vadd.f32 %v3748, %v4061
  %v4146 = vadd.f32 %v3749, %v4066
  %v4147 = vadd.f32 %v3750, %v4069
  %v4148 = vadd.f32 %v3751, %v4074
  %v4149 = vadd.f32 %v3752, %v4077
  %v4150 = vadd.f32 %v3753, %v4082
  %v4151 = vadd.f32 %v3754, %v4085
  %v4152 = vadd.f32 %v3755, %v4090
  %v4153 = vadd.f32 %v3756, %v4093
  %v4154 = vadd.f32 %v3757, %v4098
  %v4155 = vadd.f32 %v3758, %v4101
  %v4156 = vadd.f32 %v3759, %v4106
  %v4157 = vadd.f32 %v3760, %v4109
  %v4158 = vadd.f32 %v3761, %v4114
  %v4159 = vadd.f32 %v3762, %v4117
  %v4160 = vadd.f32 %v3763, %v4122
  %v4161 = vadd.f32 %v3764, %v4125
  %v4162 = vadd.f32 %v3765, %v4130
  %v4163 = vadd.f32 %v3766, %v4133
  %v4164 = vmax.f32 %v3103, %v4136
  %v4165 = vmax.f32 %v3104, %v4137
  %v4166 = vmax.f32 %v3105, %v4138
  %v4167 = vmax.f32 %v3106, %v4139
  %v4168 = vmax.f32 %v3107, %v4140
  %v4169 = vmax.f32 %v3108, %v4141
  %v4170 = vmax.f32 %v3109, %v4142
  %v4171 = vmax.f32 %v3110, %v4143
  %v4172 = vmax.f32 %v3111, %v4144
  %v4173 = vmax.f32 %v3112, %v4145
  %v4174 = vmax.f32 %v3113, %v4146
  %v4175 = vmax.f32 %v3114, %v4147
  %v4176 = vmax.f32 %v3115, %v4148
  %v4177 = vmax.f32 %v3116, %v4149
  %v4178 = vmax.f32 %v3117, %v4150
  %v4179 = vmax.f32 %v3118, %v4151
  %v4180 = vmax.f32 %v3119, %v4152
  %v4181 = vmax.f32 %v3120, %v4153
  %v4182 = vmax.f32 %v3121, %v4154
  %v4183 = vmax.f32 %v3122, %v4155
  %v4184 = vmax.f32 %v3123, %v4156
  %v4185 = vmax.f32 %v3124, %v4157
  %v4186 = vmax.f32 %v3125, %v4158
  %v4187 = vmax.f32 %v3126, %v4159
  %v4188 = vmax.f32 %v3127, %v4160
  %v4189 = vmax.f32 %v3128, %v4161
  %v4190 = vmax.f32 %v3129, %v4162
  %v4191 = vmax.f32 %v3130, %v4163
  %4192 = vmatprep.subr.bf16.mxu0 0
  %4193 = vmatpush1.bf16.msra.mxu0 0
  %4194 = vmatprep.subr.bf16.mxu0 0
  %4195 = vmatpush1.bf16.msra.mxu0 0
  %4196 = vmatprep.subr.bf16.mxu0 0
  %4197 = vmatpush1.bf16.msra.mxu0 %v2104
  %4198 = vmatprep.subr.bf16.mxu0 0
  %4199 = vmatpush1.bf16.msra.mxu0 %v2103
  %4200 = vmatprep.subr.bf16.mxu0 0
  %4201 = vmatpush1.bf16.msra.mxu0 %v2102
  %4202 = vmatprep.subr.bf16.mxu0 0
  %4203 = vmatpush1.bf16.msra.mxu0 %v2101
  %4204 = vmatprep.subr.bf16.mxu0 0
  %4205 = vmatpush1.bf16.msra.mxu0 %v2100
  %4206 = vmatprep.subr.bf16.mxu0 0
  %4207 = vmatpush1.bf16.msra.mxu0 %v2099
  %4208 = vmatprep.subr.bf16.mxu0 0
  %4209 = vmatpush2.bf16.msra.mxu0 0
  %4210 = vmatprep.subr.bf16.mxu0 0
  %4211 = vmatpush2.bf16.msra.mxu0 0
  %4212 = vmatprep.subr.bf16.mxu0 0
  %4213 = vmatpush2.bf16.msra.mxu0 0
  %4214 = vmatprep.subr.bf16.mxu0 0
  %4215 = vmatpush2.bf16.msra.mxu0 0
  %4216 = vmatprep.subr.bf16.mxu0 0
  %4217 = vmatpush2.bf16.msra.mxu0 0
  %4218 = vmatprep.subr.bf16.mxu0 0
  %4219 = vmatpush2.bf16.msra.mxu0 0
  %4220 = vmatprep.subr.bf16.mxu0 0
  %4221 = vmatpush2.bf16.msra.mxu0 0
  %4222 = vmatprep.subr.bf16.mxu0 0
  %4223 = vmatpush2.bf16.msra.mxu0 0
  %4224 = vmatprep.mubr.bf16.mxu0 0
  %4225 = vmatmul.mubr.bf16.gmra.mxu0 %v1055
  %v4226 = vpop.f32.mrf.mxu0
  %v4227 = vadd.f32 0.0, %v4226
  %v4228 = vpop.f32.mrf.mxu0
  %v4229 = vpop.f32.mrf.mxu0
  %v4230 = vadd.f32 0.0, %v4229
  %v4231 = vpop.f32.mrf.mxu0
  %4232 = vmatprep.mubr.bf16.mxu0 0
  %4233 = vmatmul.mubr.bf16.gmra.mxu0 %v1058
  %v4234 = vpop.f32.mrf.mxu0
  %v4235 = vadd.f32 0.0, %v4234
  %v4236 = vpop.f32.mrf.mxu0
  %v4237 = vpop.f32.mrf.mxu0
  %v4238 = vadd.f32 0.0, %v4237
  %v4239 = vpop.f32.mrf.mxu0
  %4240 = vmatprep.mubr.bf16.mxu0 0
  %4241 = vmatmul.mubr.bf16.gmra.mxu0 %v1061
  %v4242 = vpop.f32.mrf.mxu0
  %v4243 = vadd.f32 0.0, %v4242
  %v4244 = vpop.f32.mrf.mxu0
  %v4245 = vpop.f32.mrf.mxu0
  %v4246 = vadd.f32 0.0, %v4245
  %v4247 = vpop.f32.mrf.mxu0
  %4248 = vmatprep.mubr.bf16.mxu0 0
  %4249 = vmatmul.mubr.bf16.gmra.mxu0 %v1064
  %v4250 = vpop.f32.mrf.mxu0
  %v4251 = vadd.f32 0.0, %v4250
  %v4252 = vpop.f32.mrf.mxu0
  %v4253 = vpop.f32.mrf.mxu0
  %v4254 = vadd.f32 0.0, %v4253
  %v4255 = vpop.f32.mrf.mxu0
  %4256 = vmatprep.mubr.bf16.mxu0 0
  %4257 = vmatmul.mubr.bf16.gmra.mxu0 %v1067
  %v4258 = vpop.f32.mrf.mxu0
  %v4259 = vadd.f32 0.0, %v4258
  %v4260 = vpop.f32.mrf.mxu0
  %v4261 = vpop.f32.mrf.mxu0
  %v4262 = vadd.f32 0.0, %v4261
  %v4263 = vpop.f32.mrf.mxu0
  %4264 = vmatprep.mubr.bf16.mxu0 0
  %4265 = vmatmul.mubr.bf16.gmra.mxu0 %v1070
  %v4266 = vpop.f32.mrf.mxu0
  %v4267 = vadd.f32 0.0, %v4266
  %v4268 = vpop.f32.mrf.mxu0
  %v4269 = vpop.f32.mrf.mxu0
  %v4270 = vadd.f32 0.0, %v4269
  %v4271 = vpop.f32.mrf.mxu0
  %4272 = vmatprep.mubr.bf16.mxu0 0
  %4273 = vmatmul.mubr.bf16.gmra.mxu0 %v1073
  %v4274 = vpop.f32.mrf.mxu0
  %v4275 = vadd.f32 0.0, %v4274
  %v4276 = vpop.f32.mrf.mxu0
  %v4277 = vpop.f32.mrf.mxu0
  %v4278 = vadd.f32 0.0, %v4277
  %v4279 = vpop.f32.mrf.mxu0
  %4280 = vmatprep.mubr.bf16.mxu0 0
  %4281 = vmatmul.mubr.bf16.gmra.mxu0 %v1076
  %v4282 = vpop.f32.mrf.mxu0
  %v4283 = vadd.f32 0.0, %v4282
  %v4284 = vpop.f32.mrf.mxu0
  %v4285 = vpop.f32.mrf.mxu0
  %v4286 = vadd.f32 0.0, %v4285
  %v4287 = vpop.f32.mrf.mxu0
  %4288 = vmatprep.mubr.bf16.mxu0 0
  %4289 = vmatmul.mubr.bf16.gmra.mxu0 %v1079
  %v4290 = vpop.f32.mrf.mxu0
  %v4291 = vadd.f32 0.0, %v4290
  %v4292 = vpop.f32.mrf.mxu0
  %v4293 = vpop.f32.mrf.mxu0
  %v4294 = vadd.f32 0.0, %v4293
  %v4295 = vpop.f32.mrf.mxu0
  %4296 = vmatprep.mubr.bf16.mxu0 0
  %4297 = vmatmul.mubr.bf16.gmra.mxu0 %v1082
  %v4298 = vpop.f32.mrf.mxu0
  %v4299 = vadd.f32 0.0, %v4298
  %v4300 = vpop.f32.mrf.mxu0
  %v4301 = vpop.f32.mrf.mxu0
  %v4302 = vadd.f32 0.0, %v4301
  %v4303 = vpop.f32.mrf.mxu0
  %4304 = vmatprep.mubr.bf16.mxu0 0
  %4305 = vmatmul.mubr.bf16.gmra.mxu0 %v1085
  %v4306 = vpop.f32.mrf.mxu0
  %v4307 = vadd.f32 0.0, %v4306
  %v4308 = vpop.f32.mrf.mxu0
  %v4309 = vpop.f32.mrf.mxu0
  %v4310 = vadd.f32 0.0, %v4309
  %v4311 = vpop.f32.mrf.mxu0
  %4312 = vmatprep.mubr.bf16.mxu0 0
  %4313 = vmatmul.mubr.bf16.gmra.mxu0 %v1088
  %v4314 = vpop.f32.mrf.mxu0
  %v4315 = vadd.f32 0.0, %v4314
  %v4316 = vpop.f32.mrf.mxu0
  %v4317 = vpop.f32.mrf.mxu0
  %v4318 = vadd.f32 0.0, %v4317
  %v4319 = vpop.f32.mrf.mxu0
  %4320 = vmatprep.mubr.bf16.mxu0 0
  %4321 = vmatmul.mubr.bf16.gmra.mxu0 %v1091
  %v4322 = vpop.f32.mrf.mxu0
  %v4323 = vadd.f32 0.0, %v4322
  %v4324 = vpop.f32.mrf.mxu0
  %v4325 = vpop.f32.mrf.mxu0
  %v4326 = vadd.f32 0.0, %v4325
  %v4327 = vpop.f32.mrf.mxu0
  %4328 = vmatprep.mubr.bf16.mxu0 0
  %4329 = vmatmul.mubr.bf16.gmra.mxu0 %v1094
  %v4330 = vpop.f32.mrf.mxu0
  %v4331 = vadd.f32 0.0, %v4330
  %v4332 = vpop.f32.mrf.mxu0
  %v4333 = vpop.f32.mrf.mxu0
  %v4334 = vadd.f32 0.0, %v4333
  %v4335 = vpop.f32.mrf.mxu0
  %4336 = vdwg.mxu0
  %4337 = vmatprep.subr.bf16.mxu0 0
  %4338 = vmatpush1.bf16.msra.mxu0 0
  %4339 = vmatprep.subr.bf16.mxu0 0
  %4340 = vmatpush1.bf16.msra.mxu0 0
  %4341 = vmatprep.subr.bf16.mxu0 0
  %4342 = vmatpush1.bf16.msra.mxu0 %v2285
  %4343 = vmatprep.subr.bf16.mxu0 0
  %4344 = vmatpush1.bf16.msra.mxu0 %v2284
  %4345 = vmatprep.subr.bf16.mxu0 0
  %4346 = vmatpush1.bf16.msra.mxu0 %v2283
  %4347 = vmatprep.subr.bf16.mxu0 0
  %4348 = vmatpush1.bf16.msra.mxu0 %v2282
  %4349 = vmatprep.subr.bf16.mxu0 0
  %4350 = vmatpush1.bf16.msra.mxu0 %v2281
  %4351 = vmatprep.subr.bf16.mxu0 0
  %4352 = vmatpush1.bf16.msra.mxu0 %v2280
  %4353 = vmatprep.subr.bf16.mxu0 0
  %4354 = vmatpush2.bf16.msra.mxu0 0
  %4355 = vmatprep.subr.bf16.mxu0 0
  %4356 = vmatpush2.bf16.msra.mxu0 0
  %4357 = vmatprep.subr.bf16.mxu0 0
  %4358 = vmatpush2.bf16.msra.mxu0 0
  %4359 = vmatprep.subr.bf16.mxu0 0
  %4360 = vmatpush2.bf16.msra.mxu0 0
  %4361 = vmatprep.subr.bf16.mxu0 0
  %4362 = vmatpush2.bf16.msra.mxu0 0
  %4363 = vmatprep.subr.bf16.mxu0 0
  %4364 = vmatpush2.bf16.msra.mxu0 0
  %4365 = vmatprep.subr.bf16.mxu0 0
  %4366 = vmatpush2.bf16.msra.mxu0 0
  %4367 = vmatprep.subr.bf16.mxu0 0
  %4368 = vmatpush2.bf16.msra.mxu0 0
  %4369 = vmatprep.mubr.bf16.mxu0 0
  %4370 = vmatmul.mubr.bf16.gmra.mxu0 %v456
  %v4371 = vpop.f32.mrf.mxu0
  %v4372 = vadd.f32 %v4227, %v4371
  %v4373 = vpop.f32.mrf.mxu0
  %v4374 = vpop.f32.mrf.mxu0
  %v4375 = vadd.f32 %v4230, %v4374
  %v4376 = vpop.f32.mrf.mxu0
  %4377 = vmatprep.mubr.bf16.mxu0 0
  %4378 = vmatmul.mubr.bf16.gmra.mxu0 %v459
  %v4379 = vpop.f32.mrf.mxu0
  %v4380 = vadd.f32 %v4235, %v4379
  %v4381 = vpop.f32.mrf.mxu0
  %v4382 = vpop.f32.mrf.mxu0
  %v4383 = vadd.f32 %v4238, %v4382
  %v4384 = vpop.f32.mrf.mxu0
  %4385 = vmatprep.mubr.bf16.mxu0 0
  %4386 = vmatmul.mubr.bf16.gmra.mxu0 %v462
  %v4387 = vpop.f32.mrf.mxu0
  %v4388 = vadd.f32 %v4243, %v4387
  %v4389 = vpop.f32.mrf.mxu0
  %v4390 = vpop.f32.mrf.mxu0
  %v4391 = vadd.f32 %v4246, %v4390
  %v4392 = vpop.f32.mrf.mxu0
  %4393 = vmatprep.mubr.bf16.mxu0 0
  %4394 = vmatmul.mubr.bf16.gmra.mxu0 %v465
  %v4395 = vpop.f32.mrf.mxu0
  %v4396 = vadd.f32 %v4251, %v4395
  %v4397 = vpop.f32.mrf.mxu0
  %v4398 = vpop.f32.mrf.mxu0
  %v4399 = vadd.f32 %v4254, %v4398
  %v4400 = vpop.f32.mrf.mxu0
  %4401 = vmatprep.mubr.bf16.mxu0 0
  %4402 = vmatmul.mubr.bf16.gmra.mxu0 %v468
  %v4403 = vpop.f32.mrf.mxu0
  %v4404 = vadd.f32 %v4259, %v4403
  %v4405 = vpop.f32.mrf.mxu0
  %v4406 = vpop.f32.mrf.mxu0
  %v4407 = vadd.f32 %v4262, %v4406
  %v4408 = vpop.f32.mrf.mxu0
  %4409 = vmatprep.mubr.bf16.mxu0 0
  %4410 = vmatmul.mubr.bf16.gmra.mxu0 %v471
  %v4411 = vpop.f32.mrf.mxu0
  %v4412 = vadd.f32 %v4267, %v4411
  %v4413 = vpop.f32.mrf.mxu0
  %v4414 = vpop.f32.mrf.mxu0
  %v4415 = vadd.f32 %v4270, %v4414
  %v4416 = vpop.f32.mrf.mxu0
  %4417 = vmatprep.mubr.bf16.mxu0 0
  %4418 = vmatmul.mubr.bf16.gmra.mxu0 %v474
  %v4419 = vpop.f32.mrf.mxu0
  %v4420 = vadd.f32 %v4275, %v4419
  %v4421 = vpop.f32.mrf.mxu0
  %v4422 = vpop.f32.mrf.mxu0
  %v4423 = vadd.f32 %v4278, %v4422
  %v4424 = vpop.f32.mrf.mxu0
  %4425 = vmatprep.mubr.bf16.mxu0 0
  %4426 = vmatmul.mubr.bf16.gmra.mxu0 %v477
  %v4427 = vpop.f32.mrf.mxu0
  %v4428 = vadd.f32 %v4283, %v4427
  %v4429 = vpop.f32.mrf.mxu0
  %v4430 = vpop.f32.mrf.mxu0
  %v4431 = vadd.f32 %v4286, %v4430
  %v4432 = vpop.f32.mrf.mxu0
  %4433 = vmatprep.mubr.bf16.mxu0 0
  %4434 = vmatmul.mubr.bf16.gmra.mxu0 %v480
  %v4435 = vpop.f32.mrf.mxu0
  %v4436 = vadd.f32 %v4291, %v4435
  %v4437 = vpop.f32.mrf.mxu0
  %v4438 = vpop.f32.mrf.mxu0
  %v4439 = vadd.f32 %v4294, %v4438
  %v4440 = vpop.f32.mrf.mxu0
  %4441 = vmatprep.mubr.bf16.mxu0 0
  %4442 = vmatmul.mubr.bf16.gmra.mxu0 %v483
  %v4443 = vpop.f32.mrf.mxu0
  %v4444 = vadd.f32 %v4299, %v4443
  %v4445 = vpop.f32.mrf.mxu0
  %v4446 = vpop.f32.mrf.mxu0
  %v4447 = vadd.f32 %v4302, %v4446
  %v4448 = vpop.f32.mrf.mxu0
  %4449 = vmatprep.mubr.bf16.mxu0 0
  %4450 = vmatmul.mubr.bf16.gmra.mxu0 %v486
  %v4451 = vpop.f32.mrf.mxu0
  %v4452 = vadd.f32 %v4307, %v4451
  %v4453 = vpop.f32.mrf.mxu0
  %v4454 = vpop.f32.mrf.mxu0
  %v4455 = vadd.f32 %v4310, %v4454
  %v4456 = vpop.f32.mrf.mxu0
  %4457 = vmatprep.mubr.bf16.mxu0 0
  %4458 = vmatmul.mubr.bf16.gmra.mxu0 %v489
  %v4459 = vpop.f32.mrf.mxu0
  %v4460 = vadd.f32 %v4315, %v4459
  %v4461 = vpop.f32.mrf.mxu0
  %v4462 = vpop.f32.mrf.mxu0
  %v4463 = vadd.f32 %v4318, %v4462
  %v4464 = vpop.f32.mrf.mxu0
  %4465 = vmatprep.mubr.bf16.mxu0 0
  %4466 = vmatmul.mubr.bf16.gmra.mxu0 %v492
  %v4467 = vpop.f32.mrf.mxu0
  %v4468 = vadd.f32 %v4323, %v4467
  %v4469 = vpop.f32.mrf.mxu0
  %v4470 = vpop.f32.mrf.mxu0
  %v4471 = vadd.f32 %v4326, %v4470
  %v4472 = vpop.f32.mrf.mxu0
  %4473 = vmatprep.mubr.bf16.mxu0 0
  %4474 = vmatmul.mubr.bf16.gmra.mxu0 %v495
  %v4475 = vpop.f32.mrf.mxu0
  %v4476 = vadd.f32 %v4331, %v4475
  %v4477 = vpop.f32.mrf.mxu0
  %v4478 = vpop.f32.mrf.mxu0
  %v4479 = vadd.f32 %v4334, %v4478
  %v4480 = vpop.f32.mrf.mxu0
  %4481 = vdwg.mxu0
  %4482 = vmatprep.subr.bf16.mxu0 0
  %4483 = vmatpush1.bf16.msra.mxu0 0
  %4484 = vmatprep.subr.bf16.mxu0 0
  %4485 = vmatpush1.bf16.msra.mxu0 0
  %4486 = vmatprep.subr.bf16.mxu0 0
  %4487 = vmatpush1.bf16.msra.mxu0 %v2479
  %4488 = vmatprep.subr.bf16.mxu0 0
  %4489 = vmatpush1.bf16.msra.mxu0 %v2478
  %4490 = vmatprep.subr.bf16.mxu0 0
  %4491 = vmatpush1.bf16.msra.mxu0 %v2477
  %4492 = vmatprep.subr.bf16.mxu0 0
  %4493 = vmatpush1.bf16.msra.mxu0 %v2476
  %4494 = vmatprep.subr.bf16.mxu0 0
  %4495 = vmatpush1.bf16.msra.mxu0 %v2475
  %4496 = vmatprep.subr.bf16.mxu0 0
  %4497 = vmatpush1.bf16.msra.mxu0 %v2474
  %4498 = vmatprep.subr.bf16.mxu0 0
  %4499 = vmatpush2.bf16.msra.mxu0 0
  %4500 = vmatprep.subr.bf16.mxu0 0
  %4501 = vmatpush2.bf16.msra.mxu0 0
  %4502 = vmatprep.subr.bf16.mxu0 0
  %4503 = vmatpush2.bf16.msra.mxu0 0
  %4504 = vmatprep.subr.bf16.mxu0 0
  %4505 = vmatpush2.bf16.msra.mxu0 0
  %4506 = vmatprep.subr.bf16.mxu0 0
  %4507 = vmatpush2.bf16.msra.mxu0 0
  %4508 = vmatprep.subr.bf16.mxu0 0
  %4509 = vmatpush2.bf16.msra.mxu0 0
  %4510 = vmatprep.subr.bf16.mxu0 0
  %4511 = vmatpush2.bf16.msra.mxu0 0
  %4512 = vmatprep.subr.bf16.mxu0 0
  %4513 = vmatpush2.bf16.msra.mxu0 0
  %4514 = vmatprep.mubr.bf16.mxu0 0
  %4515 = vmatmul.mubr.bf16.gmra.mxu0 %v1501
  %v4516 = vpop.f32.mrf.mxu0
  %v4517 = vadd.f32 0.0, %v4516
  %v4518 = vpop.f32.mrf.mxu0
  %v4519 = vpop.f32.mrf.mxu0
  %v4520 = vadd.f32 0.0, %v4519
  %v4521 = vpop.f32.mrf.mxu0
  %4522 = vmatprep.mubr.bf16.mxu0 0
  %4523 = vmatmul.mubr.bf16.gmra.mxu0 %v1504
  %v4524 = vpop.f32.mrf.mxu0
  %v4525 = vadd.f32 0.0, %v4524
  %v4526 = vpop.f32.mrf.mxu0
  %v4527 = vpop.f32.mrf.mxu0
  %v4528 = vadd.f32 0.0, %v4527
  %v4529 = vpop.f32.mrf.mxu0
  %4530 = vmatprep.mubr.bf16.mxu0 0
  %4531 = vmatmul.mubr.bf16.gmra.mxu0 %v1507
  %v4532 = vpop.f32.mrf.mxu0
  %v4533 = vadd.f32 0.0, %v4532
  %v4534 = vpop.f32.mrf.mxu0
  %v4535 = vpop.f32.mrf.mxu0
  %v4536 = vadd.f32 0.0, %v4535
  %v4537 = vpop.f32.mrf.mxu0
  %4538 = vmatprep.mubr.bf16.mxu0 0
  %4539 = vmatmul.mubr.bf16.gmra.mxu0 %v1510
  %v4540 = vpop.f32.mrf.mxu0
  %v4541 = vadd.f32 0.0, %v4540
  %v4542 = vpop.f32.mrf.mxu0
  %v4543 = vpop.f32.mrf.mxu0
  %v4544 = vadd.f32 0.0, %v4543
  %v4545 = vpop.f32.mrf.mxu0
  %4546 = vmatprep.mubr.bf16.mxu0 0
  %4547 = vmatmul.mubr.bf16.gmra.mxu0 %v1513
  %v4548 = vpop.f32.mrf.mxu0
  %v4549 = vadd.f32 0.0, %v4548
  %v4550 = vpop.f32.mrf.mxu0
  %v4551 = vpop.f32.mrf.mxu0
  %v4552 = vadd.f32 0.0, %v4551
  %v4553 = vpop.f32.mrf.mxu0
  %4554 = vmatprep.mubr.bf16.mxu0 0
  %4555 = vmatmul.mubr.bf16.gmra.mxu0 %v1516
  %v4556 = vpop.f32.mrf.mxu0
  %v4557 = vadd.f32 0.0, %v4556
  %v4558 = vpop.f32.mrf.mxu0
  %v4559 = vpop.f32.mrf.mxu0
  %v4560 = vadd.f32 0.0, %v4559
  %v4561 = vpop.f32.mrf.mxu0
  %4562 = vmatprep.mubr.bf16.mxu0 0
  %4563 = vmatmul.mubr.bf16.gmra.mxu0 %v1519
  %v4564 = vpop.f32.mrf.mxu0
  %v4565 = vadd.f32 0.0, %v4564
  %v4566 = vpop.f32.mrf.mxu0
  %v4567 = vpop.f32.mrf.mxu0
  %v4568 = vadd.f32 0.0, %v4567
  %v4569 = vpop.f32.mrf.mxu0
  %4570 = vmatprep.mubr.bf16.mxu0 0
  %4571 = vmatmul.mubr.bf16.gmra.mxu0 %v1522
  %v4572 = vpop.f32.mrf.mxu0
  %v4573 = vadd.f32 0.0, %v4572
  %v4574 = vpop.f32.mrf.mxu0
  %v4575 = vpop.f32.mrf.mxu0
  %v4576 = vadd.f32 0.0, %v4575
  %v4577 = vpop.f32.mrf.mxu0
  %4578 = vmatprep.mubr.bf16.mxu0 0
  %4579 = vmatmul.mubr.bf16.gmra.mxu0 %v1525
  %v4580 = vpop.f32.mrf.mxu0
  %v4581 = vadd.f32 0.0, %v4580
  %v4582 = vpop.f32.mrf.mxu0
  %v4583 = vpop.f32.mrf.mxu0
  %v4584 = vadd.f32 0.0, %v4583
  %v4585 = vpop.f32.mrf.mxu0
  %4586 = vmatprep.mubr.bf16.mxu0 0
  %4587 = vmatmul.mubr.bf16.gmra.mxu0 %v1528
  %v4588 = vpop.f32.mrf.mxu0
  %v4589 = vadd.f32 0.0, %v4588
  %v4590 = vpop.f32.mrf.mxu0
  %v4591 = vpop.f32.mrf.mxu0
  %v4592 = vadd.f32 0.0, %v4591
  %v4593 = vpop.f32.mrf.mxu0
  %4594 = vmatprep.mubr.bf16.mxu0 0
  %4595 = vmatmul.mubr.bf16.gmra.mxu0 %v1531
  %v4596 = vpop.f32.mrf.mxu0
  %v4597 = vadd.f32 0.0, %v4596
  %v4598 = vpop.f32.mrf.mxu0
  %v4599 = vpop.f32.mrf.mxu0
  %v4600 = vadd.f32 0.0, %v4599
  %v4601 = vpop.f32.mrf.mxu0
  %4602 = vmatprep.mubr.bf16.mxu0 0
  %4603 = vmatmul.mubr.bf16.gmra.mxu0 %v1534
  %v4604 = vpop.f32.mrf.mxu0
  %v4605 = vadd.f32 0.0, %v4604
  %v4606 = vpop.f32.mrf.mxu0
  %v4607 = vpop.f32.mrf.mxu0
  %v4608 = vadd.f32 0.0, %v4607
  %v4609 = vpop.f32.mrf.mxu0
  %4610 = vmatprep.mubr.bf16.mxu0 0
  %4611 = vmatmul.mubr.bf16.gmra.mxu0 %v1537
  %v4612 = vpop.f32.mrf.mxu0
  %v4613 = vadd.f32 0.0, %v4612
  %v4614 = vpop.f32.mrf.mxu0
  %v4615 = vpop.f32.mrf.mxu0
  %v4616 = vadd.f32 0.0, %v4615
  %v4617 = vpop.f32.mrf.mxu0
  %4618 = vmatprep.mubr.bf16.mxu0 0
  %4619 = vmatmul.mubr.bf16.gmra.mxu0 %v1540
  %v4620 = vpop.f32.mrf.mxu0
  %v4621 = vadd.f32 0.0, %v4620
  %v4622 = vpop.f32.mrf.mxu0
  %v4623 = vpop.f32.mrf.mxu0
  %v4624 = vadd.f32 0.0, %v4623
  %v4625 = vpop.f32.mrf.mxu0
  %4626 = vdwg.mxu0
  %v4627 = vadd.f32 %v4372, %v4517
  %v4628 = vadd.f32 %v4375, %v4520
  %v4629 = vadd.f32 %v4380, %v4525
  %v4630 = vadd.f32 %v4383, %v4528
  %v4631 = vadd.f32 %v4388, %v4533
  %v4632 = vadd.f32 %v4391, %v4536
  %v4633 = vadd.f32 %v4396, %v4541
  %v4634 = vadd.f32 %v4399, %v4544
  %v4635 = vadd.f32 %v4404, %v4549
  %v4636 = vadd.f32 %v4407, %v4552
  %v4637 = vadd.f32 %v4412, %v4557
  %v4638 = vadd.f32 %v4415, %v4560
  %v4639 = vadd.f32 %v4420, %v4565
  %v4640 = vadd.f32 %v4423, %v4568
  %v4641 = vadd.f32 %v4428, %v4573
  %v4642 = vadd.f32 %v4431, %v4576
  %v4643 = vadd.f32 %v4436, %v4581
  %v4644 = vadd.f32 %v4439, %v4584
  %v4645 = vadd.f32 %v4444, %v4589
  %v4646 = vadd.f32 %v4447, %v4592
  %v4647 = vadd.f32 %v4452, %v4597
  %v4648 = vadd.f32 %v4455, %v4600
  %v4649 = vadd.f32 %v4460, %v4605
  %v4650 = vadd.f32 %v4463, %v4608
  %v4651 = vadd.f32 %v4468, %v4613
  %v4652 = vadd.f32 %v4471, %v4616
  %v4653 = vadd.f32 %v4476, %v4621
  %v4654 = vadd.f32 %v4479, %v4624
  %4655 = vmatprep.subr.bf16.mxu0 0
  %4656 = vmatpush1.bf16.msra.mxu0 0
  %4657 = vmatprep.subr.bf16.mxu0 0
  %4658 = vmatpush1.bf16.msra.mxu0 0
  %4659 = vmatprep.subr.bf16.mxu0 0
  %4660 = vmatpush1.bf16.msra.mxu0 %v2701
  %4661 = vmatprep.subr.bf16.mxu0 0
  %4662 = vmatpush1.bf16.msra.mxu0 %v2700
  %4663 = vmatprep.subr.bf16.mxu0 0
  %4664 = vmatpush1.bf16.msra.mxu0 %v2699
  %4665 = vmatprep.subr.bf16.mxu0 0
  %4666 = vmatpush1.bf16.msra.mxu0 %v2698
  %4667 = vmatprep.subr.bf16.mxu0 0
  %4668 = vmatpush1.bf16.msra.mxu0 %v2697
  %4669 = vmatprep.subr.bf16.mxu0 0
  %4670 = vmatpush1.bf16.msra.mxu0 %v2696
  %4671 = vmatprep.subr.bf16.mxu0 0
  %4672 = vmatpush2.bf16.msra.mxu0 0
  %4673 = vmatprep.subr.bf16.mxu0 0
  %4674 = vmatpush2.bf16.msra.mxu0 0
  %4675 = vmatprep.subr.bf16.mxu0 0
  %4676 = vmatpush2.bf16.msra.mxu0 0
  %4677 = vmatprep.subr.bf16.mxu0 0
  %4678 = vmatpush2.bf16.msra.mxu0 0
  %4679 = vmatprep.subr.bf16.mxu0 0
  %4680 = vmatpush2.bf16.msra.mxu0 0
  %4681 = vmatprep.subr.bf16.mxu0 0
  %4682 = vmatpush2.bf16.msra.mxu0 0
  %4683 = vmatprep.subr.bf16.mxu0 0
  %4684 = vmatpush2.bf16.msra.mxu0 0
  %4685 = vmatprep.subr.bf16.mxu0 0
  %4686 = vmatpush2.bf16.msra.mxu0 0
  %4687 = vmatprep.mubr.bf16.mxu0 0
  %4688 = vmatmul.mubr.bf16.gmra.mxu0 %v1835
  %v4689 = vpop.f32.mrf.mxu0
  %v4690 = vadd.f32 0.0, %v4689
  %v4691 = vpop.f32.mrf.mxu0
  %v4692 = vpop.f32.mrf.mxu0
  %v4693 = vadd.f32 0.0, %v4692
  %v4694 = vpop.f32.mrf.mxu0
  %4695 = vmatprep.mubr.bf16.mxu0 0
  %4696 = vmatmul.mubr.bf16.gmra.mxu0 %v1838
  %v4697 = vpop.f32.mrf.mxu0
  %v4698 = vadd.f32 0.0, %v4697
  %v4699 = vpop.f32.mrf.mxu0
  %v4700 = vpop.f32.mrf.mxu0
  %v4701 = vadd.f32 0.0, %v4700
  %v4702 = vpop.f32.mrf.mxu0
  %4703 = vmatprep.mubr.bf16.mxu0 0
  %4704 = vmatmul.mubr.bf16.gmra.mxu0 %v1841
  %v4705 = vpop.f32.mrf.mxu0
  %v4706 = vadd.f32 0.0, %v4705
  %v4707 = vpop.f32.mrf.mxu0
  %v4708 = vpop.f32.mrf.mxu0
  %v4709 = vadd.f32 0.0, %v4708
  %v4710 = vpop.f32.mrf.mxu0
  %4711 = vmatprep.mubr.bf16.mxu0 0
  %4712 = vmatmul.mubr.bf16.gmra.mxu0 %v1844
  %v4713 = vpop.f32.mrf.mxu0
  %v4714 = vadd.f32 0.0, %v4713
  %v4715 = vpop.f32.mrf.mxu0
  %v4716 = vpop.f32.mrf.mxu0
  %v4717 = vadd.f32 0.0, %v4716
  %v4718 = vpop.f32.mrf.mxu0
  %4719 = vmatprep.mubr.bf16.mxu0 0
  %4720 = vmatmul.mubr.bf16.gmra.mxu0 %v1847
  %v4721 = vpop.f32.mrf.mxu0
  %v4722 = vadd.f32 0.0, %v4721
  %v4723 = vpop.f32.mrf.mxu0
  %v4724 = vpop.f32.mrf.mxu0
  %v4725 = vadd.f32 0.0, %v4724
  %v4726 = vpop.f32.mrf.mxu0
  %4727 = vmatprep.mubr.bf16.mxu0 0
  %4728 = vmatmul.mubr.bf16.gmra.mxu0 %v1850
  %v4729 = vpop.f32.mrf.mxu0
  %v4730 = vadd.f32 0.0, %v4729
  %v4731 = vpop.f32.mrf.mxu0
  %v4732 = vpop.f32.mrf.mxu0
  %v4733 = vadd.f32 0.0, %v4732
  %v4734 = vpop.f32.mrf.mxu0
  %4735 = vmatprep.mubr.bf16.mxu0 0
  %4736 = vmatmul.mubr.bf16.gmra.mxu0 %v1853
  %v4737 = vpop.f32.mrf.mxu0
  %v4738 = vadd.f32 0.0, %v4737
  %v4739 = vpop.f32.mrf.mxu0
  %v4740 = vpop.f32.mrf.mxu0
  %v4741 = vadd.f32 0.0, %v4740
  %v4742 = vpop.f32.mrf.mxu0
  %4743 = vmatprep.mubr.bf16.mxu0 0
  %4744 = vmatmul.mubr.bf16.gmra.mxu0 %v1856
  %v4745 = vpop.f32.mrf.mxu0
  %v4746 = vadd.f32 0.0, %v4745
  %v4747 = vpop.f32.mrf.mxu0
  %v4748 = vpop.f32.mrf.mxu0
  %v4749 = vadd.f32 0.0, %v4748
  %v4750 = vpop.f32.mrf.mxu0
  %4751 = vmatprep.mubr.bf16.mxu0 0
  %4752 = vmatmul.mubr.bf16.gmra.mxu0 %v1859
  %v4753 = vpop.f32.mrf.mxu0
  %v4754 = vadd.f32 0.0, %v4753
  %v4755 = vpop.f32.mrf.mxu0
  %v4756 = vpop.f32.mrf.mxu0
  %v4757 = vadd.f32 0.0, %v4756
  %v4758 = vpop.f32.mrf.mxu0
  %4759 = vmatprep.mubr.bf16.mxu0 0
  %4760 = vmatmul.mubr.bf16.gmra.mxu0 %v1862
  %v4761 = vpop.f32.mrf.mxu0
  %v4762 = vadd.f32 0.0, %v4761
  %v4763 = vpop.f32.mrf.mxu0
  %v4764 = vpop.f32.mrf.mxu0
  %v4765 = vadd.f32 0.0, %v4764
  %v4766 = vpop.f32.mrf.mxu0
  %4767 = vmatprep.mubr.bf16.mxu0 0
  %4768 = vmatmul.mubr.bf16.gmra.mxu0 %v1865
  %v4769 = vpop.f32.mrf.mxu0
  %v4770 = vadd.f32 0.0, %v4769
  %v4771 = vpop.f32.mrf.mxu0
  %v4772 = vpop.f32.mrf.mxu0
  %v4773 = vadd.f32 0.0, %v4772
  %v4774 = vpop.f32.mrf.mxu0
  %4775 = vmatprep.mubr.bf16.mxu0 0
  %4776 = vmatmul.mubr.bf16.gmra.mxu0 %v1868
  %v4777 = vpop.f32.mrf.mxu0
  %v4778 = vadd.f32 0.0, %v4777
  %v4779 = vpop.f32.mrf.mxu0
  %v4780 = vpop.f32.mrf.mxu0
  %v4781 = vadd.f32 0.0, %v4780
  %v4782 = vpop.f32.mrf.mxu0
  %4783 = vmatprep.mubr.bf16.mxu0 0
  %4784 = vmatmul.mubr.bf16.gmra.mxu0 %v1871
  %v4785 = vpop.f32.mrf.mxu0
  %v4786 = vadd.f32 0.0, %v4785
  %v4787 = vpop.f32.mrf.mxu0
  %v4788 = vpop.f32.mrf.mxu0
  %v4789 = vadd.f32 0.0, %v4788
  %v4790 = vpop.f32.mrf.mxu0
  %4791 = vmatprep.mubr.bf16.mxu0 0
  %4792 = vmatmul.mubr.bf16.gmra.mxu0 %v1874
  %v4793 = vpop.f32.mrf.mxu0
  %v4794 = vadd.f32 0.0, %v4793
  %v4795 = vpop.f32.mrf.mxu0
  %v4796 = vpop.f32.mrf.mxu0
  %v4797 = vadd.f32 0.0, %v4796
  %v4798 = vpop.f32.mrf.mxu0
  %4799 = vdwg.mxu0
  %v4800 = vadd.f32 %v4627, %v4690
  %v4801 = vadd.f32 %v4628, %v4693
  %v4802 = vadd.f32 %v4629, %v4698
  %v4803 = vadd.f32 %v4630, %v4701
  %v4804 = vadd.f32 %v4631, %v4706
  %v4805 = vadd.f32 %v4632, %v4709
  %v4806 = vadd.f32 %v4633, %v4714
  %v4807 = vadd.f32 %v4634, %v4717
  %v4808 = vadd.f32 %v4635, %v4722
  %v4809 = vadd.f32 %v4636, %v4725
  %v4810 = vadd.f32 %v4637, %v4730
  %v4811 = vadd.f32 %v4638, %v4733
  %v4812 = vadd.f32 %v4639, %v4738
  %v4813 = vadd.f32 %v4640, %v4741
  %v4814 = vadd.f32 %v4641, %v4746
  %v4815 = vadd.f32 %v4642, %v4749
  %v4816 = vadd.f32 %v4643, %v4754
  %v4817 = vadd.f32 %v4644, %v4757
  %v4818 = vadd.f32 %v4645, %v4762
  %v4819 = vadd.f32 %v4646, %v4765
  %v4820 = vadd.f32 %v4647, %v4770
  %v4821 = vadd.f32 %v4648, %v4773
  %v4822 = vadd.f32 %v4649, %v4778
  %v4823 = vadd.f32 %v4650, %v4781
  %v4824 = vadd.f32 %v4651, %v4786
  %v4825 = vadd.f32 %v4652, %v4789
  %v4826 = vadd.f32 %v4653, %v4794
  %v4827 = vadd.f32 %v4654, %v4797
  %4828 = vmatprep.subr.bf16.mxu0 0
  %4829 = vmatpush1.bf16.msra.mxu0 0
  %4830 = vmatprep.subr.bf16.mxu0 0
  %4831 = vmatpush1.bf16.msra.mxu0 0
  %4832 = vmatprep.subr.bf16.mxu0 0
  %4833 = vmatpush1.bf16.msra.mxu0 %v2923
  %4834 = vmatprep.subr.bf16.mxu0 0
  %4835 = vmatpush1.bf16.msra.mxu0 %v2922
  %4836 = vmatprep.subr.bf16.mxu0 0
  %4837 = vmatpush1.bf16.msra.mxu0 %v2921
  %4838 = vmatprep.subr.bf16.mxu0 0
  %4839 = vmatpush1.bf16.msra.mxu0 %v2920
  %4840 = vmatprep.subr.bf16.mxu0 0
  %4841 = vmatpush1.bf16.msra.mxu0 %v2919
  %4842 = vmatprep.subr.bf16.mxu0 0
  %4843 = vmatpush1.bf16.msra.mxu0 %v2918
  %4844 = vmatprep.subr.bf16.mxu0 0
  %4845 = vmatpush2.bf16.msra.mxu0 0
  %4846 = vmatprep.subr.bf16.mxu0 0
  %4847 = vmatpush2.bf16.msra.mxu0 0
  %4848 = vmatprep.subr.bf16.mxu0 0
  %4849 = vmatpush2.bf16.msra.mxu0 0
  %4850 = vmatprep.subr.bf16.mxu0 0
  %4851 = vmatpush2.bf16.msra.mxu0 0
  %4852 = vmatprep.subr.bf16.mxu0 0
  %4853 = vmatpush2.bf16.msra.mxu0 0
  %4854 = vmatprep.subr.bf16.mxu0 0
  %4855 = vmatpush2.bf16.msra.mxu0 0
  %4856 = vmatprep.subr.bf16.mxu0 0
  %4857 = vmatpush2.bf16.msra.mxu0 0
  %4858 = vmatprep.subr.bf16.mxu0 0
  %4859 = vmatpush2.bf16.msra.mxu0 0
  %4860 = vmatprep.mubr.bf16.mxu0 0
  %4861 = vmatmul.mubr.bf16.gmra.mxu0 %v3950
  %v4862 = vpop.f32.mrf.mxu0
  %v4863 = vadd.f32 0.0, %v4862
  %v4864 = vpop.f32.mrf.mxu0
  %v4865 = vpop.f32.mrf.mxu0
  %v4866 = vadd.f32 0.0, %v4865
  %v4867 = vpop.f32.mrf.mxu0
  %4868 = vmatprep.mubr.bf16.mxu0 0
  %4869 = vmatmul.mubr.bf16.gmra.mxu0 %v3953
  %v4870 = vpop.f32.mrf.mxu0
  %v4871 = vadd.f32 0.0, %v4870
  %v4872 = vpop.f32.mrf.mxu0
  %v4873 = vpop.f32.mrf.mxu0
  %v4874 = vadd.f32 0.0, %v4873
  %v4875 = vpop.f32.mrf.mxu0
  %4876 = vmatprep.mubr.bf16.mxu0 0
  %4877 = vmatmul.mubr.bf16.gmra.mxu0 %v3956
  %v4878 = vpop.f32.mrf.mxu0
  %v4879 = vadd.f32 0.0, %v4878
  %v4880 = vpop.f32.mrf.mxu0
  %v4881 = vpop.f32.mrf.mxu0
  %v4882 = vadd.f32 0.0, %v4881
  %v4883 = vpop.f32.mrf.mxu0
  %4884 = vmatprep.mubr.bf16.mxu0 0
  %4885 = vmatmul.mubr.bf16.gmra.mxu0 %v3959
  %v4886 = vpop.f32.mrf.mxu0
  %v4887 = vadd.f32 0.0, %v4886
  %v4888 = vpop.f32.mrf.mxu0
  %v4889 = vpop.f32.mrf.mxu0
  %v4890 = vadd.f32 0.0, %v4889
  %v4891 = vpop.f32.mrf.mxu0
  %4892 = vmatprep.mubr.bf16.mxu0 0
  %4893 = vmatmul.mubr.bf16.gmra.mxu0 %v3962
  %v4894 = vpop.f32.mrf.mxu0
  %v4895 = vadd.f32 0.0, %v4894
  %v4896 = vpop.f32.mrf.mxu0
  %v4897 = vpop.f32.mrf.mxu0
  %v4898 = vadd.f32 0.0, %v4897
  %v4899 = vpop.f32.mrf.mxu0
  %4900 = vmatprep.mubr.bf16.mxu0 0
  %4901 = vmatmul.mubr.bf16.gmra.mxu0 %v3965
  %v4902 = vpop.f32.mrf.mxu0
  %v4903 = vadd.f32 0.0, %v4902
  %v4904 = vpop.f32.mrf.mxu0
  %v4905 = vpop.f32.mrf.mxu0
  %v4906 = vadd.f32 0.0, %v4905
  %v4907 = vpop.f32.mrf.mxu0
  %4908 = vmatprep.mubr.bf16.mxu0 0
  %4909 = vmatmul.mubr.bf16.gmra.mxu0 %v3968
  %v4910 = vpop.f32.mrf.mxu0
  %v4911 = vadd.f32 0.0, %v4910
  %v4912 = vpop.f32.mrf.mxu0
  %v4913 = vpop.f32.mrf.mxu0
  %v4914 = vadd.f32 0.0, %v4913
  %v4915 = vpop.f32.mrf.mxu0
  %4916 = vmatprep.mubr.bf16.mxu0 0
  %4917 = vmatmul.mubr.bf16.gmra.mxu0 %v3971
  %v4918 = vpop.f32.mrf.mxu0
  %v4919 = vadd.f32 0.0, %v4918
  %v4920 = vpop.f32.mrf.mxu0
  %v4921 = vpop.f32.mrf.mxu0
  %v4922 = vadd.f32 0.0, %v4921
  %v4923 = vpop.f32.mrf.mxu0
  %4924 = vmatprep.mubr.bf16.mxu0 0
  %4925 = vmatmul.mubr.bf16.gmra.mxu0 %v3974
  %v4926 = vpop.f32.mrf.mxu0
  %v4927 = vadd.f32 0.0, %v4926
  %v4928 = vpop.f32.mrf.mxu0
  %v4929 = vpop.f32.mrf.mxu0
  %v4930 = vadd.f32 0.0, %v4929
  %v4931 = vpop.f32.mrf.mxu0
  %4932 = vmatprep.mubr.bf16.mxu0 0
  %4933 = vmatmul.mubr.bf16.gmra.mxu0 %v3977
  %v4934 = vpop.f32.mrf.mxu0
  %v4935 = vadd.f32 0.0, %v4934
  %v4936 = vpop.f32.mrf.mxu0
  %v4937 = vpop.f32.mrf.mxu0
  %v4938 = vadd.f32 0.0, %v4937
  %v4939 = vpop.f32.mrf.mxu0
  %4940 = vmatprep.mubr.bf16.mxu0 0
  %4941 = vmatmul.mubr.bf16.gmra.mxu0 %v3980
  %v4942 = vpop.f32.mrf.mxu0
  %v4943 = vadd.f32 0.0, %v4942
  %v4944 = vpop.f32.mrf.mxu0
  %v4945 = vpop.f32.mrf.mxu0
  %v4946 = vadd.f32 0.0, %v4945
  %v4947 = vpop.f32.mrf.mxu0
  %4948 = vmatprep.mubr.bf16.mxu0 0
  %4949 = vmatmul.mubr.bf16.gmra.mxu0 %v3983
  %v4950 = vpop.f32.mrf.mxu0
  %v4951 = vadd.f32 0.0, %v4950
  %v4952 = vpop.f32.mrf.mxu0
  %v4953 = vpop.f32.mrf.mxu0
  %v4954 = vadd.f32 0.0, %v4953
  %v4955 = vpop.f32.mrf.mxu0
  %4956 = vmatprep.mubr.bf16.mxu0 0
  %4957 = vmatmul.mubr.bf16.gmra.mxu0 %v3986
  %v4958 = vpop.f32.mrf.mxu0
  %v4959 = vadd.f32 0.0, %v4958
  %v4960 = vpop.f32.mrf.mxu0
  %v4961 = vpop.f32.mrf.mxu0
  %v4962 = vadd.f32 0.0, %v4961
  %v4963 = vpop.f32.mrf.mxu0
  %4964 = vmatprep.mubr.bf16.mxu0 0
  %4965 = vmatmul.mubr.bf16.gmra.mxu0 %v3989
  %v4966 = vpop.f32.mrf.mxu0
  %v4967 = vadd.f32 0.0, %v4966
  %v4968 = vpop.f32.mrf.mxu0
  %v4969 = vpop.f32.mrf.mxu0
  %v4970 = vadd.f32 0.0, %v4969
  %v4971 = vpop.f32.mrf.mxu0
  %4972 = vdwg.mxu0
  %v4973 = vadd.f32 %v4800, %v4863
  %v4974 = vadd.f32 %v4801, %v4866
  %v4975 = vadd.f32 %v4802, %v4871
  %v4976 = vadd.f32 %v4803, %v4874
  %v4977 = vadd.f32 %v4804, %v4879
  %v4978 = vadd.f32 %v4805, %v4882
  %v4979 = vadd.f32 %v4806, %v4887
  %v4980 = vadd.f32 %v4807, %v4890
  %v4981 = vadd.f32 %v4808, %v4895
  %v4982 = vadd.f32 %v4809, %v4898
  %v4983 = vadd.f32 %v4810, %v4903
  %v4984 = vadd.f32 %v4811, %v4906
  %v4985 = vadd.f32 %v4812, %v4911
  %v4986 = vadd.f32 %v4813, %v4914
  %v4987 = vadd.f32 %v4814, %v4919
  %v4988 = vadd.f32 %v4815, %v4922
  %v4989 = vadd.f32 %v4816, %v4927
  %v4990 = vadd.f32 %v4817, %v4930
  %v4991 = vadd.f32 %v4818, %v4935
  %v4992 = vadd.f32 %v4819, %v4938
  %v4993 = vadd.f32 %v4820, %v4943
  %v4994 = vadd.f32 %v4821, %v4946
  %v4995 = vadd.f32 %v4822, %v4951
  %v4996 = vadd.f32 %v4823, %v4954
  %v4997 = vadd.f32 %v4824, %v4959
  %v4998 = vadd.f32 %v4825, %v4962
  %v4999 = vadd.f32 %v4826, %v4967
  %v5000 = vadd.f32 %v4827, %v4970
  %v5001 = vmax.f32 %v4164, %v4973
  %v5002 = vmax.f32 %v4165, %v4974
  %v5003 = vmax.f32 %v4166, %v4975
  %v5004 = vmax.f32 %v4167, %v4976
  %v5005 = vmax.f32 %v4168, %v4977
  %v5006 = vmax.f32 %v4169, %v4978
  %v5007 = vmax.f32 %v4170, %v4979
  %v5008 = vmax.f32 %v4171, %v4980
  %v5009 = vmax.f32 %v4172, %v4981
  %v5010 = vmax.f32 %v4173, %v4982
  %v5011 = vmax.f32 %v4174, %v4983
  %v5012 = vmax.f32 %v4175, %v4984
  %v5013 = vmax.f32 %v4176, %v4985
  %v5014 = vmax.f32 %v4177, %v4986
  %v5015 = vmax.f32 %v4178, %v4987
  %v5016 = vmax.f32 %v4179, %v4988
  %v5017 = vmax.f32 %v4180, %v4989
  %v5018 = vmax.f32 %v4181, %v4990
  %v5019 = vmax.f32 %v4182, %v4991
  %v5020 = vmax.f32 %v4183, %v4992
  %v5021 = vmax.f32 %v4184, %v4993
  %v5022 = vmax.f32 %v4185, %v4994
  %v5023 = vmax.f32 %v4186, %v4995
  %v5024 = vmax.f32 %v4187, %v4996
  %v5025 = vmax.f32 %v4188, %v4997
  %v5026 = vmax.f32 %v4189, %v4998
  %v5027 = vmax.f32 %v4190, %v4999
  %v5028 = vmax.f32 %v4191, %v5000
  %v5030 = vlaneseq
  %v5031 = vshrl.u32 %v5030, 7
  %v5032 = vsub.s32 0, %v5031
  %v5033 = vrot.slane %v209, %v5032
  %v5035 = vadd.f32 %v5001, %v5033
  %v5036 = vadd.f32 %v5002, %v5033
  %v5037 = vadd.f32 %v5003, %v5033
  %v5038 = vadd.f32 %v5004, %v5033
  %v5039 = vadd.f32 %v5005, %v5033
  %v5040 = vadd.f32 %v5006, %v5033
  %v5041 = vadd.f32 %v5007, %v5033
  %v5042 = vadd.f32 %v5008, %v5033
  %v5043 = vadd.f32 %v5009, %v5033
  %v5044 = vadd.f32 %v5010, %v5033
  %v5045 = vadd.f32 %v5011, %v5033
  %v5046 = vadd.f32 %v5012, %v5033
  %v5047 = vadd.f32 %v5013, %v5033
  %v5048 = vadd.f32 %v5014, %v5033
  %v5049 = vadd.f32 %v5015, %v5033
  %v5050 = vadd.f32 %v5016, %v5033
  %v5051 = vadd.f32 %v5017, %v5033
  %v5052 = vadd.f32 %v5018, %v5033
  %v5053 = vadd.f32 %v5019, %v5033
  %v5054 = vadd.f32 %v5020, %v5033
  %v5055 = vadd.f32 %v5021, %v5033
  %v5056 = vadd.f32 %v5022, %v5033
  %v5057 = vadd.f32 %v5023, %v5033
  %v5058 = vadd.f32 %v5024, %v5033
  %v5059 = vadd.f32 %v5025, %v5033
  %v5060 = vadd.f32 %v5026, %v5033
  %v5061 = vadd.f32 %v5027, %v5033
  %v5062 = vadd.f32 %v5028, %v5033
  %v5063 = vmax.f32 %v5035, 0.0
  %v5064 = vmax.f32 %v5036, 0.0
  %v5065 = vmax.f32 %v5037, 0.0
  %v5066 = vmax.f32 %v5038, 0.0
  %v5067 = vmax.f32 %v5039, 0.0
  %v5068 = vmax.f32 %v5040, 0.0
  %v5069 = vmax.f32 %v5041, 0.0
  %v5070 = vmax.f32 %v5042, 0.0
  %v5071 = vmax.f32 %v5043, 0.0
  %v5072 = vmax.f32 %v5044, 0.0
  %v5073 = vmax.f32 %v5045, 0.0
  %v5074 = vmax.f32 %v5046, 0.0
  %v5075 = vmax.f32 %v5047, 0.0
  %v5076 = vmax.f32 %v5048, 0.0
  %v5077 = vmax.f32 %v5049, 0.0
  %v5078 = vmax.f32 %v5050, 0.0
  %v5079 = vmax.f32 %v5051, 0.0
  %v5080 = vmax.f32 %v5052, 0.0
  %v5081 = vmax.f32 %v5053, 0.0
  %v5082 = vmax.f32 %v5054, 0.0
  %v5083 = vmax.f32 %v5055, 0.0
  %v5084 = vmax.f32 %v5056, 0.0
  %v5085 = vmax.f32 %v5057, 0.0
  %v5086 = vmax.f32 %v5058, 0.0
  %v5087 = vmax.f32 %v5059, 0.0
  %v5088 = vmax.f32 %v5060, 0.0
  %v5089 = vmax.f32 %v5061, 0.0
  %v5090 = vmax.f32 %v5062, 0.0
  %v5091 = vpack.c.bf16 %v5064, %v5063
  %v5092 = vpack.c.bf16 %v5066, %v5065
  %v5093 = vpack.c.bf16 %v5068, %v5067
  %v5094 = vpack.c.bf16 %v5070, %v5069
  %v5095 = vpack.c.bf16 %v5072, %v5071
  %v5096 = vpack.c.bf16 %v5074, %v5073
  %v5097 = vpack.c.bf16 %v5076, %v5075
  %v5098 = vpack.c.bf16 %v5078, %v5077
  %v5099 = vpack.c.bf16 %v5080, %v5079
  %v5100 = vpack.c.bf16 %v5082, %v5081
  %v5101 = vpack.c.bf16 %v5084, %v5083
  %v5102 = vpack.c.bf16 %v5086, %v5085
  %v5103 = vpack.c.bf16 %v5088, %v5087
  %v5104 = vpack.c.bf16 %v5090, %v5089
  %5112 = vrot.lane.b32.xlu0 %v5092, 84
  %v5113 = vpop.permute.xlu0 %5112
  %5114 = vrot.lane.b32.xlu0 %v5094, 84
  %v5115 = vpop.permute.xlu0 %5114
  %5116 = vrot.lane.b32.xlu0 %v5096, 84
  %v5117 = vpop.permute.xlu0 %5116
  %5118 = vrot.lane.b32.xlu0 %v5098, 84
  %v5119 = vpop.permute.xlu0 %5118
  %5120 = vrot.lane.b32.xlu0 %v5100, 84
  %v5121 = vpop.permute.xlu0 %5120
  %5122 = vrot.lane.b32.xlu0 %v5102, 84
  %v5123 = vpop.permute.xlu0 %5122
  %5124 = vrot.lane.b32.xlu0 %v5104, 84
  %v5125 = vpop.permute.xlu0 %5124
  %vm5126 = vcmask 687104
  %v5129 = vsel %vm5126, %v5091, %v5113
  %v5132 = vsel %vm5126, %v5093, %v5115
  %v5135 = vsel %vm5126, %v5095, %v5117
  %v5138 = vsel %vm5126, %v5097, %v5119
  %v5141 = vsel %vm5126, %v5099, %v5121
  %v5144 = vsel %vm5126, %v5101, %v5123
  %v5147 = vsel %vm5126, %v5103, %v5125
  %v5148 = vld [vmem:[%s4] sm:$0x1]
  %v5149 = vld [vmem:[%s3] sm:$0xf]
  %v5150 = vld [vmem:[%s3 + $0x4] sm:$0xf]
  %v5151 = vld [vmem:[%s3 + $0x8] sm:$0xf]
  %v5152 = vld [vmem:[%s3 + $0xc] sm:$0xf]
  %v5153 = vld [vmem:[%s3 + $0x10] sm:$0xf]
  %v5154 = vld [vmem:[%s3 + $0x14] sm:$0xf]
  %v5155 = vld [vmem:[%s3 + $0x18] sm:$0xf]
  %v5156 = vld [vmem:[%s3 + $0x1c] sm:$0xf]
  %v5157 = vld [vmem:[%s3 + $0x20] sm:$0xf]
  %v5158 = vld [vmem:[%s3 + $0x24] sm:$0xf]
  %v5159 = vld [vmem:[%s3 + $0x28] sm:$0x3]
  %s5160 = scalar_lea.vmem %s3, 44
  %v5161 = vld [vmem:[%s5160] sm:$0xf]
  %v5162 = vld [vmem:[%s5160 + $0x4] sm:$0xf]
  %v5163 = vld [vmem:[%s5160 + $0x8] sm:$0xf]
  %v5164 = vld [vmem:[%s5160 + $0xc] sm:$0xf]
  %v5165 = vld [vmem:[%s5160 + $0x10] sm:$0xf]
  %v5166 = vld [vmem:[%s5160 + $0x14] sm:$0xf]
  %v5167 = vld [vmem:[%s5160 + $0x18] sm:$0xf]
  %v5168 = vld [vmem:[%s5160 + $0x1c] sm:$0xf]
  %v5169 = vld [vmem:[%s5160 + $0x20] sm:$0xf]
  %v5170 = vld [vmem:[%s5160 + $0x24] sm:$0xf]
  %v5171 = vld [vmem:[%s5160 + $0x28] sm:$0x3]
  %5177 = vrot.lane.b32.xlu0 %v5129, 44
  %v5178 = vpop.permute.xlu0 %5177
  %5179 = vrot.lane.b32.xlu0 %v5113, 44
  %v5180 = vpop.permute.xlu0 %5179
  %5181 = vrot.lane.b32.xlu0 %v5132, 44
  %v5182 = vpop.permute.xlu0 %5181
  %5183 = vrot.lane.b32.xlu0 %v5115, 44
  %v5184 = vpop.permute.xlu0 %5183
  %5185 = vrot.lane.b32.xlu0 %v5135, 44
  %v5186 = vpop.permute.xlu0 %5185
  %5187 = vrot.lane.b32.xlu0 %v5117, 44
  %v5188 = vpop.permute.xlu0 %5187
  %5189 = vrot.lane.b32.xlu0 %v5138, 44
  %v5190 = vpop.permute.xlu0 %5189
  %5191 = vrot.lane.b32.xlu0 %v5119, 44
  %v5192 = vpop.permute.xlu0 %5191
  %5193 = vrot.lane.b32.xlu0 %v5141, 44
  %v5194 = vpop.permute.xlu0 %5193
  %5195 = vrot.lane.b32.xlu0 %v5121, 44
  %v5196 = vpop.permute.xlu0 %5195
  %vm5197 = vcmask 359424
  %v5198 = vsel %vm5197, %v5178, %v5180
  %v5199 = vsel %vm5197, %v5182, %v5184
  %v5200 = vsel %vm5197, %v5186, %v5188
  %v5201 = vsel %vm5197, %v5190, %v5192
  %v5202 = vsel %vm5197, %v5194, %v5196
  %v5214 = vunpack.c.l.b16 %v5161
  %v5215 = vunpack.c.l.b16 %v5162
  %v5216 = vunpack.c.l.b16 %v5163
  %v5217 = vunpack.c.l.b16 %v5164
  %v5218 = vunpack.c.l.b16 %v5165
  %v5219 = vunpack.c.l.b16 %v5166
  %v5220 = vunpack.c.l.b16 %v5167
  %v5221 = vunpack.c.l.b16 %v5168
  %v5222 = vunpack.c.l.b16 %v5169
  %v5223 = vunpack.c.l.b16 %v5170
  %v5224 = vunpack.c.l.b16 %v5171
  %v5225 = vpack.c.b16 %v5215, %v5214
  %v5226 = vpack.c.b16 %v5217, %v5216
  %v5227 = vpack.c.b16 %v5219, %v5218
  %v5228 = vpack.c.b16 %v5221, %v5220
  %v5229 = vpack.c.b16 %v5223, %v5222
  %v5230 = vpack.c.b16 %v5224, %v5224
  %v5237 = vsel %vm5126, %v5198, 0
  %v5240 = vsel %vm5126, %v5199, 0
  %v5243 = vsel %vm5126, %v5200, 0
  %v5246 = vsel %vm5126, %v5201, 0
  %v5249 = vsel %vm5126, %v5202, 0
  %vm5251 = vcmask 1041408
  %v5253 = vsel %vm5251, %v5230, 0
  %5255 = vmatprep.subr.bf16.mxu0 0
  %5256 = vmatpush1.bf16.msra.mxu0 0
  %5257 = vmatprep.subr.bf16.mxu0 0
  %5258 = vmatpush1.bf16.msra.mxu0 0
  %5259 = vmatprep.subr.bf16.mxu0 0
  %5260 = vmatpush1.bf16.msra.mxu0 %v5253
  %5261 = vmatprep.subr.bf16.mxu0 0
  %5262 = vmatpush1.bf16.msra.mxu0 %v5229
  %5263 = vmatprep.subr.bf16.mxu0 0
  %5264 = vmatpush1.bf16.msra.mxu0 %v5228
  %5265 = vmatprep.subr.bf16.mxu0 0
  %5266 = vmatpush1.bf16.msra.mxu0 %v5227
  %5267 = vmatprep.subr.bf16.mxu0 0
  %5268 = vmatpush1.bf16.msra.mxu0 %v5226
  %5269 = vmatprep.subr.bf16.mxu0 0
  %5270 = vmatpush1.bf16.msra.mxu0 %v5225
  %5271 = vmatprep.subr.bf16.mxu0 0
  %5272 = vmatpush2.bf16.msra.mxu0 0
  %5273 = vmatprep.subr.bf16.mxu0 0
  %5274 = vmatpush2.bf16.msra.mxu0 0
  %5275 = vmatprep.subr.bf16.mxu0 0
  %5276 = vmatpush2.bf16.msra.mxu0 0
  %5277 = vmatprep.subr.bf16.mxu0 0
  %5278 = vmatpush2.bf16.msra.mxu0 0
  %5279 = vmatprep.subr.bf16.mxu0 0
  %5280 = vmatpush2.bf16.msra.mxu0 0
  %5281 = vmatprep.subr.bf16.mxu0 0
  %5282 = vmatpush2.bf16.msra.mxu0 0
  %5283 = vmatprep.subr.bf16.mxu0 0
  %5284 = vmatpush2.bf16.msra.mxu0 0
  %5285 = vmatprep.subr.bf16.mxu0 0
  %5286 = vmatpush2.bf16.msra.mxu0 0
  %5287 = vmatprep.mubr.bf16.mxu0 0
  %5288 = vmatmul.mubr.bf16.gmra.mxu0 %v5237
  %v5289 = vpop.f32.mrf.mxu0
  %v5290 = vadd.f32 0.0, %v5289
  %v5291 = vpop.f32.mrf.mxu0
  %v5292 = vpop.f32.mrf.mxu0
  %v5293 = vadd.f32 0.0, %v5292
  %v5294 = vpop.f32.mrf.mxu0
  %5295 = vmatprep.mubr.bf16.mxu0 0
  %5296 = vmatmul.mubr.bf16.gmra.mxu0 %v5240
  %v5297 = vpop.f32.mrf.mxu0
  %v5298 = vadd.f32 0.0, %v5297
  %v5299 = vpop.f32.mrf.mxu0
  %v5300 = vpop.f32.mrf.mxu0
  %v5301 = vadd.f32 0.0, %v5300
  %v5302 = vpop.f32.mrf.mxu0
  %5303 = vmatprep.mubr.bf16.mxu0 0
  %5304 = vmatmul.mubr.bf16.gmra.mxu0 %v5243
  %v5305 = vpop.f32.mrf.mxu0
  %v5306 = vadd.f32 0.0, %v5305
  %v5307 = vpop.f32.mrf.mxu0
  %v5308 = vpop.f32.mrf.mxu0
  %v5309 = vadd.f32 0.0, %v5308
  %v5310 = vpop.f32.mrf.mxu0
  %5311 = vmatprep.mubr.bf16.mxu0 0
  %5312 = vmatmul.mubr.bf16.gmra.mxu0 %v5246
  %v5313 = vpop.f32.mrf.mxu0
  %v5314 = vadd.f32 0.0, %v5313
  %v5315 = vpop.f32.mrf.mxu0
  %v5316 = vpop.f32.mrf.mxu0
  %v5317 = vadd.f32 0.0, %v5316
  %v5318 = vpop.f32.mrf.mxu0
  %5319 = vmatprep.mubr.bf16.mxu0 0
  %5320 = vmatmul.mubr.bf16.gmra.mxu0 %v5249
  %v5321 = vpop.f32.mrf.mxu0
  %v5322 = vadd.f32 0.0, %v5321
  %v5323 = vpop.f32.mrf.mxu0
  %v5324 = vpop.f32.mrf.mxu0
  %v5325 = vadd.f32 0.0, %v5324
  %v5326 = vpop.f32.mrf.mxu0
  %5327 = vdwg.mxu0
  %v5339 = vunpack.c.l.b16 %v5149
  %v5340 = vunpack.c.l.b16 %v5150
  %v5341 = vunpack.c.l.b16 %v5151
  %v5342 = vunpack.c.l.b16 %v5152
  %v5343 = vunpack.c.l.b16 %v5153
  %v5344 = vunpack.c.l.b16 %v5154
  %v5345 = vunpack.c.l.b16 %v5155
  %v5346 = vunpack.c.l.b16 %v5156
  %v5347 = vunpack.c.l.b16 %v5157
  %v5348 = vunpack.c.l.b16 %v5158
  %v5349 = vunpack.c.l.b16 %v5159
  %v5350 = vpack.c.b16 %v5340, %v5339
  %v5351 = vpack.c.b16 %v5342, %v5341
  %v5352 = vpack.c.b16 %v5344, %v5343
  %v5353 = vpack.c.b16 %v5346, %v5345
  %v5354 = vpack.c.b16 %v5348, %v5347
  %v5355 = vpack.c.b16 %v5349, %v5349
  %v5361 = vsel %vm5126, %v5129, 0
  %v5363 = vsel %vm5126, %v5132, 0
  %v5365 = vsel %vm5126, %v5135, 0
  %v5367 = vsel %vm5126, %v5138, 0
  %v5369 = vsel %vm5126, %v5141, 0
  %v5372 = vsel %vm5251, %v5355, 0
  %5374 = vmatprep.subr.bf16.mxu0 0
  %5375 = vmatpush1.bf16.msra.mxu0 0
  %5376 = vmatprep.subr.bf16.mxu0 0
  %5377 = vmatpush1.bf16.msra.mxu0 0
  %5378 = vmatprep.subr.bf16.mxu0 0
  %5379 = vmatpush1.bf16.msra.mxu0 %v5372
  %5380 = vmatprep.subr.bf16.mxu0 0
  %5381 = vmatpush1.bf16.msra.mxu0 %v5354
  %5382 = vmatprep.subr.bf16.mxu0 0
  %5383 = vmatpush1.bf16.msra.mxu0 %v5353
  %5384 = vmatprep.subr.bf16.mxu0 0
  %5385 = vmatpush1.bf16.msra.mxu0 %v5352
  %5386 = vmatprep.subr.bf16.mxu0 0
  %5387 = vmatpush1.bf16.msra.mxu0 %v5351
  %5388 = vmatprep.subr.bf16.mxu0 0
  %5389 = vmatpush1.bf16.msra.mxu0 %v5350
  %5390 = vmatprep.subr.bf16.mxu0 0
  %5391 = vmatpush2.bf16.msra.mxu0 0
  %5392 = vmatprep.subr.bf16.mxu0 0
  %5393 = vmatpush2.bf16.msra.mxu0 0
  %5394 = vmatprep.subr.bf16.mxu0 0
  %5395 = vmatpush2.bf16.msra.mxu0 0
  %5396 = vmatprep.subr.bf16.mxu0 0
  %5397 = vmatpush2.bf16.msra.mxu0 0
  %5398 = vmatprep.subr.bf16.mxu0 0
  %5399 = vmatpush2.bf16.msra.mxu0 0
  %5400 = vmatprep.subr.bf16.mxu0 0
  %5401 = vmatpush2.bf16.msra.mxu0 0
  %5402 = vmatprep.subr.bf16.mxu0 0
  %5403 = vmatpush2.bf16.msra.mxu0 0
  %5404 = vmatprep.subr.bf16.mxu0 0
  %5405 = vmatpush2.bf16.msra.mxu0 0
  %5406 = vmatprep.mubr.bf16.mxu0 0
  %5407 = vmatmul.mubr.bf16.gmra.mxu0 %v5361
  %v5408 = vpop.f32.mrf.mxu0
  %v5409 = vadd.f32 %v5290, %v5408
  %v5410 = vpop.f32.mrf.mxu0
  %v5411 = vpop.f32.mrf.mxu0
  %v5412 = vadd.f32 %v5293, %v5411
  %v5413 = vpop.f32.mrf.mxu0
  %5414 = vmatprep.mubr.bf16.mxu0 0
  %5415 = vmatmul.mubr.bf16.gmra.mxu0 %v5363
  %v5416 = vpop.f32.mrf.mxu0
  %v5417 = vadd.f32 %v5298, %v5416
  %v5418 = vpop.f32.mrf.mxu0
  %v5419 = vpop.f32.mrf.mxu0
  %v5420 = vadd.f32 %v5301, %v5419
  %v5421 = vpop.f32.mrf.mxu0
  %5422 = vmatprep.mubr.bf16.mxu0 0
  %5423 = vmatmul.mubr.bf16.gmra.mxu0 %v5365
  %v5424 = vpop.f32.mrf.mxu0
  %v5425 = vadd.f32 %v5306, %v5424
  %v5426 = vpop.f32.mrf.mxu0
  %v5427 = vpop.f32.mrf.mxu0
  %v5428 = vadd.f32 %v5309, %v5427
  %v5429 = vpop.f32.mrf.mxu0
  %5430 = vmatprep.mubr.bf16.mxu0 0
  %5431 = vmatmul.mubr.bf16.gmra.mxu0 %v5367
  %v5432 = vpop.f32.mrf.mxu0
  %v5433 = vadd.f32 %v5314, %v5432
  %v5434 = vpop.f32.mrf.mxu0
  %v5435 = vpop.f32.mrf.mxu0
  %v5436 = vadd.f32 %v5317, %v5435
  %v5437 = vpop.f32.mrf.mxu0
  %5438 = vmatprep.mubr.bf16.mxu0 0
  %5439 = vmatmul.mubr.bf16.gmra.mxu0 %v5369
  %v5440 = vpop.f32.mrf.mxu0
  %v5441 = vadd.f32 %v5322, %v5440
  %v5442 = vpop.f32.mrf.mxu0
  %v5443 = vpop.f32.mrf.mxu0
  %v5444 = vadd.f32 %v5325, %v5443
  %v5445 = vpop.f32.mrf.mxu0
  %5446 = vdwg.mxu0
  %s5447 = scalar_lea.vmem %s3, 88
  %v5448 = vld [vmem:[%s5447] sm:$0xf]
  %v5449 = vld [vmem:[%s5447 + $0x4] sm:$0xf]
  %v5450 = vld [vmem:[%s5447 + $0x8] sm:$0xf]
  %v5451 = vld [vmem:[%s5447 + $0xc] sm:$0xf]
  %v5452 = vld [vmem:[%s5447 + $0x10] sm:$0xf]
  %v5453 = vld [vmem:[%s5447 + $0x14] sm:$0xf]
  %v5454 = vld [vmem:[%s5447 + $0x18] sm:$0xf]
  %v5455 = vld [vmem:[%s5447 + $0x1c] sm:$0xf]
  %v5456 = vld [vmem:[%s5447 + $0x20] sm:$0xf]
  %v5457 = vld [vmem:[%s5447 + $0x24] sm:$0xf]
  %v5458 = vld [vmem:[%s5447 + $0x28] sm:$0x3]
  %v5470 = vunpack.c.l.b16 %v5448
  %v5471 = vunpack.c.l.b16 %v5449
  %v5472 = vunpack.c.l.b16 %v5450
  %v5473 = vunpack.c.l.b16 %v5451
  %v5474 = vunpack.c.l.b16 %v5452
  %v5475 = vunpack.c.l.b16 %v5453
  %v5476 = vunpack.c.l.b16 %v5454
  %v5477 = vunpack.c.l.b16 %v5455
  %v5478 = vunpack.c.l.b16 %v5456
  %v5479 = vunpack.c.l.b16 %v5457
  %v5480 = vunpack.c.l.b16 %v5458
  %v5481 = vpack.c.b16 %v5471, %v5470
  %v5482 = vpack.c.b16 %v5473, %v5472
  %v5483 = vpack.c.b16 %v5475, %v5474
  %v5484 = vpack.c.b16 %v5477, %v5476
  %v5485 = vpack.c.b16 %v5479, %v5478
  %v5486 = vpack.c.b16 %v5480, %v5480
  %v5492 = vsel %vm5126, %v5144, 0
  %v5495 = vsel %vm5251, %v5486, 0
  %5497 = vmatprep.subr.bf16.mxu0 0
  %5498 = vmatpush1.bf16.msra.mxu0 0
  %5499 = vmatprep.subr.bf16.mxu0 0
  %5500 = vmatpush1.bf16.msra.mxu0 0
  %5501 = vmatprep.subr.bf16.mxu0 0
  %5502 = vmatpush1.bf16.msra.mxu0 %v5495
  %5503 = vmatprep.subr.bf16.mxu0 0
  %5504 = vmatpush1.bf16.msra.mxu0 %v5485
  %5505 = vmatprep.subr.bf16.mxu0 0
  %5506 = vmatpush1.bf16.msra.mxu0 %v5484
  %5507 = vmatprep.subr.bf16.mxu0 0
  %5508 = vmatpush1.bf16.msra.mxu0 %v5483
  %5509 = vmatprep.subr.bf16.mxu0 0
  %5510 = vmatpush1.bf16.msra.mxu0 %v5482
  %5511 = vmatprep.subr.bf16.mxu0 0
  %5512 = vmatpush1.bf16.msra.mxu0 %v5481
  %5513 = vmatprep.subr.bf16.mxu0 0
  %5514 = vmatpush2.bf16.msra.mxu0 0
  %5515 = vmatprep.subr.bf16.mxu0 0
  %5516 = vmatpush2.bf16.msra.mxu0 0
  %5517 = vmatprep.subr.bf16.mxu0 0
  %5518 = vmatpush2.bf16.msra.mxu0 0
  %5519 = vmatprep.subr.bf16.mxu0 0
  %5520 = vmatpush2.bf16.msra.mxu0 0
  %5521 = vmatprep.subr.bf16.mxu0 0
  %5522 = vmatpush2.bf16.msra.mxu0 0
  %5523 = vmatprep.subr.bf16.mxu0 0
  %5524 = vmatpush2.bf16.msra.mxu0 0
  %5525 = vmatprep.subr.bf16.mxu0 0
  %5526 = vmatpush2.bf16.msra.mxu0 0
  %5527 = vmatprep.subr.bf16.mxu0 0
  %5528 = vmatpush2.bf16.msra.mxu0 0
  %5529 = vmatprep.mubr.bf16.mxu0 0
  %5530 = vmatmul.mubr.bf16.gmra.mxu0 %v5363
  %v5531 = vpop.f32.mrf.mxu0
  %v5532 = vadd.f32 0.0, %v5531
  %v5533 = vpop.f32.mrf.mxu0
  %v5534 = vpop.f32.mrf.mxu0
  %v5535 = vadd.f32 0.0, %v5534
  %v5536 = vpop.f32.mrf.mxu0
  %5537 = vmatprep.mubr.bf16.mxu0 0
  %5538 = vmatmul.mubr.bf16.gmra.mxu0 %v5365
  %v5539 = vpop.f32.mrf.mxu0
  %v5540 = vadd.f32 0.0, %v5539
  %v5541 = vpop.f32.mrf.mxu0
  %v5542 = vpop.f32.mrf.mxu0
  %v5543 = vadd.f32 0.0, %v5542
  %v5544 = vpop.f32.mrf.mxu0
  %5545 = vmatprep.mubr.bf16.mxu0 0
  %5546 = vmatmul.mubr.bf16.gmra.mxu0 %v5367
  %v5547 = vpop.f32.mrf.mxu0
  %v5548 = vadd.f32 0.0, %v5547
  %v5549 = vpop.f32.mrf.mxu0
  %v5550 = vpop.f32.mrf.mxu0
  %v5551 = vadd.f32 0.0, %v5550
  %v5552 = vpop.f32.mrf.mxu0
  %5553 = vmatprep.mubr.bf16.mxu0 0
  %5554 = vmatmul.mubr.bf16.gmra.mxu0 %v5369
  %v5555 = vpop.f32.mrf.mxu0
  %v5556 = vadd.f32 0.0, %v5555
  %v5557 = vpop.f32.mrf.mxu0
  %v5558 = vpop.f32.mrf.mxu0
  %v5559 = vadd.f32 0.0, %v5558
  %v5560 = vpop.f32.mrf.mxu0
  %5561 = vmatprep.mubr.bf16.mxu0 0
  %5562 = vmatmul.mubr.bf16.gmra.mxu0 %v5492
  %v5563 = vpop.f32.mrf.mxu0
  %v5564 = vadd.f32 0.0, %v5563
  %v5565 = vpop.f32.mrf.mxu0
  %v5566 = vpop.f32.mrf.mxu0
  %v5567 = vadd.f32 0.0, %v5566
  %v5568 = vpop.f32.mrf.mxu0
  %5569 = vdwg.mxu0
  %v5570 = vadd.f32 %v5409, %v5532
  %v5571 = vadd.f32 %v5412, %v5535
  %v5572 = vadd.f32 %v5417, %v5540
  %v5573 = vadd.f32 %v5420, %v5543
  %v5574 = vadd.f32 %v5425, %v5548
  %v5575 = vadd.f32 %v5428, %v5551
  %v5576 = vadd.f32 %v5433, %v5556
  %v5577 = vadd.f32 %v5436, %v5559
  %v5578 = vadd.f32 %v5441, %v5564
  %v5579 = vadd.f32 %v5444, %v5567
  %s5580 = scalar_lea.vmem %s3, 132
  %v5581 = vld [vmem:[%s5580] sm:$0xf]
  %v5582 = vld [vmem:[%s5580 + $0x4] sm:$0xf]
  %v5583 = vld [vmem:[%s5580 + $0x8] sm:$0xf]
  %v5584 = vld [vmem:[%s5580 + $0xc] sm:$0xf]
  %v5585 = vld [vmem:[%s5580 + $0x10] sm:$0xf]
  %v5586 = vld [vmem:[%s5580 + $0x14] sm:$0xf]
  %v5587 = vld [vmem:[%s5580 + $0x18] sm:$0xf]
  %v5588 = vld [vmem:[%s5580 + $0x1c] sm:$0xf]
  %v5589 = vld [vmem:[%s5580 + $0x20] sm:$0xf]
  %v5590 = vld [vmem:[%s5580 + $0x24] sm:$0xf]
  %v5591 = vld [vmem:[%s5580 + $0x28] sm:$0x3]
  %5593 = vrot.lane.b32.xlu0 %v5144, 44
  %v5594 = vpop.permute.xlu0 %5593
  %5595 = vrot.lane.b32.xlu0 %v5123, 44
  %v5596 = vpop.permute.xlu0 %5595
  %v5597 = vsel %vm5197, %v5594, %v5596
  %v5609 = vunpack.c.l.b16 %v5581
  %v5610 = vunpack.c.l.b16 %v5582
  %v5611 = vunpack.c.l.b16 %v5583
  %v5612 = vunpack.c.l.b16 %v5584
  %v5613 = vunpack.c.l.b16 %v5585
  %v5614 = vunpack.c.l.b16 %v5586
  %v5615 = vunpack.c.l.b16 %v5587
  %v5616 = vunpack.c.l.b16 %v5588
  %v5617 = vunpack.c.l.b16 %v5589
  %v5618 = vunpack.c.l.b16 %v5590
  %v5619 = vunpack.c.l.b16 %v5591
  %v5620 = vpack.c.b16 %v5610, %v5609
  %v5621 = vpack.c.b16 %v5612, %v5611
  %v5622 = vpack.c.b16 %v5614, %v5613
  %v5623 = vpack.c.b16 %v5616, %v5615
  %v5624 = vpack.c.b16 %v5618, %v5617
  %v5625 = vpack.c.b16 %v5619, %v5619
  %v5632 = vsel %vm5126, %v5597, 0
  %v5635 = vsel %vm5251, %v5625, 0
  %5637 = vmatprep.subr.bf16.mxu0 0
  %5638 = vmatpush1.bf16.msra.mxu0 0
  %5639 = vmatprep.subr.bf16.mxu0 0
  %5640 = vmatpush1.bf16.msra.mxu0 0
  %5641 = vmatprep.subr.bf16.mxu0 0
  %5642 = vmatpush1.bf16.msra.mxu0 %v5635
  %5643 = vmatprep.subr.bf16.mxu0 0
  %5644 = vmatpush1.bf16.msra.mxu0 %v5624
  %5645 = vmatprep.subr.bf16.mxu0 0
  %5646 = vmatpush1.bf16.msra.mxu0 %v5623
  %5647 = vmatprep.subr.bf16.mxu0 0
  %5648 = vmatpush1.bf16.msra.mxu0 %v5622
  %5649 = vmatprep.subr.bf16.mxu0 0
  %5650 = vmatpush1.bf16.msra.mxu0 %v5621
  %5651 = vmatprep.subr.bf16.mxu0 0
  %5652 = vmatpush1.bf16.msra.mxu0 %v5620
  %5653 = vmatprep.subr.bf16.mxu0 0
  %5654 = vmatpush2.bf16.msra.mxu0 0
  %5655 = vmatprep.subr.bf16.mxu0 0
  %5656 = vmatpush2.bf16.msra.mxu0 0
  %5657 = vmatprep.subr.bf16.mxu0 0
  %5658 = vmatpush2.bf16.msra.mxu0 0
  %5659 = vmatprep.subr.bf16.mxu0 0
  %5660 = vmatpush2.bf16.msra.mxu0 0
  %5661 = vmatprep.subr.bf16.mxu0 0
  %5662 = vmatpush2.bf16.msra.mxu0 0
  %5663 = vmatprep.subr.bf16.mxu0 0
  %5664 = vmatpush2.bf16.msra.mxu0 0
  %5665 = vmatprep.subr.bf16.mxu0 0
  %5666 = vmatpush2.bf16.msra.mxu0 0
  %5667 = vmatprep.subr.bf16.mxu0 0
  %5668 = vmatpush2.bf16.msra.mxu0 0
  %5669 = vmatprep.mubr.bf16.mxu0 0
  %5670 = vmatmul.mubr.bf16.gmra.mxu0 %v5240
  %v5671 = vpop.f32.mrf.mxu0
  %v5672 = vadd.f32 0.0, %v5671
  %v5673 = vpop.f32.mrf.mxu0
  %v5674 = vpop.f32.mrf.mxu0
  %v5675 = vadd.f32 0.0, %v5674
  %v5676 = vpop.f32.mrf.mxu0
  %5677 = vmatprep.mubr.bf16.mxu0 0
  %5678 = vmatmul.mubr.bf16.gmra.mxu0 %v5243
  %v5679 = vpop.f32.mrf.mxu0
  %v5680 = vadd.f32 0.0, %v5679
  %v5681 = vpop.f32.mrf.mxu0
  %v5682 = vpop.f32.mrf.mxu0
  %v5683 = vadd.f32 0.0, %v5682
  %v5684 = vpop.f32.mrf.mxu0
  %5685 = vmatprep.mubr.bf16.mxu0 0
  %5686 = vmatmul.mubr.bf16.gmra.mxu0 %v5246
  %v5687 = vpop.f32.mrf.mxu0
  %v5688 = vadd.f32 0.0, %v5687
  %v5689 = vpop.f32.mrf.mxu0
  %v5690 = vpop.f32.mrf.mxu0
  %v5691 = vadd.f32 0.0, %v5690
  %v5692 = vpop.f32.mrf.mxu0
  %5693 = vmatprep.mubr.bf16.mxu0 0
  %5694 = vmatmul.mubr.bf16.gmra.mxu0 %v5249
  %v5695 = vpop.f32.mrf.mxu0
  %v5696 = vadd.f32 0.0, %v5695
  %v5697 = vpop.f32.mrf.mxu0
  %v5698 = vpop.f32.mrf.mxu0
  %v5699 = vadd.f32 0.0, %v5698
  %v5700 = vpop.f32.mrf.mxu0
  %5701 = vmatprep.mubr.bf16.mxu0 0
  %5702 = vmatmul.mubr.bf16.gmra.mxu0 %v5632
  %v5703 = vpop.f32.mrf.mxu0
  %v5704 = vadd.f32 0.0, %v5703
  %v5705 = vpop.f32.mrf.mxu0
  %v5706 = vpop.f32.mrf.mxu0
  %v5707 = vadd.f32 0.0, %v5706
  %v5708 = vpop.f32.mrf.mxu0
  %5709 = vdwg.mxu0
  %v5710 = vadd.f32 %v5570, %v5672
  %v5711 = vadd.f32 %v5571, %v5675
  %v5712 = vadd.f32 %v5572, %v5680
  %v5713 = vadd.f32 %v5573, %v5683
  %v5714 = vadd.f32 %v5574, %v5688
  %v5715 = vadd.f32 %v5575, %v5691
  %v5716 = vadd.f32 %v5576, %v5696
  %v5717 = vadd.f32 %v5577, %v5699
  %v5718 = vadd.f32 %v5578, %v5704
  %v5719 = vadd.f32 %v5579, %v5707
  %s5720 = scalar_lea.vmem %s3, 176
  %v5721 = vld [vmem:[%s5720] sm:$0xf]
  %v5722 = vld [vmem:[%s5720 + $0x4] sm:$0xf]
  %v5723 = vld [vmem:[%s5720 + $0x8] sm:$0xf]
  %v5724 = vld [vmem:[%s5720 + $0xc] sm:$0xf]
  %v5725 = vld [vmem:[%s5720 + $0x10] sm:$0xf]
  %v5726 = vld [vmem:[%s5720 + $0x14] sm:$0xf]
  %v5727 = vld [vmem:[%s5720 + $0x18] sm:$0xf]
  %v5728 = vld [vmem:[%s5720 + $0x1c] sm:$0xf]
  %v5729 = vld [vmem:[%s5720 + $0x20] sm:$0xf]
  %v5730 = vld [vmem:[%s5720 + $0x24] sm:$0xf]
  %v5731 = vld [vmem:[%s5720 + $0x28] sm:$0x3]
  %v5743 = vunpack.c.l.b16 %v5721
  %v5744 = vunpack.c.l.b16 %v5722
  %v5745 = vunpack.c.l.b16 %v5723
  %v5746 = vunpack.c.l.b16 %v5724
  %v5747 = vunpack.c.l.b16 %v5725
  %v5748 = vunpack.c.l.b16 %v5726
  %v5749 = vunpack.c.l.b16 %v5727
  %v5750 = vunpack.c.l.b16 %v5728
  %v5751 = vunpack.c.l.b16 %v5729
  %v5752 = vunpack.c.l.b16 %v5730
  %v5753 = vunpack.c.l.b16 %v5731
  %v5754 = vpack.c.b16 %v5744, %v5743
  %v5755 = vpack.c.b16 %v5746, %v5745
  %v5756 = vpack.c.b16 %v5748, %v5747
  %v5757 = vpack.c.b16 %v5750, %v5749
  %v5758 = vpack.c.b16 %v5752, %v5751
  %v5759 = vpack.c.b16 %v5753, %v5753
  %v5765 = vsel %vm5126, %v5147, 0
  %v5768 = vsel %vm5251, %v5759, 0
  %5770 = vmatprep.subr.bf16.mxu0 0
  %5771 = vmatpush1.bf16.msra.mxu0 0
  %5772 = vmatprep.subr.bf16.mxu0 0
  %5773 = vmatpush1.bf16.msra.mxu0 0
  %5774 = vmatprep.subr.bf16.mxu0 0
  %5775 = vmatpush1.bf16.msra.mxu0 %v5768
  %5776 = vmatprep.subr.bf16.mxu0 0
  %5777 = vmatpush1.bf16.msra.mxu0 %v5758
  %5778 = vmatprep.subr.bf16.mxu0 0
  %5779 = vmatpush1.bf16.msra.mxu0 %v5757
  %5780 = vmatprep.subr.bf16.mxu0 0
  %5781 = vmatpush1.bf16.msra.mxu0 %v5756
  %5782 = vmatprep.subr.bf16.mxu0 0
  %5783 = vmatpush1.bf16.msra.mxu0 %v5755
  %5784 = vmatprep.subr.bf16.mxu0 0
  %5785 = vmatpush1.bf16.msra.mxu0 %v5754
  %5786 = vmatprep.subr.bf16.mxu0 0
  %5787 = vmatpush2.bf16.msra.mxu0 0
  %5788 = vmatprep.subr.bf16.mxu0 0
  %5789 = vmatpush2.bf16.msra.mxu0 0
  %5790 = vmatprep.subr.bf16.mxu0 0
  %5791 = vmatpush2.bf16.msra.mxu0 0
  %5792 = vmatprep.subr.bf16.mxu0 0
  %5793 = vmatpush2.bf16.msra.mxu0 0
  %5794 = vmatprep.subr.bf16.mxu0 0
  %5795 = vmatpush2.bf16.msra.mxu0 0
  %5796 = vmatprep.subr.bf16.mxu0 0
  %5797 = vmatpush2.bf16.msra.mxu0 0
  %5798 = vmatprep.subr.bf16.mxu0 0
  %5799 = vmatpush2.bf16.msra.mxu0 0
  %5800 = vmatprep.subr.bf16.mxu0 0
  %5801 = vmatpush2.bf16.msra.mxu0 0
  %5802 = vmatprep.mubr.bf16.mxu0 0
  %5803 = vmatmul.mubr.bf16.gmra.mxu0 %v5365
  %v5804 = vpop.f32.mrf.mxu0
  %v5805 = vadd.f32 0.0, %v5804
  %v5806 = vpop.f32.mrf.mxu0
  %v5807 = vpop.f32.mrf.mxu0
  %v5808 = vadd.f32 0.0, %v5807
  %v5809 = vpop.f32.mrf.mxu0
  %5810 = vmatprep.mubr.bf16.mxu0 0
  %5811 = vmatmul.mubr.bf16.gmra.mxu0 %v5367
  %v5812 = vpop.f32.mrf.mxu0
  %v5813 = vadd.f32 0.0, %v5812
  %v5814 = vpop.f32.mrf.mxu0
  %v5815 = vpop.f32.mrf.mxu0
  %v5816 = vadd.f32 0.0, %v5815
  %v5817 = vpop.f32.mrf.mxu0
  %5818 = vmatprep.mubr.bf16.mxu0 0
  %5819 = vmatmul.mubr.bf16.gmra.mxu0 %v5369
  %v5820 = vpop.f32.mrf.mxu0
  %v5821 = vadd.f32 0.0, %v5820
  %v5822 = vpop.f32.mrf.mxu0
  %v5823 = vpop.f32.mrf.mxu0
  %v5824 = vadd.f32 0.0, %v5823
  %v5825 = vpop.f32.mrf.mxu0
  %5826 = vmatprep.mubr.bf16.mxu0 0
  %5827 = vmatmul.mubr.bf16.gmra.mxu0 %v5492
  %v5828 = vpop.f32.mrf.mxu0
  %v5829 = vadd.f32 0.0, %v5828
  %v5830 = vpop.f32.mrf.mxu0
  %v5831 = vpop.f32.mrf.mxu0
  %v5832 = vadd.f32 0.0, %v5831
  %v5833 = vpop.f32.mrf.mxu0
  %5834 = vmatprep.mubr.bf16.mxu0 0
  %5835 = vmatmul.mubr.bf16.gmra.mxu0 %v5765
  %v5836 = vpop.f32.mrf.mxu0
  %v5837 = vadd.f32 0.0, %v5836
  %v5838 = vpop.f32.mrf.mxu0
  %v5839 = vpop.f32.mrf.mxu0
  %v5840 = vadd.f32 0.0, %v5839
  %v5841 = vpop.f32.mrf.mxu0
  %5842 = vdwg.mxu0
  %v5843 = vadd.f32 %v5710, %v5805
  %v5844 = vadd.f32 %v5711, %v5808
  %v5845 = vadd.f32 %v5712, %v5813
  %v5846 = vadd.f32 %v5713, %v5816
  %v5847 = vadd.f32 %v5714, %v5821
  %v5848 = vadd.f32 %v5715, %v5824
  %v5849 = vadd.f32 %v5716, %v5829
  %v5850 = vadd.f32 %v5717, %v5832
  %v5851 = vadd.f32 %v5718, %v5837
  %v5852 = vadd.f32 %v5719, %v5840
  %s5853 = scalar_lea.vmem %s3, 220
  %v5854 = vld [vmem:[%s5853] sm:$0xf]
  %v5855 = vld [vmem:[%s5853 + $0x4] sm:$0xf]
  %v5856 = vld [vmem:[%s5853 + $0x8] sm:$0xf]
  %v5857 = vld [vmem:[%s5853 + $0xc] sm:$0xf]
  %v5858 = vld [vmem:[%s5853 + $0x10] sm:$0xf]
  %v5859 = vld [vmem:[%s5853 + $0x14] sm:$0xf]
  %v5860 = vld [vmem:[%s5853 + $0x18] sm:$0xf]
  %v5861 = vld [vmem:[%s5853 + $0x1c] sm:$0xf]
  %v5862 = vld [vmem:[%s5853 + $0x20] sm:$0xf]
  %v5863 = vld [vmem:[%s5853 + $0x24] sm:$0xf]
  %v5864 = vld [vmem:[%s5853 + $0x28] sm:$0x3]
  %s5865 = scalar_lea.vmem %s3, 264
  %v5866 = vld [vmem:[%s5865] sm:$0xf]
  %v5867 = vld [vmem:[%s5865 + $0x4] sm:$0xf]
  %v5868 = vld [vmem:[%s5865 + $0x8] sm:$0xf]
  %v5869 = vld [vmem:[%s5865 + $0xc] sm:$0xf]
  %v5870 = vld [vmem:[%s5865 + $0x10] sm:$0xf]
  %v5871 = vld [vmem:[%s5865 + $0x14] sm:$0xf]
  %v5872 = vld [vmem:[%s5865 + $0x18] sm:$0xf]
  %v5873 = vld [vmem:[%s5865 + $0x1c] sm:$0xf]
  %v5874 = vld [vmem:[%s5865 + $0x20] sm:$0xf]
  %v5875 = vld [vmem:[%s5865 + $0x24] sm:$0xf]
  %v5876 = vld [vmem:[%s5865 + $0x28] sm:$0x3]
  %v5888 = vunpack.c.l.b16 %v5866
  %v5889 = vunpack.c.l.b16 %v5867
  %v5890 = vunpack.c.l.b16 %v5868
  %v5891 = vunpack.c.l.b16 %v5869
  %v5892 = vunpack.c.l.b16 %v5870
  %v5893 = vunpack.c.l.b16 %v5871
  %v5894 = vunpack.c.l.b16 %v5872
  %v5895 = vunpack.c.l.b16 %v5873
  %v5896 = vunpack.c.l.b16 %v5874
  %v5897 = vunpack.c.l.b16 %v5875
  %v5898 = vunpack.c.l.b16 %v5876
  %v5899 = vpack.c.b16 %v5889, %v5888
  %v5900 = vpack.c.b16 %v5891, %v5890
  %v5901 = vpack.c.b16 %v5893, %v5892
  %v5902 = vpack.c.b16 %v5895, %v5894
  %v5903 = vpack.c.b16 %v5897, %v5896
  %v5904 = vpack.c.b16 %v5898, %v5898
  %v5911 = vsel %vm5251, %v5904, 0
  %5913 = vmatprep.subr.bf16.mxu0 0
  %5914 = vmatpush1.bf16.msra.mxu0 0
  %5915 = vmatprep.subr.bf16.mxu0 0
  %5916 = vmatpush1.bf16.msra.mxu0 0
  %5917 = vmatprep.subr.bf16.mxu0 0
  %5918 = vmatpush1.bf16.msra.mxu0 %v5911
  %5919 = vmatprep.subr.bf16.mxu0 0
  %5920 = vmatpush1.bf16.msra.mxu0 %v5903
  %5921 = vmatprep.subr.bf16.mxu0 0
  %5922 = vmatpush1.bf16.msra.mxu0 %v5902
  %5923 = vmatprep.subr.bf16.mxu0 0
  %5924 = vmatpush1.bf16.msra.mxu0 %v5901
  %5925 = vmatprep.subr.bf16.mxu0 0
  %5926 = vmatpush1.bf16.msra.mxu0 %v5900
  %5927 = vmatprep.subr.bf16.mxu0 0
  %5928 = vmatpush1.bf16.msra.mxu0 %v5899
  %5929 = vmatprep.subr.bf16.mxu0 0
  %5930 = vmatpush2.bf16.msra.mxu0 0
  %5931 = vmatprep.subr.bf16.mxu0 0
  %5932 = vmatpush2.bf16.msra.mxu0 0
  %5933 = vmatprep.subr.bf16.mxu0 0
  %5934 = vmatpush2.bf16.msra.mxu0 0
  %5935 = vmatprep.subr.bf16.mxu0 0
  %5936 = vmatpush2.bf16.msra.mxu0 0
  %5937 = vmatprep.subr.bf16.mxu0 0
  %5938 = vmatpush2.bf16.msra.mxu0 0
  %5939 = vmatprep.subr.bf16.mxu0 0
  %5940 = vmatpush2.bf16.msra.mxu0 0
  %5941 = vmatprep.subr.bf16.mxu0 0
  %5942 = vmatpush2.bf16.msra.mxu0 0
  %5943 = vmatprep.subr.bf16.mxu0 0
  %5944 = vmatpush2.bf16.msra.mxu0 0
  %5945 = vmatprep.mubr.bf16.mxu0 0
  %5946 = vmatmul.mubr.bf16.gmra.mxu0 %v5237
  %v5947 = vpop.f32.mrf.mxu0
  %v5948 = vadd.f32 0.0, %v5947
  %v5949 = vpop.f32.mrf.mxu0
  %v5950 = vpop.f32.mrf.mxu0
  %v5951 = vadd.f32 0.0, %v5950
  %v5952 = vpop.f32.mrf.mxu0
  %5953 = vmatprep.mubr.bf16.mxu0 0
  %5954 = vmatmul.mubr.bf16.gmra.mxu0 %v5240
  %v5955 = vpop.f32.mrf.mxu0
  %v5956 = vadd.f32 0.0, %v5955
  %v5957 = vpop.f32.mrf.mxu0
  %v5958 = vpop.f32.mrf.mxu0
  %v5959 = vadd.f32 0.0, %v5958
  %v5960 = vpop.f32.mrf.mxu0
  %5961 = vmatprep.mubr.bf16.mxu0 0
  %5962 = vmatmul.mubr.bf16.gmra.mxu0 %v5243
  %v5963 = vpop.f32.mrf.mxu0
  %v5964 = vadd.f32 0.0, %v5963
  %v5965 = vpop.f32.mrf.mxu0
  %v5966 = vpop.f32.mrf.mxu0
  %v5967 = vadd.f32 0.0, %v5966
  %v5968 = vpop.f32.mrf.mxu0
  %5969 = vmatprep.mubr.bf16.mxu0 0
  %5970 = vmatmul.mubr.bf16.gmra.mxu0 %v5246
  %v5971 = vpop.f32.mrf.mxu0
  %v5972 = vadd.f32 0.0, %v5971
  %v5973 = vpop.f32.mrf.mxu0
  %v5974 = vpop.f32.mrf.mxu0
  %v5975 = vadd.f32 0.0, %v5974
  %v5976 = vpop.f32.mrf.mxu0
  %5977 = vmatprep.mubr.bf16.mxu0 0
  %5978 = vmatmul.mubr.bf16.gmra.mxu0 %v5249
  %v5979 = vpop.f32.mrf.mxu0
  %v5980 = vadd.f32 0.0, %v5979
  %v5981 = vpop.f32.mrf.mxu0
  %v5982 = vpop.f32.mrf.mxu0
  %v5983 = vadd.f32 0.0, %v5982
  %v5984 = vpop.f32.mrf.mxu0
  %5985 = vdwg.mxu0
  %v5997 = vunpack.c.l.b16 %v5854
  %v5998 = vunpack.c.l.b16 %v5855
  %v5999 = vunpack.c.l.b16 %v5856
  %v6000 = vunpack.c.l.b16 %v5857
  %v6001 = vunpack.c.l.b16 %v5858
  %v6002 = vunpack.c.l.b16 %v5859
  %v6003 = vunpack.c.l.b16 %v5860
  %v6004 = vunpack.c.l.b16 %v5861
  %v6005 = vunpack.c.l.b16 %v5862
  %v6006 = vunpack.c.l.b16 %v5863
  %v6007 = vunpack.c.l.b16 %v5864
  %v6008 = vpack.c.b16 %v5998, %v5997
  %v6009 = vpack.c.b16 %v6000, %v5999
  %v6010 = vpack.c.b16 %v6002, %v6001
  %v6011 = vpack.c.b16 %v6004, %v6003
  %v6012 = vpack.c.b16 %v6006, %v6005
  %v6013 = vpack.c.b16 %v6007, %v6007
  %v6020 = vsel %vm5251, %v6013, 0
  %6022 = vmatprep.subr.bf16.mxu0 0
  %6023 = vmatpush1.bf16.msra.mxu0 0
  %6024 = vmatprep.subr.bf16.mxu0 0
  %6025 = vmatpush1.bf16.msra.mxu0 0
  %6026 = vmatprep.subr.bf16.mxu0 0
  %6027 = vmatpush1.bf16.msra.mxu0 %v6020
  %6028 = vmatprep.subr.bf16.mxu0 0
  %6029 = vmatpush1.bf16.msra.mxu0 %v6012
  %6030 = vmatprep.subr.bf16.mxu0 0
  %6031 = vmatpush1.bf16.msra.mxu0 %v6011
  %6032 = vmatprep.subr.bf16.mxu0 0
  %6033 = vmatpush1.bf16.msra.mxu0 %v6010
  %6034 = vmatprep.subr.bf16.mxu0 0
  %6035 = vmatpush1.bf16.msra.mxu0 %v6009
  %6036 = vmatprep.subr.bf16.mxu0 0
  %6037 = vmatpush1.bf16.msra.mxu0 %v6008
  %6038 = vmatprep.subr.bf16.mxu0 0
  %6039 = vmatpush2.bf16.msra.mxu0 0
  %6040 = vmatprep.subr.bf16.mxu0 0
  %6041 = vmatpush2.bf16.msra.mxu0 0
  %6042 = vmatprep.subr.bf16.mxu0 0
  %6043 = vmatpush2.bf16.msra.mxu0 0
  %6044 = vmatprep.subr.bf16.mxu0 0
  %6045 = vmatpush2.bf16.msra.mxu0 0
  %6046 = vmatprep.subr.bf16.mxu0 0
  %6047 = vmatpush2.bf16.msra.mxu0 0
  %6048 = vmatprep.subr.bf16.mxu0 0
  %6049 = vmatpush2.bf16.msra.mxu0 0
  %6050 = vmatprep.subr.bf16.mxu0 0
  %6051 = vmatpush2.bf16.msra.mxu0 0
  %6052 = vmatprep.subr.bf16.mxu0 0
  %6053 = vmatpush2.bf16.msra.mxu0 0
  %6054 = vmatprep.mubr.bf16.mxu0 0
  %6055 = vmatmul.mubr.bf16.gmra.mxu0 %v5361
  %v6056 = vpop.f32.mrf.mxu0
  %v6057 = vadd.f32 %v5948, %v6056
  %v6058 = vpop.f32.mrf.mxu0
  %v6059 = vpop.f32.mrf.mxu0
  %v6060 = vadd.f32 %v5951, %v6059
  %v6061 = vpop.f32.mrf.mxu0
  %6062 = vmatprep.mubr.bf16.mxu0 0
  %6063 = vmatmul.mubr.bf16.gmra.mxu0 %v5363
  %v6064 = vpop.f32.mrf.mxu0
  %v6065 = vadd.f32 %v5956, %v6064
  %v6066 = vpop.f32.mrf.mxu0
  %v6067 = vpop.f32.mrf.mxu0
  %v6068 = vadd.f32 %v5959, %v6067
  %v6069 = vpop.f32.mrf.mxu0
  %6070 = vmatprep.mubr.bf16.mxu0 0
  %6071 = vmatmul.mubr.bf16.gmra.mxu0 %v5365
  %v6072 = vpop.f32.mrf.mxu0
  %v6073 = vadd.f32 %v5964, %v6072
  %v6074 = vpop.f32.mrf.mxu0
  %v6075 = vpop.f32.mrf.mxu0
  %v6076 = vadd.f32 %v5967, %v6075
  %v6077 = vpop.f32.mrf.mxu0
  %6078 = vmatprep.mubr.bf16.mxu0 0
  %6079 = vmatmul.mubr.bf16.gmra.mxu0 %v5367
  %v6080 = vpop.f32.mrf.mxu0
  %v6081 = vadd.f32 %v5972, %v6080
  %v6082 = vpop.f32.mrf.mxu0
  %v6083 = vpop.f32.mrf.mxu0
  %v6084 = vadd.f32 %v5975, %v6083
  %v6085 = vpop.f32.mrf.mxu0
  %6086 = vmatprep.mubr.bf16.mxu0 0
  %6087 = vmatmul.mubr.bf16.gmra.mxu0 %v5369
  %v6088 = vpop.f32.mrf.mxu0
  %v6089 = vadd.f32 %v5980, %v6088
  %v6090 = vpop.f32.mrf.mxu0
  %v6091 = vpop.f32.mrf.mxu0
  %v6092 = vadd.f32 %v5983, %v6091
  %v6093 = vpop.f32.mrf.mxu0
  %6094 = vdwg.mxu0
  %s6095 = scalar_lea.vmem %s3, 308
  %v6096 = vld [vmem:[%s6095] sm:$0xf]
  %v6097 = vld [vmem:[%s6095 + $0x4] sm:$0xf]
  %v6098 = vld [vmem:[%s6095 + $0x8] sm:$0xf]
  %v6099 = vld [vmem:[%s6095 + $0xc] sm:$0xf]
  %v6100 = vld [vmem:[%s6095 + $0x10] sm:$0xf]
  %v6101 = vld [vmem:[%s6095 + $0x14] sm:$0xf]
  %v6102 = vld [vmem:[%s6095 + $0x18] sm:$0xf]
  %v6103 = vld [vmem:[%s6095 + $0x1c] sm:$0xf]
  %v6104 = vld [vmem:[%s6095 + $0x20] sm:$0xf]
  %v6105 = vld [vmem:[%s6095 + $0x24] sm:$0xf]
  %v6106 = vld [vmem:[%s6095 + $0x28] sm:$0x3]
  %v6118 = vunpack.c.l.b16 %v6096
  %v6119 = vunpack.c.l.b16 %v6097
  %v6120 = vunpack.c.l.b16 %v6098
  %v6121 = vunpack.c.l.b16 %v6099
  %v6122 = vunpack.c.l.b16 %v6100
  %v6123 = vunpack.c.l.b16 %v6101
  %v6124 = vunpack.c.l.b16 %v6102
  %v6125 = vunpack.c.l.b16 %v6103
  %v6126 = vunpack.c.l.b16 %v6104
  %v6127 = vunpack.c.l.b16 %v6105
  %v6128 = vunpack.c.l.b16 %v6106
  %v6129 = vpack.c.b16 %v6119, %v6118
  %v6130 = vpack.c.b16 %v6121, %v6120
  %v6131 = vpack.c.b16 %v6123, %v6122
  %v6132 = vpack.c.b16 %v6125, %v6124
  %v6133 = vpack.c.b16 %v6127, %v6126
  %v6134 = vpack.c.b16 %v6128, %v6128
  %v6141 = vsel %vm5251, %v6134, 0
  %6143 = vmatprep.subr.bf16.mxu0 0
  %6144 = vmatpush1.bf16.msra.mxu0 0
  %6145 = vmatprep.subr.bf16.mxu0 0
  %6146 = vmatpush1.bf16.msra.mxu0 0
  %6147 = vmatprep.subr.bf16.mxu0 0
  %6148 = vmatpush1.bf16.msra.mxu0 %v6141
  %6149 = vmatprep.subr.bf16.mxu0 0
  %6150 = vmatpush1.bf16.msra.mxu0 %v6133
  %6151 = vmatprep.subr.bf16.mxu0 0
  %6152 = vmatpush1.bf16.msra.mxu0 %v6132
  %6153 = vmatprep.subr.bf16.mxu0 0
  %6154 = vmatpush1.bf16.msra.mxu0 %v6131
  %6155 = vmatprep.subr.bf16.mxu0 0
  %6156 = vmatpush1.bf16.msra.mxu0 %v6130
  %6157 = vmatprep.subr.bf16.mxu0 0
  %6158 = vmatpush1.bf16.msra.mxu0 %v6129
  %6159 = vmatprep.subr.bf16.mxu0 0
  %6160 = vmatpush2.bf16.msra.mxu0 0
  %6161 = vmatprep.subr.bf16.mxu0 0
  %6162 = vmatpush2.bf16.msra.mxu0 0
  %6163 = vmatprep.subr.bf16.mxu0 0
  %6164 = vmatpush2.bf16.msra.mxu0 0
  %6165 = vmatprep.subr.bf16.mxu0 0
  %6166 = vmatpush2.bf16.msra.mxu0 0
  %6167 = vmatprep.subr.bf16.mxu0 0
  %6168 = vmatpush2.bf16.msra.mxu0 0
  %6169 = vmatprep.subr.bf16.mxu0 0
  %6170 = vmatpush2.bf16.msra.mxu0 0
  %6171 = vmatprep.subr.bf16.mxu0 0
  %6172 = vmatpush2.bf16.msra.mxu0 0
  %6173 = vmatprep.subr.bf16.mxu0 0
  %6174 = vmatpush2.bf16.msra.mxu0 0
  %6175 = vmatprep.mubr.bf16.mxu0 0
  %6176 = vmatmul.mubr.bf16.gmra.mxu0 %v5363
  %v6177 = vpop.f32.mrf.mxu0
  %v6178 = vadd.f32 0.0, %v6177
  %v6179 = vpop.f32.mrf.mxu0
  %v6180 = vpop.f32.mrf.mxu0
  %v6181 = vadd.f32 0.0, %v6180
  %v6182 = vpop.f32.mrf.mxu0
  %6183 = vmatprep.mubr.bf16.mxu0 0
  %6184 = vmatmul.mubr.bf16.gmra.mxu0 %v5365
  %v6185 = vpop.f32.mrf.mxu0
  %v6186 = vadd.f32 0.0, %v6185
  %v6187 = vpop.f32.mrf.mxu0
  %v6188 = vpop.f32.mrf.mxu0
  %v6189 = vadd.f32 0.0, %v6188
  %v6190 = vpop.f32.mrf.mxu0
  %6191 = vmatprep.mubr.bf16.mxu0 0
  %6192 = vmatmul.mubr.bf16.gmra.mxu0 %v5367
  %v6193 = vpop.f32.mrf.mxu0
  %v6194 = vadd.f32 0.0, %v6193
  %v6195 = vpop.f32.mrf.mxu0
  %v6196 = vpop.f32.mrf.mxu0
  %v6197 = vadd.f32 0.0, %v6196
  %v6198 = vpop.f32.mrf.mxu0
  %6199 = vmatprep.mubr.bf16.mxu0 0
  %6200 = vmatmul.mubr.bf16.gmra.mxu0 %v5369
  %v6201 = vpop.f32.mrf.mxu0
  %v6202 = vadd.f32 0.0, %v6201
  %v6203 = vpop.f32.mrf.mxu0
  %v6204 = vpop.f32.mrf.mxu0
  %v6205 = vadd.f32 0.0, %v6204
  %v6206 = vpop.f32.mrf.mxu0
  %6207 = vmatprep.mubr.bf16.mxu0 0
  %6208 = vmatmul.mubr.bf16.gmra.mxu0 %v5492
  %v6209 = vpop.f32.mrf.mxu0
  %v6210 = vadd.f32 0.0, %v6209
  %v6211 = vpop.f32.mrf.mxu0
  %v6212 = vpop.f32.mrf.mxu0
  %v6213 = vadd.f32 0.0, %v6212
  %v6214 = vpop.f32.mrf.mxu0
  %6215 = vdwg.mxu0
  %v6216 = vadd.f32 %v6057, %v6178
  %v6217 = vadd.f32 %v6060, %v6181
  %v6218 = vadd.f32 %v6065, %v6186
  %v6219 = vadd.f32 %v6068, %v6189
  %v6220 = vadd.f32 %v6073, %v6194
  %v6221 = vadd.f32 %v6076, %v6197
  %v6222 = vadd.f32 %v6081, %v6202
  %v6223 = vadd.f32 %v6084, %v6205
  %v6224 = vadd.f32 %v6089, %v6210
  %v6225 = vadd.f32 %v6092, %v6213
  %s6226 = scalar_lea.vmem %s3, 352
  %v6227 = vld [vmem:[%s6226] sm:$0xf]
  %v6228 = vld [vmem:[%s6226 + $0x4] sm:$0xf]
  %v6229 = vld [vmem:[%s6226 + $0x8] sm:$0xf]
  %v6230 = vld [vmem:[%s6226 + $0xc] sm:$0xf]
  %v6231 = vld [vmem:[%s6226 + $0x10] sm:$0xf]
  %v6232 = vld [vmem:[%s6226 + $0x14] sm:$0xf]
  %v6233 = vld [vmem:[%s6226 + $0x18] sm:$0xf]
  %v6234 = vld [vmem:[%s6226 + $0x1c] sm:$0xf]
  %v6235 = vld [vmem:[%s6226 + $0x20] sm:$0xf]
  %v6236 = vld [vmem:[%s6226 + $0x24] sm:$0xf]
  %v6237 = vld [vmem:[%s6226 + $0x28] sm:$0x3]
  %v6249 = vunpack.c.l.b16 %v6227
  %v6250 = vunpack.c.l.b16 %v6228
  %v6251 = vunpack.c.l.b16 %v6229
  %v6252 = vunpack.c.l.b16 %v6230
  %v6253 = vunpack.c.l.b16 %v6231
  %v6254 = vunpack.c.l.b16 %v6232
  %v6255 = vunpack.c.l.b16 %v6233
  %v6256 = vunpack.c.l.b16 %v6234
  %v6257 = vunpack.c.l.b16 %v6235
  %v6258 = vunpack.c.l.b16 %v6236
  %v6259 = vunpack.c.l.b16 %v6237
  %v6260 = vpack.c.b16 %v6250, %v6249
  %v6261 = vpack.c.b16 %v6252, %v6251
  %v6262 = vpack.c.b16 %v6254, %v6253
  %v6263 = vpack.c.b16 %v6256, %v6255
  %v6264 = vpack.c.b16 %v6258, %v6257
  %v6265 = vpack.c.b16 %v6259, %v6259
  %v6272 = vsel %vm5251, %v6265, 0
  %6274 = vmatprep.subr.bf16.mxu0 0
  %6275 = vmatpush1.bf16.msra.mxu0 0
  %6276 = vmatprep.subr.bf16.mxu0 0
  %6277 = vmatpush1.bf16.msra.mxu0 0
  %6278 = vmatprep.subr.bf16.mxu0 0
  %6279 = vmatpush1.bf16.msra.mxu0 %v6272
  %6280 = vmatprep.subr.bf16.mxu0 0
  %6281 = vmatpush1.bf16.msra.mxu0 %v6264
  %6282 = vmatprep.subr.bf16.mxu0 0
  %6283 = vmatpush1.bf16.msra.mxu0 %v6263
  %6284 = vmatprep.subr.bf16.mxu0 0
  %6285 = vmatpush1.bf16.msra.mxu0 %v6262
  %6286 = vmatprep.subr.bf16.mxu0 0
  %6287 = vmatpush1.bf16.msra.mxu0 %v6261
  %6288 = vmatprep.subr.bf16.mxu0 0
  %6289 = vmatpush1.bf16.msra.mxu0 %v6260
  %6290 = vmatprep.subr.bf16.mxu0 0
  %6291 = vmatpush2.bf16.msra.mxu0 0
  %6292 = vmatprep.subr.bf16.mxu0 0
  %6293 = vmatpush2.bf16.msra.mxu0 0
  %6294 = vmatprep.subr.bf16.mxu0 0
  %6295 = vmatpush2.bf16.msra.mxu0 0
  %6296 = vmatprep.subr.bf16.mxu0 0
  %6297 = vmatpush2.bf16.msra.mxu0 0
  %6298 = vmatprep.subr.bf16.mxu0 0
  %6299 = vmatpush2.bf16.msra.mxu0 0
  %6300 = vmatprep.subr.bf16.mxu0 0
  %6301 = vmatpush2.bf16.msra.mxu0 0
  %6302 = vmatprep.subr.bf16.mxu0 0
  %6303 = vmatpush2.bf16.msra.mxu0 0
  %6304 = vmatprep.subr.bf16.mxu0 0
  %6305 = vmatpush2.bf16.msra.mxu0 0
  %6306 = vmatprep.mubr.bf16.mxu0 0
  %6307 = vmatmul.mubr.bf16.gmra.mxu0 %v5240
  %v6308 = vpop.f32.mrf.mxu0
  %v6309 = vadd.f32 0.0, %v6308
  %v6310 = vpop.f32.mrf.mxu0
  %v6311 = vpop.f32.mrf.mxu0
  %v6312 = vadd.f32 0.0, %v6311
  %v6313 = vpop.f32.mrf.mxu0
  %6314 = vmatprep.mubr.bf16.mxu0 0
  %6315 = vmatmul.mubr.bf16.gmra.mxu0 %v5243
  %v6316 = vpop.f32.mrf.mxu0
  %v6317 = vadd.f32 0.0, %v6316
  %v6318 = vpop.f32.mrf.mxu0
  %v6319 = vpop.f32.mrf.mxu0
  %v6320 = vadd.f32 0.0, %v6319
  %v6321 = vpop.f32.mrf.mxu0
  %6322 = vmatprep.mubr.bf16.mxu0 0
  %6323 = vmatmul.mubr.bf16.gmra.mxu0 %v5246
  %v6324 = vpop.f32.mrf.mxu0
  %v6325 = vadd.f32 0.0, %v6324
  %v6326 = vpop.f32.mrf.mxu0
  %v6327 = vpop.f32.mrf.mxu0
  %v6328 = vadd.f32 0.0, %v6327
  %v6329 = vpop.f32.mrf.mxu0
  %6330 = vmatprep.mubr.bf16.mxu0 0
  %6331 = vmatmul.mubr.bf16.gmra.mxu0 %v5249
  %v6332 = vpop.f32.mrf.mxu0
  %v6333 = vadd.f32 0.0, %v6332
  %v6334 = vpop.f32.mrf.mxu0
  %v6335 = vpop.f32.mrf.mxu0
  %v6336 = vadd.f32 0.0, %v6335
  %v6337 = vpop.f32.mrf.mxu0
  %6338 = vmatprep.mubr.bf16.mxu0 0
  %6339 = vmatmul.mubr.bf16.gmra.mxu0 %v5632
  %v6340 = vpop.f32.mrf.mxu0
  %v6341 = vadd.f32 0.0, %v6340
  %v6342 = vpop.f32.mrf.mxu0
  %v6343 = vpop.f32.mrf.mxu0
  %v6344 = vadd.f32 0.0, %v6343
  %v6345 = vpop.f32.mrf.mxu0
  %6346 = vdwg.mxu0
  %v6347 = vadd.f32 %v6216, %v6309
  %v6348 = vadd.f32 %v6217, %v6312
  %v6349 = vadd.f32 %v6218, %v6317
  %v6350 = vadd.f32 %v6219, %v6320
  %v6351 = vadd.f32 %v6220, %v6325
  %v6352 = vadd.f32 %v6221, %v6328
  %v6353 = vadd.f32 %v6222, %v6333
  %v6354 = vadd.f32 %v6223, %v6336
  %v6355 = vadd.f32 %v6224, %v6341
  %v6356 = vadd.f32 %v6225, %v6344
  %s6357 = scalar_lea.vmem %s3, 396
  %v6358 = vld [vmem:[%s6357] sm:$0xf]
  %v6359 = vld [vmem:[%s6357 + $0x4] sm:$0xf]
  %v6360 = vld [vmem:[%s6357 + $0x8] sm:$0xf]
  %v6361 = vld [vmem:[%s6357 + $0xc] sm:$0xf]
  %v6362 = vld [vmem:[%s6357 + $0x10] sm:$0xf]
  %v6363 = vld [vmem:[%s6357 + $0x14] sm:$0xf]
  %v6364 = vld [vmem:[%s6357 + $0x18] sm:$0xf]
  %v6365 = vld [vmem:[%s6357 + $0x1c] sm:$0xf]
  %v6366 = vld [vmem:[%s6357 + $0x20] sm:$0xf]
  %v6367 = vld [vmem:[%s6357 + $0x24] sm:$0xf]
  %v6368 = vld [vmem:[%s6357 + $0x28] sm:$0x3]
  %v6380 = vunpack.c.l.b16 %v6358
  %v6381 = vunpack.c.l.b16 %v6359
  %v6382 = vunpack.c.l.b16 %v6360
  %v6383 = vunpack.c.l.b16 %v6361
  %v6384 = vunpack.c.l.b16 %v6362
  %v6385 = vunpack.c.l.b16 %v6363
  %v6386 = vunpack.c.l.b16 %v6364
  %v6387 = vunpack.c.l.b16 %v6365
  %v6388 = vunpack.c.l.b16 %v6366
  %v6389 = vunpack.c.l.b16 %v6367
  %v6390 = vunpack.c.l.b16 %v6368
  %v6391 = vpack.c.b16 %v6381, %v6380
  %v6392 = vpack.c.b16 %v6383, %v6382
  %v6393 = vpack.c.b16 %v6385, %v6384
  %v6394 = vpack.c.b16 %v6387, %v6386
  %v6395 = vpack.c.b16 %v6389, %v6388
  %v6396 = vpack.c.b16 %v6390, %v6390
  %v6403 = vsel %vm5251, %v6396, 0
  %6405 = vmatprep.subr.bf16.mxu0 0
  %6406 = vmatpush1.bf16.msra.mxu0 0
  %6407 = vmatprep.subr.bf16.mxu0 0
  %6408 = vmatpush1.bf16.msra.mxu0 0
  %6409 = vmatprep.subr.bf16.mxu0 0
  %6410 = vmatpush1.bf16.msra.mxu0 %v6403
  %6411 = vmatprep.subr.bf16.mxu0 0
  %6412 = vmatpush1.bf16.msra.mxu0 %v6395
  %6413 = vmatprep.subr.bf16.mxu0 0
  %6414 = vmatpush1.bf16.msra.mxu0 %v6394
  %6415 = vmatprep.subr.bf16.mxu0 0
  %6416 = vmatpush1.bf16.msra.mxu0 %v6393
  %6417 = vmatprep.subr.bf16.mxu0 0
  %6418 = vmatpush1.bf16.msra.mxu0 %v6392
  %6419 = vmatprep.subr.bf16.mxu0 0
  %6420 = vmatpush1.bf16.msra.mxu0 %v6391
  %6421 = vmatprep.subr.bf16.mxu0 0
  %6422 = vmatpush2.bf16.msra.mxu0 0
  %6423 = vmatprep.subr.bf16.mxu0 0
  %6424 = vmatpush2.bf16.msra.mxu0 0
  %6425 = vmatprep.subr.bf16.mxu0 0
  %6426 = vmatpush2.bf16.msra.mxu0 0
  %6427 = vmatprep.subr.bf16.mxu0 0
  %6428 = vmatpush2.bf16.msra.mxu0 0
  %6429 = vmatprep.subr.bf16.mxu0 0
  %6430 = vmatpush2.bf16.msra.mxu0 0
  %6431 = vmatprep.subr.bf16.mxu0 0
  %6432 = vmatpush2.bf16.msra.mxu0 0
  %6433 = vmatprep.subr.bf16.mxu0 0
  %6434 = vmatpush2.bf16.msra.mxu0 0
  %6435 = vmatprep.subr.bf16.mxu0 0
  %6436 = vmatpush2.bf16.msra.mxu0 0
  %6437 = vmatprep.mubr.bf16.mxu0 0
  %6438 = vmatmul.mubr.bf16.gmra.mxu0 %v5365
  %v6439 = vpop.f32.mrf.mxu0
  %v6440 = vadd.f32 0.0, %v6439
  %v6441 = vpop.f32.mrf.mxu0
  %v6442 = vpop.f32.mrf.mxu0
  %v6443 = vadd.f32 0.0, %v6442
  %v6444 = vpop.f32.mrf.mxu0
  %6445 = vmatprep.mubr.bf16.mxu0 0
  %6446 = vmatmul.mubr.bf16.gmra.mxu0 %v5367
  %v6447 = vpop.f32.mrf.mxu0
  %v6448 = vadd.f32 0.0, %v6447
  %v6449 = vpop.f32.mrf.mxu0
  %v6450 = vpop.f32.mrf.mxu0
  %v6451 = vadd.f32 0.0, %v6450
  %v6452 = vpop.f32.mrf.mxu0
  %6453 = vmatprep.mubr.bf16.mxu0 0
  %6454 = vmatmul.mubr.bf16.gmra.mxu0 %v5369
  %v6455 = vpop.f32.mrf.mxu0
  %v6456 = vadd.f32 0.0, %v6455
  %v6457 = vpop.f32.mrf.mxu0
  %v6458 = vpop.f32.mrf.mxu0
  %v6459 = vadd.f32 0.0, %v6458
  %v6460 = vpop.f32.mrf.mxu0
  %6461 = vmatprep.mubr.bf16.mxu0 0
  %6462 = vmatmul.mubr.bf16.gmra.mxu0 %v5492
  %v6463 = vpop.f32.mrf.mxu0
  %v6464 = vadd.f32 0.0, %v6463
  %v6465 = vpop.f32.mrf.mxu0
  %v6466 = vpop.f32.mrf.mxu0
  %v6467 = vadd.f32 0.0, %v6466
  %v6468 = vpop.f32.mrf.mxu0
  %6469 = vmatprep.mubr.bf16.mxu0 0
  %6470 = vmatmul.mubr.bf16.gmra.mxu0 %v5765
  %v6471 = vpop.f32.mrf.mxu0
  %v6472 = vadd.f32 0.0, %v6471
  %v6473 = vpop.f32.mrf.mxu0
  %v6474 = vpop.f32.mrf.mxu0
  %v6475 = vadd.f32 0.0, %v6474
  %v6476 = vpop.f32.mrf.mxu0
  %6477 = vdwg.mxu0
  %v6478 = vadd.f32 %v6347, %v6440
  %v6479 = vadd.f32 %v6348, %v6443
  %v6480 = vadd.f32 %v6349, %v6448
  %v6481 = vadd.f32 %v6350, %v6451
  %v6482 = vadd.f32 %v6351, %v6456
  %v6483 = vadd.f32 %v6352, %v6459
  %v6484 = vadd.f32 %v6353, %v6464
  %v6485 = vadd.f32 %v6354, %v6467
  %v6486 = vadd.f32 %v6355, %v6472
  %v6487 = vadd.f32 %v6356, %v6475
  %v6488 = vmax.f32 %v5843, %v6478
  %v6489 = vmax.f32 %v5844, %v6479
  %v6490 = vmax.f32 %v5845, %v6480
  %v6491 = vmax.f32 %v5846, %v6481
  %v6492 = vmax.f32 %v5847, %v6482
  %v6493 = vmax.f32 %v5848, %v6483
  %v6494 = vmax.f32 %v5849, %v6484
  %v6495 = vmax.f32 %v5850, %v6485
  %v6496 = vmax.f32 %v5851, %v6486
  %v6497 = vmax.f32 %v5852, %v6487
  %6498 = vmatprep.subr.bf16.mxu0 0
  %6499 = vmatpush1.bf16.msra.mxu0 0
  %6500 = vmatprep.subr.bf16.mxu0 0
  %6501 = vmatpush1.bf16.msra.mxu0 0
  %6502 = vmatprep.subr.bf16.mxu0 0
  %6503 = vmatpush1.bf16.msra.mxu0 %v5253
  %6504 = vmatprep.subr.bf16.mxu0 0
  %6505 = vmatpush1.bf16.msra.mxu0 %v5229
  %6506 = vmatprep.subr.bf16.mxu0 0
  %6507 = vmatpush1.bf16.msra.mxu0 %v5228
  %6508 = vmatprep.subr.bf16.mxu0 0
  %6509 = vmatpush1.bf16.msra.mxu0 %v5227
  %6510 = vmatprep.subr.bf16.mxu0 0
  %6511 = vmatpush1.bf16.msra.mxu0 %v5226
  %6512 = vmatprep.subr.bf16.mxu0 0
  %6513 = vmatpush1.bf16.msra.mxu0 %v5225
  %6514 = vmatprep.subr.bf16.mxu0 0
  %6515 = vmatpush2.bf16.msra.mxu0 0
  %6516 = vmatprep.subr.bf16.mxu0 0
  %6517 = vmatpush2.bf16.msra.mxu0 0
  %6518 = vmatprep.subr.bf16.mxu0 0
  %6519 = vmatpush2.bf16.msra.mxu0 0
  %6520 = vmatprep.subr.bf16.mxu0 0
  %6521 = vmatpush2.bf16.msra.mxu0 0
  %6522 = vmatprep.subr.bf16.mxu0 0
  %6523 = vmatpush2.bf16.msra.mxu0 0
  %6524 = vmatprep.subr.bf16.mxu0 0
  %6525 = vmatpush2.bf16.msra.mxu0 0
  %6526 = vmatprep.subr.bf16.mxu0 0
  %6527 = vmatpush2.bf16.msra.mxu0 0
  %6528 = vmatprep.subr.bf16.mxu0 0
  %6529 = vmatpush2.bf16.msra.mxu0 0
  %6530 = vmatprep.mubr.bf16.mxu0 0
  %6531 = vmatmul.mubr.bf16.gmra.mxu0 %v5363
  %v6532 = vpop.f32.mrf.mxu0
  %v6533 = vadd.f32 0.0, %v6532
  %v6534 = vpop.f32.mrf.mxu0
  %v6535 = vpop.f32.mrf.mxu0
  %v6536 = vadd.f32 0.0, %v6535
  %v6537 = vpop.f32.mrf.mxu0
  %6538 = vmatprep.mubr.bf16.mxu0 0
  %6539 = vmatmul.mubr.bf16.gmra.mxu0 %v5365
  %v6540 = vpop.f32.mrf.mxu0
  %v6541 = vadd.f32 0.0, %v6540
  %v6542 = vpop.f32.mrf.mxu0
  %v6543 = vpop.f32.mrf.mxu0
  %v6544 = vadd.f32 0.0, %v6543
  %v6545 = vpop.f32.mrf.mxu0
  %6546 = vmatprep.mubr.bf16.mxu0 0
  %6547 = vmatmul.mubr.bf16.gmra.mxu0 %v5367
  %v6548 = vpop.f32.mrf.mxu0
  %v6549 = vadd.f32 0.0, %v6548
  %v6550 = vpop.f32.mrf.mxu0
  %v6551 = vpop.f32.mrf.mxu0
  %v6552 = vadd.f32 0.0, %v6551
  %v6553 = vpop.f32.mrf.mxu0
  %6554 = vmatprep.mubr.bf16.mxu0 0
  %6555 = vmatmul.mubr.bf16.gmra.mxu0 %v5369
  %v6556 = vpop.f32.mrf.mxu0
  %v6557 = vadd.f32 0.0, %v6556
  %v6558 = vpop.f32.mrf.mxu0
  %v6559 = vpop.f32.mrf.mxu0
  %v6560 = vadd.f32 0.0, %v6559
  %v6561 = vpop.f32.mrf.mxu0
  %6562 = vmatprep.mubr.bf16.mxu0 0
  %6563 = vmatmul.mubr.bf16.gmra.mxu0 %v5492
  %v6564 = vpop.f32.mrf.mxu0
  %v6565 = vadd.f32 0.0, %v6564
  %v6566 = vpop.f32.mrf.mxu0
  %v6567 = vpop.f32.mrf.mxu0
  %v6568 = vadd.f32 0.0, %v6567
  %v6569 = vpop.f32.mrf.mxu0
  %6570 = vdwg.mxu0
  %6571 = vmatprep.subr.bf16.mxu0 0
  %6572 = vmatpush1.bf16.msra.mxu0 0
  %6573 = vmatprep.subr.bf16.mxu0 0
  %6574 = vmatpush1.bf16.msra.mxu0 0
  %6575 = vmatprep.subr.bf16.mxu0 0
  %6576 = vmatpush1.bf16.msra.mxu0 %v5372
  %6577 = vmatprep.subr.bf16.mxu0 0
  %6578 = vmatpush1.bf16.msra.mxu0 %v5354
  %6579 = vmatprep.subr.bf16.mxu0 0
  %6580 = vmatpush1.bf16.msra.mxu0 %v5353
  %6581 = vmatprep.subr.bf16.mxu0 0
  %6582 = vmatpush1.bf16.msra.mxu0 %v5352
  %6583 = vmatprep.subr.bf16.mxu0 0
  %6584 = vmatpush1.bf16.msra.mxu0 %v5351
  %6585 = vmatprep.subr.bf16.mxu0 0
  %6586 = vmatpush1.bf16.msra.mxu0 %v5350
  %6587 = vmatprep.subr.bf16.mxu0 0
  %6588 = vmatpush2.bf16.msra.mxu0 0
  %6589 = vmatprep.subr.bf16.mxu0 0
  %6590 = vmatpush2.bf16.msra.mxu0 0
  %6591 = vmatprep.subr.bf16.mxu0 0
  %6592 = vmatpush2.bf16.msra.mxu0 0
  %6593 = vmatprep.subr.bf16.mxu0 0
  %6594 = vmatpush2.bf16.msra.mxu0 0
  %6595 = vmatprep.subr.bf16.mxu0 0
  %6596 = vmatpush2.bf16.msra.mxu0 0
  %6597 = vmatprep.subr.bf16.mxu0 0
  %6598 = vmatpush2.bf16.msra.mxu0 0
  %6599 = vmatprep.subr.bf16.mxu0 0
  %6600 = vmatpush2.bf16.msra.mxu0 0
  %6601 = vmatprep.subr.bf16.mxu0 0
  %6602 = vmatpush2.bf16.msra.mxu0 0
  %6603 = vmatprep.mubr.bf16.mxu0 0
  %6604 = vmatmul.mubr.bf16.gmra.mxu0 %v5237
  %v6605 = vpop.f32.mrf.mxu0
  %v6606 = vadd.f32 %v6533, %v6605
  %v6607 = vpop.f32.mrf.mxu0
  %v6608 = vpop.f32.mrf.mxu0
  %v6609 = vadd.f32 %v6536, %v6608
  %v6610 = vpop.f32.mrf.mxu0
  %6611 = vmatprep.mubr.bf16.mxu0 0
  %6612 = vmatmul.mubr.bf16.gmra.mxu0 %v5240
  %v6613 = vpop.f32.mrf.mxu0
  %v6614 = vadd.f32 %v6541, %v6613
  %v6615 = vpop.f32.mrf.mxu0
  %v6616 = vpop.f32.mrf.mxu0
  %v6617 = vadd.f32 %v6544, %v6616
  %v6618 = vpop.f32.mrf.mxu0
  %6619 = vmatprep.mubr.bf16.mxu0 0
  %6620 = vmatmul.mubr.bf16.gmra.mxu0 %v5243
  %v6621 = vpop.f32.mrf.mxu0
  %v6622 = vadd.f32 %v6549, %v6621
  %v6623 = vpop.f32.mrf.mxu0
  %v6624 = vpop.f32.mrf.mxu0
  %v6625 = vadd.f32 %v6552, %v6624
  %v6626 = vpop.f32.mrf.mxu0
  %6627 = vmatprep.mubr.bf16.mxu0 0
  %6628 = vmatmul.mubr.bf16.gmra.mxu0 %v5246
  %v6629 = vpop.f32.mrf.mxu0
  %v6630 = vadd.f32 %v6557, %v6629
  %v6631 = vpop.f32.mrf.mxu0
  %v6632 = vpop.f32.mrf.mxu0
  %v6633 = vadd.f32 %v6560, %v6632
  %v6634 = vpop.f32.mrf.mxu0
  %6635 = vmatprep.mubr.bf16.mxu0 0
  %6636 = vmatmul.mubr.bf16.gmra.mxu0 %v5249
  %v6637 = vpop.f32.mrf.mxu0
  %v6638 = vadd.f32 %v6565, %v6637
  %v6639 = vpop.f32.mrf.mxu0
  %v6640 = vpop.f32.mrf.mxu0
  %v6641 = vadd.f32 %v6568, %v6640
  %v6642 = vpop.f32.mrf.mxu0
  %6643 = vdwg.mxu0
  %6644 = vmatprep.subr.bf16.mxu0 0
  %6645 = vmatpush1.bf16.msra.mxu0 0
  %6646 = vmatprep.subr.bf16.mxu0 0
  %6647 = vmatpush1.bf16.msra.mxu0 0
  %6648 = vmatprep.subr.bf16.mxu0 0
  %6649 = vmatpush1.bf16.msra.mxu0 %v5495
  %6650 = vmatprep.subr.bf16.mxu0 0
  %6651 = vmatpush1.bf16.msra.mxu0 %v5485
  %6652 = vmatprep.subr.bf16.mxu0 0
  %6653 = vmatpush1.bf16.msra.mxu0 %v5484
  %6654 = vmatprep.subr.bf16.mxu0 0
  %6655 = vmatpush1.bf16.msra.mxu0 %v5483
  %6656 = vmatprep.subr.bf16.mxu0 0
  %6657 = vmatpush1.bf16.msra.mxu0 %v5482
  %6658 = vmatprep.subr.bf16.mxu0 0
  %6659 = vmatpush1.bf16.msra.mxu0 %v5481
  %6660 = vmatprep.subr.bf16.mxu0 0
  %6661 = vmatpush2.bf16.msra.mxu0 0
  %6662 = vmatprep.subr.bf16.mxu0 0
  %6663 = vmatpush2.bf16.msra.mxu0 0
  %6664 = vmatprep.subr.bf16.mxu0 0
  %6665 = vmatpush2.bf16.msra.mxu0 0
  %6666 = vmatprep.subr.bf16.mxu0 0
  %6667 = vmatpush2.bf16.msra.mxu0 0
  %6668 = vmatprep.subr.bf16.mxu0 0
  %6669 = vmatpush2.bf16.msra.mxu0 0
  %6670 = vmatprep.subr.bf16.mxu0 0
  %6671 = vmatpush2.bf16.msra.mxu0 0
  %6672 = vmatprep.subr.bf16.mxu0 0
  %6673 = vmatpush2.bf16.msra.mxu0 0
  %6674 = vmatprep.subr.bf16.mxu0 0
  %6675 = vmatpush2.bf16.msra.mxu0 0
  %6676 = vmatprep.mubr.bf16.mxu0 0
  %6677 = vmatmul.mubr.bf16.gmra.mxu0 %v5240
  %v6678 = vpop.f32.mrf.mxu0
  %v6679 = vadd.f32 0.0, %v6678
  %v6680 = vpop.f32.mrf.mxu0
  %v6681 = vpop.f32.mrf.mxu0
  %v6682 = vadd.f32 0.0, %v6681
  %v6683 = vpop.f32.mrf.mxu0
  %6684 = vmatprep.mubr.bf16.mxu0 0
  %6685 = vmatmul.mubr.bf16.gmra.mxu0 %v5243
  %v6686 = vpop.f32.mrf.mxu0
  %v6687 = vadd.f32 0.0, %v6686
  %v6688 = vpop.f32.mrf.mxu0
  %v6689 = vpop.f32.mrf.mxu0
  %v6690 = vadd.f32 0.0, %v6689
  %v6691 = vpop.f32.mrf.mxu0
  %6692 = vmatprep.mubr.bf16.mxu0 0
  %6693 = vmatmul.mubr.bf16.gmra.mxu0 %v5246
  %v6694 = vpop.f32.mrf.mxu0
  %v6695 = vadd.f32 0.0, %v6694
  %v6696 = vpop.f32.mrf.mxu0
  %v6697 = vpop.f32.mrf.mxu0
  %v6698 = vadd.f32 0.0, %v6697
  %v6699 = vpop.f32.mrf.mxu0
  %6700 = vmatprep.mubr.bf16.mxu0 0
  %6701 = vmatmul.mubr.bf16.gmra.mxu0 %v5249
  %v6702 = vpop.f32.mrf.mxu0
  %v6703 = vadd.f32 0.0, %v6702
  %v6704 = vpop.f32.mrf.mxu0
  %v6705 = vpop.f32.mrf.mxu0
  %v6706 = vadd.f32 0.0, %v6705
  %v6707 = vpop.f32.mrf.mxu0
  %6708 = vmatprep.mubr.bf16.mxu0 0
  %6709 = vmatmul.mubr.bf16.gmra.mxu0 %v5632
  %v6710 = vpop.f32.mrf.mxu0
  %v6711 = vadd.f32 0.0, %v6710
  %v6712 = vpop.f32.mrf.mxu0
  %v6713 = vpop.f32.mrf.mxu0
  %v6714 = vadd.f32 0.0, %v6713
  %v6715 = vpop.f32.mrf.mxu0
  %6716 = vdwg.mxu0
  %v6717 = vadd.f32 %v6606, %v6679
  %v6718 = vadd.f32 %v6609, %v6682
  %v6719 = vadd.f32 %v6614, %v6687
  %v6720 = vadd.f32 %v6617, %v6690
  %v6721 = vadd.f32 %v6622, %v6695
  %v6722 = vadd.f32 %v6625, %v6698
  %v6723 = vadd.f32 %v6630, %v6703
  %v6724 = vadd.f32 %v6633, %v6706
  %v6725 = vadd.f32 %v6638, %v6711
  %v6726 = vadd.f32 %v6641, %v6714
  %6727 = vmatprep.subr.bf16.mxu0 0
  %6728 = vmatpush1.bf16.msra.mxu0 0
  %6729 = vmatprep.subr.bf16.mxu0 0
  %6730 = vmatpush1.bf16.msra.mxu0 0
  %6731 = vmatprep.subr.bf16.mxu0 0
  %6732 = vmatpush1.bf16.msra.mxu0 %v5635
  %6733 = vmatprep.subr.bf16.mxu0 0
  %6734 = vmatpush1.bf16.msra.mxu0 %v5624
  %6735 = vmatprep.subr.bf16.mxu0 0
  %6736 = vmatpush1.bf16.msra.mxu0 %v5623
  %6737 = vmatprep.subr.bf16.mxu0 0
  %6738 = vmatpush1.bf16.msra.mxu0 %v5622
  %6739 = vmatprep.subr.bf16.mxu0 0
  %6740 = vmatpush1.bf16.msra.mxu0 %v5621
  %6741 = vmatprep.subr.bf16.mxu0 0
  %6742 = vmatpush1.bf16.msra.mxu0 %v5620
  %6743 = vmatprep.subr.bf16.mxu0 0
  %6744 = vmatpush2.bf16.msra.mxu0 0
  %6745 = vmatprep.subr.bf16.mxu0 0
  %6746 = vmatpush2.bf16.msra.mxu0 0
  %6747 = vmatprep.subr.bf16.mxu0 0
  %6748 = vmatpush2.bf16.msra.mxu0 0
  %6749 = vmatprep.subr.bf16.mxu0 0
  %6750 = vmatpush2.bf16.msra.mxu0 0
  %6751 = vmatprep.subr.bf16.mxu0 0
  %6752 = vmatpush2.bf16.msra.mxu0 0
  %6753 = vmatprep.subr.bf16.mxu0 0
  %6754 = vmatpush2.bf16.msra.mxu0 0
  %6755 = vmatprep.subr.bf16.mxu0 0
  %6756 = vmatpush2.bf16.msra.mxu0 0
  %6757 = vmatprep.subr.bf16.mxu0 0
  %6758 = vmatpush2.bf16.msra.mxu0 0
  %6759 = vmatprep.mubr.bf16.mxu0 0
  %6760 = vmatmul.mubr.bf16.gmra.mxu0 %v5365
  %v6761 = vpop.f32.mrf.mxu0
  %v6762 = vadd.f32 0.0, %v6761
  %v6763 = vpop.f32.mrf.mxu0
  %v6764 = vpop.f32.mrf.mxu0
  %v6765 = vadd.f32 0.0, %v6764
  %v6766 = vpop.f32.mrf.mxu0
  %6767 = vmatprep.mubr.bf16.mxu0 0
  %6768 = vmatmul.mubr.bf16.gmra.mxu0 %v5367
  %v6769 = vpop.f32.mrf.mxu0
  %v6770 = vadd.f32 0.0, %v6769
  %v6771 = vpop.f32.mrf.mxu0
  %v6772 = vpop.f32.mrf.mxu0
  %v6773 = vadd.f32 0.0, %v6772
  %v6774 = vpop.f32.mrf.mxu0
  %6775 = vmatprep.mubr.bf16.mxu0 0
  %6776 = vmatmul.mubr.bf16.gmra.mxu0 %v5369
  %v6777 = vpop.f32.mrf.mxu0
  %v6778 = vadd.f32 0.0, %v6777
  %v6779 = vpop.f32.mrf.mxu0
  %v6780 = vpop.f32.mrf.mxu0
  %v6781 = vadd.f32 0.0, %v6780
  %v6782 = vpop.f32.mrf.mxu0
  %6783 = vmatprep.mubr.bf16.mxu0 0
  %6784 = vmatmul.mubr.bf16.gmra.mxu0 %v5492
  %v6785 = vpop.f32.mrf.mxu0
  %v6786 = vadd.f32 0.0, %v6785
  %v6787 = vpop.f32.mrf.mxu0
  %v6788 = vpop.f32.mrf.mxu0
  %v6789 = vadd.f32 0.0, %v6788
  %v6790 = vpop.f32.mrf.mxu0
  %6791 = vmatprep.mubr.bf16.mxu0 0
  %6792 = vmatmul.mubr.bf16.gmra.mxu0 %v5765
  %v6793 = vpop.f32.mrf.mxu0
  %v6794 = vadd.f32 0.0, %v6793
  %v6795 = vpop.f32.mrf.mxu0
  %v6796 = vpop.f32.mrf.mxu0
  %v6797 = vadd.f32 0.0, %v6796
  %v6798 = vpop.f32.mrf.mxu0
  %6799 = vdwg.mxu0
  %v6800 = vadd.f32 %v6717, %v6762
  %v6801 = vadd.f32 %v6718, %v6765
  %v6802 = vadd.f32 %v6719, %v6770
  %v6803 = vadd.f32 %v6720, %v6773
  %v6804 = vadd.f32 %v6721, %v6778
  %v6805 = vadd.f32 %v6722, %v6781
  %v6806 = vadd.f32 %v6723, %v6786
  %v6807 = vadd.f32 %v6724, %v6789
  %v6808 = vadd.f32 %v6725, %v6794
  %v6809 = vadd.f32 %v6726, %v6797
  %6811 = vrot.lane.b32.xlu0 %v5147, 44
  %v6812 = vpop.permute.xlu0 %6811
  %6813 = vrot.lane.b32.xlu0 %v5125, 44
  %v6814 = vpop.permute.xlu0 %6813
  %v6815 = vsel %vm5197, %v6812, %v6814
  %v6817 = vsel %vm5126, %v6815, 0
  %6819 = vmatprep.subr.bf16.mxu0 0
  %6820 = vmatpush1.bf16.msra.mxu0 0
  %6821 = vmatprep.subr.bf16.mxu0 0
  %6822 = vmatpush1.bf16.msra.mxu0 0
  %6823 = vmatprep.subr.bf16.mxu0 0
  %6824 = vmatpush1.bf16.msra.mxu0 %v5768
  %6825 = vmatprep.subr.bf16.mxu0 0
  %6826 = vmatpush1.bf16.msra.mxu0 %v5758
  %6827 = vmatprep.subr.bf16.mxu0 0
  %6828 = vmatpush1.bf16.msra.mxu0 %v5757
  %6829 = vmatprep.subr.bf16.mxu0 0
  %6830 = vmatpush1.bf16.msra.mxu0 %v5756
  %6831 = vmatprep.subr.bf16.mxu0 0
  %6832 = vmatpush1.bf16.msra.mxu0 %v5755
  %6833 = vmatprep.subr.bf16.mxu0 0
  %6834 = vmatpush1.bf16.msra.mxu0 %v5754
  %6835 = vmatprep.subr.bf16.mxu0 0
  %6836 = vmatpush2.bf16.msra.mxu0 0
  %6837 = vmatprep.subr.bf16.mxu0 0
  %6838 = vmatpush2.bf16.msra.mxu0 0
  %6839 = vmatprep.subr.bf16.mxu0 0
  %6840 = vmatpush2.bf16.msra.mxu0 0
  %6841 = vmatprep.subr.bf16.mxu0 0
  %6842 = vmatpush2.bf16.msra.mxu0 0
  %6843 = vmatprep.subr.bf16.mxu0 0
  %6844 = vmatpush2.bf16.msra.mxu0 0
  %6845 = vmatprep.subr.bf16.mxu0 0
  %6846 = vmatpush2.bf16.msra.mxu0 0
  %6847 = vmatprep.subr.bf16.mxu0 0
  %6848 = vmatpush2.bf16.msra.mxu0 0
  %6849 = vmatprep.subr.bf16.mxu0 0
  %6850 = vmatpush2.bf16.msra.mxu0 0
  %6851 = vmatprep.mubr.bf16.mxu0 0
  %6852 = vmatmul.mubr.bf16.gmra.mxu0 %v5243
  %v6853 = vpop.f32.mrf.mxu0
  %v6854 = vadd.f32 0.0, %v6853
  %v6855 = vpop.f32.mrf.mxu0
  %v6856 = vpop.f32.mrf.mxu0
  %v6857 = vadd.f32 0.0, %v6856
  %v6858 = vpop.f32.mrf.mxu0
  %6859 = vmatprep.mubr.bf16.mxu0 0
  %6860 = vmatmul.mubr.bf16.gmra.mxu0 %v5246
  %v6861 = vpop.f32.mrf.mxu0
  %v6862 = vadd.f32 0.0, %v6861
  %v6863 = vpop.f32.mrf.mxu0
  %v6864 = vpop.f32.mrf.mxu0
  %v6865 = vadd.f32 0.0, %v6864
  %v6866 = vpop.f32.mrf.mxu0
  %6867 = vmatprep.mubr.bf16.mxu0 0
  %6868 = vmatmul.mubr.bf16.gmra.mxu0 %v5249
  %v6869 = vpop.f32.mrf.mxu0
  %v6870 = vadd.f32 0.0, %v6869
  %v6871 = vpop.f32.mrf.mxu0
  %v6872 = vpop.f32.mrf.mxu0
  %v6873 = vadd.f32 0.0, %v6872
  %v6874 = vpop.f32.mrf.mxu0
  %6875 = vmatprep.mubr.bf16.mxu0 0
  %6876 = vmatmul.mubr.bf16.gmra.mxu0 %v5632
  %v6877 = vpop.f32.mrf.mxu0
  %v6878 = vadd.f32 0.0, %v6877
  %v6879 = vpop.f32.mrf.mxu0
  %v6880 = vpop.f32.mrf.mxu0
  %v6881 = vadd.f32 0.0, %v6880
  %v6882 = vpop.f32.mrf.mxu0
  %6883 = vmatprep.mubr.bf16.mxu0 0
  %6884 = vmatmul.mubr.bf16.gmra.mxu0 %v6817
  %v6885 = vpop.f32.mrf.mxu0
  %v6886 = vadd.f32 0.0, %v6885
  %v6887 = vpop.f32.mrf.mxu0
  %v6888 = vpop.f32.mrf.mxu0
  %v6889 = vadd.f32 0.0, %v6888
  %v6890 = vpop.f32.mrf.mxu0
  %6891 = vdwg.mxu0
  %v6892 = vadd.f32 %v6800, %v6854
  %v6893 = vadd.f32 %v6801, %v6857
  %v6894 = vadd.f32 %v6802, %v6862
  %v6895 = vadd.f32 %v6803, %v6865
  %v6896 = vadd.f32 %v6804, %v6870
  %v6897 = vadd.f32 %v6805, %v6873
  %v6898 = vadd.f32 %v6806, %v6878
  %v6899 = vadd.f32 %v6807, %v6881
  %v6900 = vadd.f32 %v6808, %v6886
  %v6901 = vadd.f32 %v6809, %v6889
  %v6902 = vmax.f32 %v6488, %v6892
  %v6903 = vmax.f32 %v6489, %v6893
  %v6904 = vmax.f32 %v6490, %v6894
  %v6905 = vmax.f32 %v6491, %v6895
  %v6906 = vmax.f32 %v6492, %v6896
  %v6907 = vmax.f32 %v6493, %v6897
  %v6908 = vmax.f32 %v6494, %v6898
  %v6909 = vmax.f32 %v6495, %v6899
  %v6910 = vmax.f32 %v6496, %v6900
  %v6911 = vmax.f32 %v6497, %v6901
  %6912 = vmatprep.subr.bf16.mxu0 0
  %6913 = vmatpush1.bf16.msra.mxu0 0
  %6914 = vmatprep.subr.bf16.mxu0 0
  %6915 = vmatpush1.bf16.msra.mxu0 0
  %6916 = vmatprep.subr.bf16.mxu0 0
  %6917 = vmatpush1.bf16.msra.mxu0 %v5911
  %6918 = vmatprep.subr.bf16.mxu0 0
  %6919 = vmatpush1.bf16.msra.mxu0 %v5903
  %6920 = vmatprep.subr.bf16.mxu0 0
  %6921 = vmatpush1.bf16.msra.mxu0 %v5902
  %6922 = vmatprep.subr.bf16.mxu0 0
  %6923 = vmatpush1.bf16.msra.mxu0 %v5901
  %6924 = vmatprep.subr.bf16.mxu0 0
  %6925 = vmatpush1.bf16.msra.mxu0 %v5900
  %6926 = vmatprep.subr.bf16.mxu0 0
  %6927 = vmatpush1.bf16.msra.mxu0 %v5899
  %6928 = vmatprep.subr.bf16.mxu0 0
  %6929 = vmatpush2.bf16.msra.mxu0 0
  %6930 = vmatprep.subr.bf16.mxu0 0
  %6931 = vmatpush2.bf16.msra.mxu0 0
  %6932 = vmatprep.subr.bf16.mxu0 0
  %6933 = vmatpush2.bf16.msra.mxu0 0
  %6934 = vmatprep.subr.bf16.mxu0 0
  %6935 = vmatpush2.bf16.msra.mxu0 0
  %6936 = vmatprep.subr.bf16.mxu0 0
  %6937 = vmatpush2.bf16.msra.mxu0 0
  %6938 = vmatprep.subr.bf16.mxu0 0
  %6939 = vmatpush2.bf16.msra.mxu0 0
  %6940 = vmatprep.subr.bf16.mxu0 0
  %6941 = vmatpush2.bf16.msra.mxu0 0
  %6942 = vmatprep.subr.bf16.mxu0 0
  %6943 = vmatpush2.bf16.msra.mxu0 0
  %6944 = vmatprep.mubr.bf16.mxu0 0
  %6945 = vmatmul.mubr.bf16.gmra.mxu0 %v5363
  %v6946 = vpop.f32.mrf.mxu0
  %v6947 = vadd.f32 0.0, %v6946
  %v6948 = vpop.f32.mrf.mxu0
  %v6949 = vpop.f32.mrf.mxu0
  %v6950 = vadd.f32 0.0, %v6949
  %v6951 = vpop.f32.mrf.mxu0
  %6952 = vmatprep.mubr.bf16.mxu0 0
  %6953 = vmatmul.mubr.bf16.gmra.mxu0 %v5365
  %v6954 = vpop.f32.mrf.mxu0
  %v6955 = vadd.f32 0.0, %v6954
  %v6956 = vpop.f32.mrf.mxu0
  %v6957 = vpop.f32.mrf.mxu0
  %v6958 = vadd.f32 0.0, %v6957
  %v6959 = vpop.f32.mrf.mxu0
  %6960 = vmatprep.mubr.bf16.mxu0 0
  %6961 = vmatmul.mubr.bf16.gmra.mxu0 %v5367
  %v6962 = vpop.f32.mrf.mxu0
  %v6963 = vadd.f32 0.0, %v6962
  %v6964 = vpop.f32.mrf.mxu0
  %v6965 = vpop.f32.mrf.mxu0
  %v6966 = vadd.f32 0.0, %v6965
  %v6967 = vpop.f32.mrf.mxu0
  %6968 = vmatprep.mubr.bf16.mxu0 0
  %6969 = vmatmul.mubr.bf16.gmra.mxu0 %v5369
  %v6970 = vpop.f32.mrf.mxu0
  %v6971 = vadd.f32 0.0, %v6970
  %v6972 = vpop.f32.mrf.mxu0
  %v6973 = vpop.f32.mrf.mxu0
  %v6974 = vadd.f32 0.0, %v6973
  %v6975 = vpop.f32.mrf.mxu0
  %6976 = vmatprep.mubr.bf16.mxu0 0
  %6977 = vmatmul.mubr.bf16.gmra.mxu0 %v5492
  %v6978 = vpop.f32.mrf.mxu0
  %v6979 = vadd.f32 0.0, %v6978
  %v6980 = vpop.f32.mrf.mxu0
  %v6981 = vpop.f32.mrf.mxu0
  %v6982 = vadd.f32 0.0, %v6981
  %v6983 = vpop.f32.mrf.mxu0
  %6984 = vdwg.mxu0
  %6985 = vmatprep.subr.bf16.mxu0 0
  %6986 = vmatpush1.bf16.msra.mxu0 0
  %6987 = vmatprep.subr.bf16.mxu0 0
  %6988 = vmatpush1.bf16.msra.mxu0 0
  %6989 = vmatprep.subr.bf16.mxu0 0
  %6990 = vmatpush1.bf16.msra.mxu0 %v6020
  %6991 = vmatprep.subr.bf16.mxu0 0
  %6992 = vmatpush1.bf16.msra.mxu0 %v6012
  %6993 = vmatprep.subr.bf16.mxu0 0
  %6994 = vmatpush1.bf16.msra.mxu0 %v6011
  %6995 = vmatprep.subr.bf16.mxu0 0
  %6996 = vmatpush1.bf16.msra.mxu0 %v6010
  %6997 = vmatprep.subr.bf16.mxu0 0
  %6998 = vmatpush1.bf16.msra.mxu0 %v6009
  %6999 = vmatprep.subr.bf16.mxu0 0
  %7000 = vmatpush1.bf16.msra.mxu0 %v6008
  %7001 = vmatprep.subr.bf16.mxu0 0
  %7002 = vmatpush2.bf16.msra.mxu0 0
  %7003 = vmatprep.subr.bf16.mxu0 0
  %7004 = vmatpush2.bf16.msra.mxu0 0
  %7005 = vmatprep.subr.bf16.mxu0 0
  %7006 = vmatpush2.bf16.msra.mxu0 0
  %7007 = vmatprep.subr.bf16.mxu0 0
  %7008 = vmatpush2.bf16.msra.mxu0 0
  %7009 = vmatprep.subr.bf16.mxu0 0
  %7010 = vmatpush2.bf16.msra.mxu0 0
  %7011 = vmatprep.subr.bf16.mxu0 0
  %7012 = vmatpush2.bf16.msra.mxu0 0
  %7013 = vmatprep.subr.bf16.mxu0 0
  %7014 = vmatpush2.bf16.msra.mxu0 0
  %7015 = vmatprep.subr.bf16.mxu0 0
  %7016 = vmatpush2.bf16.msra.mxu0 0
  %7017 = vmatprep.mubr.bf16.mxu0 0
  %7018 = vmatmul.mubr.bf16.gmra.mxu0 %v5237
  %v7019 = vpop.f32.mrf.mxu0
  %v7020 = vadd.f32 %v6947, %v7019
  %v7021 = vpop.f32.mrf.mxu0
  %v7022 = vpop.f32.mrf.mxu0
  %v7023 = vadd.f32 %v6950, %v7022
  %v7024 = vpop.f32.mrf.mxu0
  %7025 = vmatprep.mubr.bf16.mxu0 0
  %7026 = vmatmul.mubr.bf16.gmra.mxu0 %v5240
  %v7027 = vpop.f32.mrf.mxu0
  %v7028 = vadd.f32 %v6955, %v7027
  %v7029 = vpop.f32.mrf.mxu0
  %v7030 = vpop.f32.mrf.mxu0
  %v7031 = vadd.f32 %v6958, %v7030
  %v7032 = vpop.f32.mrf.mxu0
  %7033 = vmatprep.mubr.bf16.mxu0 0
  %7034 = vmatmul.mubr.bf16.gmra.mxu0 %v5243
  %v7035 = vpop.f32.mrf.mxu0
  %v7036 = vadd.f32 %v6963, %v7035
  %v7037 = vpop.f32.mrf.mxu0
  %v7038 = vpop.f32.mrf.mxu0
  %v7039 = vadd.f32 %v6966, %v7038
  %v7040 = vpop.f32.mrf.mxu0
  %7041 = vmatprep.mubr.bf16.mxu0 0
  %7042 = vmatmul.mubr.bf16.gmra.mxu0 %v5246
  %v7043 = vpop.f32.mrf.mxu0
  %v7044 = vadd.f32 %v6971, %v7043
  %v7045 = vpop.f32.mrf.mxu0
  %v7046 = vpop.f32.mrf.mxu0
  %v7047 = vadd.f32 %v6974, %v7046
  %v7048 = vpop.f32.mrf.mxu0
  %7049 = vmatprep.mubr.bf16.mxu0 0
  %7050 = vmatmul.mubr.bf16.gmra.mxu0 %v5249
  %v7051 = vpop.f32.mrf.mxu0
  %v7052 = vadd.f32 %v6979, %v7051
  %v7053 = vpop.f32.mrf.mxu0
  %v7054 = vpop.f32.mrf.mxu0
  %v7055 = vadd.f32 %v6982, %v7054
  %v7056 = vpop.f32.mrf.mxu0
  %7057 = vdwg.mxu0
  %7058 = vmatprep.subr.bf16.mxu0 0
  %7059 = vmatpush1.bf16.msra.mxu0 0
  %7060 = vmatprep.subr.bf16.mxu0 0
  %7061 = vmatpush1.bf16.msra.mxu0 0
  %7062 = vmatprep.subr.bf16.mxu0 0
  %7063 = vmatpush1.bf16.msra.mxu0 %v6141
  %7064 = vmatprep.subr.bf16.mxu0 0
  %7065 = vmatpush1.bf16.msra.mxu0 %v6133
  %7066 = vmatprep.subr.bf16.mxu0 0
  %7067 = vmatpush1.bf16.msra.mxu0 %v6132
  %7068 = vmatprep.subr.bf16.mxu0 0
  %7069 = vmatpush1.bf16.msra.mxu0 %v6131
  %7070 = vmatprep.subr.bf16.mxu0 0
  %7071 = vmatpush1.bf16.msra.mxu0 %v6130
  %7072 = vmatprep.subr.bf16.mxu0 0
  %7073 = vmatpush1.bf16.msra.mxu0 %v6129
  %7074 = vmatprep.subr.bf16.mxu0 0
  %7075 = vmatpush2.bf16.msra.mxu0 0
  %7076 = vmatprep.subr.bf16.mxu0 0
  %7077 = vmatpush2.bf16.msra.mxu0 0
  %7078 = vmatprep.subr.bf16.mxu0 0
  %7079 = vmatpush2.bf16.msra.mxu0 0
  %7080 = vmatprep.subr.bf16.mxu0 0
  %7081 = vmatpush2.bf16.msra.mxu0 0
  %7082 = vmatprep.subr.bf16.mxu0 0
  %7083 = vmatpush2.bf16.msra.mxu0 0
  %7084 = vmatprep.subr.bf16.mxu0 0
  %7085 = vmatpush2.bf16.msra.mxu0 0
  %7086 = vmatprep.subr.bf16.mxu0 0
  %7087 = vmatpush2.bf16.msra.mxu0 0
  %7088 = vmatprep.subr.bf16.mxu0 0
  %7089 = vmatpush2.bf16.msra.mxu0 0
  %7090 = vmatprep.mubr.bf16.mxu0 0
  %7091 = vmatmul.mubr.bf16.gmra.mxu0 %v5240
  %v7092 = vpop.f32.mrf.mxu0
  %v7093 = vadd.f32 0.0, %v7092
  %v7094 = vpop.f32.mrf.mxu0
  %v7095 = vpop.f32.mrf.mxu0
  %v7096 = vadd.f32 0.0, %v7095
  %v7097 = vpop.f32.mrf.mxu0
  %7098 = vmatprep.mubr.bf16.mxu0 0
  %7099 = vmatmul.mubr.bf16.gmra.mxu0 %v5243
  %v7100 = vpop.f32.mrf.mxu0
  %v7101 = vadd.f32 0.0, %v7100
  %v7102 = vpop.f32.mrf.mxu0
  %v7103 = vpop.f32.mrf.mxu0
  %v7104 = vadd.f32 0.0, %v7103
  %v7105 = vpop.f32.mrf.mxu0
  %7106 = vmatprep.mubr.bf16.mxu0 0
  %7107 = vmatmul.mubr.bf16.gmra.mxu0 %v5246
  %v7108 = vpop.f32.mrf.mxu0
  %v7109 = vadd.f32 0.0, %v7108
  %v7110 = vpop.f32.mrf.mxu0
  %v7111 = vpop.f32.mrf.mxu0
  %v7112 = vadd.f32 0.0, %v7111
  %v7113 = vpop.f32.mrf.mxu0
  %7114 = vmatprep.mubr.bf16.mxu0 0
  %7115 = vmatmul.mubr.bf16.gmra.mxu0 %v5249
  %v7116 = vpop.f32.mrf.mxu0
  %v7117 = vadd.f32 0.0, %v7116
  %v7118 = vpop.f32.mrf.mxu0
  %v7119 = vpop.f32.mrf.mxu0
  %v7120 = vadd.f32 0.0, %v7119
  %v7121 = vpop.f32.mrf.mxu0
  %7122 = vmatprep.mubr.bf16.mxu0 0
  %7123 = vmatmul.mubr.bf16.gmra.mxu0 %v5632
  %v7124 = vpop.f32.mrf.mxu0
  %v7125 = vadd.f32 0.0, %v7124
  %v7126 = vpop.f32.mrf.mxu0
  %v7127 = vpop.f32.mrf.mxu0
  %v7128 = vadd.f32 0.0, %v7127
  %v7129 = vpop.f32.mrf.mxu0
  %7130 = vdwg.mxu0
  %v7131 = vadd.f32 %v7020, %v7093
  %v7132 = vadd.f32 %v7023, %v7096
  %v7133 = vadd.f32 %v7028, %v7101
  %v7134 = vadd.f32 %v7031, %v7104
  %v7135 = vadd.f32 %v7036, %v7109
  %v7136 = vadd.f32 %v7039, %v7112
  %v7137 = vadd.f32 %v7044, %v7117
  %v7138 = vadd.f32 %v7047, %v7120
  %v7139 = vadd.f32 %v7052, %v7125
  %v7140 = vadd.f32 %v7055, %v7128
  %7141 = vmatprep.subr.bf16.mxu0 0
  %7142 = vmatpush1.bf16.msra.mxu0 0
  %7143 = vmatprep.subr.bf16.mxu0 0
  %7144 = vmatpush1.bf16.msra.mxu0 0
  %7145 = vmatprep.subr.bf16.mxu0 0
  %7146 = vmatpush1.bf16.msra.mxu0 %v6272
  %7147 = vmatprep.subr.bf16.mxu0 0
  %7148 = vmatpush1.bf16.msra.mxu0 %v6264
  %7149 = vmatprep.subr.bf16.mxu0 0
  %7150 = vmatpush1.bf16.msra.mxu0 %v6263
  %7151 = vmatprep.subr.bf16.mxu0 0
  %7152 = vmatpush1.bf16.msra.mxu0 %v6262
  %7153 = vmatprep.subr.bf16.mxu0 0
  %7154 = vmatpush1.bf16.msra.mxu0 %v6261
  %7155 = vmatprep.subr.bf16.mxu0 0
  %7156 = vmatpush1.bf16.msra.mxu0 %v6260
  %7157 = vmatprep.subr.bf16.mxu0 0
  %7158 = vmatpush2.bf16.msra.mxu0 0
  %7159 = vmatprep.subr.bf16.mxu0 0
  %7160 = vmatpush2.bf16.msra.mxu0 0
  %7161 = vmatprep.subr.bf16.mxu0 0
  %7162 = vmatpush2.bf16.msra.mxu0 0
  %7163 = vmatprep.subr.bf16.mxu0 0
  %7164 = vmatpush2.bf16.msra.mxu0 0
  %7165 = vmatprep.subr.bf16.mxu0 0
  %7166 = vmatpush2.bf16.msra.mxu0 0
  %7167 = vmatprep.subr.bf16.mxu0 0
  %7168 = vmatpush2.bf16.msra.mxu0 0
  %7169 = vmatprep.subr.bf16.mxu0 0
  %7170 = vmatpush2.bf16.msra.mxu0 0
  %7171 = vmatprep.subr.bf16.mxu0 0
  %7172 = vmatpush2.bf16.msra.mxu0 0
  %7173 = vmatprep.mubr.bf16.mxu0 0
  %7174 = vmatmul.mubr.bf16.gmra.mxu0 %v5365
  %v7175 = vpop.f32.mrf.mxu0
  %v7176 = vadd.f32 0.0, %v7175
  %v7177 = vpop.f32.mrf.mxu0
  %v7178 = vpop.f32.mrf.mxu0
  %v7179 = vadd.f32 0.0, %v7178
  %v7180 = vpop.f32.mrf.mxu0
  %7181 = vmatprep.mubr.bf16.mxu0 0
  %7182 = vmatmul.mubr.bf16.gmra.mxu0 %v5367
  %v7183 = vpop.f32.mrf.mxu0
  %v7184 = vadd.f32 0.0, %v7183
  %v7185 = vpop.f32.mrf.mxu0
  %v7186 = vpop.f32.mrf.mxu0
  %v7187 = vadd.f32 0.0, %v7186
  %v7188 = vpop.f32.mrf.mxu0
  %7189 = vmatprep.mubr.bf16.mxu0 0
  %7190 = vmatmul.mubr.bf16.gmra.mxu0 %v5369
  %v7191 = vpop.f32.mrf.mxu0
  %v7192 = vadd.f32 0.0, %v7191
  %v7193 = vpop.f32.mrf.mxu0
  %v7194 = vpop.f32.mrf.mxu0
  %v7195 = vadd.f32 0.0, %v7194
  %v7196 = vpop.f32.mrf.mxu0
  %7197 = vmatprep.mubr.bf16.mxu0 0
  %7198 = vmatmul.mubr.bf16.gmra.mxu0 %v5492
  %v7199 = vpop.f32.mrf.mxu0
  %v7200 = vadd.f32 0.0, %v7199
  %v7201 = vpop.f32.mrf.mxu0
  %v7202 = vpop.f32.mrf.mxu0
  %v7203 = vadd.f32 0.0, %v7202
  %v7204 = vpop.f32.mrf.mxu0
  %7205 = vmatprep.mubr.bf16.mxu0 0
  %7206 = vmatmul.mubr.bf16.gmra.mxu0 %v5765
  %v7207 = vpop.f32.mrf.mxu0
  %v7208 = vadd.f32 0.0, %v7207
  %v7209 = vpop.f32.mrf.mxu0
  %v7210 = vpop.f32.mrf.mxu0
  %v7211 = vadd.f32 0.0, %v7210
  %v7212 = vpop.f32.mrf.mxu0
  %7213 = vdwg.mxu0
  %v7214 = vadd.f32 %v7131, %v7176
  %v7215 = vadd.f32 %v7132, %v7179
  %v7216 = vadd.f32 %v7133, %v7184
  %v7217 = vadd.f32 %v7134, %v7187
  %v7218 = vadd.f32 %v7135, %v7192
  %v7219 = vadd.f32 %v7136, %v7195
  %v7220 = vadd.f32 %v7137, %v7200
  %v7221 = vadd.f32 %v7138, %v7203
  %v7222 = vadd.f32 %v7139, %v7208
  %v7223 = vadd.f32 %v7140, %v7211
  %7224 = vmatprep.subr.bf16.mxu0 0
  %7225 = vmatpush1.bf16.msra.mxu0 0
  %7226 = vmatprep.subr.bf16.mxu0 0
  %7227 = vmatpush1.bf16.msra.mxu0 0
  %7228 = vmatprep.subr.bf16.mxu0 0
  %7229 = vmatpush1.bf16.msra.mxu0 %v6403
  %7230 = vmatprep.subr.bf16.mxu0 0
  %7231 = vmatpush1.bf16.msra.mxu0 %v6395
  %7232 = vmatprep.subr.bf16.mxu0 0
  %7233 = vmatpush1.bf16.msra.mxu0 %v6394
  %7234 = vmatprep.subr.bf16.mxu0 0
  %7235 = vmatpush1.bf16.msra.mxu0 %v6393
  %7236 = vmatprep.subr.bf16.mxu0 0
  %7237 = vmatpush1.bf16.msra.mxu0 %v6392
  %7238 = vmatprep.subr.bf16.mxu0 0
  %7239 = vmatpush1.bf16.msra.mxu0 %v6391
  %7240 = vmatprep.subr.bf16.mxu0 0
  %7241 = vmatpush2.bf16.msra.mxu0 0
  %7242 = vmatprep.subr.bf16.mxu0 0
  %7243 = vmatpush2.bf16.msra.mxu0 0
  %7244 = vmatprep.subr.bf16.mxu0 0
  %7245 = vmatpush2.bf16.msra.mxu0 0
  %7246 = vmatprep.subr.bf16.mxu0 0
  %7247 = vmatpush2.bf16.msra.mxu0 0
  %7248 = vmatprep.subr.bf16.mxu0 0
  %7249 = vmatpush2.bf16.msra.mxu0 0
  %7250 = vmatprep.subr.bf16.mxu0 0
  %7251 = vmatpush2.bf16.msra.mxu0 0
  %7252 = vmatprep.subr.bf16.mxu0 0
  %7253 = vmatpush2.bf16.msra.mxu0 0
  %7254 = vmatprep.subr.bf16.mxu0 0
  %7255 = vmatpush2.bf16.msra.mxu0 0
  %7256 = vmatprep.mubr.bf16.mxu0 0
  %7257 = vmatmul.mubr.bf16.gmra.mxu0 %v5243
  %v7258 = vpop.f32.mrf.mxu0
  %v7259 = vadd.f32 0.0, %v7258
  %v7260 = vpop.f32.mrf.mxu0
  %v7261 = vpop.f32.mrf.mxu0
  %v7262 = vadd.f32 0.0, %v7261
  %v7263 = vpop.f32.mrf.mxu0
  %7264 = vmatprep.mubr.bf16.mxu0 0
  %7265 = vmatmul.mubr.bf16.gmra.mxu0 %v5246
  %v7266 = vpop.f32.mrf.mxu0
  %v7267 = vadd.f32 0.0, %v7266
  %v7268 = vpop.f32.mrf.mxu0
  %v7269 = vpop.f32.mrf.mxu0
  %v7270 = vadd.f32 0.0, %v7269
  %v7271 = vpop.f32.mrf.mxu0
  %7272 = vmatprep.mubr.bf16.mxu0 0
  %7273 = vmatmul.mubr.bf16.gmra.mxu0 %v5249
  %v7274 = vpop.f32.mrf.mxu0
  %v7275 = vadd.f32 0.0, %v7274
  %v7276 = vpop.f32.mrf.mxu0
  %v7277 = vpop.f32.mrf.mxu0
  %v7278 = vadd.f32 0.0, %v7277
  %v7279 = vpop.f32.mrf.mxu0
  %7280 = vmatprep.mubr.bf16.mxu0 0
  %7281 = vmatmul.mubr.bf16.gmra.mxu0 %v5632
  %v7282 = vpop.f32.mrf.mxu0
  %v7283 = vadd.f32 0.0, %v7282
  %v7284 = vpop.f32.mrf.mxu0
  %v7285 = vpop.f32.mrf.mxu0
  %v7286 = vadd.f32 0.0, %v7285
  %v7287 = vpop.f32.mrf.mxu0
  %7288 = vmatprep.mubr.bf16.mxu0 0
  %7289 = vmatmul.mubr.bf16.gmra.mxu0 %v6817
  %v7290 = vpop.f32.mrf.mxu0
  %v7291 = vadd.f32 0.0, %v7290
  %v7292 = vpop.f32.mrf.mxu0
  %v7293 = vpop.f32.mrf.mxu0
  %v7294 = vadd.f32 0.0, %v7293
  %v7295 = vpop.f32.mrf.mxu0
  %7296 = vdwg.mxu0
  %v7297 = vadd.f32 %v7214, %v7259
  %v7298 = vadd.f32 %v7215, %v7262
  %v7299 = vadd.f32 %v7216, %v7267
  %v7300 = vadd.f32 %v7217, %v7270
  %v7301 = vadd.f32 %v7218, %v7275
  %v7302 = vadd.f32 %v7219, %v7278
  %v7303 = vadd.f32 %v7220, %v7283
  %v7304 = vadd.f32 %v7221, %v7286
  %v7305 = vadd.f32 %v7222, %v7291
  %v7306 = vadd.f32 %v7223, %v7294
  %v7307 = vmax.f32 %v6902, %v7297
  %v7308 = vmax.f32 %v6903, %v7298
  %v7309 = vmax.f32 %v6904, %v7299
  %v7310 = vmax.f32 %v6905, %v7300
  %v7311 = vmax.f32 %v6906, %v7301
  %v7312 = vmax.f32 %v6907, %v7302
  %v7313 = vmax.f32 %v6908, %v7303
  %v7314 = vmax.f32 %v6909, %v7304
  %v7315 = vmax.f32 %v6910, %v7305
  %v7316 = vmax.f32 %v6911, %v7306
  %v7318 = vlaneseq
  %v7319 = vshrl.u32 %v7318, 7
  %v7320 = vsub.s32 0, %v7319
  %v7321 = vrot.slane %v5148, %v7320
  %v7323 = vadd.f32 %v7307, %v7321
  %v7324 = vadd.f32 %v7308, %v7321
  %v7325 = vadd.f32 %v7309, %v7321
  %v7326 = vadd.f32 %v7310, %v7321
  %v7327 = vadd.f32 %v7311, %v7321
  %v7328 = vadd.f32 %v7312, %v7321
  %v7329 = vadd.f32 %v7313, %v7321
  %v7330 = vadd.f32 %v7314, %v7321
  %v7331 = vadd.f32 %v7315, %v7321
  %v7332 = vadd.f32 %v7316, %v7321
  %v7333 = vmax.f32 %v7323, 0.0
  %v7334 = vmax.f32 %v7324, 0.0
  %v7335 = vmax.f32 %v7325, 0.0
  %v7336 = vmax.f32 %v7326, 0.0
  %v7337 = vmax.f32 %v7327, 0.0
  %v7338 = vmax.f32 %v7328, 0.0
  %v7339 = vmax.f32 %v7329, 0.0
  %v7340 = vmax.f32 %v7330, 0.0
  %v7341 = vmax.f32 %v7331, 0.0
  %v7342 = vmax.f32 %v7332, 0.0
  %v7343 = vpack.c.bf16 %v7334, %v7333
  %v7344 = vpack.c.bf16 %v7336, %v7335
  %v7345 = vpack.c.bf16 %v7338, %v7337
  %v7346 = vpack.c.bf16 %v7340, %v7339
  %v7347 = vpack.c.bf16 %v7342, %v7341
  %v7348 = vld [vmem:[%s5] sm:$0xf]
  %v7349 = vld [vmem:[%s5 + $0x4] sm:$0xf]
  %v7350 = vld [vmem:[%s5 + $0x8] sm:$0xf]
  %v7351 = vld [vmem:[%s5 + $0xc] sm:$0xf]
  %v7352 = vld [vmem:[%s5 + $0x10] sm:$0xf]
  %v7353 = vld [vmem:[%s5 + $0x14] sm:$0xf]
  %v7354 = vld [vmem:[%s5 + $0x18] sm:$0xf]
  %v7355 = vld [vmem:[%s5 + $0x1c] sm:$0xf]
  %v7356 = vld [vmem:[%s5 + $0x20] sm:$0xf]
  %v7357 = vld [vmem:[%s5 + $0x24] sm:$0xf]
  %s7358 = scalar_lea.vmem %s5, 40
  %v7359 = vld [vmem:[%s7358] sm:$0xf]
  %v7360 = vld [vmem:[%s7358 + $0x4] sm:$0xf]
  %v7361 = vld [vmem:[%s7358 + $0x8] sm:$0xf]
  %v7362 = vld [vmem:[%s7358 + $0xc] sm:$0xf]
  %v7363 = vld [vmem:[%s7358 + $0x10] sm:$0xf]
  %v7364 = vld [vmem:[%s7358 + $0x14] sm:$0xf]
  %v7365 = vld [vmem:[%s7358 + $0x18] sm:$0xf]
  %v7366 = vld [vmem:[%s7358 + $0x1c] sm:$0xf]
  %v7367 = vld [vmem:[%s7358 + $0x20] sm:$0xf]
  %v7368 = vld [vmem:[%s7358 + $0x24] sm:$0xf]
  %v7379 = vunpack.c.l.b16 %v7359
  %v7380 = vunpack.c.l.b16 %v7360
  %v7381 = vunpack.c.l.b16 %v7361
  %v7382 = vunpack.c.l.b16 %v7362
  %v7383 = vunpack.c.l.b16 %v7363
  %v7384 = vunpack.c.l.b16 %v7364
  %v7385 = vunpack.c.l.b16 %v7365
  %v7386 = vunpack.c.l.b16 %v7366
  %v7387 = vunpack.c.l.b16 %v7367
  %v7388 = vunpack.c.l.b16 %v7368
  %v7389 = vpack.c.b16 %v7380, %v7379
  %v7390 = vpack.c.b16 %v7382, %v7381
  %v7391 = vpack.c.b16 %v7384, %v7383
  %v7392 = vpack.c.b16 %v7386, %v7385
  %v7393 = vpack.c.b16 %v7388, %v7387
  %vm7399 = vcmask 654336
  %v7401 = vsel %vm7399, %v7344, 0
  %7403 = vmatprep.subr.bf16.mxu0 0
  %7404 = vmatpush1.bf16.msra.mxu0 0
  %7405 = vmatprep.subr.bf16.mxu0 0
  %7406 = vmatpush1.bf16.msra.mxu0 0
  %7407 = vmatprep.subr.bf16.mxu0 0
  %7408 = vmatpush1.bf16.msra.mxu0 0
  %7409 = vmatprep.subr.bf16.mxu0 0
  %7410 = vmatpush1.bf16.msra.mxu0 %v7393
  %7411 = vmatprep.subr.bf16.mxu0 0
  %7412 = vmatpush1.bf16.msra.mxu0 %v7392
  %7413 = vmatprep.subr.bf16.mxu0 0
  %7414 = vmatpush1.bf16.msra.mxu0 %v7391
  %7415 = vmatprep.subr.bf16.mxu0 0
  %7416 = vmatpush1.bf16.msra.mxu0 %v7390
  %7417 = vmatprep.subr.bf16.mxu0 0
  %7418 = vmatpush1.bf16.msra.mxu0 %v7389
  %7419 = vmatprep.subr.bf16.mxu0 0
  %7420 = vmatpush2.bf16.msra.mxu0 0
  %7421 = vmatprep.subr.bf16.mxu0 0
  %7422 = vmatpush2.bf16.msra.mxu0 0
  %7423 = vmatprep.subr.bf16.mxu0 0
  %7424 = vmatpush2.bf16.msra.mxu0 0
  %7425 = vmatprep.subr.bf16.mxu0 0
  %7426 = vmatpush2.bf16.msra.mxu0 0
  %7427 = vmatprep.subr.bf16.mxu0 0
  %7428 = vmatpush2.bf16.msra.mxu0 0
  %7429 = vmatprep.subr.bf16.mxu0 0
  %7430 = vmatpush2.bf16.msra.mxu0 0
  %7431 = vmatprep.subr.bf16.mxu0 0
  %7432 = vmatpush2.bf16.msra.mxu0 0
  %7433 = vmatprep.subr.bf16.mxu0 0
  %7434 = vmatpush2.bf16.msra.mxu0 0
  %7435 = vmatprep.mubr.bf16.mxu0 0
  %7436 = vmatmul.mubr.bf16.gmra.mxu0 %v7401
  %v7437 = vpop.f32.mrf.mxu0
  %v7438 = vadd.f32 0.0, %v7437
  %v7439 = vpop.f32.mrf.mxu0
  %v7440 = vpop.f32.mrf.mxu0
  %v7441 = vadd.f32 0.0, %v7440
  %v7442 = vpop.f32.mrf.mxu0
  %7443 = vdwg.mxu0
  %v7454 = vunpack.c.l.b16 %v7348
  %v7455 = vunpack.c.l.b16 %v7349
  %v7456 = vunpack.c.l.b16 %v7350
  %v7457 = vunpack.c.l.b16 %v7351
  %v7458 = vunpack.c.l.b16 %v7352
  %v7459 = vunpack.c.l.b16 %v7353
  %v7460 = vunpack.c.l.b16 %v7354
  %v7461 = vunpack.c.l.b16 %v7355
  %v7462 = vunpack.c.l.b16 %v7356
  %v7463 = vunpack.c.l.b16 %v7357
  %v7464 = vpack.c.b16 %v7455, %v7454
  %v7465 = vpack.c.b16 %v7457, %v7456
  %v7466 = vpack.c.b16 %v7459, %v7458
  %v7467 = vpack.c.b16 %v7461, %v7460
  %v7468 = vpack.c.b16 %v7463, %v7462
  %v7475 = vsel %vm7399, %v7343, 0
  %7477 = vmatprep.subr.bf16.mxu0 0
  %7478 = vmatpush1.bf16.msra.mxu0 0
  %7479 = vmatprep.subr.bf16.mxu0 0
  %7480 = vmatpush1.bf16.msra.mxu0 0
  %7481 = vmatprep.subr.bf16.mxu0 0
  %7482 = vmatpush1.bf16.msra.mxu0 0
  %7483 = vmatprep.subr.bf16.mxu0 0
  %7484 = vmatpush1.bf16.msra.mxu0 %v7468
  %7485 = vmatprep.subr.bf16.mxu0 0
  %7486 = vmatpush1.bf16.msra.mxu0 %v7467
  %7487 = vmatprep.subr.bf16.mxu0 0
  %7488 = vmatpush1.bf16.msra.mxu0 %v7466
  %7489 = vmatprep.subr.bf16.mxu0 0
  %7490 = vmatpush1.bf16.msra.mxu0 %v7465
  %7491 = vmatprep.subr.bf16.mxu0 0
  %7492 = vmatpush1.bf16.msra.mxu0 %v7464
  %7493 = vmatprep.subr.bf16.mxu0 0
  %7494 = vmatpush2.bf16.msra.mxu0 0
  %7495 = vmatprep.subr.bf16.mxu0 0
  %7496 = vmatpush2.bf16.msra.mxu0 0
  %7497 = vmatprep.subr.bf16.mxu0 0
  %7498 = vmatpush2.bf16.msra.mxu0 0
  %7499 = vmatprep.subr.bf16.mxu0 0
  %7500 = vmatpush2.bf16.msra.mxu0 0
  %7501 = vmatprep.subr.bf16.mxu0 0
  %7502 = vmatpush2.bf16.msra.mxu0 0
  %7503 = vmatprep.subr.bf16.mxu0 0
  %7504 = vmatpush2.bf16.msra.mxu0 0
  %7505 = vmatprep.subr.bf16.mxu0 0
  %7506 = vmatpush2.bf16.msra.mxu0 0
  %7507 = vmatprep.subr.bf16.mxu0 0
  %7508 = vmatpush2.bf16.msra.mxu0 0
  %7509 = vmatprep.mubr.bf16.mxu0 0
  %7510 = vmatmul.mubr.bf16.gmra.mxu0 %v7475
  %v7511 = vpop.f32.mrf.mxu0
  %v7512 = vadd.f32 %v7438, %v7511
  %v7513 = vpop.f32.mrf.mxu0
  %v7514 = vpop.f32.mrf.mxu0
  %v7515 = vadd.f32 %v7441, %v7514
  %v7516 = vpop.f32.mrf.mxu0
  %7517 = vdwg.mxu0
  %s7518 = scalar_lea.vmem %s5, 80
  %v7519 = vld [vmem:[%s7518] sm:$0xf]
  %v7520 = vld [vmem:[%s7518 + $0x4] sm:$0xf]
  %v7521 = vld [vmem:[%s7518 + $0x8] sm:$0xf]
  %v7522 = vld [vmem:[%s7518 + $0xc] sm:$0xf]
  %v7523 = vld [vmem:[%s7518 + $0x10] sm:$0xf]
  %v7524 = vld [vmem:[%s7518 + $0x14] sm:$0xf]
  %v7525 = vld [vmem:[%s7518 + $0x18] sm:$0xf]
  %v7526 = vld [vmem:[%s7518 + $0x1c] sm:$0xf]
  %v7527 = vld [vmem:[%s7518 + $0x20] sm:$0xf]
  %v7528 = vld [vmem:[%s7518 + $0x24] sm:$0xf]
  %v7539 = vunpack.c.l.b16 %v7519
  %v7540 = vunpack.c.l.b16 %v7520
  %v7541 = vunpack.c.l.b16 %v7521
  %v7542 = vunpack.c.l.b16 %v7522
  %v7543 = vunpack.c.l.b16 %v7523
  %v7544 = vunpack.c.l.b16 %v7524
  %v7545 = vunpack.c.l.b16 %v7525
  %v7546 = vunpack.c.l.b16 %v7526
  %v7547 = vunpack.c.l.b16 %v7527
  %v7548 = vunpack.c.l.b16 %v7528
  %v7549 = vpack.c.b16 %v7540, %v7539
  %v7550 = vpack.c.b16 %v7542, %v7541
  %v7551 = vpack.c.b16 %v7544, %v7543
  %v7552 = vpack.c.b16 %v7546, %v7545
  %v7553 = vpack.c.b16 %v7548, %v7547
  %v7560 = vsel %vm7399, %v7345, 0
  %7562 = vmatprep.subr.bf16.mxu0 0
  %7563 = vmatpush1.bf16.msra.mxu0 0
  %7564 = vmatprep.subr.bf16.mxu0 0
  %7565 = vmatpush1.bf16.msra.mxu0 0
  %7566 = vmatprep.subr.bf16.mxu0 0
  %7567 = vmatpush1.bf16.msra.mxu0 0
  %7568 = vmatprep.subr.bf16.mxu0 0
  %7569 = vmatpush1.bf16.msra.mxu0 %v7553
  %7570 = vmatprep.subr.bf16.mxu0 0
  %7571 = vmatpush1.bf16.msra.mxu0 %v7552
  %7572 = vmatprep.subr.bf16.mxu0 0
  %7573 = vmatpush1.bf16.msra.mxu0 %v7551
  %7574 = vmatprep.subr.bf16.mxu0 0
  %7575 = vmatpush1.bf16.msra.mxu0 %v7550
  %7576 = vmatprep.subr.bf16.mxu0 0
  %7577 = vmatpush1.bf16.msra.mxu0 %v7549
  %7578 = vmatprep.subr.bf16.mxu0 0
  %7579 = vmatpush2.bf16.msra.mxu0 0
  %7580 = vmatprep.subr.bf16.mxu0 0
  %7581 = vmatpush2.bf16.msra.mxu0 0
  %7582 = vmatprep.subr.bf16.mxu0 0
  %7583 = vmatpush2.bf16.msra.mxu0 0
  %7584 = vmatprep.subr.bf16.mxu0 0
  %7585 = vmatpush2.bf16.msra.mxu0 0
  %7586 = vmatprep.subr.bf16.mxu0 0
  %7587 = vmatpush2.bf16.msra.mxu0 0
  %7588 = vmatprep.subr.bf16.mxu0 0
  %7589 = vmatpush2.bf16.msra.mxu0 0
  %7590 = vmatprep.subr.bf16.mxu0 0
  %7591 = vmatpush2.bf16.msra.mxu0 0
  %7592 = vmatprep.subr.bf16.mxu0 0
  %7593 = vmatpush2.bf16.msra.mxu0 0
  %7594 = vmatprep.mubr.bf16.mxu0 0
  %7595 = vmatmul.mubr.bf16.gmra.mxu0 %v7560
  %v7596 = vpop.f32.mrf.mxu0
  %v7597 = vadd.f32 0.0, %v7596
  %v7598 = vpop.f32.mrf.mxu0
  %v7599 = vpop.f32.mrf.mxu0
  %v7600 = vadd.f32 0.0, %v7599
  %v7601 = vpop.f32.mrf.mxu0
  %7602 = vdwg.mxu0
  %v7603 = vadd.f32 %v7512, %v7597
  %v7604 = vadd.f32 %v7515, %v7600
  %s7605 = scalar_lea.vmem %s5, 120
  %v7606 = vld [vmem:[%s7605] sm:$0xf]
  %v7607 = vld [vmem:[%s7605 + $0x4] sm:$0xf]
  %v7608 = vld [vmem:[%s7605 + $0x8] sm:$0xf]
  %v7609 = vld [vmem:[%s7605 + $0xc] sm:$0xf]
  %v7610 = vld [vmem:[%s7605 + $0x10] sm:$0xf]
  %v7611 = vld [vmem:[%s7605 + $0x14] sm:$0xf]
  %v7612 = vld [vmem:[%s7605 + $0x18] sm:$0xf]
  %v7613 = vld [vmem:[%s7605 + $0x1c] sm:$0xf]
  %v7614 = vld [vmem:[%s7605 + $0x20] sm:$0xf]
  %v7615 = vld [vmem:[%s7605 + $0x24] sm:$0xf]
  %v7626 = vunpack.c.l.b16 %v7606
  %v7627 = vunpack.c.l.b16 %v7607
  %v7628 = vunpack.c.l.b16 %v7608
  %v7629 = vunpack.c.l.b16 %v7609
  %v7630 = vunpack.c.l.b16 %v7610
  %v7631 = vunpack.c.l.b16 %v7611
  %v7632 = vunpack.c.l.b16 %v7612
  %v7633 = vunpack.c.l.b16 %v7613
  %v7634 = vunpack.c.l.b16 %v7614
  %v7635 = vunpack.c.l.b16 %v7615
  %v7636 = vpack.c.b16 %v7627, %v7626
  %v7637 = vpack.c.b16 %v7629, %v7628
  %v7638 = vpack.c.b16 %v7631, %v7630
  %v7639 = vpack.c.b16 %v7633, %v7632
  %v7640 = vpack.c.b16 %v7635, %v7634
  %v7647 = vsel %vm7399, %v7346, 0
  %7649 = vmatprep.subr.bf16.mxu0 0
  %7650 = vmatpush1.bf16.msra.mxu0 0
  %7651 = vmatprep.subr.bf16.mxu0 0
  %7652 = vmatpush1.bf16.msra.mxu0 0
  %7653 = vmatprep.subr.bf16.mxu0 0
  %7654 = vmatpush1.bf16.msra.mxu0 0
  %7655 = vmatprep.subr.bf16.mxu0 0
  %7656 = vmatpush1.bf16.msra.mxu0 %v7640
  %7657 = vmatprep.subr.bf16.mxu0 0
  %7658 = vmatpush1.bf16.msra.mxu0 %v7639
  %7659 = vmatprep.subr.bf16.mxu0 0
  %7660 = vmatpush1.bf16.msra.mxu0 %v7638
  %7661 = vmatprep.subr.bf16.mxu0 0
  %7662 = vmatpush1.bf16.msra.mxu0 %v7637
  %7663 = vmatprep.subr.bf16.mxu0 0
  %7664 = vmatpush1.bf16.msra.mxu0 %v7636
  %7665 = vmatprep.subr.bf16.mxu0 0
  %7666 = vmatpush2.bf16.msra.mxu0 0
  %7667 = vmatprep.subr.bf16.mxu0 0
  %7668 = vmatpush2.bf16.msra.mxu0 0
  %7669 = vmatprep.subr.bf16.mxu0 0
  %7670 = vmatpush2.bf16.msra.mxu0 0
  %7671 = vmatprep.subr.bf16.mxu0 0
  %7672 = vmatpush2.bf16.msra.mxu0 0
  %7673 = vmatprep.subr.bf16.mxu0 0
  %7674 = vmatpush2.bf16.msra.mxu0 0
  %7675 = vmatprep.subr.bf16.mxu0 0
  %7676 = vmatpush2.bf16.msra.mxu0 0
  %7677 = vmatprep.subr.bf16.mxu0 0
  %7678 = vmatpush2.bf16.msra.mxu0 0
  %7679 = vmatprep.subr.bf16.mxu0 0
  %7680 = vmatpush2.bf16.msra.mxu0 0
  %7681 = vmatprep.mubr.bf16.mxu0 0
  %7682 = vmatmul.mubr.bf16.gmra.mxu0 %v7647
  %v7683 = vpop.f32.mrf.mxu0
  %v7684 = vadd.f32 0.0, %v7683
  %v7685 = vpop.f32.mrf.mxu0
  %v7686 = vpop.f32.mrf.mxu0
  %v7687 = vadd.f32 0.0, %v7686
  %v7688 = vpop.f32.mrf.mxu0
  %7689 = vdwg.mxu0
  %v7690 = vadd.f32 %v7603, %v7684
  %v7691 = vadd.f32 %v7604, %v7687
  %s7692 = scalar_lea.vmem %s5, 160
  %v7693 = vld [vmem:[%s7692] sm:$0xf]
  %v7694 = vld [vmem:[%s7692 + $0x4] sm:$0xf]
  %v7695 = vld [vmem:[%s7692 + $0x8] sm:$0xf]
  %v7696 = vld [vmem:[%s7692 + $0xc] sm:$0xf]
  %v7697 = vld [vmem:[%s7692 + $0x10] sm:$0xf]
  %v7698 = vld [vmem:[%s7692 + $0x14] sm:$0xf]
  %v7699 = vld [vmem:[%s7692 + $0x18] sm:$0xf]
  %v7700 = vld [vmem:[%s7692 + $0x1c] sm:$0xf]
  %v7701 = vld [vmem:[%s7692 + $0x20] sm:$0xf]
  %v7702 = vld [vmem:[%s7692 + $0x24] sm:$0xf]
  %v7713 = vunpack.c.l.b16 %v7693
  %v7714 = vunpack.c.l.b16 %v7694
  %v7715 = vunpack.c.l.b16 %v7695
  %v7716 = vunpack.c.l.b16 %v7696
  %v7717 = vunpack.c.l.b16 %v7697
  %v7718 = vunpack.c.l.b16 %v7698
  %v7719 = vunpack.c.l.b16 %v7699
  %v7720 = vunpack.c.l.b16 %v7700
  %v7721 = vunpack.c.l.b16 %v7701
  %v7722 = vunpack.c.l.b16 %v7702
  %v7723 = vpack.c.b16 %v7714, %v7713
  %v7724 = vpack.c.b16 %v7716, %v7715
  %v7725 = vpack.c.b16 %v7718, %v7717
  %v7726 = vpack.c.b16 %v7720, %v7719
  %v7727 = vpack.c.b16 %v7722, %v7721
  %v7734 = vsel %vm7399, %v7347, 0
  %7736 = vmatprep.subr.bf16.mxu0 0
  %7737 = vmatpush1.bf16.msra.mxu0 0
  %7738 = vmatprep.subr.bf16.mxu0 0
  %7739 = vmatpush1.bf16.msra.mxu0 0
  %7740 = vmatprep.subr.bf16.mxu0 0
  %7741 = vmatpush1.bf16.msra.mxu0 0
  %7742 = vmatprep.subr.bf16.mxu0 0
  %7743 = vmatpush1.bf16.msra.mxu0 %v7727
  %7744 = vmatprep.subr.bf16.mxu0 0
  %7745 = vmatpush1.bf16.msra.mxu0 %v7726
  %7746 = vmatprep.subr.bf16.mxu0 0
  %7747 = vmatpush1.bf16.msra.mxu0 %v7725
  %7748 = vmatprep.subr.bf16.mxu0 0
  %7749 = vmatpush1.bf16.msra.mxu0 %v7724
  %7750 = vmatprep.subr.bf16.mxu0 0
  %7751 = vmatpush1.bf16.msra.mxu0 %v7723
  %7752 = vmatprep.subr.bf16.mxu0 0
  %7753 = vmatpush2.bf16.msra.mxu0 0
  %7754 = vmatprep.subr.bf16.mxu0 0
  %7755 = vmatpush2.bf16.msra.mxu0 0
  %7756 = vmatprep.subr.bf16.mxu0 0
  %7757 = vmatpush2.bf16.msra.mxu0 0
  %7758 = vmatprep.subr.bf16.mxu0 0
  %7759 = vmatpush2.bf16.msra.mxu0 0
  %7760 = vmatprep.subr.bf16.mxu0 0
  %7761 = vmatpush2.bf16.msra.mxu0 0
  %7762 = vmatprep.subr.bf16.mxu0 0
  %7763 = vmatpush2.bf16.msra.mxu0 0
  %7764 = vmatprep.subr.bf16.mxu0 0
  %7765 = vmatpush2.bf16.msra.mxu0 0
  %7766 = vmatprep.subr.bf16.mxu0 0
  %7767 = vmatpush2.bf16.msra.mxu0 0
  %7768 = vmatprep.mubr.bf16.mxu0 0
  %7769 = vmatmul.mubr.bf16.gmra.mxu0 %v7734
  %v7770 = vpop.f32.mrf.mxu0
  %v7771 = vadd.f32 0.0, %v7770
  %v7772 = vpop.f32.mrf.mxu0
  %v7773 = vpop.f32.mrf.mxu0
  %v7774 = vadd.f32 0.0, %v7773
  %v7775 = vpop.f32.mrf.mxu0
  %7776 = vdwg.mxu0
  %v7777 = vadd.f32 %v7690, %v7771
  %v7778 = vadd.f32 %v7691, %v7774
  %v7779 = vld [vmem:[%s6] sm:$0x1]
  %v7781 = vlaneseq
  %v7782 = vshrl.u32 %v7781, 7
  %v7783 = vsub.s32 0, %v7782
  %v7784 = vrot.slane %v7779, %v7783
  %v7786 = vadd.f32 %v7777, %v7784
  %v7787 = vadd.f32 %v7778, %v7784
  %v7788 = vmax.f32 %v7786, 0.0
  %v7789 = vmax.f32 %v7787, 0.0
  %v7790 = vpack.c.bf16 %v7789, %v7788
  %v7791 = vld [vmem:[%s7] sm:$0xf]
  %v7792 = vld [vmem:[%s7 + $0x4] sm:$0xf]
  %v7793 = vld [vmem:[%s7 + $0x8] sm:$0xf]
  %v7794 = vld [vmem:[%s7 + $0xc] sm:$0xf]
  %v7795 = vld [vmem:[%s7 + $0x10] sm:$0xf]
  %v7796 = vld [vmem:[%s7 + $0x14] sm:$0xf]
  %v7797 = vld [vmem:[%s7 + $0x18] sm:$0xf]
  %v7798 = vld [vmem:[%s7 + $0x1c] sm:$0xf]
  %v7799 = vld [vmem:[%s7 + $0x20] sm:$0xf]
  %v7800 = vld [vmem:[%s7 + $0x24] sm:$0xf]
  %v7801 = vld [vmem:[%s7 + $0x28] sm:$0xf]
  %v7802 = vld [vmem:[%s7 + $0x2c] sm:$0xf]
  %v7803 = vld [vmem:[%s7 + $0x30] sm:$0xf]
  %v7804 = vld [vmem:[%s7 + $0x34] sm:$0xf]
  %v7805 = vld [vmem:[%s7 + $0x38] sm:$0xf]
  %v7806 = vld [vmem:[%s8] sm:$0x1]
  %v7808 = vlaneseq
  %v7809 = vshrl.u32 %v7808, 7
  %v7810 = vsub.s32 0, %v7809
  %v7811 = vrot.slane %v7806, %v7810
  %v7828 = vunpack.c.l.b16 %v7791
  %v7829 = vunpack.c.l.b16 %v7792
  %v7830 = vunpack.c.l.b16 %v7793
  %v7831 = vunpack.c.l.b16 %v7794
  %v7832 = vunpack.c.l.b16 %v7795
  %v7833 = vunpack.c.l.b16 %v7796
  %v7834 = vunpack.c.l.b16 %v7797
  %v7835 = vunpack.c.l.b16 %v7798
  %v7836 = vunpack.c.l.b16 %v7799
  %v7837 = vunpack.c.l.b16 %v7800
  %v7838 = vunpack.c.l.b16 %v7801
  %v7839 = vunpack.c.l.b16 %v7802
  %v7840 = vunpack.c.l.b16 %v7803
  %v7841 = vunpack.c.l.b16 %v7804
  %v7842 = vunpack.c.l.b16 %v7805
  %v7843 = vpack.c.b16 %v7829, %v7828
  %v7844 = vpack.c.b16 %v7831, %v7830
  %v7845 = vpack.c.b16 %v7833, %v7832
  %v7846 = vpack.c.b16 %v7835, %v7834
  %v7847 = vpack.c.b16 %v7837, %v7836
  %v7848 = vpack.c.b16 %v7839, %v7838
  %v7849 = vpack.c.b16 %v7841, %v7840
  %v7850 = vpack.c.b16 %v7842, %v7842
  %vm7858 = vcmask 982016
  %v7860 = vsel %vm7858, %v7790, 0
  %vm7862 = vcmask 1043456
  %v7864 = vsel %vm7862, %v7850, 0
  %7866 = vmatprep.subr.bf16.mxu0 0
  %7867 = vmatpush1.bf16.msra.mxu0 %v7864
  %7868 = vmatprep.subr.bf16.mxu0 0
  %7869 = vmatpush1.bf16.msra.mxu0 %v7849
  %7870 = vmatprep.subr.bf16.mxu0 0
  %7871 = vmatpush1.bf16.msra.mxu0 %v7848
  %7872 = vmatprep.subr.bf16.mxu0 0
  %7873 = vmatpush1.bf16.msra.mxu0 %v7847
  %7874 = vmatprep.subr.bf16.mxu0 0
  %7875 = vmatpush1.bf16.msra.mxu0 %v7846
  %7876 = vmatprep.subr.bf16.mxu0 0
  %7877 = vmatpush1.bf16.msra.mxu0 %v7845
  %7878 = vmatprep.subr.bf16.mxu0 0
  %7879 = vmatpush1.bf16.msra.mxu0 %v7844
  %7880 = vmatprep.subr.bf16.mxu0 0
  %7881 = vmatpush1.bf16.msra.mxu0 %v7843
  %7882 = vmatprep.subr.bf16.mxu0 0
  %7883 = vmatpush2.bf16.msra.mxu0 0
  %7884 = vmatprep.subr.bf16.mxu0 0
  %7885 = vmatpush2.bf16.msra.mxu0 0
  %7886 = vmatprep.subr.bf16.mxu0 0
  %7887 = vmatpush2.bf16.msra.mxu0 0
  %7888 = vmatprep.subr.bf16.mxu0 0
  %7889 = vmatpush2.bf16.msra.mxu0 0
  %7890 = vmatprep.subr.bf16.mxu0 0
  %7891 = vmatpush2.bf16.msra.mxu0 0
  %7892 = vmatprep.subr.bf16.mxu0 0
  %7893 = vmatpush2.bf16.msra.mxu0 0
  %7894 = vmatprep.subr.bf16.mxu0 0
  %7895 = vmatpush2.bf16.msra.mxu0 0
  %7896 = vmatprep.subr.bf16.mxu0 0
  %7897 = vmatpush2.bf16.msra.mxu0 0
  %7898 = vmatprep.mubr.bf16.mxu0 0
  %7899 = vmatmul.mubr.bf16.gmra.mxu0 %v7860
  %v7900 = vpop.f32.mrf.mxu0
  %v7901 = vadd.f32 %v7811, %v7900
  %v7902 = vpop.f32.mrf.mxu0
  %v7903 = vpop.f32.mrf.mxu0
  %v7904 = vadd.f32 %v7811, %v7903
  %v7905 = vpop.f32.mrf.mxu0
  %7906 = vdwg.mxu0
  %v7907 = vmax.f32 %v7901, 0.0
  %v7908 = vmax.f32 %v7904, 0.0
  %v7909 = vpack.c.bf16 %v7908, %v7907
  %v7910 = vld [vmem:[%s9] sm:$0xf]
  %v7911 = vld [vmem:[%s9 + $0x4] sm:$0xf]
  %v7912 = vld [vmem:[%s9 + $0x8] sm:$0xf]
  %v7913 = vld [vmem:[%s9 + $0xc] sm:$0xf]
  %v7914 = vld [vmem:[%s9 + $0x10] sm:$0xf]
  %v7915 = vld [vmem:[%s9 + $0x14] sm:$0xf]
  %v7916 = vld [vmem:[%s9 + $0x18] sm:$0xf]
  %v7917 = vld [vmem:[%s9 + $0x1c] sm:$0xf]
  %v7918 = vld [vmem:[%s9 + $0x20] sm:$0xf]
  %v7919 = vld [vmem:[%s9 + $0x24] sm:$0xf]
  %v7920 = vld [vmem:[%s9 + $0x28] sm:$0x3]
  %v7921 = vld [vmem:[%s10] sm:$0x1]
  %v7923 = vlaneseq
  %v7924 = vshrl.u32 %v7923, 7
  %v7925 = vsub.s32 0, %v7924
  %v7926 = vrot.slane %v7921, %v7925
  %v7939 = vunpack.c.l.b16 %v7910
  %v7940 = vunpack.c.l.b16 %v7911
  %v7941 = vunpack.c.l.b16 %v7912
  %v7942 = vunpack.c.l.b16 %v7913
  %v7943 = vunpack.c.l.b16 %v7914
  %v7944 = vunpack.c.l.b16 %v7915
  %v7945 = vunpack.c.l.b16 %v7916
  %v7946 = vunpack.c.l.b16 %v7917
  %v7947 = vunpack.c.l.b16 %v7918
  %v7948 = vunpack.c.l.b16 %v7919
  %v7949 = vunpack.c.l.b16 %v7920
  %v7950 = vpack.c.b16 %v7940, %v7939
  %v7951 = vpack.c.b16 %v7942, %v7941
  %v7952 = vpack.c.b16 %v7944, %v7943
  %v7953 = vpack.c.b16 %v7946, %v7945
  %v7954 = vpack.c.b16 %v7948, %v7947
  %v7955 = vpack.c.b16 %v7949, %v7949
  %v7962 = vsel %vm5126, %v7909, 0
  %v7965 = vsel %vm5251, %v7955, 0
  %7967 = vmatprep.subr.bf16.mxu0 0
  %7968 = vmatpush1.bf16.msra.mxu0 0
  %7969 = vmatprep.subr.bf16.mxu0 0
  %7970 = vmatpush1.bf16.msra.mxu0 0
  %7971 = vmatprep.subr.bf16.mxu0 0
  %7972 = vmatpush1.bf16.msra.mxu0 %v7965
  %7973 = vmatprep.subr.bf16.mxu0 0
  %7974 = vmatpush1.bf16.msra.mxu0 %v7954
  %7975 = vmatprep.subr.bf16.mxu0 0
  %7976 = vmatpush1.bf16.msra.mxu0 %v7953
  %7977 = vmatprep.subr.bf16.mxu0 0
  %7978 = vmatpush1.bf16.msra.mxu0 %v7952
  %7979 = vmatprep.subr.bf16.mxu0 0
  %7980 = vmatpush1.bf16.msra.mxu0 %v7951
  %7981 = vmatprep.subr.bf16.mxu0 0
  %7982 = vmatpush1.bf16.msra.mxu0 %v7950
  %7983 = vmatprep.subr.bf16.mxu0 0
  %7984 = vmatpush2.bf16.msra.mxu0 0
  %7985 = vmatprep.subr.bf16.mxu0 0
  %7986 = vmatpush2.bf16.msra.mxu0 0
  %7987 = vmatprep.subr.bf16.mxu0 0
  %7988 = vmatpush2.bf16.msra.mxu0 0
  %7989 = vmatprep.subr.bf16.mxu0 0
  %7990 = vmatpush2.bf16.msra.mxu0 0
  %7991 = vmatprep.subr.bf16.mxu0 0
  %7992 = vmatpush2.bf16.msra.mxu0 0
  %7993 = vmatprep.subr.bf16.mxu0 0
  %7994 = vmatpush2.bf16.msra.mxu0 0
  %7995 = vmatprep.subr.bf16.mxu0 0
  %7996 = vmatpush2.bf16.msra.mxu0 0
  %7997 = vmatprep.subr.bf16.mxu0 0
  %7998 = vmatpush2.bf16.msra.mxu0 0
  %7999 = vmatprep.mubr.bf16.mxu0 0
  %8000 = vmatmul.mubr.bf16.gmra.mxu0 %v7962
  %v8001 = vpop.f32.mrf.mxu0
  %v8002 = vadd.f32 %v7926, %v8001
  %v8003 = vpop.f32.mrf.mxu0
  %v8004 = vpop.f32.mrf.mxu0
  %v8005 = vadd.f32 %v7926, %v8004
  %v8006 = vpop.f32.mrf.mxu0
  %8007 = vdwg.mxu0
  %8008 = vst [vmem:[%s11] sm:$0xff] %v8002
  %8009 = vst [vmem:[%s11 + $0x8] sm:$0xff] %v8005
  // Predicated region
  $region46: #{net_forward.1} parent=0 // pred_check
    _
  $region47: #{net_forward.1} parent=0 // pred_check_branch
    %8011 = sbr.rel (0) target = $region49
  $region48: #{net_forward.1} parent=0 // pred_region
    _
  $region49: #{net_forward.1} parent=0 // pred_fallthru
    _
  // Predicated region
  $region50: #{net_forward.1} parent=0 // pred_check
    _
  $region51: #{net_forward.1} parent=0 // pred_check_branch
    %8013 = sbr.rel (0) target = $region53
  $region52: #{net_forward.1} parent=0 // pred_region
    _
  $region53: #{net_forward.1} parent=0 // pred_fallthru
    _

</llo_original>
